<compile_context>
chip_gen: v6e
topology: v6e:2x2x1
jax: 0.10.0
libtpu: 0.0.40
codegen_flags: <defaults>
</compile_context>

<pallas_src>
import jax
import jax.numpy as jnp
from jax import lax
from jax.experimental import pallas as pl
from jax.experimental.pallas import tpu as pltpu

EPS = 1e-5
LANE = 128
# bf16 conv operands (f32 accumulate) per the perf review; set to jnp.float32
# to recover <=1e-4 agreement with the f32 reference.
MATMUL_DTYPE = jnp.bfloat16


def residual_block(x_nchw, params, *, kernel_size=3, padding=1):
    """params: w1, w2 as (KH, KW, C, C) HWIO; BN params as (C,) vectors."""
    x = jnp.transpose(x_nchw, (0, 2, 3, 1)).astype(jnp.float32)  # NCHW -> NHWC
    N, H, W, C = x.shape
    KH = KW = kernel_size
    PAD = padding
    Cp = ((C + LANE - 1) // LANE) * LANE        # lane-dense channel count
    cpad = Cp - C
    M = N * H * W
    Hp = H + 2 * PAD
    Wp = W + 2 * PAD

    x_pad = jnp.pad(x, ((0, 0), (0, 0), (0, 0), (0, cpad)))

    def pad_weight(w):
        # (KH,KW,C,C) HWIO -> (KH*KW*C, Cp): pad ONLY Cout to the lane width,
        # keep the contraction axis at its real size K = KH*KW*C.
        w = jnp.pad(w.astype(jnp.float32), ((0, 0), (0, 0), (0, 0), (0, cpad)))
        return w.reshape(KH * KW * C, Cp).astype(MATMUL_DTYPE)

    def pad_vec(v):      # (C,) -> (1, Cp) f32, padded entries = 0
        return jnp.pad(v.astype(jnp.float32), (0, cpad)).reshape(1, Cp)

    args = (
        x_pad,
        pad_weight(params["w1"]), pad_vec(params["gc1"]), pad_vec(params["bc1"]),
        pad_weight(params["w2"]), pad_vec(params["gc2"]), pad_vec(params["bc2"]),
        pad_vec(params["g1"]), pad_vec(params["b1"]),
        pad_vec(params["g2"]), pad_vec(params["b2"]),
    )

    def kernel(x_ref, w1_ref, gc1_ref, bc1_ref, w2_ref, gc2_ref, bc2_ref,
               g1_ref, b1_ref, g2_ref, b2_ref, out_ref, xp_ref):
        inv_m = jnp.float32(1.0 / M)

        def bn_stats(v):
            # Exact f32 per-channel sums (VPU/XLU); no concat temp, no MXU
            # default-precision concern on the statistics path.
            mean = jnp.sum(v, axis=0, keepdims=True) * inv_m
            ex2 = jnp.sum(v * v, axis=0, keepdims=True) * inv_m
            var = jnp.maximum(ex2 - mean * mean, 0.0)   # clamp: cancellation
            return mean, var

        def batchnorm(v, g_ref, b_ref):
            mean, var = bn_stats(v)
            scale = lax.rsqrt(var + EPS) * g_ref[...]
            return (v - mean) * scale + b_ref[...]

        def conv(v, w_ref):
            # KHxKW / stride 1 / pad PAD conv as ONE fused im2col matmul with
            # an UN-padded contraction axis: patch (M, KH*KW*C) @ (KH*KW*C, Cp).
            xp_ref[:, PAD:PAD + H, PAD:PAD + W, :] = (
                v[:, :C].reshape(N, H, W, C))
            taps = []
            for kh in range(KH):
                for kw in range(KW):
                    taps.append(
                        xp_ref[:, kh:kh + H, kw:kw + W, :]
                        .reshape(M, C).astype(MATMUL_DTYPE))
            # TODO(synk): once row-tiled, generate the kw shifts with
            # pltpu.roll (XLU) instead of 9 materialized window-slice copies.
            patch = jnp.concatenate(taps, axis=1)          # (M, KH*KW*C) bf16
            return jnp.dot(patch, w_ref[...],
                           preferred_element_type=jnp.float32)   # (M, Cp) f32

        # Zero only the halo ring of the padded scratch, once; the interior is
        # fully overwritten by every conv.
        if PAD > 0:
            xp_ref[:, :PAD, :, :] = jnp.zeros((N, PAD, Wp, C), xp_ref.dtype)
            xp_ref[:, H + PAD:, :, :] = jnp.zeros((N, PAD, Wp, C), xp_ref.dtype)
            xp_ref[:, PAD:H + PAD, :PAD, :] = jnp.zeros((N, H, PAD, C), xp_ref.dtype)
            xp_ref[:, PAD:H + PAD, W + PAD:, :] = jnp.zeros((N, H, PAD, C), xp_ref.dtype)

        x2 = x_ref[...].reshape(M, Cp)

        # Residual path: compute bn2 statistics only; the affine is fused into
        # the single final store below (no early out_ref write + read-back).
        mean2, var2 = bn_stats(x2)
        scale2 = lax.rsqrt(var2 + EPS) * g2_ref[...]
        shift2 = b2_ref[...] - mean2 * scale2

        # Main path: relu -> bn1 -> conv1(conv,bn,relu) -> conv2(conv,bn).
        y = batchnorm(jnp.maximum(x2, 0.0), g1_ref, b1_ref)
        y = conv(y, w1_ref)
        y = jnp.maximum(batchnorm(y, gc1_ref, bc1_ref), 0.0)
        y = conv(y, w2_ref)
        y = batchnorm(y, gc2_ref, bc2_ref)

        # Fused residual: out = bn2(x) + y in one lane-dense store.
        out_ref[...] = (x2 * scale2 + shift2 + y).reshape(N, H, W, Cp)

    def full_spec(shape):
        nd = len(shape)
        return pl.BlockSpec(shape, lambda i, _nd=nd: (0,) * _nd)

    out_nhwc = pl.pallas_call(
        kernel,
        out_shape=jax.ShapeDtypeStruct((N, H, W, Cp), jnp.float32),
        grid=(1,),
        in_specs=[full_spec(a.shape) for a in args],
        out_specs=full_spec((N, H, W, Cp)),
        # Scratch holds only the real C channels (un-padded contraction).
        scratch_shapes=[pltpu.VMEM((N, Hp, Wp, C), jnp.float32)],
        compiler_params=pltpu.CompilerParams(
            dimension_semantics=("arbitrary",),
            # Toy working set is <2 MiB; the per-generation budgets from the
            # review (96-112 MiB v5e/v6e, <=48-56 MiB v7x) apply once tiled.
            vmem_limit_bytes=32 * 1024 * 1024),
    )(*args)

    # drop channel padding, NHWC -> NCHW
    return jnp.transpose(out_nhwc[..., :C], (0, 3, 1, 2))


# ---------------- pure-JAX reference (NCHW, matches PyTorch semantics) ----------------
def _ref_bn(v, gamma, beta):
    mean = jnp.mean(v, axis=(0, 2, 3), keepdims=True)
    var = jnp.mean((v - mean) ** 2, axis=(0, 2, 3), keepdims=True)
    return (v - mean) / jnp.sqrt(var + EPS) * gamma.reshape(1, -1, 1, 1) + beta.reshape(
        1, -1, 1, 1
    )


def _ref_conv(v, w_hwio, padding):
    return lax.conv_general_dilated(
        v, w_hwio, window_strides=(1, 1),
        padding=((padding, padding), (padding, padding)),
        dimension_numbers=("NCHW", "HWIO", "NCHW"),
    )


def residual_block_reference(x, p, *, padding=1):
    y = jnp.maximum(x, 0.0)
    y = _ref_bn(y, p["g1"], p["b1"])
    y = _ref_conv(y, p["w1"], padding)
    y = _ref_bn(y, p["gc1"], p["bc1"])
    y = jnp.maximum(y, 0.0)
    y = _ref_conv(y, p["w2"], padding)
    y = _ref_bn(y, p["gc2"], p["bc2"])
    xb = _ref_bn(x, p["g2"], p["b2"])
    return xb + y


if __name__ == "__main__":
    N, C, H, W = 2, 8, 16, 16
    K, PADDING = 3, 1

    key = jax.random.PRNGKey(0)
    keys = jax.random.split(key, 12)

    x = jax.random.normal(keys[0], (N, C, H, W), dtype=jnp.float32)

    params = {
        # conv weights in HWIO layout (KH, KW, Cin, Cout)
        "w1": 0.1 * jax.random.normal(keys[1], (K, K, C, C), dtype=jnp.float32),
        "w2": 0.1 * jax.random.normal(keys[2], (K, K, C, C), dtype=jnp.float32),
        # bn1 / bn2 (standalone BatchNorm2d)
        "g1": 1.0 + 0.1 * jax.random.normal(keys[3], (C,), dtype=jnp.float32),
        "b1": 0.1 * jax.random.normal(keys[4], (C,), dtype=jnp.float32),
        "g2": 1.0 + 0.1 * jax.random.normal(keys[5], (C,), dtype=jnp.float32),
        "b2": 0.1 * jax.random.normal(keys[6], (C,), dtype=jnp.float32),
        # BN inside conv1 / conv2 blocks
        "gc1": 1.0 + 0.1 * jax.random.normal(keys[7], (C,), dtype=jnp.float32),
        "bc1": 0.1 * jax.random.normal(keys[8], (C,), dtype=jnp.float32),
        "gc2": 1.0 + 0.1 * jax.random.normal(keys[9], (C,), dtype=jnp.float32),
        "bc2": 0.1 * jax.random.normal(keys[10], (C,), dtype=jnp.float32),
    }

    out = residual_block(x, params, kernel_size=K, padding=PADDING)
    out = jax.block_until_ready(out)

    ref = residual_block_reference(x, params, padding=PADDING)
    ref = jax.block_until_ready(ref)

    # Tolerance reflects bf16 conv operands (f32 accumulation): ~0.2-0.5%
    # relative error through two conv+BN stages. With MATMUL_DTYPE = float32
    # the kernel matches the reference to <=1e-4.
    if not jnp.allclose(out, ref, atol=2e-2, rtol=2e-2):
        max_err = jnp.max(jnp.abs(out - ref))
        raise AssertionError(f"Pallas kernel mismatch, max abs err = {max_err}")

    print("KERNEL_OK")
</pallas_src>

<mosaic_0001>
module attributes {stable_mosaic.version = 11 : i64} {
  func.func @kernel(%arg0: i32, %arg1: memref<2x16x16x128xf32, #tpu.memory_space<vmem>>, %arg2: memref<72x128xbf16, #tpu.memory_space<vmem>>, %arg3: memref<1x128xf32, #tpu.memory_space<vmem>>, %arg4: memref<1x128xf32, #tpu.memory_space<vmem>>, %arg5: memref<72x128xbf16, #tpu.memory_space<vmem>>, %arg6: memref<1x128xf32, #tpu.memory_space<vmem>>, %arg7: memref<1x128xf32, #tpu.memory_space<vmem>>, %arg8: memref<1x128xf32, #tpu.memory_space<vmem>>, %arg9: memref<1x128xf32, #tpu.memory_space<vmem>>, %arg10: memref<1x128xf32, #tpu.memory_space<vmem>>, %arg11: memref<1x128xf32, #tpu.memory_space<vmem>>, %arg12: memref<2x16x16x128xf32, #tpu.memory_space<vmem>>, %arg13: memref<2x18x18x8xf32, #tpu.memory_space<vmem>>) attributes {dimension_semantics = [#tpu.dimension_semantics<arbitrary>], iteration_bounds = array<i64: 1>, scalar_prefetch = 0 : i64, scratch_operands = 1 : i64, tpu.core_type = #tpu.core_type<tc>, window_params = [{pipeline_mode = #tpu.pipeline_mode<synchronous>, transform_indices = @transform_0, window_bounds = array<i64: 2, 16, 16, 128>}, {pipeline_mode = #tpu.pipeline_mode<synchronous>, transform_indices = @transform_1, window_bounds = array<i64: 72, 128>}, {pipeline_mode = #tpu.pipeline_mode<synchronous>, transform_indices = @transform_2, window_bounds = array<i64: 1, 128>}, {pipeline_mode = #tpu.pipeline_mode<synchronous>, transform_indices = @transform_3, window_bounds = array<i64: 1, 128>}, {pipeline_mode = #tpu.pipeline_mode<synchronous>, transform_indices = @transform_4, window_bounds = array<i64: 72, 128>}, {pipeline_mode = #tpu.pipeline_mode<synchronous>, transform_indices = @transform_5, window_bounds = array<i64: 1, 128>}, {pipeline_mode = #tpu.pipeline_mode<synchronous>, transform_indices = @transform_6, window_bounds = array<i64: 1, 128>}, {pipeline_mode = #tpu.pipeline_mode<synchronous>, transform_indices = @transform_7, window_bounds = array<i64: 1, 128>}, {pipeline_mode = #tpu.pipeline_mode<synchronous>, transform_indices = @transform_8, window_bounds = array<i64: 1, 128>}, {pipeline_mode = #tpu.pipeline_mode<synchronous>, transform_indices = @transform_9, window_bounds = array<i64: 1, 128>}, {pipeline_mode = #tpu.pipeline_mode<synchronous>, transform_indices = @transform_10, window_bounds = array<i64: 1, 128>}, {pipeline_mode = #tpu.pipeline_mode<synchronous>, transform_indices = @transform_11, window_bounds = array<i64: 2, 16, 16, 128>}]} {
    %cst = arith.constant 0.000000e+00 : f32
    %0 = vector.broadcast %cst : f32 to vector<2x1x18x8xf32>
    %c0 = arith.constant 0 : index
    %c0_0 = arith.constant 0 : index
    %c0_1 = arith.constant 0 : index
    %c0_2 = arith.constant 0 : index
    %1 = vector.load %arg13[%c0, %c0_0, %c0_1, %c0_2] : memref<2x18x18x8xf32, #tpu.memory_space<vmem>>, vector<2x1x18x8xf32>
    tpu.vector_store %arg13[%c0, %c0_0, %c0_1, %c0_2], %0 {strides = array<i32>} : memref<2x18x18x8xf32, #tpu.memory_space<vmem>>, vector<2x1x18x8xf32>,
    %cst_3 = arith.constant 0.000000e+00 : f32
    %2 = vector.broadcast %cst_3 : f32 to vector<2x1x18x8xf32>
    %c0_4 = arith.constant 0 : index
    %c17 = arith.constant 17 : index
    %c0_5 = arith.constant 0 : index
    %c0_6 = arith.constant 0 : index
    %3 = vector.load %arg13[%c0_4, %c17, %c0_5, %c0_6] : memref<2x18x18x8xf32, #tpu.memory_space<vmem>>, vector<2x1x18x8xf32>
    tpu.vector_store %arg13[%c0_4, %c17, %c0_5, %c0_6], %2 {strides = array<i32>} : memref<2x18x18x8xf32, #tpu.memory_space<vmem>>, vector<2x1x18x8xf32>,
    %cst_7 = arith.constant 0.000000e+00 : f32
    %4 = vector.broadcast %cst_7 : f32 to vector<2x16x1x8xf32>
    %c0_8 = arith.constant 0 : index
    %c1 = arith.constant 1 : index
    %c0_9 = arith.constant 0 : index
    %c0_10 = arith.constant 0 : index
    %5 = vector.load %arg13[%c0_8, %c1, %c0_9, %c0_10] : memref<2x18x18x8xf32, #tpu.memory_space<vmem>>, vector<2x16x1x8xf32>
    tpu.vector_store %arg13[%c0_8, %c1, %c0_9, %c0_10], %4 {strides = array<i32>} : memref<2x18x18x8xf32, #tpu.memory_space<vmem>>, vector<2x16x1x8xf32>,
    %cst_11 = arith.constant 0.000000e+00 : f32
    %6 = vector.broadcast %cst_11 : f32 to vector<2x16x1x8xf32>
    %c0_12 = arith.constant 0 : index
    %c1_13 = arith.constant 1 : index
    %c17_14 = arith.constant 17 : index
    %c0_15 = arith.constant 0 : index
    %7 = vector.load %arg13[%c0_12, %c1_13, %c17_14, %c0_15] : memref<2x18x18x8xf32, #tpu.memory_space<vmem>>, vector<2x16x1x8xf32>
    tpu.vector_store %arg13[%c0_12, %c1_13, %c17_14, %c0_15], %6 {strides = array<i32>} : memref<2x18x18x8xf32, #tpu.memory_space<vmem>>, vector<2x16x1x8xf32>,
    %c0_16 = arith.constant 0 : index
    %c0_17 = arith.constant 0 : index
    %c0_18 = arith.constant 0 : index
    %c0_19 = arith.constant 0 : index
    %8 = vector.load %arg1[%c0_16, %c0_17, %c0_18, %c0_19] : memref<2x16x16x128xf32, #tpu.memory_space<vmem>>, vector<2x16x16x128xf32>
    %9 = vector.shape_cast %8 : vector<2x16x16x128xf32> to vector<512x128xf32>
    %cst_20 = arith.constant dense<0.000000e+00> : vector<128xf32>
    %10 = vector.multi_reduction <add>, %9, %cst_20 [0] : vector<512x128xf32> to vector<128xf32>
    %11 = vector.shape_cast %10 : vector<128xf32> to vector<1x128xf32>
    %cst_21 = arith.constant 0.001953125 : f32
    %12 = vector.broadcast %cst_21 : f32 to vector<1x128xf32>
    %13 = arith.mulf %11, %12 : vector<1x128xf32>
    %14 = arith.mulf %9, %9 : vector<512x128xf32>
    %cst_22 = arith.constant dense<0.000000e+00> : vector<128xf32>
    %15 = vector.multi_reduction <add>, %14, %cst_22 [0] : vector<512x128xf32> to vector<128xf32>
    %16 = vector.shape_cast %15 : vector<128xf32> to vector<1x128xf32>
    %cst_23 = arith.constant 0.001953125 : f32
    %17 = vector.broadcast %cst_23 : f32 to vector<1x128xf32>
    %18 = arith.mulf %16, %17 : vector<1x128xf32>
    %19 = arith.mulf %13, %13 : vector<1x128xf32>
    %20 = arith.subf %18, %19 : vector<1x128xf32>
    %cst_24 = arith.constant 0.000000e+00 : f32
    %21 = vector.broadcast %cst_24 : f32 to vector<1x128xf32>
    %22 = arith.maximumf %20, %21 : vector<1x128xf32>
    %cst_25 = arith.constant 9.99999974E-6 : f32
    %23 = vector.broadcast %cst_25 : f32 to vector<1x128xf32>
    %24 = arith.addf %22, %23 : vector<1x128xf32>
    %25 = math.rsqrt %24 : vector<1x128xf32>
    %c0_26 = arith.constant 0 : index
    %c0_27 = arith.constant 0 : index
    %26 = vector.load %arg10[%c0_26, %c0_27] : memref<1x128xf32, #tpu.memory_space<vmem>>, vector<1x128xf32>
    %27 = arith.mulf %25, %26 : vector<1x128xf32>
    %c0_28 = arith.constant 0 : index
    %c0_29 = arith.constant 0 : index
    %28 = vector.load %arg11[%c0_28, %c0_29] : memref<1x128xf32, #tpu.memory_space<vmem>>, vector<1x128xf32>
    %29 = arith.mulf %13, %27 : vector<1x128xf32>
    %30 = arith.subf %28, %29 : vector<1x128xf32>
    %cst_30 = arith.constant 0.000000e+00 : f32
    %31 = vector.broadcast %cst_30 : f32 to vector<512x128xf32>
    %32 = arith.maximumf %9, %31 : vector<512x128xf32>
    %cst_31 = arith.constant dense<0.000000e+00> : vector<128xf32>
    %33 = vector.multi_reduction <add>, %32, %cst_31 [0] : vector<512x128xf32> to vector<128xf32>
    %34 = vector.shape_cast %33 : vector<128xf32> to vector<1x128xf32>
    %cst_32 = arith.constant 0.001953125 : f32
    %35 = vector.broadcast %cst_32 : f32 to vector<1x128xf32>
    %36 = arith.mulf %34, %35 : vector<1x128xf32>
    %37 = arith.mulf %32, %32 : vector<512x128xf32>
    %cst_33 = arith.constant dense<0.000000e+00> : vector<128xf32>
    %38 = vector.multi_reduction <add>, %37, %cst_33 [0] : vector<512x128xf32> to vector<128xf32>
    %39 = vector.shape_cast %38 : vector<128xf32> to vector<1x128xf32>
    %cst_34 = arith.constant 0.001953125 : f32
    %40 = vector.broadcast %cst_34 : f32 to vector<1x128xf32>
    %41 = arith.mulf %39, %40 : vector<1x128xf32>
    %42 = arith.mulf %36, %36 : vector<1x128xf32>
    %43 = arith.subf %41, %42 : vector<1x128xf32>
    %cst_35 = arith.constant 0.000000e+00 : f32
    %44 = vector.broadcast %cst_35 : f32 to vector<1x128xf32>
    %45 = arith.maximumf %43, %44 : vector<1x128xf32>
    %cst_36 = arith.constant 9.99999974E-6 : f32
    %46 = vector.broadcast %cst_36 : f32 to vector<1x128xf32>
    %47 = arith.addf %45, %46 : vector<1x128xf32>
    %48 = math.rsqrt %47 : vector<1x128xf32>
    %c0_37 = arith.constant 0 : index
    %c0_38 = arith.constant 0 : index
    %49 = vector.load %arg8[%c0_37, %c0_38] : memref<1x128xf32, #tpu.memory_space<vmem>>, vector<1x128xf32>
    %50 = arith.mulf %48, %49 : vector<1x128xf32>
    %51 = vector.broadcast %36 : vector<1x128xf32> to vector<512x128xf32>
    %52 = arith.subf %32, %51 : vector<512x128xf32>
    %53 = vector.broadcast %50 : vector<1x128xf32> to vector<512x128xf32>
    %54 = arith.mulf %52, %53 : vector<512x128xf32>
    %c0_39 = arith.constant 0 : index
    %c0_40 = arith.constant 0 : index
    %55 = vector.load %arg9[%c0_39, %c0_40] : memref<1x128xf32, #tpu.memory_space<vmem>>, vector<1x128xf32>
    %56 = vector.broadcast %55 : vector<1x128xf32> to vector<512x128xf32>
    %57 = arith.addf %54, %56 : vector<512x128xf32>
    %58 = vector.extract_strided_slice %57 {offsets = [0, 0], sizes = [512, 8], strides = [1, 1]} : vector<512x128xf32> to vector<512x8xf32>
    %59 = vector.shape_cast %58 : vector<512x8xf32> to vector<2x16x16x8xf32>
    %c0_41 = arith.constant 0 : index
    %c1_42 = arith.constant 1 : index
    %c1_43 = arith.constant 1 : index
    %c0_44 = arith.constant 0 : index
    %60 = vector.load %arg13[%c0_41, %c1_42, %c1_43, %c0_44] : memref<2x18x18x8xf32, #tpu.memory_space<vmem>>, vector<2x16x16x8xf32>
    tpu.vector_store %arg13[%c0_41, %c1_42, %c1_43, %c0_44], %59 {strides = array<i32>} : memref<2x18x18x8xf32, #tpu.memory_space<vmem>>, vector<2x16x16x8xf32>,
    %c0_45 = arith.constant 0 : index
    %c0_46 = arith.constant 0 : index
    %c0_47 = arith.constant 0 : index
    %c0_48 = arith.constant 0 : index
    %61 = vector.load %arg13[%c0_45, %c0_46, %c0_47, %c0_48] : memref<2x18x18x8xf32, #tpu.memory_space<vmem>>, vector<2x16x16x8xf32>
    %62 = vector.shape_cast %61 : vector<2x16x16x8xf32> to vector<512x8xf32>
    %63 = arith.truncf %62 : vector<512x8xf32> to vector<512x8xbf16>
    %c0_49 = arith.constant 0 : index
    %c0_50 = arith.constant 0 : index
    %c1_51 = arith.constant 1 : index
    %c0_52 = arith.constant 0 : index
    %64 = vector.load %arg13[%c0_49, %c0_50, %c1_51, %c0_52] : memref<2x18x18x8xf32, #tpu.memory_space<vmem>>, vector<2x16x16x8xf32>
    %65 = vector.shape_cast %64 : vector<2x16x16x8xf32> to vector<512x8xf32>
    %66 = arith.truncf %65 : vector<512x8xf32> to vector<512x8xbf16>
    %c0_53 = arith.constant 0 : index
    %c0_54 = arith.constant 0 : index
    %c2 = arith.constant 2 : index
    %c0_55 = arith.constant 0 : index
    %67 = vector.load %arg13[%c0_53, %c0_54, %c2, %c0_55] : memref<2x18x18x8xf32, #tpu.memory_space<vmem>>, vector<2x16x16x8xf32>
    %68 = vector.shape_cast %67 : vector<2x16x16x8xf32> to vector<512x8xf32>
    %69 = arith.truncf %68 : vector<512x8xf32> to vector<512x8xbf16>
    %c0_56 = arith.constant 0 : index
    %c1_57 = arith.constant 1 : index
    %c0_58 = arith.constant 0 : index
    %c0_59 = arith.constant 0 : index
    %70 = vector.load %arg13[%c0_56, %c1_57, %c0_58, %c0_59] : memref<2x18x18x8xf32, #tpu.memory_space<vmem>>, vector<2x16x16x8xf32>
    %71 = vector.shape_cast %70 : vector<2x16x16x8xf32> to vector<512x8xf32>
    %72 = arith.truncf %71 : vector<512x8xf32> to vector<512x8xbf16>
    %c0_60 = arith.constant 0 : index
    %c1_61 = arith.constant 1 : index
    %c1_62 = arith.constant 1 : index
    %c0_63 = arith.constant 0 : index
    %73 = vector.load %arg13[%c0_60, %c1_61, %c1_62, %c0_63] : memref<2x18x18x8xf32, #tpu.memory_space<vmem>>, vector<2x16x16x8xf32>
    %74 = vector.shape_cast %73 : vector<2x16x16x8xf32> to vector<512x8xf32>
    %75 = arith.truncf %74 : vector<512x8xf32> to vector<512x8xbf16>
    %c0_64 = arith.constant 0 : index
    %c1_65 = arith.constant 1 : index
    %c2_66 = arith.constant 2 : index
    %c0_67 = arith.constant 0 : index
    %76 = vector.load %arg13[%c0_64, %c1_65, %c2_66, %c0_67] : memref<2x18x18x8xf32, #tpu.memory_space<vmem>>, vector<2x16x16x8xf32>
    %77 = vector.shape_cast %76 : vector<2x16x16x8xf32> to vector<512x8xf32>
    %78 = arith.truncf %77 : vector<512x8xf32> to vector<512x8xbf16>
    %c0_68 = arith.constant 0 : index
    %c2_69 = arith.constant 2 : index
    %c0_70 = arith.constant 0 : index
    %c0_71 = arith.constant 0 : index
    %79 = vector.load %arg13[%c0_68, %c2_69, %c0_70, %c0_71] : memref<2x18x18x8xf32, #tpu.memory_space<vmem>>, vector<2x16x16x8xf32>
    %80 = vector.shape_cast %79 : vector<2x16x16x8xf32> to vector<512x8xf32>
    %81 = arith.truncf %80 : vector<512x8xf32> to vector<512x8xbf16>
    %c0_72 = arith.constant 0 : index
    %c2_73 = arith.constant 2 : index
    %c1_74 = arith.constant 1 : index
    %c0_75 = arith.constant 0 : index
    %82 = vector.load %arg13[%c0_72, %c2_73, %c1_74, %c0_75] : memref<2x18x18x8xf32, #tpu.memory_space<vmem>>, vector<2x16x16x8xf32>
    %83 = vector.shape_cast %82 : vector<2x16x16x8xf32> to vector<512x8xf32>
    %84 = arith.truncf %83 : vector<512x8xf32> to vector<512x8xbf16>
    %c0_76 = arith.constant 0 : index
    %c2_77 = arith.constant 2 : index
    %c2_78 = arith.constant 2 : index
    %c0_79 = arith.constant 0 : index
    %85 = vector.load %arg13[%c0_76, %c2_77, %c2_78, %c0_79] : memref<2x18x18x8xf32, #tpu.memory_space<vmem>>, vector<2x16x16x8xf32>
    %86 = vector.shape_cast %85 : vector<2x16x16x8xf32> to vector<512x8xf32>
    %87 = arith.truncf %86 : vector<512x8xf32> to vector<512x8xbf16>
    %88 = tpu.concatenate %63, %66, %69, %72, %75, %78, %81, %84, %87 in 1 : vector<512x8xbf16>, vector<512x8xbf16>, vector<512x8xbf16>, vector<512x8xbf16>, vector<512x8xbf16>, vector<512x8xbf16>, vector<512x8xbf16>, vector<512x8xbf16>, vector<512x8xbf16> -> vector<512x72xbf16>
    %c0_80 = arith.constant 0 : index
    %c0_81 = arith.constant 0 : index
    %89 = vector.load %arg2[%c0_80, %c0_81] : memref<72x128xbf16, #tpu.memory_space<vmem>>, vector<72x128xbf16>
    %cst_82 = arith.constant dense<0.000000e+00> : vector<512x128xf32>
    %90 = tpu.matmul %88, %89, %cst_82 {dimension_numbers = #tpu.dot_dimension_numbers<[1], [0], [0], [1], [0, 0, 1, 1], [], []>} : vector<512x72xbf16>, vector<72x128xbf16>, vector<512x128xf32> -> vector<512x128xf32>
    %cst_83 = arith.constant dense<0.000000e+00> : vector<128xf32>
    %91 = vector.multi_reduction <add>, %90, %cst_83 [0] : vector<512x128xf32> to vector<128xf32>
    %92 = vector.shape_cast %91 : vector<128xf32> to vector<1x128xf32>
    %cst_84 = arith.constant 0.001953125 : f32
    %93 = vector.broadcast %cst_84 : f32 to vector<1x128xf32>
    %94 = arith.mulf %92, %93 : vector<1x128xf32>
    %95 = arith.mulf %90, %90 : vector<512x128xf32>
    %cst_85 = arith.constant dense<0.000000e+00> : vector<128xf32>
    %96 = vector.multi_reduction <add>, %95, %cst_85 [0] : vector<512x128xf32> to vector<128xf32>
    %97 = vector.shape_cast %96 : vector<128xf32> to vector<1x128xf32>
    %cst_86 = arith.constant 0.001953125 : f32
    %98 = vector.broadcast %cst_86 : f32 to vector<1x128xf32>
    %99 = arith.mulf %97, %98 : vector<1x128xf32>
    %100 = arith.mulf %94, %94 : vector<1x128xf32>
    %101 = arith.subf %99, %100 : vector<1x128xf32>
    %cst_87 = arith.constant 0.000000e+00 : f32
    %102 = vector.broadcast %cst_87 : f32 to vector<1x128xf32>
    %103 = arith.maximumf %101, %102 : vector<1x128xf32>
    %cst_88 = arith.constant 9.99999974E-6 : f32
    %104 = vector.broadcast %cst_88 : f32 to vector<1x128xf32>
    %105 = arith.addf %103, %104 : vector<1x128xf32>
    %106 = math.rsqrt %105 : vector<1x128xf32>
    %c0_89 = arith.constant 0 : index
    %c0_90 = arith.constant 0 : index
    %107 = vector.load %arg3[%c0_89, %c0_90] : memref<1x128xf32, #tpu.memory_space<vmem>>, vector<1x128xf32>
    %108 = arith.mulf %106, %107 : vector<1x128xf32>
    %109 = vector.broadcast %94 : vector<1x128xf32> to vector<512x128xf32>
    %110 = arith.subf %90, %109 : vector<512x128xf32>
    %111 = vector.broadcast %108 : vector<1x128xf32> to vector<512x128xf32>
    %112 = arith.mulf %110, %111 : vector<512x128xf32>
    %c0_91 = arith.constant 0 : index
    %c0_92 = arith.constant 0 : index
    %113 = vector.load %arg4[%c0_91, %c0_92] : memref<1x128xf32, #tpu.memory_space<vmem>>, vector<1x128xf32>
    %114 = vector.broadcast %113 : vector<1x128xf32> to vector<512x128xf32>
    %115 = arith.addf %112, %114 : vector<512x128xf32>
    %cst_93 = arith.constant 0.000000e+00 : f32
    %116 = vector.broadcast %cst_93 : f32 to vector<512x128xf32>
    %117 = arith.maximumf %115, %116 : vector<512x128xf32>
    %118 = vector.extract_strided_slice %117 {offsets = [0, 0], sizes = [512, 8], strides = [1, 1]} : vector<512x128xf32> to vector<512x8xf32>
    %119 = vector.shape_cast %118 : vector<512x8xf32> to vector<2x16x16x8xf32>
    %c0_94 = arith.constant 0 : index
    %c1_95 = arith.constant 1 : index
    %c1_96 = arith.constant 1 : index
    %c0_97 = arith.constant 0 : index
    %120 = vector.load %arg13[%c0_94, %c1_95, %c1_96, %c0_97] : memref<2x18x18x8xf32, #tpu.memory_space<vmem>>, vector<2x16x16x8xf32>
    tpu.vector_store %arg13[%c0_94, %c1_95, %c1_96, %c0_97], %119 {strides = array<i32>} : memref<2x18x18x8xf32, #tpu.memory_space<vmem>>, vector<2x16x16x8xf32>,
    %c0_98 = arith.constant 0 : index
    %c0_99 = arith.constant 0 : index
    %c0_100 = arith.constant 0 : index
    %c0_101 = arith.constant 0 : index
    %121 = vector.load %arg13[%c0_98, %c0_99, %c0_100, %c0_101] : memref<2x18x18x8xf32, #tpu.memory_space<vmem>>, vector<2x16x16x8xf32>
    %122 = vector.shape_cast %121 : vector<2x16x16x8xf32> to vector<512x8xf32>
    %123 = arith.truncf %122 : vector<512x8xf32> to vector<512x8xbf16>
    %c0_102 = arith.constant 0 : index
    %c0_103 = arith.constant 0 : index
    %c1_104 = arith.constant 1 : index
    %c0_105 = arith.constant 0 : index
    %124 = vector.load %arg13[%c0_102, %c0_103, %c1_104, %c0_105] : memref<2x18x18x8xf32, #tpu.memory_space<vmem>>, vector<2x16x16x8xf32>
    %125 = vector.shape_cast %124 : vector<2x16x16x8xf32> to vector<512x8xf32>
    %126 = arith.truncf %125 : vector<512x8xf32> to vector<512x8xbf16>
    %c0_106 = arith.constant 0 : index
    %c0_107 = arith.constant 0 : index
    %c2_108 = arith.constant 2 : index
    %c0_109 = arith.constant 0 : index
    %127 = vector.load %arg13[%c0_106, %c0_107, %c2_108, %c0_109] : memref<2x18x18x8xf32, #tpu.memory_space<vmem>>, vector<2x16x16x8xf32>
    %128 = vector.shape_cast %127 : vector<2x16x16x8xf32> to vector<512x8xf32>
    %129 = arith.truncf %128 : vector<512x8xf32> to vector<512x8xbf16>
    %c0_110 = arith.constant 0 : index
    %c1_111 = arith.constant 1 : index
    %c0_112 = arith.constant 0 : index
    %c0_113 = arith.constant 0 : index
    %130 = vector.load %arg13[%c0_110, %c1_111, %c0_112, %c0_113] : memref<2x18x18x8xf32, #tpu.memory_space<vmem>>, vector<2x16x16x8xf32>
    %131 = vector.shape_cast %130 : vector<2x16x16x8xf32> to vector<512x8xf32>
    %132 = arith.truncf %131 : vector<512x8xf32> to vector<512x8xbf16>
    %c0_114 = arith.constant 0 : index
    %c1_115 = arith.constant 1 : index
    %c1_116 = arith.constant 1 : index
    %c0_117 = arith.constant 0 : index
    %133 = vector.load %arg13[%c0_114, %c1_115, %c1_116, %c0_117] : memref<2x18x18x8xf32, #tpu.memory_space<vmem>>, vector<2x16x16x8xf32>
    %134 = vector.shape_cast %133 : vector<2x16x16x8xf32> to vector<512x8xf32>
    %135 = arith.truncf %134 : vector<512x8xf32> to vector<512x8xbf16>
    %c0_118 = arith.constant 0 : index
    %c1_119 = arith.constant 1 : index
    %c2_120 = arith.constant 2 : index
    %c0_121 = arith.constant 0 : index
    %136 = vector.load %arg13[%c0_118, %c1_119, %c2_120, %c0_121] : memref<2x18x18x8xf32, #tpu.memory_space<vmem>>, vector<2x16x16x8xf32>
    %137 = vector.shape_cast %136 : vector<2x16x16x8xf32> to vector<512x8xf32>
    %138 = arith.truncf %137 : vector<512x8xf32> to vector<512x8xbf16>
    %c0_122 = arith.constant 0 : index
    %c2_123 = arith.constant 2 : index
    %c0_124 = arith.constant 0 : index
    %c0_125 = arith.constant 0 : index
    %139 = vector.load %arg13[%c0_122, %c2_123, %c0_124, %c0_125] : memref<2x18x18x8xf32, #tpu.memory_space<vmem>>, vector<2x16x16x8xf32>
    %140 = vector.shape_cast %139 : vector<2x16x16x8xf32> to vector<512x8xf32>
    %141 = arith.truncf %140 : vector<512x8xf32> to vector<512x8xbf16>
    %c0_126 = arith.constant 0 : index
    %c2_127 = arith.constant 2 : index
    %c1_128 = arith.constant 1 : index
    %c0_129 = arith.constant 0 : index
    %142 = vector.load %arg13[%c0_126, %c2_127, %c1_128, %c0_129] : memref<2x18x18x8xf32, #tpu.memory_space<vmem>>, vector<2x16x16x8xf32>
    %143 = vector.shape_cast %142 : vector<2x16x16x8xf32> to vector<512x8xf32>
    %144 = arith.truncf %143 : vector<512x8xf32> to vector<512x8xbf16>
    %c0_130 = arith.constant 0 : index
    %c2_131 = arith.constant 2 : index
    %c2_132 = arith.constant 2 : index
    %c0_133 = arith.constant 0 : index
    %145 = vector.load %arg13[%c0_130, %c2_131, %c2_132, %c0_133] : memref<2x18x18x8xf32, #tpu.memory_space<vmem>>, vector<2x16x16x8xf32>
    %146 = vector.shape_cast %145 : vector<2x16x16x8xf32> to vector<512x8xf32>
    %147 = arith.truncf %146 : vector<512x8xf32> to vector<512x8xbf16>
    %148 = tpu.concatenate %123, %126, %129, %132, %135, %138, %141, %144, %147 in 1 : vector<512x8xbf16>, vector<512x8xbf16>, vector<512x8xbf16>, vector<512x8xbf16>, vector<512x8xbf16>, vector<512x8xbf16>, vector<512x8xbf16>, vector<512x8xbf16>, vector<512x8xbf16> -> vector<512x72xbf16>
    %c0_134 = arith.constant 0 : index
    %c0_135 = arith.constant 0 : index
    %149 = vector.load %arg5[%c0_134, %c0_135] : memref<72x128xbf16, #tpu.memory_space<vmem>>, vector<72x128xbf16>
    %cst_136 = arith.constant dense<0.000000e+00> : vector<512x128xf32>
    %150 = tpu.matmul %148, %149, %cst_136 {dimension_numbers = #tpu.dot_dimension_numbers<[1], [0], [0], [1], [0, 0, 1, 1], [], []>} : vector<512x72xbf16>, vector<72x128xbf16>, vector<512x128xf32> -> vector<512x128xf32>
    %cst_137 = arith.constant dense<0.000000e+00> : vector<128xf32>
    %151 = vector.multi_reduction <add>, %150, %cst_137 [0] : vector<512x128xf32> to vector<128xf32>
    %152 = vector.shape_cast %151 : vector<128xf32> to vector<1x128xf32>
    %cst_138 = arith.constant 0.001953125 : f32
    %153 = vector.broadcast %cst_138 : f32 to vector<1x128xf32>
    %154 = arith.mulf %152, %153 : vector<1x128xf32>
    %155 = arith.mulf %150, %150 : vector<512x128xf32>
    %cst_139 = arith.constant dense<0.000000e+00> : vector<128xf32>
    %156 = vector.multi_reduction <add>, %155, %cst_139 [0] : vector<512x128xf32> to vector<128xf32>
    %157 = vector.shape_cast %156 : vector<128xf32> to vector<1x128xf32>
    %cst_140 = arith.constant 0.001953125 : f32
    %158 = vector.broadcast %cst_140 : f32 to vector<1x128xf32>
    %159 = arith.mulf %157, %158 : vector<1x128xf32>
    %160 = arith.mulf %154, %154 : vector<1x128xf32>
    %161 = arith.subf %159, %160 : vector<1x128xf32>
    %cst_141 = arith.constant 0.000000e+00 : f32
    %162 = vector.broadcast %cst_141 : f32 to vector<1x128xf32>
    %163 = arith.maximumf %161, %162 : vector<1x128xf32>
    %cst_142 = arith.constant 9.99999974E-6 : f32
    %164 = vector.broadcast %cst_142 : f32 to vector<1x128xf32>
    %165 = arith.addf %163, %164 : vector<1x128xf32>
    %166 = math.rsqrt %165 : vector<1x128xf32>
    %c0_143 = arith.constant 0 : index
    %c0_144 = arith.constant 0 : index
    %167 = vector.load %arg6[%c0_143, %c0_144] : memref<1x128xf32, #tpu.memory_space<vmem>>, vector<1x128xf32>
    %168 = arith.mulf %166, %167 : vector<1x128xf32>
    %169 = vector.broadcast %154 : vector<1x128xf32> to vector<512x128xf32>
    %170 = arith.subf %150, %169 : vector<512x128xf32>
    %171 = vector.broadcast %168 : vector<1x128xf32> to vector<512x128xf32>
    %172 = arith.mulf %170, %171 : vector<512x128xf32>
    %c0_145 = arith.constant 0 : index
    %c0_146 = arith.constant 0 : index
    %173 = vector.load %arg7[%c0_145, %c0_146] : memref<1x128xf32, #tpu.memory_space<vmem>>, vector<1x128xf32>
    %174 = vector.broadcast %173 : vector<1x128xf32> to vector<512x128xf32>
    %175 = arith.addf %172, %174 : vector<512x128xf32>
    %176 = vector.broadcast %27 : vector<1x128xf32> to vector<512x128xf32>
    %177 = arith.mulf %9, %176 : vector<512x128xf32>
    %178 = vector.broadcast %30 : vector<1x128xf32> to vector<512x128xf32>
    %179 = arith.addf %177, %178 : vector<512x128xf32>
    %180 = arith.addf %179, %175 : vector<512x128xf32>
    %181 = vector.shape_cast %180 : vector<512x128xf32> to vector<2x16x16x128xf32>
    %c0_147 = arith.constant 0 : index
    %c0_148 = arith.constant 0 : index
    %c0_149 = arith.constant 0 : index
    %c0_150 = arith.constant 0 : index
    %182 = vector.load %arg12[%c0_147, %c0_148, %c0_149, %c0_150] : memref<2x16x16x128xf32, #tpu.memory_space<vmem>>, vector<2x16x16x128xf32>
    tpu.vector_store %arg12[%c0_147, %c0_148, %c0_149, %c0_150], %181 {strides = array<i32>} : memref<2x16x16x128xf32, #tpu.memory_space<vmem>>, vector<2x16x16x128xf32>,
    return
  }
  func.func @transform_0(%arg0: i32) -> (i32, i32, i32, i32) {
    %c0_i32 = arith.constant 0 : i32
    %c0_i32_0 = arith.constant 0 : i32
    %c0_i32_1 = arith.constant 0 : i32
    %c0_i32_2 = arith.constant 0 : i32
    %c0_i32_3 = arith.constant 0 : i32
    return %c0_i32, %c0_i32_0, %c0_i32_1, %c0_i32_2 : i32, i32, i32, i32
  }
  func.func @transform_1(%arg0: i32) -> (i32, i32) {
    %c0_i32 = arith.constant 0 : i32
    %c0_i32_0 = arith.constant 0 : i32
    %c0_i32_1 = arith.constant 0 : i32
    return %c0_i32, %c0_i32_0 : i32, i32
  }
  func.func @transform_2(%arg0: i32) -> (i32, i32) {
    %c0_i32 = arith.constant 0 : i32
    %c0_i32_0 = arith.constant 0 : i32
    %c0_i32_1 = arith.constant 0 : i32
    return %c0_i32, %c0_i32_0 : i32, i32
  }
  func.func @transform_3(%arg0: i32) -> (i32, i32) {
    %c0_i32 = arith.constant 0 : i32
    %c0_i32_0 = arith.constant 0 : i32
    %c0_i32_1 = arith.constant 0 : i32
    return %c0_i32, %c0_i32_0 : i32, i32
  }
  func.func @transform_4(%arg0: i32) -> (i32, i32) {
    %c0_i32 = arith.constant 0 : i32
    %c0_i32_0 = arith.constant 0 : i32
    %c0_i32_1 = arith.constant 0 : i32
    return %c0_i32, %c0_i32_0 : i32, i32
  }
  func.func @transform_5(%arg0: i32) -> (i32, i32) {
    %c0_i32 = arith.constant 0 : i32
    %c0_i32_0 = arith.constant 0 : i32
    %c0_i32_1 = arith.constant 0 : i32
    return %c0_i32, %c0_i32_0 : i32, i32
  }
  func.func @transform_6(%arg0: i32) -> (i32, i32) {
    %c0_i32 = arith.constant 0 : i32
    %c0_i32_0 = arith.constant 0 : i32
    %c0_i32_1 = arith.constant 0 : i32
    return %c0_i32, %c0_i32_0 : i32, i32
  }
  func.func @transform_7(%arg0: i32) -> (i32, i32) {
    %c0_i32 = arith.constant 0 : i32
    %c0_i32_0 = arith.constant 0 : i32
    %c0_i32_1 = arith.constant 0 : i32
    return %c0_i32, %c0_i32_0 : i32, i32
  }
  func.func @transform_8(%arg0: i32) -> (i32, i32) {
    %c0_i32 = arith.constant 0 : i32
    %c0_i32_0 = arith.constant 0 : i32
    %c0_i32_1 = arith.constant 0 : i32
    return %c0_i32, %c0_i32_0 : i32, i32
  }
  func.func @transform_9(%arg0: i32) -> (i32, i32) {
    %c0_i32 = arith.constant 0 : i32
    %c0_i32_0 = arith.constant 0 : i32
    %c0_i32_1 = arith.constant 0 : i32
    return %c0_i32, %c0_i32_0 : i32, i32
  }
  func.func @transform_10(%arg0: i32) -> (i32, i32) {
    %c0_i32 = arith.constant 0 : i32
    %c0_i32_0 = arith.constant 0 : i32
    %c0_i32_1 = arith.constant 0 : i32
    return %c0_i32, %c0_i32_0 : i32, i32
  }
  func.func @transform_11(%arg0: i32) -> (i32, i32, i32, i32) {
    %c0_i32 = arith.constant 0 : i32
    %c0_i32_0 = arith.constant 0 : i32
    %c0_i32_1 = arith.constant 0 : i32
    %c0_i32_2 = arith.constant 0 : i32
    %c0_i32_3 = arith.constant 0 : i32
    return %c0_i32, %c0_i32_0, %c0_i32_1, %c0_i32_2 : i32, i32, i32, i32
  }
}

</mosaic_0001>

<llo_original>
// kernel: tpu_custom_call.1
$region0: #{tpu_custom_call.1}
  #allocation0 [shape = 'u32[]', space=smem, size = 0x4, offset = 0x4, fixed_abs, tag = 'smem constant byte address 0x4 - core index']
  #allocation1 [shape = 'u32[144,128]{1,0:T(1,128)}', space=vmem, size = 0x12000, scoped, tag = 'internal scratch']
  #allocation2 [shape = 'f32[2,18,18,8]{3,2,1,0:T(8,128)}', space=vmem, size = 0x6c000, scoped, tag = 'scratch operand']
  %s0 = inlined_call_operand.hbm [shape: f32[2,16,16,128], index: 0, kind: input, shape index: {}]
  %s1 = inlined_call_operand.hbm [shape: bf16[72,128], index: 1, kind: input, shape index: {}]
  %s2 = inlined_call_operand.vmem [shape: f32[1,128], index: 2, kind: input, shape index: {}]
  %s3 = inlined_call_operand.vmem [shape: f32[1,128], index: 3, kind: input, shape index: {}]
  %s4 = inlined_call_operand.hbm [shape: bf16[72,128], index: 4, kind: input, shape index: {}]
  %s5 = inlined_call_operand.vmem [shape: f32[1,128], index: 5, kind: input, shape index: {}]
  %s6 = inlined_call_operand.vmem [shape: f32[1,128], index: 6, kind: input, shape index: {}]
  %s7 = inlined_call_operand.vmem [shape: f32[1,128], index: 7, kind: input, shape index: {}]
  %s8 = inlined_call_operand.vmem [shape: f32[1,128], index: 8, kind: input, shape index: {}]
  %s9 = inlined_call_operand.vmem [shape: f32[1,128], index: 9, kind: input, shape index: {}]
  %s10 = inlined_call_operand.vmem [shape: f32[1,128], index: 10, kind: input, shape index: {}]
  %s11 = inlined_call_operand.hbm [shape: f32[2,16,16,128], index: 11, kind: output, shape index: {}]
  %s12 = sld [smem:[#allocation0]]
  $region66: #{tpu_custom_call.1} parent=0
    _
  %s14 = ssub.s32 1, %s12
  %s15 = scalar_select 0, %s14, %s12
  $region1: #{tpu_custom_call.1} parent=0
    #allocation3 [shape = 'u8[262144]{0}', space=vmem, size = 0x40000, scoped, tag = 'input window, operand 0, single buffered']
    #allocation4 [shape = 's32[1]{0}', space=sflag, size = 0x4, scoped, tag = 'scoped memory for tpu_custom_call.1']
    #allocation5 [shape = 's32[1]{0}', space=sflag, size = 0x4, scoped, tag = 'scoped memory for tpu_custom_call.1']
    #allocation6 [shape = 'u8[18432]{0}', space=vmem, size = 0x4800, scoped, tag = 'input window, operand 1, single buffered']
    #allocation7 [shape = 's32[1]{0}', space=sflag, size = 0x4, scoped, tag = 'scoped memory for tpu_custom_call.1']
    #allocation8 [shape = 'u8[18432]{0}', space=vmem, size = 0x4800, scoped, tag = 'input window, operand 4, single buffered']
    #allocation9 [shape = 'u8[262144]{0}', space=vmem, size = 0x40000, scoped, tag = 'output window, operand 0, single buffered']
    %16 = vsyncpa [#allocation4], 0
    %17 = vsyncpa [#allocation7], 0
    %18 = vsyncpa [#allocation5], 0
    // Predicated region
    $region2: #{tpu_custom_call.1} parent=1 // pred_check
      _
    $region3: #{tpu_custom_call.1} parent=1 // pred_check_branch
      %20 = sbr.rel (0) target = $region5
    $region4: #{tpu_custom_call.1} parent=1 // pred_region
      %s22 = ssub.s32 8192, 8192
      %23 = vsyncadd [#allocation4], %s22
      %s24 = sshll.u32 [#allocation3], 4
      %s25 = int_to_ptr.vmem [resolvable:$true] %s24
      %30 = dma.hbm_to_vmem [thread:$0]  %s0, 8192, %s25, [#allocation4], 128, 128, 8
    $region5: #{tpu_custom_call.1} parent=1 // pred_fallthru
      _
    // Predicated region
    $region6: #{tpu_custom_call.1} parent=1 // pred_check
      _
    $region7: #{tpu_custom_call.1} parent=1 // pred_check_branch
      %32 = sbr.rel (0) target = $region9
    $region8: #{tpu_custom_call.1} parent=1 // pred_region
      %s34 = ssub.s32 576, 576
      %35 = vsyncadd [#allocation7], %s34
      %s36 = sshll.u32 [#allocation6], 4
      %s37 = int_to_ptr.vmem [resolvable:$true] %s36
      %42 = dma.hbm_to_vmem [thread:$0]  %s1, 576, %s37, [#allocation7], 64, 64, 4
    $region9: #{tpu_custom_call.1} parent=1 // pred_fallthru
      _
    // Predicated region
    $region10: #{tpu_custom_call.1} parent=1 // pred_check
      _
    $region11: #{tpu_custom_call.1} parent=1 // pred_check_branch
      %44 = sbr.rel (0) target = $region13
    $region12: #{tpu_custom_call.1} parent=1 // pred_region
      _
    $region13: #{tpu_custom_call.1} parent=1 // pred_fallthru
      _
    // Predicated region
    $region14: #{tpu_custom_call.1} parent=1 // pred_check
      _
    $region15: #{tpu_custom_call.1} parent=1 // pred_check_branch
      %46 = sbr.rel (0) target = $region17
    $region16: #{tpu_custom_call.1} parent=1 // pred_region
      _
    $region17: #{tpu_custom_call.1} parent=1 // pred_fallthru
      _
    // Predicated region
    $region18: #{tpu_custom_call.1} parent=1 // pred_check
      _
    $region19: #{tpu_custom_call.1} parent=1 // pred_check_branch
      %48 = sbr.rel (0) target = $region21
    $region20: #{tpu_custom_call.1} parent=1 // pred_region
      %s50 = ssub.s32 576, 576
      %51 = vsyncadd [#allocation7], %s50
      %s52 = sshll.u32 [#allocation8], 4
      %s53 = int_to_ptr.vmem [resolvable:$true] %s52
      %58 = dma.hbm_to_vmem [thread:$0]  %s4, 576, %s53, [#allocation7], 64, 64, 4
    $region21: #{tpu_custom_call.1} parent=1 // pred_fallthru
      _
    // Predicated region
    $region22: #{tpu_custom_call.1} parent=1 // pred_check
      _
    $region23: #{tpu_custom_call.1} parent=1 // pred_check_branch
      %60 = sbr.rel (0) target = $region25
    $region24: #{tpu_custom_call.1} parent=1 // pred_region
      _
    $region25: #{tpu_custom_call.1} parent=1 // pred_fallthru
      _
    // Predicated region
    $region26: #{tpu_custom_call.1} parent=1 // pred_check
      _
    $region27: #{tpu_custom_call.1} parent=1 // pred_check_branch
      %62 = sbr.rel (0) target = $region29
    $region28: #{tpu_custom_call.1} parent=1 // pred_region
      _
    $region29: #{tpu_custom_call.1} parent=1 // pred_fallthru
      _
    // Predicated region
    $region30: #{tpu_custom_call.1} parent=1 // pred_check
      _
    $region31: #{tpu_custom_call.1} parent=1 // pred_check_branch
      %64 = sbr.rel (0) target = $region33
    $region32: #{tpu_custom_call.1} parent=1 // pred_region
      _
    $region33: #{tpu_custom_call.1} parent=1 // pred_fallthru
      _
    // Predicated region
    $region34: #{tpu_custom_call.1} parent=1 // pred_check
      _
    $region35: #{tpu_custom_call.1} parent=1 // pred_check_branch
      %66 = sbr.rel (0) target = $region37
    $region36: #{tpu_custom_call.1} parent=1 // pred_region
      _
    $region37: #{tpu_custom_call.1} parent=1 // pred_fallthru
      _
    // Predicated region
    $region38: #{tpu_custom_call.1} parent=1 // pred_check
      _
    $region39: #{tpu_custom_call.1} parent=1 // pred_check_branch
      %68 = sbr.rel (0) target = $region41
    $region40: #{tpu_custom_call.1} parent=1 // pred_region
      _
    $region41: #{tpu_custom_call.1} parent=1 // pred_fallthru
      _
    // Predicated region
    $region42: #{tpu_custom_call.1} parent=1 // pred_check
      _
    $region43: #{tpu_custom_call.1} parent=1 // pred_check_branch
      %70 = sbr.rel (0) target = $region45
    $region44: #{tpu_custom_call.1} parent=1 // pred_region
      _
    $region45: #{tpu_custom_call.1} parent=1 // pred_fallthru
      _
    // Predicated region
    $region46: #{tpu_custom_call.1} parent=1 // pred_check
      _
    $region47: #{tpu_custom_call.1} parent=1 // pred_check_branch
      %72 = sbr.rel (0) target = $region49
    $region48: #{tpu_custom_call.1} parent=1 // pred_region
      %73 = dma.done [#allocation4], 8192
    $region49: #{tpu_custom_call.1} parent=1 // pred_fallthru
      _
    // Predicated region
    $region50: #{tpu_custom_call.1} parent=1 // pred_check
      _
    $region51: #{tpu_custom_call.1} parent=1 // pred_check_branch
      %75 = sbr.rel (0) target = $region53
    $region52: #{tpu_custom_call.1} parent=1 // pred_region
      %76 = dma.done [#allocation7], 576
    $region53: #{tpu_custom_call.1} parent=1 // pred_fallthru
      _
    // Predicated region
    $region54: #{tpu_custom_call.1} parent=1 // pred_check
      _
    $region55: #{tpu_custom_call.1} parent=1 // pred_check_branch
      %78 = sbr.rel (0) target = $region57
    $region56: #{tpu_custom_call.1} parent=1 // pred_region
      %79 = dma.done [#allocation7], 576
    $region57: #{tpu_custom_call.1} parent=1 // pred_fallthru
      _
    %vm81 = vcmask 64512
    %82 = vst.msk [vmem:[#allocation2] sm:$0xff] %vm81, 0.0
    %83 = vst.msk [vmem:[#allocation2 + $0x8] sm:$0xff] %vm81, 0.0
    %vm84 = vcmask 58368
    %85 = vst.msk [vmem:[#allocation2 + $0x10] sm:$0x3] %vm84, 0.0
    %86 = vst.msk [vmem:[#allocation2 + $0x1b0] sm:$0xff] %vm81, 0.0
    %87 = vst.msk [vmem:[#allocation2 + $0x1b8] sm:$0xff] %vm81, 0.0
    %88 = vst.msk [vmem:[#allocation2 + $0x1c0] sm:$0x3] %vm84, 0.0
    %s89 = scalar_lea.vmem [#allocation2], 408
    %90 = vst.msk [vmem:[%s89] sm:$0xff] %vm81, 0.0
    %91 = vst.msk [vmem:[%s89 + $0x8] sm:$0xff] %vm81, 0.0
    %92 = vst.msk [vmem:[%s89 + $0x10] sm:$0x3] %vm84, 0.0
    %93 = vst.msk [vmem:[%s89 + $0x1b0] sm:$0xff] %vm81, 0.0
    %94 = vst.msk [vmem:[%s89 + $0x1b8] sm:$0xff] %vm81, 0.0
    %95 = vst.msk [vmem:[%s89 + $0x1c0] sm:$0x3] %vm84, 0.0
    %s96 = scalar_lea.vmem [#allocation2], 24
    %vm97 = vcmask 57344
    %98 = vst.msk [vmem:[%s96] sm:$0x1] %vm97, 0.0
    %99 = vst.msk [vmem:[%s96 + $0x18] sm:$0x1] %vm97, 0.0
    %100 = vst.msk [vmem:[%s96 + $0x30] sm:$0x1] %vm97, 0.0
    %101 = vst.msk [vmem:[%s96 + $0x48] sm:$0x1] %vm97, 0.0
    %102 = vst.msk [vmem:[%s96 + $0x60] sm:$0x1] %vm97, 0.0
    %103 = vst.msk [vmem:[%s96 + $0x78] sm:$0x1] %vm97, 0.0
    %104 = vst.msk [vmem:[%s96 + $0x90] sm:$0x1] %vm97, 0.0
    %105 = vst.msk [vmem:[%s96 + $0xa8] sm:$0x1] %vm97, 0.0
    %106 = vst.msk [vmem:[%s96 + $0xc0] sm:$0x1] %vm97, 0.0
    %107 = vst.msk [vmem:[%s96 + $0xd8] sm:$0x1] %vm97, 0.0
    %108 = vst.msk [vmem:[%s96 + $0xf0] sm:$0x1] %vm97, 0.0
    %109 = vst.msk [vmem:[%s96 + $0x108] sm:$0x1] %vm97, 0.0
    %110 = vst.msk [vmem:[%s96 + $0x120] sm:$0x1] %vm97, 0.0
    %111 = vst.msk [vmem:[%s96 + $0x138] sm:$0x1] %vm97, 0.0
    %112 = vst.msk [vmem:[%s96 + $0x150] sm:$0x1] %vm97, 0.0
    %113 = vst.msk [vmem:[%s96 + $0x168] sm:$0x1] %vm97, 0.0
    %114 = vst.msk [vmem:[%s96 + $0x1b0] sm:$0x1] %vm97, 0.0
    %115 = vst.msk [vmem:[%s96 + $0x1c8] sm:$0x1] %vm97, 0.0
    %116 = vst.msk [vmem:[%s96 + $0x1e0] sm:$0x1] %vm97, 0.0
    %117 = vst.msk [vmem:[%s96 + $0x1f8] sm:$0x1] %vm97, 0.0
    %118 = vst.msk [vmem:[%s96 + $0x210] sm:$0x1] %vm97, 0.0
    %119 = vst.msk [vmem:[%s96 + $0x228] sm:$0x1] %vm97, 0.0
    %120 = vst.msk [vmem:[%s96 + $0x240] sm:$0x1] %vm97, 0.0
    %121 = vst.msk [vmem:[%s96 + $0x258] sm:$0x1] %vm97, 0.0
    %122 = vst.msk [vmem:[%s96 + $0x270] sm:$0x1] %vm97, 0.0
    %123 = vst.msk [vmem:[%s96 + $0x288] sm:$0x1] %vm97, 0.0
    %124 = vst.msk [vmem:[%s96 + $0x2a0] sm:$0x1] %vm97, 0.0
    %125 = vst.msk [vmem:[%s96 + $0x2b8] sm:$0x1] %vm97, 0.0
    %126 = vst.msk [vmem:[%s96 + $0x2d0] sm:$0x1] %vm97, 0.0
    %127 = vst.msk [vmem:[%s96 + $0x2e8] sm:$0x1] %vm97, 0.0
    %128 = vst.msk [vmem:[%s96 + $0x300] sm:$0x1] %vm97, 0.0
    %129 = vst.msk [vmem:[%s96 + $0x318] sm:$0x1] %vm97, 0.0
    %130 = vst.msk [vmem:[%s96 + $0x11] sm:$0x1] %vm97, 0.0
    %131 = vst.msk [vmem:[%s96 + $0x29] sm:$0x1] %vm97, 0.0
    %132 = vst.msk [vmem:[%s96 + $0x41] sm:$0x1] %vm97, 0.0
    %133 = vst.msk [vmem:[%s96 + $0x59] sm:$0x1] %vm97, 0.0
    %134 = vst.msk [vmem:[%s96 + $0x71] sm:$0x1] %vm97, 0.0
    %135 = vst.msk [vmem:[%s96 + $0x89] sm:$0x1] %vm97, 0.0
    %136 = vst.msk [vmem:[%s96 + $0xa1] sm:$0x1] %vm97, 0.0
    %137 = vst.msk [vmem:[%s96 + $0xb9] sm:$0x1] %vm97, 0.0
    %138 = vst.msk [vmem:[%s96 + $0xd1] sm:$0x1] %vm97, 0.0
    %139 = vst.msk [vmem:[%s96 + $0xe9] sm:$0x1] %vm97, 0.0
    %140 = vst.msk [vmem:[%s96 + $0x101] sm:$0x1] %vm97, 0.0
    %141 = vst.msk [vmem:[%s96 + $0x119] sm:$0x1] %vm97, 0.0
    %142 = vst.msk [vmem:[%s96 + $0x131] sm:$0x1] %vm97, 0.0
    %143 = vst.msk [vmem:[%s96 + $0x149] sm:$0x1] %vm97, 0.0
    %144 = vst.msk [vmem:[%s96 + $0x161] sm:$0x1] %vm97, 0.0
    %145 = vst.msk [vmem:[%s96 + $0x179] sm:$0x1] %vm97, 0.0
    %146 = vst.msk [vmem:[%s96 + $0x1c1] sm:$0x1] %vm97, 0.0
    %147 = vst.msk [vmem:[%s96 + $0x1d9] sm:$0x1] %vm97, 0.0
    %148 = vst.msk [vmem:[%s96 + $0x1f1] sm:$0x1] %vm97, 0.0
    %149 = vst.msk [vmem:[%s96 + $0x209] sm:$0x1] %vm97, 0.0
    %150 = vst.msk [vmem:[%s96 + $0x221] sm:$0x1] %vm97, 0.0
    %151 = vst.msk [vmem:[%s96 + $0x239] sm:$0x1] %vm97, 0.0
    %152 = vst.msk [vmem:[%s96 + $0x251] sm:$0x1] %vm97, 0.0
    %153 = vst.msk [vmem:[%s96 + $0x269] sm:$0x1] %vm97, 0.0
    %154 = vst.msk [vmem:[%s96 + $0x281] sm:$0x1] %vm97, 0.0
    %155 = vst.msk [vmem:[%s96 + $0x299] sm:$0x1] %vm97, 0.0
    %156 = vst.msk [vmem:[%s96 + $0x2b1] sm:$0x1] %vm97, 0.0
    %157 = vst.msk [vmem:[%s96 + $0x2c9] sm:$0x1] %vm97, 0.0
    %158 = vst.msk [vmem:[%s96 + $0x2e1] sm:$0x1] %vm97, 0.0
    %159 = vst.msk [vmem:[%s96 + $0x2f9] sm:$0x1] %vm97, 0.0
    %160 = vst.msk [vmem:[%s96 + $0x311] sm:$0x1] %vm97, 0.0
    %161 = vst.msk [vmem:[%s96 + $0x329] sm:$0x1] %vm97, 0.0
    %v162 = vld [vmem:[#allocation3] sm:$0xff]
    %v163 = vld [vmem:[#allocation3 + $0x8] sm:$0xff]
    %v164 = vld [vmem:[#allocation3 + $0x10] sm:$0xff]
    %v165 = vld [vmem:[#allocation3 + $0x18] sm:$0xff]
    %v166 = vld [vmem:[#allocation3 + $0x20] sm:$0xff]
    %v167 = vld [vmem:[#allocation3 + $0x28] sm:$0xff]
    %v168 = vld [vmem:[#allocation3 + $0x30] sm:$0xff]
    %v169 = vld [vmem:[#allocation3 + $0x38] sm:$0xff]
    %v170 = vld [vmem:[#allocation3 + $0x40] sm:$0xff]
    %v171 = vld [vmem:[#allocation3 + $0x48] sm:$0xff]
    %v172 = vld [vmem:[#allocation3 + $0x50] sm:$0xff]
    %v173 = vld [vmem:[#allocation3 + $0x58] sm:$0xff]
    %v174 = vld [vmem:[#allocation3 + $0x60] sm:$0xff]
    %v175 = vld [vmem:[#allocation3 + $0x68] sm:$0xff]
    %v176 = vld [vmem:[#allocation3 + $0x70] sm:$0xff]
    %v177 = vld [vmem:[#allocation3 + $0x78] sm:$0xff]
    %v178 = vld [vmem:[#allocation3 + $0x80] sm:$0xff]
    %v179 = vld [vmem:[#allocation3 + $0x88] sm:$0xff]
    %v180 = vld [vmem:[#allocation3 + $0x90] sm:$0xff]
    %v181 = vld [vmem:[#allocation3 + $0x98] sm:$0xff]
    %v182 = vld [vmem:[#allocation3 + $0xa0] sm:$0xff]
    %v183 = vld [vmem:[#allocation3 + $0xa8] sm:$0xff]
    %v184 = vld [vmem:[#allocation3 + $0xb0] sm:$0xff]
    %v185 = vld [vmem:[#allocation3 + $0xb8] sm:$0xff]
    %v186 = vld [vmem:[#allocation3 + $0xc0] sm:$0xff]
    %v187 = vld [vmem:[#allocation3 + $0xc8] sm:$0xff]
    %v188 = vld [vmem:[#allocation3 + $0xd0] sm:$0xff]
    %v189 = vld [vmem:[#allocation3 + $0xd8] sm:$0xff]
    %v190 = vld [vmem:[#allocation3 + $0xe0] sm:$0xff]
    %v191 = vld [vmem:[#allocation3 + $0xe8] sm:$0xff]
    %v192 = vld [vmem:[#allocation3 + $0xf0] sm:$0xff]
    %v193 = vld [vmem:[#allocation3 + $0xf8] sm:$0xff]
    %v194 = vld [vmem:[#allocation3 + $0x100] sm:$0xff]
    %v195 = vld [vmem:[#allocation3 + $0x108] sm:$0xff]
    %v196 = vld [vmem:[#allocation3 + $0x110] sm:$0xff]
    %v197 = vld [vmem:[#allocation3 + $0x118] sm:$0xff]
    %v198 = vld [vmem:[#allocation3 + $0x120] sm:$0xff]
    %v199 = vld [vmem:[#allocation3 + $0x128] sm:$0xff]
    %v200 = vld [vmem:[#allocation3 + $0x130] sm:$0xff]
    %v201 = vld [vmem:[#allocation3 + $0x138] sm:$0xff]
    %v202 = vld [vmem:[#allocation3 + $0x140] sm:$0xff]
    %v203 = vld [vmem:[#allocation3 + $0x148] sm:$0xff]
    %v204 = vld [vmem:[#allocation3 + $0x150] sm:$0xff]
    %v205 = vld [vmem:[#allocation3 + $0x158] sm:$0xff]
    %v206 = vld [vmem:[#allocation3 + $0x160] sm:$0xff]
    %v207 = vld [vmem:[#allocation3 + $0x168] sm:$0xff]
    %v208 = vld [vmem:[#allocation3 + $0x170] sm:$0xff]
    %v209 = vld [vmem:[#allocation3 + $0x178] sm:$0xff]
    %v210 = vld [vmem:[#allocation3 + $0x180] sm:$0xff]
    %v211 = vld [vmem:[#allocation3 + $0x188] sm:$0xff]
    %v212 = vld [vmem:[#allocation3 + $0x190] sm:$0xff]
    %v213 = vld [vmem:[#allocation3 + $0x198] sm:$0xff]
    %v214 = vld [vmem:[#allocation3 + $0x1a0] sm:$0xff]
    %v215 = vld [vmem:[#allocation3 + $0x1a8] sm:$0xff]
    %v216 = vld [vmem:[#allocation3 + $0x1b0] sm:$0xff]
    %v217 = vld [vmem:[#allocation3 + $0x1b8] sm:$0xff]
    %v218 = vld [vmem:[#allocation3 + $0x1c0] sm:$0xff]
    %v219 = vld [vmem:[#allocation3 + $0x1c8] sm:$0xff]
    %v220 = vld [vmem:[#allocation3 + $0x1d0] sm:$0xff]
    %v221 = vld [vmem:[#allocation3 + $0x1d8] sm:$0xff]
    %v222 = vld [vmem:[#allocation3 + $0x1e0] sm:$0xff]
    %v223 = vld [vmem:[#allocation3 + $0x1e8] sm:$0xff]
    %v224 = vld [vmem:[#allocation3 + $0x1f0] sm:$0xff]
    %v225 = vld [vmem:[#allocation3 + $0x1f8] sm:$0xff]
    %v226 = vadd.f32 %v162, %v163
    %v227 = vadd.f32 %v226, %v164
    %v228 = vadd.f32 %v227, %v165
    %v229 = vadd.f32 %v228, %v166
    %v230 = vadd.f32 %v229, %v167
    %v231 = vadd.f32 %v230, %v168
    %v232 = vadd.f32 %v231, %v169
    %v233 = vadd.f32 %v232, %v170
    %v234 = vadd.f32 %v233, %v171
    %v235 = vadd.f32 %v234, %v172
    %v236 = vadd.f32 %v235, %v173
    %v237 = vadd.f32 %v236, %v174
    %v238 = vadd.f32 %v237, %v175
    %v239 = vadd.f32 %v238, %v176
    %v240 = vadd.f32 %v239, %v177
    %v241 = vadd.f32 %v240, %v178
    %v242 = vadd.f32 %v241, %v179
    %v243 = vadd.f32 %v242, %v180
    %v244 = vadd.f32 %v243, %v181
    %v245 = vadd.f32 %v244, %v182
    %v246 = vadd.f32 %v245, %v183
    %v247 = vadd.f32 %v246, %v184
    %v248 = vadd.f32 %v247, %v185
    %v249 = vadd.f32 %v248, %v186
    %v250 = vadd.f32 %v249, %v187
    %v251 = vadd.f32 %v250, %v188
    %v252 = vadd.f32 %v251, %v189
    %v253 = vadd.f32 %v252, %v190
    %v254 = vadd.f32 %v253, %v191
    %v255 = vadd.f32 %v254, %v192
    %v256 = vadd.f32 %v255, %v193
    %v257 = vadd.f32 %v256, %v194
    %v258 = vadd.f32 %v257, %v195
    %v259 = vadd.f32 %v258, %v196
    %v260 = vadd.f32 %v259, %v197
    %v261 = vadd.f32 %v260, %v198
    %v262 = vadd.f32 %v261, %v199
    %v263 = vadd.f32 %v262, %v200
    %v264 = vadd.f32 %v263, %v201
    %v265 = vadd.f32 %v264, %v202
    %v266 = vadd.f32 %v265, %v203
    %v267 = vadd.f32 %v266, %v204
    %v268 = vadd.f32 %v267, %v205
    %v269 = vadd.f32 %v268, %v206
    %v270 = vadd.f32 %v269, %v207
    %v271 = vadd.f32 %v270, %v208
    %v272 = vadd.f32 %v271, %v209
    %v273 = vadd.f32 %v272, %v210
    %v274 = vadd.f32 %v273, %v211
    %v275 = vadd.f32 %v274, %v212
    %v276 = vadd.f32 %v275, %v213
    %v277 = vadd.f32 %v276, %v214
    %v278 = vadd.f32 %v277, %v215
    %v279 = vadd.f32 %v278, %v216
    %v280 = vadd.f32 %v279, %v217
    %v281 = vadd.f32 %v280, %v218
    %v282 = vadd.f32 %v281, %v219
    %v283 = vadd.f32 %v282, %v220
    %v284 = vadd.f32 %v283, %v221
    %v285 = vadd.f32 %v284, %v222
    %v286 = vadd.f32 %v285, %v223
    %v287 = vadd.f32 %v286, %v224
    %v288 = vadd.f32 %v287, %v225
    %v289 = vrot.slane %v288, 4
    %v290 = vadd.f32 %v288, %v289
    %v291 = vrot.slane %v290, 2
    %v292 = vadd.f32 %v290, %v291
    %v293 = vrot.slane %v292, 1
    %v294 = vadd.f32 %v292, %v293
    %v295 = vmul.f32 %v294, 0.001953125
    %v296 = vmul.f32 %v162, %v162
    %v297 = vmul.f32 %v163, %v163
    %v298 = vmul.f32 %v164, %v164
    %v299 = vmul.f32 %v165, %v165
    %v300 = vmul.f32 %v166, %v166
    %v301 = vmul.f32 %v167, %v167
    %v302 = vmul.f32 %v168, %v168
    %v303 = vmul.f32 %v169, %v169
    %v304 = vmul.f32 %v170, %v170
    %v305 = vmul.f32 %v171, %v171
    %v306 = vmul.f32 %v172, %v172
    %v307 = vmul.f32 %v173, %v173
    %v308 = vmul.f32 %v174, %v174
    %v309 = vmul.f32 %v175, %v175
    %v310 = vmul.f32 %v176, %v176
    %v311 = vmul.f32 %v177, %v177
    %v312 = vmul.f32 %v178, %v178
    %v313 = vmul.f32 %v179, %v179
    %v314 = vmul.f32 %v180, %v180
    %v315 = vmul.f32 %v181, %v181
    %v316 = vmul.f32 %v182, %v182
    %v317 = vmul.f32 %v183, %v183
    %v318 = vmul.f32 %v184, %v184
    %v319 = vmul.f32 %v185, %v185
    %v320 = vmul.f32 %v186, %v186
    %v321 = vmul.f32 %v187, %v187
    %v322 = vmul.f32 %v188, %v188
    %v323 = vmul.f32 %v189, %v189
    %v324 = vmul.f32 %v190, %v190
    %v325 = vmul.f32 %v191, %v191
    %v326 = vmul.f32 %v192, %v192
    %v327 = vmul.f32 %v193, %v193
    %v328 = vmul.f32 %v194, %v194
    %v329 = vmul.f32 %v195, %v195
    %v330 = vmul.f32 %v196, %v196
    %v331 = vmul.f32 %v197, %v197
    %v332 = vmul.f32 %v198, %v198
    %v333 = vmul.f32 %v199, %v199
    %v334 = vmul.f32 %v200, %v200
    %v335 = vmul.f32 %v201, %v201
    %v336 = vmul.f32 %v202, %v202
    %v337 = vmul.f32 %v203, %v203
    %v338 = vmul.f32 %v204, %v204
    %v339 = vmul.f32 %v205, %v205
    %v340 = vmul.f32 %v206, %v206
    %v341 = vmul.f32 %v207, %v207
    %v342 = vmul.f32 %v208, %v208
    %v343 = vmul.f32 %v209, %v209
    %v344 = vmul.f32 %v210, %v210
    %v345 = vmul.f32 %v211, %v211
    %v346 = vmul.f32 %v212, %v212
    %v347 = vmul.f32 %v213, %v213
    %v348 = vmul.f32 %v214, %v214
    %v349 = vmul.f32 %v215, %v215
    %v350 = vmul.f32 %v216, %v216
    %v351 = vmul.f32 %v217, %v217
    %v352 = vmul.f32 %v218, %v218
    %v353 = vmul.f32 %v219, %v219
    %v354 = vmul.f32 %v220, %v220
    %v355 = vmul.f32 %v221, %v221
    %v356 = vmul.f32 %v222, %v222
    %v357 = vmul.f32 %v223, %v223
    %v358 = vmul.f32 %v224, %v224
    %v359 = vmul.f32 %v225, %v225
    %v360 = vadd.f32 %v296, %v297
    %v361 = vadd.f32 %v360, %v298
    %v362 = vadd.f32 %v361, %v299
    %v363 = vadd.f32 %v362, %v300
    %v364 = vadd.f32 %v363, %v301
    %v365 = vadd.f32 %v364, %v302
    %v366 = vadd.f32 %v365, %v303
    %v367 = vadd.f32 %v366, %v304
    %v368 = vadd.f32 %v367, %v305
    %v369 = vadd.f32 %v368, %v306
    %v370 = vadd.f32 %v369, %v307
    %v371 = vadd.f32 %v370, %v308
    %v372 = vadd.f32 %v371, %v309
    %v373 = vadd.f32 %v372, %v310
    %v374 = vadd.f32 %v373, %v311
    %v375 = vadd.f32 %v374, %v312
    %v376 = vadd.f32 %v375, %v313
    %v377 = vadd.f32 %v376, %v314
    %v378 = vadd.f32 %v377, %v315
    %v379 = vadd.f32 %v378, %v316
    %v380 = vadd.f32 %v379, %v317
    %v381 = vadd.f32 %v380, %v318
    %v382 = vadd.f32 %v381, %v319
    %v383 = vadd.f32 %v382, %v320
    %v384 = vadd.f32 %v383, %v321
    %v385 = vadd.f32 %v384, %v322
    %v386 = vadd.f32 %v385, %v323
    %v387 = vadd.f32 %v386, %v324
    %v388 = vadd.f32 %v387, %v325
    %v389 = vadd.f32 %v388, %v326
    %v390 = vadd.f32 %v389, %v327
    %v391 = vadd.f32 %v390, %v328
    %v392 = vadd.f32 %v391, %v329
    %v393 = vadd.f32 %v392, %v330
    %v394 = vadd.f32 %v393, %v331
    %v395 = vadd.f32 %v394, %v332
    %v396 = vadd.f32 %v395, %v333
    %v397 = vadd.f32 %v396, %v334
    %v398 = vadd.f32 %v397, %v335
    %v399 = vadd.f32 %v398, %v336
    %v400 = vadd.f32 %v399, %v337
    %v401 = vadd.f32 %v400, %v338
    %v402 = vadd.f32 %v401, %v339
    %v403 = vadd.f32 %v402, %v340
    %v404 = vadd.f32 %v403, %v341
    %v405 = vadd.f32 %v404, %v342
    %v406 = vadd.f32 %v405, %v343
    %v407 = vadd.f32 %v406, %v344
    %v408 = vadd.f32 %v407, %v345
    %v409 = vadd.f32 %v408, %v346
    %v410 = vadd.f32 %v409, %v347
    %v411 = vadd.f32 %v410, %v348
    %v412 = vadd.f32 %v411, %v349
    %v413 = vadd.f32 %v412, %v350
    %v414 = vadd.f32 %v413, %v351
    %v415 = vadd.f32 %v414, %v352
    %v416 = vadd.f32 %v415, %v353
    %v417 = vadd.f32 %v416, %v354
    %v418 = vadd.f32 %v417, %v355
    %v419 = vadd.f32 %v418, %v356
    %v420 = vadd.f32 %v419, %v357
    %v421 = vadd.f32 %v420, %v358
    %v422 = vadd.f32 %v421, %v359
    %v423 = vrot.slane %v422, 4
    %v424 = vadd.f32 %v422, %v423
    %v425 = vrot.slane %v424, 2
    %v426 = vadd.f32 %v424, %v425
    %v427 = vrot.slane %v426, 1
    %v428 = vadd.f32 %v426, %v427
    %v429 = vmul.f32 %v428, 0.001953125
    %v430 = vmul.f32 %v295, %v295
    %v431 = vsub.f32 %v429, %v430
    %v432 = vmax.f32 %v431, 0.0
    %v433 = vadd.f32 %v432, 1e-05
    %v434 = vrsqrt.pop %v433
    %v435 = vld [vmem:[%s9] sm:$0x1]
    %v436 = vmul.f32 %v434, %v435
    %v437 = vld [vmem:[%s10] sm:$0x1]
    %v438 = vmul.f32 %v295, %v436
    %v439 = vsub.f32 %v437, %v438
    %v440 = vmax.f32 %v162, 0.0
    %v441 = vmax.f32 %v163, 0.0
    %v442 = vmax.f32 %v164, 0.0
    %v443 = vmax.f32 %v165, 0.0
    %v444 = vmax.f32 %v166, 0.0
    %v445 = vmax.f32 %v167, 0.0
    %v446 = vmax.f32 %v168, 0.0
    %v447 = vmax.f32 %v169, 0.0
    %v448 = vmax.f32 %v170, 0.0
    %v449 = vmax.f32 %v171, 0.0
    %v450 = vmax.f32 %v172, 0.0
    %v451 = vmax.f32 %v173, 0.0
    %v452 = vmax.f32 %v174, 0.0
    %v453 = vmax.f32 %v175, 0.0
    %v454 = vmax.f32 %v176, 0.0
    %v455 = vmax.f32 %v177, 0.0
    %v456 = vmax.f32 %v178, 0.0
    %v457 = vmax.f32 %v179, 0.0
    %v458 = vmax.f32 %v180, 0.0
    %v459 = vmax.f32 %v181, 0.0
    %v460 = vmax.f32 %v182, 0.0
    %v461 = vmax.f32 %v183, 0.0
    %v462 = vmax.f32 %v184, 0.0
    %v463 = vmax.f32 %v185, 0.0
    %v464 = vmax.f32 %v186, 0.0
    %v465 = vmax.f32 %v187, 0.0
    %v466 = vmax.f32 %v188, 0.0
    %v467 = vmax.f32 %v189, 0.0
    %v468 = vmax.f32 %v190, 0.0
    %v469 = vmax.f32 %v191, 0.0
    %v470 = vmax.f32 %v192, 0.0
    %v471 = vmax.f32 %v193, 0.0
    %v472 = vmax.f32 %v194, 0.0
    %v473 = vmax.f32 %v195, 0.0
    %v474 = vmax.f32 %v196, 0.0
    %v475 = vmax.f32 %v197, 0.0
    %v476 = vmax.f32 %v198, 0.0
    %v477 = vmax.f32 %v199, 0.0
    %v478 = vmax.f32 %v200, 0.0
    %v479 = vmax.f32 %v201, 0.0
    %v480 = vmax.f32 %v202, 0.0
    %v481 = vmax.f32 %v203, 0.0
    %v482 = vmax.f32 %v204, 0.0
    %v483 = vmax.f32 %v205, 0.0
    %v484 = vmax.f32 %v206, 0.0
    %v485 = vmax.f32 %v207, 0.0
    %v486 = vmax.f32 %v208, 0.0
    %v487 = vmax.f32 %v209, 0.0
    %v488 = vmax.f32 %v210, 0.0
    %v489 = vmax.f32 %v211, 0.0
    %v490 = vmax.f32 %v212, 0.0
    %v491 = vmax.f32 %v213, 0.0
    %v492 = vmax.f32 %v214, 0.0
    %v493 = vmax.f32 %v215, 0.0
    %v494 = vmax.f32 %v216, 0.0
    %v495 = vmax.f32 %v217, 0.0
    %v496 = vmax.f32 %v218, 0.0
    %v497 = vmax.f32 %v219, 0.0
    %v498 = vmax.f32 %v220, 0.0
    %v499 = vmax.f32 %v221, 0.0
    %v500 = vmax.f32 %v222, 0.0
    %v501 = vmax.f32 %v223, 0.0
    %v502 = vmax.f32 %v224, 0.0
    %v503 = vmax.f32 %v225, 0.0
    %v504 = vadd.f32 %v440, %v441
    %v505 = vadd.f32 %v504, %v442
    %v506 = vadd.f32 %v505, %v443
    %v507 = vadd.f32 %v506, %v444
    %v508 = vadd.f32 %v507, %v445
    %v509 = vadd.f32 %v508, %v446
    %v510 = vadd.f32 %v509, %v447
    %v511 = vadd.f32 %v510, %v448
    %v512 = vadd.f32 %v511, %v449
    %v513 = vadd.f32 %v512, %v450
    %v514 = vadd.f32 %v513, %v451
    %v515 = vadd.f32 %v514, %v452
    %v516 = vadd.f32 %v515, %v453
    %v517 = vadd.f32 %v516, %v454
    %v518 = vadd.f32 %v517, %v455
    %v519 = vadd.f32 %v518, %v456
    %v520 = vadd.f32 %v519, %v457
    %v521 = vadd.f32 %v520, %v458
    %v522 = vadd.f32 %v521, %v459
    %v523 = vadd.f32 %v522, %v460
    %v524 = vadd.f32 %v523, %v461
    %v525 = vadd.f32 %v524, %v462
    %v526 = vadd.f32 %v525, %v463
    %v527 = vadd.f32 %v526, %v464
    %v528 = vadd.f32 %v527, %v465
    %v529 = vadd.f32 %v528, %v466
    %v530 = vadd.f32 %v529, %v467
    %v531 = vadd.f32 %v530, %v468
    %v532 = vadd.f32 %v531, %v469
    %v533 = vadd.f32 %v532, %v470
    %v534 = vadd.f32 %v533, %v471
    %v535 = vadd.f32 %v534, %v472
    %v536 = vadd.f32 %v535, %v473
    %v537 = vadd.f32 %v536, %v474
    %v538 = vadd.f32 %v537, %v475
    %v539 = vadd.f32 %v538, %v476
    %v540 = vadd.f32 %v539, %v477
    %v541 = vadd.f32 %v540, %v478
    %v542 = vadd.f32 %v541, %v479
    %v543 = vadd.f32 %v542, %v480
    %v544 = vadd.f32 %v543, %v481
    %v545 = vadd.f32 %v544, %v482
    %v546 = vadd.f32 %v545, %v483
    %v547 = vadd.f32 %v546, %v484
    %v548 = vadd.f32 %v547, %v485
    %v549 = vadd.f32 %v548, %v486
    %v550 = vadd.f32 %v549, %v487
    %v551 = vadd.f32 %v550, %v488
    %v552 = vadd.f32 %v551, %v489
    %v553 = vadd.f32 %v552, %v490
    %v554 = vadd.f32 %v553, %v491
    %v555 = vadd.f32 %v554, %v492
    %v556 = vadd.f32 %v555, %v493
    %v557 = vadd.f32 %v556, %v494
    %v558 = vadd.f32 %v557, %v495
    %v559 = vadd.f32 %v558, %v496
    %v560 = vadd.f32 %v559, %v497
    %v561 = vadd.f32 %v560, %v498
    %v562 = vadd.f32 %v561, %v499
    %v563 = vadd.f32 %v562, %v500
    %v564 = vadd.f32 %v563, %v501
    %v565 = vadd.f32 %v564, %v502
    %v566 = vadd.f32 %v565, %v503
    %v567 = vrot.slane %v566, 4
    %v568 = vadd.f32 %v566, %v567
    %v569 = vrot.slane %v568, 2
    %v570 = vadd.f32 %v568, %v569
    %v571 = vrot.slane %v570, 1
    %v572 = vadd.f32 %v570, %v571
    %v573 = vmul.f32 %v572, 0.001953125
    %v574 = vmul.f32 %v440, %v440
    %v575 = vmul.f32 %v441, %v441
    %v576 = vmul.f32 %v442, %v442
    %v577 = vmul.f32 %v443, %v443
    %v578 = vmul.f32 %v444, %v444
    %v579 = vmul.f32 %v445, %v445
    %v580 = vmul.f32 %v446, %v446
    %v581 = vmul.f32 %v447, %v447
    %v582 = vmul.f32 %v448, %v448
    %v583 = vmul.f32 %v449, %v449
    %v584 = vmul.f32 %v450, %v450
    %v585 = vmul.f32 %v451, %v451
    %v586 = vmul.f32 %v452, %v452
    %v587 = vmul.f32 %v453, %v453
    %v588 = vmul.f32 %v454, %v454
    %v589 = vmul.f32 %v455, %v455
    %v590 = vmul.f32 %v456, %v456
    %v591 = vmul.f32 %v457, %v457
    %v592 = vmul.f32 %v458, %v458
    %v593 = vmul.f32 %v459, %v459
    %v594 = vmul.f32 %v460, %v460
    %v595 = vmul.f32 %v461, %v461
    %v596 = vmul.f32 %v462, %v462
    %v597 = vmul.f32 %v463, %v463
    %v598 = vmul.f32 %v464, %v464
    %v599 = vmul.f32 %v465, %v465
    %v600 = vmul.f32 %v466, %v466
    %v601 = vmul.f32 %v467, %v467
    %v602 = vmul.f32 %v468, %v468
    %v603 = vmul.f32 %v469, %v469
    %v604 = vmul.f32 %v470, %v470
    %v605 = vmul.f32 %v471, %v471
    %v606 = vmul.f32 %v472, %v472
    %v607 = vmul.f32 %v473, %v473
    %v608 = vmul.f32 %v474, %v474
    %v609 = vmul.f32 %v475, %v475
    %v610 = vmul.f32 %v476, %v476
    %v611 = vmul.f32 %v477, %v477
    %v612 = vmul.f32 %v478, %v478
    %v613 = vmul.f32 %v479, %v479
    %v614 = vmul.f32 %v480, %v480
    %v615 = vmul.f32 %v481, %v481
    %v616 = vmul.f32 %v482, %v482
    %v617 = vmul.f32 %v483, %v483
    %v618 = vmul.f32 %v484, %v484
    %v619 = vmul.f32 %v485, %v485
    %v620 = vmul.f32 %v486, %v486
    %v621 = vmul.f32 %v487, %v487
    %v622 = vmul.f32 %v488, %v488
    %v623 = vmul.f32 %v489, %v489
    %v624 = vmul.f32 %v490, %v490
    %v625 = vmul.f32 %v491, %v491
    %v626 = vmul.f32 %v492, %v492
    %v627 = vmul.f32 %v493, %v493
    %v628 = vmul.f32 %v494, %v494
    %v629 = vmul.f32 %v495, %v495
    %v630 = vmul.f32 %v496, %v496
    %v631 = vmul.f32 %v497, %v497
    %v632 = vmul.f32 %v498, %v498
    %v633 = vmul.f32 %v499, %v499
    %v634 = vmul.f32 %v500, %v500
    %v635 = vmul.f32 %v501, %v501
    %v636 = vmul.f32 %v502, %v502
    %v637 = vmul.f32 %v503, %v503
    %v638 = vadd.f32 %v574, %v575
    %v639 = vadd.f32 %v638, %v576
    %v640 = vadd.f32 %v639, %v577
    %v641 = vadd.f32 %v640, %v578
    %v642 = vadd.f32 %v641, %v579
    %v643 = vadd.f32 %v642, %v580
    %v644 = vadd.f32 %v643, %v581
    %v645 = vadd.f32 %v644, %v582
    %v646 = vadd.f32 %v645, %v583
    %v647 = vadd.f32 %v646, %v584
    %v648 = vadd.f32 %v647, %v585
    %v649 = vadd.f32 %v648, %v586
    %v650 = vadd.f32 %v649, %v587
    %v651 = vadd.f32 %v650, %v588
    %v652 = vadd.f32 %v651, %v589
    %v653 = vadd.f32 %v652, %v590
    %v654 = vadd.f32 %v653, %v591
    %v655 = vadd.f32 %v654, %v592
    %v656 = vadd.f32 %v655, %v593
    %v657 = vadd.f32 %v656, %v594
    %v658 = vadd.f32 %v657, %v595
    %v659 = vadd.f32 %v658, %v596
    %v660 = vadd.f32 %v659, %v597
    %v661 = vadd.f32 %v660, %v598
    %v662 = vadd.f32 %v661, %v599
    %v663 = vadd.f32 %v662, %v600
    %v664 = vadd.f32 %v663, %v601
    %v665 = vadd.f32 %v664, %v602
    %v666 = vadd.f32 %v665, %v603
    %v667 = vadd.f32 %v666, %v604
    %v668 = vadd.f32 %v667, %v605
    %v669 = vadd.f32 %v668, %v606
    %v670 = vadd.f32 %v669, %v607
    %v671 = vadd.f32 %v670, %v608
    %v672 = vadd.f32 %v671, %v609
    %v673 = vadd.f32 %v672, %v610
    %v674 = vadd.f32 %v673, %v611
    %v675 = vadd.f32 %v674, %v612
    %v676 = vadd.f32 %v675, %v613
    %v677 = vadd.f32 %v676, %v614
    %v678 = vadd.f32 %v677, %v615
    %v679 = vadd.f32 %v678, %v616
    %v680 = vadd.f32 %v679, %v617
    %v681 = vadd.f32 %v680, %v618
    %v682 = vadd.f32 %v681, %v619
    %v683 = vadd.f32 %v682, %v620
    %v684 = vadd.f32 %v683, %v621
    %v685 = vadd.f32 %v684, %v622
    %v686 = vadd.f32 %v685, %v623
    %v687 = vadd.f32 %v686, %v624
    %v688 = vadd.f32 %v687, %v625
    %v689 = vadd.f32 %v688, %v626
    %v690 = vadd.f32 %v689, %v627
    %v691 = vadd.f32 %v690, %v628
    %v692 = vadd.f32 %v691, %v629
    %v693 = vadd.f32 %v692, %v630
    %v694 = vadd.f32 %v693, %v631
    %v695 = vadd.f32 %v694, %v632
    %v696 = vadd.f32 %v695, %v633
    %v697 = vadd.f32 %v696, %v634
    %v698 = vadd.f32 %v697, %v635
    %v699 = vadd.f32 %v698, %v636
    %v700 = vadd.f32 %v699, %v637
    %v701 = vrot.slane %v700, 4
    %v702 = vadd.f32 %v700, %v701
    %v703 = vrot.slane %v702, 2
    %v704 = vadd.f32 %v702, %v703
    %v705 = vrot.slane %v704, 1
    %v706 = vadd.f32 %v704, %v705
    %v707 = vmul.f32 %v706, 0.001953125
    %v708 = vmul.f32 %v573, %v573
    %v709 = vsub.f32 %v707, %v708
    %v710 = vmax.f32 %v709, 0.0
    %v711 = vadd.f32 %v710, 1e-05
    %v712 = vrsqrt.pop %v711
    %v713 = vld [vmem:[%s7] sm:$0x1]
    %v714 = vmul.f32 %v712, %v713
    %v715 = vsub.f32 %v440, %v573
    %v716 = vsub.f32 %v441, %v573
    %v717 = vsub.f32 %v442, %v573
    %v718 = vsub.f32 %v443, %v573
    %v719 = vsub.f32 %v444, %v573
    %v720 = vsub.f32 %v445, %v573
    %v721 = vsub.f32 %v446, %v573
    %v722 = vsub.f32 %v447, %v573
    %v723 = vsub.f32 %v448, %v573
    %v724 = vsub.f32 %v449, %v573
    %v725 = vsub.f32 %v450, %v573
    %v726 = vsub.f32 %v451, %v573
    %v727 = vsub.f32 %v452, %v573
    %v728 = vsub.f32 %v453, %v573
    %v729 = vsub.f32 %v454, %v573
    %v730 = vsub.f32 %v455, %v573
    %v731 = vsub.f32 %v456, %v573
    %v732 = vsub.f32 %v457, %v573
    %v733 = vsub.f32 %v458, %v573
    %v734 = vsub.f32 %v459, %v573
    %v735 = vsub.f32 %v460, %v573
    %v736 = vsub.f32 %v461, %v573
    %v737 = vsub.f32 %v462, %v573
    %v738 = vsub.f32 %v463, %v573
    %v739 = vsub.f32 %v464, %v573
    %v740 = vsub.f32 %v465, %v573
    %v741 = vsub.f32 %v466, %v573
    %v742 = vsub.f32 %v467, %v573
    %v743 = vsub.f32 %v468, %v573
    %v744 = vsub.f32 %v469, %v573
    %v745 = vsub.f32 %v470, %v573
    %v746 = vsub.f32 %v471, %v573
    %v747 = vsub.f32 %v472, %v573
    %v748 = vsub.f32 %v473, %v573
    %v749 = vsub.f32 %v474, %v573
    %v750 = vsub.f32 %v475, %v573
    %v751 = vsub.f32 %v476, %v573
    %v752 = vsub.f32 %v477, %v573
    %v753 = vsub.f32 %v478, %v573
    %v754 = vsub.f32 %v479, %v573
    %v755 = vsub.f32 %v480, %v573
    %v756 = vsub.f32 %v481, %v573
    %v757 = vsub.f32 %v482, %v573
    %v758 = vsub.f32 %v483, %v573
    %v759 = vsub.f32 %v484, %v573
    %v760 = vsub.f32 %v485, %v573
    %v761 = vsub.f32 %v486, %v573
    %v762 = vsub.f32 %v487, %v573
    %v763 = vsub.f32 %v488, %v573
    %v764 = vsub.f32 %v489, %v573
    %v765 = vsub.f32 %v490, %v573
    %v766 = vsub.f32 %v491, %v573
    %v767 = vsub.f32 %v492, %v573
    %v768 = vsub.f32 %v493, %v573
    %v769 = vsub.f32 %v494, %v573
    %v770 = vsub.f32 %v495, %v573
    %v771 = vsub.f32 %v496, %v573
    %v772 = vsub.f32 %v497, %v573
    %v773 = vsub.f32 %v498, %v573
    %v774 = vsub.f32 %v499, %v573
    %v775 = vsub.f32 %v500, %v573
    %v776 = vsub.f32 %v501, %v573
    %v777 = vsub.f32 %v502, %v573
    %v778 = vsub.f32 %v503, %v573
    %v779 = vlaneseq
    %v780 = vshrl.u32 %v779, 7
    %v781 = vsub.s32 0, %v780
    %v782 = vrot.slane %v714, %v781
    %v783 = vmul.f32 %v715, %v782
    %v784 = vmul.f32 %v716, %v782
    %v785 = vmul.f32 %v717, %v782
    %v786 = vmul.f32 %v718, %v782
    %v787 = vmul.f32 %v719, %v782
    %v788 = vmul.f32 %v720, %v782
    %v789 = vmul.f32 %v721, %v782
    %v790 = vmul.f32 %v722, %v782
    %v791 = vmul.f32 %v723, %v782
    %v792 = vmul.f32 %v724, %v782
    %v793 = vmul.f32 %v725, %v782
    %v794 = vmul.f32 %v726, %v782
    %v795 = vmul.f32 %v727, %v782
    %v796 = vmul.f32 %v728, %v782
    %v797 = vmul.f32 %v729, %v782
    %v798 = vmul.f32 %v730, %v782
    %v799 = vmul.f32 %v731, %v782
    %v800 = vmul.f32 %v732, %v782
    %v801 = vmul.f32 %v733, %v782
    %v802 = vmul.f32 %v734, %v782
    %v803 = vmul.f32 %v735, %v782
    %v804 = vmul.f32 %v736, %v782
    %v805 = vmul.f32 %v737, %v782
    %v806 = vmul.f32 %v738, %v782
    %v807 = vmul.f32 %v739, %v782
    %v808 = vmul.f32 %v740, %v782
    %v809 = vmul.f32 %v741, %v782
    %v810 = vmul.f32 %v742, %v782
    %v811 = vmul.f32 %v743, %v782
    %v812 = vmul.f32 %v744, %v782
    %v813 = vmul.f32 %v745, %v782
    %v814 = vmul.f32 %v746, %v782
    %v815 = vmul.f32 %v747, %v782
    %v816 = vmul.f32 %v748, %v782
    %v817 = vmul.f32 %v749, %v782
    %v818 = vmul.f32 %v750, %v782
    %v819 = vmul.f32 %v751, %v782
    %v820 = vmul.f32 %v752, %v782
    %v821 = vmul.f32 %v753, %v782
    %v822 = vmul.f32 %v754, %v782
    %v823 = vmul.f32 %v755, %v782
    %v824 = vmul.f32 %v756, %v782
    %v825 = vmul.f32 %v757, %v782
    %v826 = vmul.f32 %v758, %v782
    %v827 = vmul.f32 %v759, %v782
    %v828 = vmul.f32 %v760, %v782
    %v829 = vmul.f32 %v761, %v782
    %v830 = vmul.f32 %v762, %v782
    %v831 = vmul.f32 %v763, %v782
    %v832 = vmul.f32 %v764, %v782
    %v833 = vmul.f32 %v765, %v782
    %v834 = vmul.f32 %v766, %v782
    %v835 = vmul.f32 %v767, %v782
    %v836 = vmul.f32 %v768, %v782
    %v837 = vmul.f32 %v769, %v782
    %v838 = vmul.f32 %v770, %v782
    %v839 = vmul.f32 %v771, %v782
    %v840 = vmul.f32 %v772, %v782
    %v841 = vmul.f32 %v773, %v782
    %v842 = vmul.f32 %v774, %v782
    %v843 = vmul.f32 %v775, %v782
    %v844 = vmul.f32 %v776, %v782
    %v845 = vmul.f32 %v777, %v782
    %v846 = vmul.f32 %v778, %v782
    %v847 = vld [vmem:[%s8] sm:$0x1]
    %v849 = vlaneseq
    %v850 = vshrl.u32 %v849, 7
    %v851 = vsub.s32 0, %v850
    %v852 = vrot.slane %v847, %v851
    %v854 = vadd.f32 %v783, %v852
    %v855 = vadd.f32 %v784, %v852
    %v856 = vadd.f32 %v785, %v852
    %v857 = vadd.f32 %v786, %v852
    %v858 = vadd.f32 %v787, %v852
    %v859 = vadd.f32 %v788, %v852
    %v860 = vadd.f32 %v789, %v852
    %v861 = vadd.f32 %v790, %v852
    %v862 = vadd.f32 %v791, %v852
    %v863 = vadd.f32 %v792, %v852
    %v864 = vadd.f32 %v793, %v852
    %v865 = vadd.f32 %v794, %v852
    %v866 = vadd.f32 %v795, %v852
    %v867 = vadd.f32 %v796, %v852
    %v868 = vadd.f32 %v797, %v852
    %v869 = vadd.f32 %v798, %v852
    %v870 = vadd.f32 %v799, %v852
    %v871 = vadd.f32 %v800, %v852
    %v872 = vadd.f32 %v801, %v852
    %v873 = vadd.f32 %v802, %v852
    %v874 = vadd.f32 %v803, %v852
    %v875 = vadd.f32 %v804, %v852
    %v876 = vadd.f32 %v805, %v852
    %v877 = vadd.f32 %v806, %v852
    %v878 = vadd.f32 %v807, %v852
    %v879 = vadd.f32 %v808, %v852
    %v880 = vadd.f32 %v809, %v852
    %v881 = vadd.f32 %v810, %v852
    %v882 = vadd.f32 %v811, %v852
    %v883 = vadd.f32 %v812, %v852
    %v884 = vadd.f32 %v813, %v852
    %v885 = vadd.f32 %v814, %v852
    %v886 = vadd.f32 %v815, %v852
    %v887 = vadd.f32 %v816, %v852
    %v888 = vadd.f32 %v817, %v852
    %v889 = vadd.f32 %v818, %v852
    %v890 = vadd.f32 %v819, %v852
    %v891 = vadd.f32 %v820, %v852
    %v892 = vadd.f32 %v821, %v852
    %v893 = vadd.f32 %v822, %v852
    %v894 = vadd.f32 %v823, %v852
    %v895 = vadd.f32 %v824, %v852
    %v896 = vadd.f32 %v825, %v852
    %v897 = vadd.f32 %v826, %v852
    %v898 = vadd.f32 %v827, %v852
    %v899 = vadd.f32 %v828, %v852
    %v900 = vadd.f32 %v829, %v852
    %v901 = vadd.f32 %v830, %v852
    %v902 = vadd.f32 %v831, %v852
    %v903 = vadd.f32 %v832, %v852
    %v904 = vadd.f32 %v833, %v852
    %v905 = vadd.f32 %v834, %v852
    %v906 = vadd.f32 %v835, %v852
    %v907 = vadd.f32 %v836, %v852
    %v908 = vadd.f32 %v837, %v852
    %v909 = vadd.f32 %v838, %v852
    %v910 = vadd.f32 %v839, %v852
    %v911 = vadd.f32 %v840, %v852
    %v912 = vadd.f32 %v841, %v852
    %v913 = vadd.f32 %v842, %v852
    %v914 = vadd.f32 %v843, %v852
    %v915 = vadd.f32 %v844, %v852
    %v916 = vadd.f32 %v845, %v852
    %v917 = vadd.f32 %v846, %v852
    %918 = vst.msk [vmem:[%s96 + $0x1] sm:$0xff] %vm81, %v854
    %919 = vst.msk [vmem:[%s96 + $0x9] sm:$0xff] %vm81, %v855
    %920 = vst.msk [vmem:[%s96 + $0x19] sm:$0xff] %vm81, %v856
    %921 = vst.msk [vmem:[%s96 + $0x21] sm:$0xff] %vm81, %v857
    %922 = vst.msk [vmem:[%s96 + $0x31] sm:$0xff] %vm81, %v858
    %923 = vst.msk [vmem:[%s96 + $0x39] sm:$0xff] %vm81, %v859
    %924 = vst.msk [vmem:[%s96 + $0x49] sm:$0xff] %vm81, %v860
    %925 = vst.msk [vmem:[%s96 + $0x51] sm:$0xff] %vm81, %v861
    %926 = vst.msk [vmem:[%s96 + $0x61] sm:$0xff] %vm81, %v862
    %927 = vst.msk [vmem:[%s96 + $0x69] sm:$0xff] %vm81, %v863
    %928 = vst.msk [vmem:[%s96 + $0x79] sm:$0xff] %vm81, %v864
    %929 = vst.msk [vmem:[%s96 + $0x81] sm:$0xff] %vm81, %v865
    %930 = vst.msk [vmem:[%s96 + $0x91] sm:$0xff] %vm81, %v866
    %931 = vst.msk [vmem:[%s96 + $0x99] sm:$0xff] %vm81, %v867
    %932 = vst.msk [vmem:[%s96 + $0xa9] sm:$0xff] %vm81, %v868
    %933 = vst.msk [vmem:[%s96 + $0xb1] sm:$0xff] %vm81, %v869
    %934 = vst.msk [vmem:[%s96 + $0xc1] sm:$0xff] %vm81, %v870
    %935 = vst.msk [vmem:[%s96 + $0xc9] sm:$0xff] %vm81, %v871
    %936 = vst.msk [vmem:[%s96 + $0xd9] sm:$0xff] %vm81, %v872
    %937 = vst.msk [vmem:[%s96 + $0xe1] sm:$0xff] %vm81, %v873
    %938 = vst.msk [vmem:[%s96 + $0xf1] sm:$0xff] %vm81, %v874
    %939 = vst.msk [vmem:[%s96 + $0xf9] sm:$0xff] %vm81, %v875
    %940 = vst.msk [vmem:[%s96 + $0x109] sm:$0xff] %vm81, %v876
    %941 = vst.msk [vmem:[%s96 + $0x111] sm:$0xff] %vm81, %v877
    %942 = vst.msk [vmem:[%s96 + $0x121] sm:$0xff] %vm81, %v878
    %943 = vst.msk [vmem:[%s96 + $0x129] sm:$0xff] %vm81, %v879
    %944 = vst.msk [vmem:[%s96 + $0x139] sm:$0xff] %vm81, %v880
    %945 = vst.msk [vmem:[%s96 + $0x141] sm:$0xff] %vm81, %v881
    %946 = vst.msk [vmem:[%s96 + $0x151] sm:$0xff] %vm81, %v882
    %947 = vst.msk [vmem:[%s96 + $0x159] sm:$0xff] %vm81, %v883
    %948 = vst.msk [vmem:[%s96 + $0x169] sm:$0xff] %vm81, %v884
    %949 = vst.msk [vmem:[%s96 + $0x171] sm:$0xff] %vm81, %v885
    %950 = vst.msk [vmem:[%s96 + $0x1b1] sm:$0xff] %vm81, %v886
    %951 = vst.msk [vmem:[%s96 + $0x1b9] sm:$0xff] %vm81, %v887
    %952 = vst.msk [vmem:[%s96 + $0x1c9] sm:$0xff] %vm81, %v888
    %953 = vst.msk [vmem:[%s96 + $0x1d1] sm:$0xff] %vm81, %v889
    %954 = vst.msk [vmem:[%s96 + $0x1e1] sm:$0xff] %vm81, %v890
    %955 = vst.msk [vmem:[%s96 + $0x1e9] sm:$0xff] %vm81, %v891
    %956 = vst.msk [vmem:[%s96 + $0x1f9] sm:$0xff] %vm81, %v892
    %957 = vst.msk [vmem:[%s96 + $0x201] sm:$0xff] %vm81, %v893
    %958 = vst.msk [vmem:[%s96 + $0x211] sm:$0xff] %vm81, %v894
    %959 = vst.msk [vmem:[%s96 + $0x219] sm:$0xff] %vm81, %v895
    %960 = vst.msk [vmem:[%s96 + $0x229] sm:$0xff] %vm81, %v896
    %961 = vst.msk [vmem:[%s96 + $0x231] sm:$0xff] %vm81, %v897
    %962 = vst.msk [vmem:[%s96 + $0x241] sm:$0xff] %vm81, %v898
    %963 = vst.msk [vmem:[%s96 + $0x249] sm:$0xff] %vm81, %v899
    %964 = vst.msk [vmem:[%s96 + $0x259] sm:$0xff] %vm81, %v900
    %965 = vst.msk [vmem:[%s96 + $0x261] sm:$0xff] %vm81, %v901
    %966 = vst.msk [vmem:[%s96 + $0x271] sm:$0xff] %vm81, %v902
    %967 = vst.msk [vmem:[%s96 + $0x279] sm:$0xff] %vm81, %v903
    %968 = vst.msk [vmem:[%s96 + $0x289] sm:$0xff] %vm81, %v904
    %969 = vst.msk [vmem:[%s96 + $0x291] sm:$0xff] %vm81, %v905
    %970 = vst.msk [vmem:[%s96 + $0x2a1] sm:$0xff] %vm81, %v906
    %971 = vst.msk [vmem:[%s96 + $0x2a9] sm:$0xff] %vm81, %v907
    %972 = vst.msk [vmem:[%s96 + $0x2b9] sm:$0xff] %vm81, %v908
    %973 = vst.msk [vmem:[%s96 + $0x2c1] sm:$0xff] %vm81, %v909
    %974 = vst.msk [vmem:[%s96 + $0x2d1] sm:$0xff] %vm81, %v910
    %975 = vst.msk [vmem:[%s96 + $0x2d9] sm:$0xff] %vm81, %v911
    %976 = vst.msk [vmem:[%s96 + $0x2e9] sm:$0xff] %vm81, %v912
    %977 = vst.msk [vmem:[%s96 + $0x2f1] sm:$0xff] %vm81, %v913
    %978 = vst.msk [vmem:[%s96 + $0x301] sm:$0xff] %vm81, %v914
    %979 = vst.msk [vmem:[%s96 + $0x309] sm:$0xff] %vm81, %v915
    %980 = vst.msk [vmem:[%s96 + $0x319] sm:$0xff] %vm81, %v916
    %981 = vst.msk [vmem:[%s96 + $0x321] sm:$0xff] %vm81, %v917
    %v982 = vld [vmem:[#allocation2] sm:$0xff]
    %v983 = vld [vmem:[#allocation2 + $0x8] sm:$0xff]
    %v984 = vld [vmem:[#allocation2 + $0x18] sm:$0xff]
    %v985 = vld [vmem:[#allocation2 + $0x20] sm:$0xff]
    %v986 = vld [vmem:[#allocation2 + $0x30] sm:$0xff]
    %v987 = vld [vmem:[#allocation2 + $0x38] sm:$0xff]
    %v988 = vld [vmem:[#allocation2 + $0x48] sm:$0xff]
    %v989 = vld [vmem:[#allocation2 + $0x50] sm:$0xff]
    %v990 = vld [vmem:[#allocation2 + $0x60] sm:$0xff]
    %v991 = vld [vmem:[#allocation2 + $0x68] sm:$0xff]
    %v992 = vld [vmem:[#allocation2 + $0x78] sm:$0xff]
    %v993 = vld [vmem:[#allocation2 + $0x80] sm:$0xff]
    %v994 = vld [vmem:[#allocation2 + $0x90] sm:$0xff]
    %v995 = vld [vmem:[#allocation2 + $0x98] sm:$0xff]
    %v996 = vld [vmem:[#allocation2 + $0xa8] sm:$0xff]
    %v997 = vld [vmem:[#allocation2 + $0xb0] sm:$0xff]
    %v998 = vld [vmem:[#allocation2 + $0xc0] sm:$0xff]
    %v999 = vld [vmem:[#allocation2 + $0xc8] sm:$0xff]
    %v1000 = vld [vmem:[#allocation2 + $0xd8] sm:$0xff]
    %v1001 = vld [vmem:[#allocation2 + $0xe0] sm:$0xff]
    %v1002 = vld [vmem:[#allocation2 + $0xf0] sm:$0xff]
    %v1003 = vld [vmem:[#allocation2 + $0xf8] sm:$0xff]
    %v1004 = vld [vmem:[#allocation2 + $0x108] sm:$0xff]
    %v1005 = vld [vmem:[#allocation2 + $0x110] sm:$0xff]
    %v1006 = vld [vmem:[#allocation2 + $0x120] sm:$0xff]
    %v1007 = vld [vmem:[#allocation2 + $0x128] sm:$0xff]
    %v1008 = vld [vmem:[#allocation2 + $0x138] sm:$0xff]
    %v1009 = vld [vmem:[#allocation2 + $0x140] sm:$0xff]
    %v1010 = vld [vmem:[#allocation2 + $0x150] sm:$0xff]
    %v1011 = vld [vmem:[#allocation2 + $0x158] sm:$0xff]
    %v1012 = vld [vmem:[#allocation2 + $0x168] sm:$0xff]
    %v1013 = vld [vmem:[#allocation2 + $0x170] sm:$0xff]
    %v1014 = vld [vmem:[#allocation2 + $0x1b0] sm:$0xff]
    %v1015 = vld [vmem:[#allocation2 + $0x1b8] sm:$0xff]
    %v1016 = vld [vmem:[#allocation2 + $0x1c8] sm:$0xff]
    %v1017 = vld [vmem:[#allocation2 + $0x1d0] sm:$0xff]
    %v1018 = vld [vmem:[#allocation2 + $0x1e0] sm:$0xff]
    %v1019 = vld [vmem:[#allocation2 + $0x1e8] sm:$0xff]
    %v1020 = vld [vmem:[#allocation2 + $0x1f8] sm:$0xff]
    %v1021 = vld [vmem:[#allocation2 + $0x200] sm:$0xff]
    %v1022 = vld [vmem:[#allocation2 + $0x210] sm:$0xff]
    %v1023 = vld [vmem:[#allocation2 + $0x218] sm:$0xff]
    %v1024 = vld [vmem:[#allocation2 + $0x228] sm:$0xff]
    %v1025 = vld [vmem:[#allocation2 + $0x230] sm:$0xff]
    %v1026 = vld [vmem:[#allocation2 + $0x240] sm:$0xff]
    %v1027 = vld [vmem:[#allocation2 + $0x248] sm:$0xff]
    %v1028 = vld [vmem:[#allocation2 + $0x258] sm:$0xff]
    %v1029 = vld [vmem:[#allocation2 + $0x260] sm:$0xff]
    %v1030 = vld [vmem:[#allocation2 + $0x270] sm:$0xff]
    %v1031 = vld [vmem:[#allocation2 + $0x278] sm:$0xff]
    %v1032 = vld [vmem:[#allocation2 + $0x288] sm:$0xff]
    %v1033 = vld [vmem:[#allocation2 + $0x290] sm:$0xff]
    %v1034 = vld [vmem:[#allocation2 + $0x2a0] sm:$0xff]
    %v1035 = vld [vmem:[#allocation2 + $0x2a8] sm:$0xff]
    %v1036 = vld [vmem:[#allocation2 + $0x2b8] sm:$0xff]
    %v1037 = vld [vmem:[#allocation2 + $0x2c0] sm:$0xff]
    %v1038 = vld [vmem:[#allocation2 + $0x2d0] sm:$0xff]
    %v1039 = vld [vmem:[#allocation2 + $0x2d8] sm:$0xff]
    %v1040 = vld [vmem:[#allocation2 + $0x2e8] sm:$0xff]
    %v1041 = vld [vmem:[#allocation2 + $0x2f0] sm:$0xff]
    %v1042 = vld [vmem:[#allocation2 + $0x300] sm:$0xff]
    %v1043 = vld [vmem:[#allocation2 + $0x308] sm:$0xff]
    %v1044 = vld [vmem:[#allocation2 + $0x318] sm:$0xff]
    %v1045 = vld [vmem:[#allocation2 + $0x320] sm:$0xff]
    %v1046 = vpack.c.bf16 %v983, %v982
    %v1047 = vpack.c.bf16 %v985, %v984
    %v1048 = vpack.c.bf16 %v987, %v986
    %v1049 = vpack.c.bf16 %v989, %v988
    %v1050 = vpack.c.bf16 %v991, %v990
    %v1051 = vpack.c.bf16 %v993, %v992
    %v1052 = vpack.c.bf16 %v995, %v994
    %v1053 = vpack.c.bf16 %v997, %v996
    %v1054 = vpack.c.bf16 %v999, %v998
    %v1055 = vpack.c.bf16 %v1001, %v1000
    %v1056 = vpack.c.bf16 %v1003, %v1002
    %v1057 = vpack.c.bf16 %v1005, %v1004
    %v1058 = vpack.c.bf16 %v1007, %v1006
    %v1059 = vpack.c.bf16 %v1009, %v1008
    %v1060 = vpack.c.bf16 %v1011, %v1010
    %v1061 = vpack.c.bf16 %v1013, %v1012
    %v1062 = vpack.c.bf16 %v1015, %v1014
    %v1063 = vpack.c.bf16 %v1017, %v1016
    %v1064 = vpack.c.bf16 %v1019, %v1018
    %v1065 = vpack.c.bf16 %v1021, %v1020
    %v1066 = vpack.c.bf16 %v1023, %v1022
    %v1067 = vpack.c.bf16 %v1025, %v1024
    %v1068 = vpack.c.bf16 %v1027, %v1026
    %v1069 = vpack.c.bf16 %v1029, %v1028
    %v1070 = vpack.c.bf16 %v1031, %v1030
    %v1071 = vpack.c.bf16 %v1033, %v1032
    %v1072 = vpack.c.bf16 %v1035, %v1034
    %v1073 = vpack.c.bf16 %v1037, %v1036
    %v1074 = vpack.c.bf16 %v1039, %v1038
    %v1075 = vpack.c.bf16 %v1041, %v1040
    %v1076 = vpack.c.bf16 %v1043, %v1042
    %v1077 = vpack.c.bf16 %v1045, %v1044
    %v1078 = vld [vmem:[#allocation2 + $0x1] sm:$0xff]
    %v1079 = vld [vmem:[#allocation2 + $0x9] sm:$0xff]
    %v1080 = vld [vmem:[#allocation2 + $0x19] sm:$0xff]
    %v1081 = vld [vmem:[#allocation2 + $0x21] sm:$0xff]
    %v1082 = vld [vmem:[#allocation2 + $0x31] sm:$0xff]
    %v1083 = vld [vmem:[#allocation2 + $0x39] sm:$0xff]
    %v1084 = vld [vmem:[#allocation2 + $0x49] sm:$0xff]
    %v1085 = vld [vmem:[#allocation2 + $0x51] sm:$0xff]
    %v1086 = vld [vmem:[#allocation2 + $0x61] sm:$0xff]
    %v1087 = vld [vmem:[#allocation2 + $0x69] sm:$0xff]
    %v1088 = vld [vmem:[#allocation2 + $0x79] sm:$0xff]
    %v1089 = vld [vmem:[#allocation2 + $0x81] sm:$0xff]
    %v1090 = vld [vmem:[#allocation2 + $0x91] sm:$0xff]
    %v1091 = vld [vmem:[#allocation2 + $0x99] sm:$0xff]
    %v1092 = vld [vmem:[#allocation2 + $0xa9] sm:$0xff]
    %v1093 = vld [vmem:[#allocation2 + $0xb1] sm:$0xff]
    %v1094 = vld [vmem:[#allocation2 + $0xc1] sm:$0xff]
    %v1095 = vld [vmem:[#allocation2 + $0xc9] sm:$0xff]
    %v1096 = vld [vmem:[#allocation2 + $0xd9] sm:$0xff]
    %v1097 = vld [vmem:[#allocation2 + $0xe1] sm:$0xff]
    %v1098 = vld [vmem:[#allocation2 + $0xf1] sm:$0xff]
    %v1099 = vld [vmem:[#allocation2 + $0xf9] sm:$0xff]
    %v1100 = vld [vmem:[#allocation2 + $0x109] sm:$0xff]
    %v1101 = vld [vmem:[#allocation2 + $0x111] sm:$0xff]
    %v1102 = vld [vmem:[#allocation2 + $0x121] sm:$0xff]
    %v1103 = vld [vmem:[#allocation2 + $0x129] sm:$0xff]
    %v1104 = vld [vmem:[#allocation2 + $0x139] sm:$0xff]
    %v1105 = vld [vmem:[#allocation2 + $0x141] sm:$0xff]
    %v1106 = vld [vmem:[#allocation2 + $0x151] sm:$0xff]
    %v1107 = vld [vmem:[#allocation2 + $0x159] sm:$0xff]
    %v1108 = vld [vmem:[#allocation2 + $0x169] sm:$0xff]
    %v1109 = vld [vmem:[#allocation2 + $0x171] sm:$0xff]
    %v1110 = vld [vmem:[#allocation2 + $0x1b1] sm:$0xff]
    %v1111 = vld [vmem:[#allocation2 + $0x1b9] sm:$0xff]
    %v1112 = vld [vmem:[#allocation2 + $0x1c9] sm:$0xff]
    %v1113 = vld [vmem:[#allocation2 + $0x1d1] sm:$0xff]
    %v1114 = vld [vmem:[#allocation2 + $0x1e1] sm:$0xff]
    %v1115 = vld [vmem:[#allocation2 + $0x1e9] sm:$0xff]
    %v1116 = vld [vmem:[#allocation2 + $0x1f9] sm:$0xff]
    %v1117 = vld [vmem:[#allocation2 + $0x201] sm:$0xff]
    %v1118 = vld [vmem:[#allocation2 + $0x211] sm:$0xff]
    %v1119 = vld [vmem:[#allocation2 + $0x219] sm:$0xff]
    %v1120 = vld [vmem:[#allocation2 + $0x229] sm:$0xff]
    %v1121 = vld [vmem:[#allocation2 + $0x231] sm:$0xff]
    %v1122 = vld [vmem:[#allocation2 + $0x241] sm:$0xff]
    %v1123 = vld [vmem:[#allocation2 + $0x249] sm:$0xff]
    %v1124 = vld [vmem:[#allocation2 + $0x259] sm:$0xff]
    %v1125 = vld [vmem:[#allocation2 + $0x261] sm:$0xff]
    %v1126 = vld [vmem:[#allocation2 + $0x271] sm:$0xff]
    %v1127 = vld [vmem:[#allocation2 + $0x279] sm:$0xff]
    %v1128 = vld [vmem:[#allocation2 + $0x289] sm:$0xff]
    %v1129 = vld [vmem:[#allocation2 + $0x291] sm:$0xff]
    %v1130 = vld [vmem:[#allocation2 + $0x2a1] sm:$0xff]
    %v1131 = vld [vmem:[#allocation2 + $0x2a9] sm:$0xff]
    %v1132 = vld [vmem:[#allocation2 + $0x2b9] sm:$0xff]
    %v1133 = vld [vmem:[#allocation2 + $0x2c1] sm:$0xff]
    %v1134 = vld [vmem:[#allocation2 + $0x2d1] sm:$0xff]
    %v1135 = vld [vmem:[#allocation2 + $0x2d9] sm:$0xff]
    %v1136 = vld [vmem:[#allocation2 + $0x2e9] sm:$0xff]
    %v1137 = vld [vmem:[#allocation2 + $0x2f1] sm:$0xff]
    %v1138 = vld [vmem:[#allocation2 + $0x301] sm:$0xff]
    %v1139 = vld [vmem:[#allocation2 + $0x309] sm:$0xff]
    %v1140 = vld [vmem:[#allocation2 + $0x319] sm:$0xff]
    %v1141 = vld [vmem:[#allocation2 + $0x321] sm:$0xff]
    %v1142 = vpack.c.bf16 %v1079, %v1078
    %v1143 = vpack.c.bf16 %v1081, %v1080
    %v1144 = vpack.c.bf16 %v1083, %v1082
    %v1145 = vpack.c.bf16 %v1085, %v1084
    %v1146 = vpack.c.bf16 %v1087, %v1086
    %v1147 = vpack.c.bf16 %v1089, %v1088
    %v1148 = vpack.c.bf16 %v1091, %v1090
    %v1149 = vpack.c.bf16 %v1093, %v1092
    %v1150 = vpack.c.bf16 %v1095, %v1094
    %v1151 = vpack.c.bf16 %v1097, %v1096
    %v1152 = vpack.c.bf16 %v1099, %v1098
    %v1153 = vpack.c.bf16 %v1101, %v1100
    %v1154 = vpack.c.bf16 %v1103, %v1102
    %v1155 = vpack.c.bf16 %v1105, %v1104
    %v1156 = vpack.c.bf16 %v1107, %v1106
    %v1157 = vpack.c.bf16 %v1109, %v1108
    %v1158 = vpack.c.bf16 %v1111, %v1110
    %v1159 = vpack.c.bf16 %v1113, %v1112
    %v1160 = vpack.c.bf16 %v1115, %v1114
    %v1161 = vpack.c.bf16 %v1117, %v1116
    %v1162 = vpack.c.bf16 %v1119, %v1118
    %v1163 = vpack.c.bf16 %v1121, %v1120
    %v1164 = vpack.c.bf16 %v1123, %v1122
    %v1165 = vpack.c.bf16 %v1125, %v1124
    %v1166 = vpack.c.bf16 %v1127, %v1126
    %v1167 = vpack.c.bf16 %v1129, %v1128
    %v1168 = vpack.c.bf16 %v1131, %v1130
    %v1169 = vpack.c.bf16 %v1133, %v1132
    %v1170 = vpack.c.bf16 %v1135, %v1134
    %v1171 = vpack.c.bf16 %v1137, %v1136
    %v1172 = vpack.c.bf16 %v1139, %v1138
    %v1173 = vpack.c.bf16 %v1141, %v1140
    %v1174 = vld [vmem:[#allocation2 + $0x2] sm:$0xff]
    %v1175 = vld [vmem:[#allocation2 + $0xa] sm:$0xff]
    %v1176 = vld [vmem:[#allocation2 + $0x1a] sm:$0xff]
    %v1177 = vld [vmem:[#allocation2 + $0x22] sm:$0xff]
    %v1178 = vld [vmem:[#allocation2 + $0x32] sm:$0xff]
    %v1179 = vld [vmem:[#allocation2 + $0x3a] sm:$0xff]
    %v1180 = vld [vmem:[#allocation2 + $0x4a] sm:$0xff]
    %v1181 = vld [vmem:[#allocation2 + $0x52] sm:$0xff]
    %v1182 = vld [vmem:[#allocation2 + $0x62] sm:$0xff]
    %v1183 = vld [vmem:[#allocation2 + $0x6a] sm:$0xff]
    %v1184 = vld [vmem:[#allocation2 + $0x7a] sm:$0xff]
    %v1185 = vld [vmem:[#allocation2 + $0x82] sm:$0xff]
    %v1186 = vld [vmem:[#allocation2 + $0x92] sm:$0xff]
    %v1187 = vld [vmem:[#allocation2 + $0x9a] sm:$0xff]
    %v1188 = vld [vmem:[#allocation2 + $0xaa] sm:$0xff]
    %v1189 = vld [vmem:[#allocation2 + $0xb2] sm:$0xff]
    %v1190 = vld [vmem:[#allocation2 + $0xc2] sm:$0xff]
    %v1191 = vld [vmem:[#allocation2 + $0xca] sm:$0xff]
    %v1192 = vld [vmem:[#allocation2 + $0xda] sm:$0xff]
    %v1193 = vld [vmem:[#allocation2 + $0xe2] sm:$0xff]
    %v1194 = vld [vmem:[#allocation2 + $0xf2] sm:$0xff]
    %v1195 = vld [vmem:[#allocation2 + $0xfa] sm:$0xff]
    %v1196 = vld [vmem:[#allocation2 + $0x10a] sm:$0xff]
    %v1197 = vld [vmem:[#allocation2 + $0x112] sm:$0xff]
    %v1198 = vld [vmem:[#allocation2 + $0x122] sm:$0xff]
    %v1199 = vld [vmem:[#allocation2 + $0x12a] sm:$0xff]
    %v1200 = vld [vmem:[#allocation2 + $0x13a] sm:$0xff]
    %v1201 = vld [vmem:[#allocation2 + $0x142] sm:$0xff]
    %v1202 = vld [vmem:[#allocation2 + $0x152] sm:$0xff]
    %v1203 = vld [vmem:[#allocation2 + $0x15a] sm:$0xff]
    %v1204 = vld [vmem:[#allocation2 + $0x16a] sm:$0xff]
    %v1205 = vld [vmem:[#allocation2 + $0x172] sm:$0xff]
    %v1206 = vld [vmem:[#allocation2 + $0x1b2] sm:$0xff]
    %v1207 = vld [vmem:[#allocation2 + $0x1ba] sm:$0xff]
    %v1208 = vld [vmem:[#allocation2 + $0x1ca] sm:$0xff]
    %v1209 = vld [vmem:[#allocation2 + $0x1d2] sm:$0xff]
    %v1210 = vld [vmem:[#allocation2 + $0x1e2] sm:$0xff]
    %v1211 = vld [vmem:[#allocation2 + $0x1ea] sm:$0xff]
    %v1212 = vld [vmem:[#allocation2 + $0x1fa] sm:$0xff]
    %v1213 = vld [vmem:[#allocation2 + $0x202] sm:$0xff]
    %v1214 = vld [vmem:[#allocation2 + $0x212] sm:$0xff]
    %v1215 = vld [vmem:[#allocation2 + $0x21a] sm:$0xff]
    %v1216 = vld [vmem:[#allocation2 + $0x22a] sm:$0xff]
    %v1217 = vld [vmem:[#allocation2 + $0x232] sm:$0xff]
    %v1218 = vld [vmem:[#allocation2 + $0x242] sm:$0xff]
    %v1219 = vld [vmem:[#allocation2 + $0x24a] sm:$0xff]
    %v1220 = vld [vmem:[#allocation2 + $0x25a] sm:$0xff]
    %v1221 = vld [vmem:[#allocation2 + $0x262] sm:$0xff]
    %v1222 = vld [vmem:[#allocation2 + $0x272] sm:$0xff]
    %v1223 = vld [vmem:[#allocation2 + $0x27a] sm:$0xff]
    %v1224 = vld [vmem:[#allocation2 + $0x28a] sm:$0xff]
    %v1225 = vld [vmem:[#allocation2 + $0x292] sm:$0xff]
    %v1226 = vld [vmem:[#allocation2 + $0x2a2] sm:$0xff]
    %v1227 = vld [vmem:[#allocation2 + $0x2aa] sm:$0xff]
    %v1228 = vld [vmem:[#allocation2 + $0x2ba] sm:$0xff]
    %v1229 = vld [vmem:[#allocation2 + $0x2c2] sm:$0xff]
    %v1230 = vld [vmem:[#allocation2 + $0x2d2] sm:$0xff]
    %v1231 = vld [vmem:[#allocation2 + $0x2da] sm:$0xff]
    %v1232 = vld [vmem:[#allocation2 + $0x2ea] sm:$0xff]
    %v1233 = vld [vmem:[#allocation2 + $0x2f2] sm:$0xff]
    %v1234 = vld [vmem:[#allocation2 + $0x302] sm:$0xff]
    %v1235 = vld [vmem:[#allocation2 + $0x30a] sm:$0xff]
    %v1236 = vld [vmem:[#allocation2 + $0x31a] sm:$0xff]
    %v1237 = vld [vmem:[#allocation2 + $0x322] sm:$0xff]
    %v1238 = vpack.c.bf16 %v1175, %v1174
    %v1239 = vpack.c.bf16 %v1177, %v1176
    %v1240 = vpack.c.bf16 %v1179, %v1178
    %v1241 = vpack.c.bf16 %v1181, %v1180
    %v1242 = vpack.c.bf16 %v1183, %v1182
    %v1243 = vpack.c.bf16 %v1185, %v1184
    %v1244 = vpack.c.bf16 %v1187, %v1186
    %v1245 = vpack.c.bf16 %v1189, %v1188
    %v1246 = vpack.c.bf16 %v1191, %v1190
    %v1247 = vpack.c.bf16 %v1193, %v1192
    %v1248 = vpack.c.bf16 %v1195, %v1194
    %v1249 = vpack.c.bf16 %v1197, %v1196
    %v1250 = vpack.c.bf16 %v1199, %v1198
    %v1251 = vpack.c.bf16 %v1201, %v1200
    %v1252 = vpack.c.bf16 %v1203, %v1202
    %v1253 = vpack.c.bf16 %v1205, %v1204
    %v1254 = vpack.c.bf16 %v1207, %v1206
    %v1255 = vpack.c.bf16 %v1209, %v1208
    %v1256 = vpack.c.bf16 %v1211, %v1210
    %v1257 = vpack.c.bf16 %v1213, %v1212
    %v1258 = vpack.c.bf16 %v1215, %v1214
    %v1259 = vpack.c.bf16 %v1217, %v1216
    %v1260 = vpack.c.bf16 %v1219, %v1218
    %v1261 = vpack.c.bf16 %v1221, %v1220
    %v1262 = vpack.c.bf16 %v1223, %v1222
    %v1263 = vpack.c.bf16 %v1225, %v1224
    %v1264 = vpack.c.bf16 %v1227, %v1226
    %v1265 = vpack.c.bf16 %v1229, %v1228
    %v1266 = vpack.c.bf16 %v1231, %v1230
    %v1267 = vpack.c.bf16 %v1233, %v1232
    %v1268 = vpack.c.bf16 %v1235, %v1234
    %v1269 = vpack.c.bf16 %v1237, %v1236
    %v1270 = vld [vmem:[%s96] sm:$0xff]
    %v1271 = vld [vmem:[%s96 + $0x8] sm:$0xff]
    %v1272 = vld [vmem:[%s96 + $0x18] sm:$0xff]
    %v1273 = vld [vmem:[%s96 + $0x20] sm:$0xff]
    %v1274 = vld [vmem:[%s96 + $0x30] sm:$0xff]
    %v1275 = vld [vmem:[%s96 + $0x38] sm:$0xff]
    %v1276 = vld [vmem:[%s96 + $0x48] sm:$0xff]
    %v1277 = vld [vmem:[%s96 + $0x50] sm:$0xff]
    %v1278 = vld [vmem:[%s96 + $0x60] sm:$0xff]
    %v1279 = vld [vmem:[%s96 + $0x68] sm:$0xff]
    %v1280 = vld [vmem:[%s96 + $0x78] sm:$0xff]
    %v1281 = vld [vmem:[%s96 + $0x80] sm:$0xff]
    %v1282 = vld [vmem:[%s96 + $0x90] sm:$0xff]
    %v1283 = vld [vmem:[%s96 + $0x98] sm:$0xff]
    %v1284 = vld [vmem:[%s96 + $0xa8] sm:$0xff]
    %v1285 = vld [vmem:[%s96 + $0xb0] sm:$0xff]
    %v1286 = vld [vmem:[%s96 + $0xc0] sm:$0xff]
    %v1287 = vld [vmem:[%s96 + $0xc8] sm:$0xff]
    %v1288 = vld [vmem:[%s96 + $0xd8] sm:$0xff]
    %v1289 = vld [vmem:[%s96 + $0xe0] sm:$0xff]
    %v1290 = vld [vmem:[%s96 + $0xf0] sm:$0xff]
    %v1291 = vld [vmem:[%s96 + $0xf8] sm:$0xff]
    %v1292 = vld [vmem:[%s96 + $0x108] sm:$0xff]
    %v1293 = vld [vmem:[%s96 + $0x110] sm:$0xff]
    %v1294 = vld [vmem:[%s96 + $0x120] sm:$0xff]
    %v1295 = vld [vmem:[%s96 + $0x128] sm:$0xff]
    %v1296 = vld [vmem:[%s96 + $0x138] sm:$0xff]
    %v1297 = vld [vmem:[%s96 + $0x140] sm:$0xff]
    %v1298 = vld [vmem:[%s96 + $0x150] sm:$0xff]
    %v1299 = vld [vmem:[%s96 + $0x158] sm:$0xff]
    %v1300 = vld [vmem:[%s96 + $0x168] sm:$0xff]
    %v1301 = vld [vmem:[%s96 + $0x170] sm:$0xff]
    %v1302 = vld [vmem:[%s96 + $0x1b0] sm:$0xff]
    %v1303 = vld [vmem:[%s96 + $0x1b8] sm:$0xff]
    %v1304 = vld [vmem:[%s96 + $0x1c8] sm:$0xff]
    %v1305 = vld [vmem:[%s96 + $0x1d0] sm:$0xff]
    %v1306 = vld [vmem:[%s96 + $0x1e0] sm:$0xff]
    %v1307 = vld [vmem:[%s96 + $0x1e8] sm:$0xff]
    %v1308 = vld [vmem:[%s96 + $0x1f8] sm:$0xff]
    %v1309 = vld [vmem:[%s96 + $0x200] sm:$0xff]
    %v1310 = vld [vmem:[%s96 + $0x210] sm:$0xff]
    %v1311 = vld [vmem:[%s96 + $0x218] sm:$0xff]
    %v1312 = vld [vmem:[%s96 + $0x228] sm:$0xff]
    %v1313 = vld [vmem:[%s96 + $0x230] sm:$0xff]
    %v1314 = vld [vmem:[%s96 + $0x240] sm:$0xff]
    %v1315 = vld [vmem:[%s96 + $0x248] sm:$0xff]
    %v1316 = vld [vmem:[%s96 + $0x258] sm:$0xff]
    %v1317 = vld [vmem:[%s96 + $0x260] sm:$0xff]
    %v1318 = vld [vmem:[%s96 + $0x270] sm:$0xff]
    %v1319 = vld [vmem:[%s96 + $0x278] sm:$0xff]
    %v1320 = vld [vmem:[%s96 + $0x288] sm:$0xff]
    %v1321 = vld [vmem:[%s96 + $0x290] sm:$0xff]
    %v1322 = vld [vmem:[%s96 + $0x2a0] sm:$0xff]
    %v1323 = vld [vmem:[%s96 + $0x2a8] sm:$0xff]
    %v1324 = vld [vmem:[%s96 + $0x2b8] sm:$0xff]
    %v1325 = vld [vmem:[%s96 + $0x2c0] sm:$0xff]
    %v1326 = vld [vmem:[%s96 + $0x2d0] sm:$0xff]
    %v1327 = vld [vmem:[%s96 + $0x2d8] sm:$0xff]
    %v1328 = vld [vmem:[%s96 + $0x2e8] sm:$0xff]
    %v1329 = vld [vmem:[%s96 + $0x2f0] sm:$0xff]
    %v1330 = vld [vmem:[%s96 + $0x300] sm:$0xff]
    %v1331 = vld [vmem:[%s96 + $0x308] sm:$0xff]
    %v1332 = vld [vmem:[%s96 + $0x318] sm:$0xff]
    %v1333 = vld [vmem:[%s96 + $0x320] sm:$0xff]
    %v1334 = vpack.c.bf16 %v1271, %v1270
    %v1335 = vpack.c.bf16 %v1273, %v1272
    %v1336 = vpack.c.bf16 %v1275, %v1274
    %v1337 = vpack.c.bf16 %v1277, %v1276
    %v1338 = vpack.c.bf16 %v1279, %v1278
    %v1339 = vpack.c.bf16 %v1281, %v1280
    %v1340 = vpack.c.bf16 %v1283, %v1282
    %v1341 = vpack.c.bf16 %v1285, %v1284
    %v1342 = vpack.c.bf16 %v1287, %v1286
    %v1343 = vpack.c.bf16 %v1289, %v1288
    %v1344 = vpack.c.bf16 %v1291, %v1290
    %v1345 = vpack.c.bf16 %v1293, %v1292
    %v1346 = vpack.c.bf16 %v1295, %v1294
    %v1347 = vpack.c.bf16 %v1297, %v1296
    %v1348 = vpack.c.bf16 %v1299, %v1298
    %v1349 = vpack.c.bf16 %v1301, %v1300
    %v1350 = vpack.c.bf16 %v1303, %v1302
    %v1351 = vpack.c.bf16 %v1305, %v1304
    %v1352 = vpack.c.bf16 %v1307, %v1306
    %v1353 = vpack.c.bf16 %v1309, %v1308
    %v1354 = vpack.c.bf16 %v1311, %v1310
    %v1355 = vpack.c.bf16 %v1313, %v1312
    %v1356 = vpack.c.bf16 %v1315, %v1314
    %v1357 = vpack.c.bf16 %v1317, %v1316
    %v1358 = vpack.c.bf16 %v1319, %v1318
    %v1359 = vpack.c.bf16 %v1321, %v1320
    %v1360 = vpack.c.bf16 %v1323, %v1322
    %v1361 = vpack.c.bf16 %v1325, %v1324
    %v1362 = vpack.c.bf16 %v1327, %v1326
    %v1363 = vpack.c.bf16 %v1329, %v1328
    %v1364 = vpack.c.bf16 %v1331, %v1330
    %v1365 = vpack.c.bf16 %v1333, %v1332
    %v1366 = vld [vmem:[%s96 + $0x1] sm:$0xff]
    %v1367 = vld [vmem:[%s96 + $0x9] sm:$0xff]
    %v1368 = vld [vmem:[%s96 + $0x19] sm:$0xff]
    %v1369 = vld [vmem:[%s96 + $0x21] sm:$0xff]
    %v1370 = vld [vmem:[%s96 + $0x31] sm:$0xff]
    %v1371 = vld [vmem:[%s96 + $0x39] sm:$0xff]
    %v1372 = vld [vmem:[%s96 + $0x49] sm:$0xff]
    %v1373 = vld [vmem:[%s96 + $0x51] sm:$0xff]
    %v1374 = vld [vmem:[%s96 + $0x61] sm:$0xff]
    %v1375 = vld [vmem:[%s96 + $0x69] sm:$0xff]
    %v1376 = vld [vmem:[%s96 + $0x79] sm:$0xff]
    %v1377 = vld [vmem:[%s96 + $0x81] sm:$0xff]
    %v1378 = vld [vmem:[%s96 + $0x91] sm:$0xff]
    %v1379 = vld [vmem:[%s96 + $0x99] sm:$0xff]
    %v1380 = vld [vmem:[%s96 + $0xa9] sm:$0xff]
    %v1381 = vld [vmem:[%s96 + $0xb1] sm:$0xff]
    %v1382 = vld [vmem:[%s96 + $0xc1] sm:$0xff]
    %v1383 = vld [vmem:[%s96 + $0xc9] sm:$0xff]
    %v1384 = vld [vmem:[%s96 + $0xd9] sm:$0xff]
    %v1385 = vld [vmem:[%s96 + $0xe1] sm:$0xff]
    %v1386 = vld [vmem:[%s96 + $0xf1] sm:$0xff]
    %v1387 = vld [vmem:[%s96 + $0xf9] sm:$0xff]
    %v1388 = vld [vmem:[%s96 + $0x109] sm:$0xff]
    %v1389 = vld [vmem:[%s96 + $0x111] sm:$0xff]
    %v1390 = vld [vmem:[%s96 + $0x121] sm:$0xff]
    %v1391 = vld [vmem:[%s96 + $0x129] sm:$0xff]
    %v1392 = vld [vmem:[%s96 + $0x139] sm:$0xff]
    %v1393 = vld [vmem:[%s96 + $0x141] sm:$0xff]
    %v1394 = vld [vmem:[%s96 + $0x151] sm:$0xff]
    %v1395 = vld [vmem:[%s96 + $0x159] sm:$0xff]
    %v1396 = vld [vmem:[%s96 + $0x169] sm:$0xff]
    %v1397 = vld [vmem:[%s96 + $0x171] sm:$0xff]
    %v1398 = vld [vmem:[%s96 + $0x1b1] sm:$0xff]
    %v1399 = vld [vmem:[%s96 + $0x1b9] sm:$0xff]
    %v1400 = vld [vmem:[%s96 + $0x1c9] sm:$0xff]
    %v1401 = vld [vmem:[%s96 + $0x1d1] sm:$0xff]
    %v1402 = vld [vmem:[%s96 + $0x1e1] sm:$0xff]
    %v1403 = vld [vmem:[%s96 + $0x1e9] sm:$0xff]
    %v1404 = vld [vmem:[%s96 + $0x1f9] sm:$0xff]
    %v1405 = vld [vmem:[%s96 + $0x201] sm:$0xff]
    %v1406 = vld [vmem:[%s96 + $0x211] sm:$0xff]
    %v1407 = vld [vmem:[%s96 + $0x219] sm:$0xff]
    %v1408 = vld [vmem:[%s96 + $0x229] sm:$0xff]
    %v1409 = vld [vmem:[%s96 + $0x231] sm:$0xff]
    %v1410 = vld [vmem:[%s96 + $0x241] sm:$0xff]
    %v1411 = vld [vmem:[%s96 + $0x249] sm:$0xff]
    %v1412 = vld [vmem:[%s96 + $0x259] sm:$0xff]
    %v1413 = vld [vmem:[%s96 + $0x261] sm:$0xff]
    %v1414 = vld [vmem:[%s96 + $0x271] sm:$0xff]
    %v1415 = vld [vmem:[%s96 + $0x279] sm:$0xff]
    %v1416 = vld [vmem:[%s96 + $0x289] sm:$0xff]
    %v1417 = vld [vmem:[%s96 + $0x291] sm:$0xff]
    %v1418 = vld [vmem:[%s96 + $0x2a1] sm:$0xff]
    %v1419 = vld [vmem:[%s96 + $0x2a9] sm:$0xff]
    %v1420 = vld [vmem:[%s96 + $0x2b9] sm:$0xff]
    %v1421 = vld [vmem:[%s96 + $0x2c1] sm:$0xff]
    %v1422 = vld [vmem:[%s96 + $0x2d1] sm:$0xff]
    %v1423 = vld [vmem:[%s96 + $0x2d9] sm:$0xff]
    %v1424 = vld [vmem:[%s96 + $0x2e9] sm:$0xff]
    %v1425 = vld [vmem:[%s96 + $0x2f1] sm:$0xff]
    %v1426 = vld [vmem:[%s96 + $0x301] sm:$0xff]
    %v1427 = vld [vmem:[%s96 + $0x309] sm:$0xff]
    %v1428 = vld [vmem:[%s96 + $0x319] sm:$0xff]
    %v1429 = vld [vmem:[%s96 + $0x321] sm:$0xff]
    %v1430 = vpack.c.bf16 %v1367, %v1366
    %v1431 = vpack.c.bf16 %v1369, %v1368
    %v1432 = vpack.c.bf16 %v1371, %v1370
    %v1433 = vpack.c.bf16 %v1373, %v1372
    %v1434 = vpack.c.bf16 %v1375, %v1374
    %v1435 = vpack.c.bf16 %v1377, %v1376
    %v1436 = vpack.c.bf16 %v1379, %v1378
    %v1437 = vpack.c.bf16 %v1381, %v1380
    %v1438 = vpack.c.bf16 %v1383, %v1382
    %v1439 = vpack.c.bf16 %v1385, %v1384
    %v1440 = vpack.c.bf16 %v1387, %v1386
    %v1441 = vpack.c.bf16 %v1389, %v1388
    %v1442 = vpack.c.bf16 %v1391, %v1390
    %v1443 = vpack.c.bf16 %v1393, %v1392
    %v1444 = vpack.c.bf16 %v1395, %v1394
    %v1445 = vpack.c.bf16 %v1397, %v1396
    %v1446 = vpack.c.bf16 %v1399, %v1398
    %v1447 = vpack.c.bf16 %v1401, %v1400
    %v1448 = vpack.c.bf16 %v1403, %v1402
    %v1449 = vpack.c.bf16 %v1405, %v1404
    %v1450 = vpack.c.bf16 %v1407, %v1406
    %v1451 = vpack.c.bf16 %v1409, %v1408
    %v1452 = vpack.c.bf16 %v1411, %v1410
    %v1453 = vpack.c.bf16 %v1413, %v1412
    %v1454 = vpack.c.bf16 %v1415, %v1414
    %v1455 = vpack.c.bf16 %v1417, %v1416
    %v1456 = vpack.c.bf16 %v1419, %v1418
    %v1457 = vpack.c.bf16 %v1421, %v1420
    %v1458 = vpack.c.bf16 %v1423, %v1422
    %v1459 = vpack.c.bf16 %v1425, %v1424
    %v1460 = vpack.c.bf16 %v1427, %v1426
    %v1461 = vpack.c.bf16 %v1429, %v1428
    %v1462 = vld [vmem:[%s96 + $0x2] sm:$0xff]
    %v1463 = vld [vmem:[%s96 + $0xa] sm:$0xff]
    %v1464 = vld [vmem:[%s96 + $0x1a] sm:$0xff]
    %v1465 = vld [vmem:[%s96 + $0x22] sm:$0xff]
    %v1466 = vld [vmem:[%s96 + $0x32] sm:$0xff]
    %v1467 = vld [vmem:[%s96 + $0x3a] sm:$0xff]
    %v1468 = vld [vmem:[%s96 + $0x4a] sm:$0xff]
    %v1469 = vld [vmem:[%s96 + $0x52] sm:$0xff]
    %v1470 = vld [vmem:[%s96 + $0x62] sm:$0xff]
    %v1471 = vld [vmem:[%s96 + $0x6a] sm:$0xff]
    %v1472 = vld [vmem:[%s96 + $0x7a] sm:$0xff]
    %v1473 = vld [vmem:[%s96 + $0x82] sm:$0xff]
    %v1474 = vld [vmem:[%s96 + $0x92] sm:$0xff]
    %v1475 = vld [vmem:[%s96 + $0x9a] sm:$0xff]
    %v1476 = vld [vmem:[%s96 + $0xaa] sm:$0xff]
    %v1477 = vld [vmem:[%s96 + $0xb2] sm:$0xff]
    %v1478 = vld [vmem:[%s96 + $0xc2] sm:$0xff]
    %v1479 = vld [vmem:[%s96 + $0xca] sm:$0xff]
    %v1480 = vld [vmem:[%s96 + $0xda] sm:$0xff]
    %v1481 = vld [vmem:[%s96 + $0xe2] sm:$0xff]
    %v1482 = vld [vmem:[%s96 + $0xf2] sm:$0xff]
    %v1483 = vld [vmem:[%s96 + $0xfa] sm:$0xff]
    %v1484 = vld [vmem:[%s96 + $0x10a] sm:$0xff]
    %v1485 = vld [vmem:[%s96 + $0x112] sm:$0xff]
    %v1486 = vld [vmem:[%s96 + $0x122] sm:$0xff]
    %v1487 = vld [vmem:[%s96 + $0x12a] sm:$0xff]
    %v1488 = vld [vmem:[%s96 + $0x13a] sm:$0xff]
    %v1489 = vld [vmem:[%s96 + $0x142] sm:$0xff]
    %v1490 = vld [vmem:[%s96 + $0x152] sm:$0xff]
    %v1491 = vld [vmem:[%s96 + $0x15a] sm:$0xff]
    %v1492 = vld [vmem:[%s96 + $0x16a] sm:$0xff]
    %v1493 = vld [vmem:[%s96 + $0x172] sm:$0xff]
    %v1494 = vld [vmem:[%s96 + $0x1b2] sm:$0xff]
    %v1495 = vld [vmem:[%s96 + $0x1ba] sm:$0xff]
    %v1496 = vld [vmem:[%s96 + $0x1ca] sm:$0xff]
    %v1497 = vld [vmem:[%s96 + $0x1d2] sm:$0xff]
    %v1498 = vld [vmem:[%s96 + $0x1e2] sm:$0xff]
    %v1499 = vld [vmem:[%s96 + $0x1ea] sm:$0xff]
    %v1500 = vld [vmem:[%s96 + $0x1fa] sm:$0xff]
    %v1501 = vld [vmem:[%s96 + $0x202] sm:$0xff]
    %v1502 = vld [vmem:[%s96 + $0x212] sm:$0xff]
    %v1503 = vld [vmem:[%s96 + $0x21a] sm:$0xff]
    %v1504 = vld [vmem:[%s96 + $0x22a] sm:$0xff]
    %v1505 = vld [vmem:[%s96 + $0x232] sm:$0xff]
    %v1506 = vld [vmem:[%s96 + $0x242] sm:$0xff]
    %v1507 = vld [vmem:[%s96 + $0x24a] sm:$0xff]
    %v1508 = vld [vmem:[%s96 + $0x25a] sm:$0xff]
    %v1509 = vld [vmem:[%s96 + $0x262] sm:$0xff]
    %v1510 = vld [vmem:[%s96 + $0x272] sm:$0xff]
    %v1511 = vld [vmem:[%s96 + $0x27a] sm:$0xff]
    %v1512 = vld [vmem:[%s96 + $0x28a] sm:$0xff]
    %v1513 = vld [vmem:[%s96 + $0x292] sm:$0xff]
    %v1514 = vld [vmem:[%s96 + $0x2a2] sm:$0xff]
    %v1515 = vld [vmem:[%s96 + $0x2aa] sm:$0xff]
    %v1516 = vld [vmem:[%s96 + $0x2ba] sm:$0xff]
    %v1517 = vld [vmem:[%s96 + $0x2c2] sm:$0xff]
    %v1518 = vld [vmem:[%s96 + $0x2d2] sm:$0xff]
    %v1519 = vld [vmem:[%s96 + $0x2da] sm:$0xff]
    %v1520 = vld [vmem:[%s96 + $0x2ea] sm:$0xff]
    %v1521 = vld [vmem:[%s96 + $0x2f2] sm:$0xff]
    %v1522 = vld [vmem:[%s96 + $0x302] sm:$0xff]
    %v1523 = vld [vmem:[%s96 + $0x30a] sm:$0xff]
    %v1524 = vld [vmem:[%s96 + $0x31a] sm:$0xff]
    %v1525 = vld [vmem:[%s96 + $0x322] sm:$0xff]
    %v1526 = vpack.c.bf16 %v1463, %v1462
    %v1527 = vpack.c.bf16 %v1465, %v1464
    %v1528 = vpack.c.bf16 %v1467, %v1466
    %v1529 = vpack.c.bf16 %v1469, %v1468
    %v1530 = vpack.c.bf16 %v1471, %v1470
    %v1531 = vpack.c.bf16 %v1473, %v1472
    %v1532 = vpack.c.bf16 %v1475, %v1474
    %v1533 = vpack.c.bf16 %v1477, %v1476
    %v1534 = vpack.c.bf16 %v1479, %v1478
    %v1535 = vpack.c.bf16 %v1481, %v1480
    %v1536 = vpack.c.bf16 %v1483, %v1482
    %v1537 = vpack.c.bf16 %v1485, %v1484
    %v1538 = vpack.c.bf16 %v1487, %v1486
    %v1539 = vpack.c.bf16 %v1489, %v1488
    %v1540 = vpack.c.bf16 %v1491, %v1490
    %v1541 = vpack.c.bf16 %v1493, %v1492
    %v1542 = vpack.c.bf16 %v1495, %v1494
    %v1543 = vpack.c.bf16 %v1497, %v1496
    %v1544 = vpack.c.bf16 %v1499, %v1498
    %v1545 = vpack.c.bf16 %v1501, %v1500
    %v1546 = vpack.c.bf16 %v1503, %v1502
    %v1547 = vpack.c.bf16 %v1505, %v1504
    %v1548 = vpack.c.bf16 %v1507, %v1506
    %v1549 = vpack.c.bf16 %v1509, %v1508
    %v1550 = vpack.c.bf16 %v1511, %v1510
    %v1551 = vpack.c.bf16 %v1513, %v1512
    %v1552 = vpack.c.bf16 %v1515, %v1514
    %v1553 = vpack.c.bf16 %v1517, %v1516
    %v1554 = vpack.c.bf16 %v1519, %v1518
    %v1555 = vpack.c.bf16 %v1521, %v1520
    %v1556 = vpack.c.bf16 %v1523, %v1522
    %v1557 = vpack.c.bf16 %v1525, %v1524
    %s1558 = scalar_lea.vmem [#allocation2], 48
    %v1559 = vld [vmem:[%s1558] sm:$0xff]
    %v1560 = vld [vmem:[%s1558 + $0x8] sm:$0xff]
    %v1561 = vld [vmem:[%s1558 + $0x18] sm:$0xff]
    %v1562 = vld [vmem:[%s1558 + $0x20] sm:$0xff]
    %v1563 = vld [vmem:[%s1558 + $0x30] sm:$0xff]
    %v1564 = vld [vmem:[%s1558 + $0x38] sm:$0xff]
    %v1565 = vld [vmem:[%s1558 + $0x48] sm:$0xff]
    %v1566 = vld [vmem:[%s1558 + $0x50] sm:$0xff]
    %v1567 = vld [vmem:[%s1558 + $0x60] sm:$0xff]
    %v1568 = vld [vmem:[%s1558 + $0x68] sm:$0xff]
    %v1569 = vld [vmem:[%s1558 + $0x78] sm:$0xff]
    %v1570 = vld [vmem:[%s1558 + $0x80] sm:$0xff]
    %v1571 = vld [vmem:[%s1558 + $0x90] sm:$0xff]
    %v1572 = vld [vmem:[%s1558 + $0x98] sm:$0xff]
    %v1573 = vld [vmem:[%s1558 + $0xa8] sm:$0xff]
    %v1574 = vld [vmem:[%s1558 + $0xb0] sm:$0xff]
    %v1575 = vld [vmem:[%s1558 + $0xc0] sm:$0xff]
    %v1576 = vld [vmem:[%s1558 + $0xc8] sm:$0xff]
    %v1577 = vld [vmem:[%s1558 + $0xd8] sm:$0xff]
    %v1578 = vld [vmem:[%s1558 + $0xe0] sm:$0xff]
    %v1579 = vld [vmem:[%s1558 + $0xf0] sm:$0xff]
    %v1580 = vld [vmem:[%s1558 + $0xf8] sm:$0xff]
    %v1581 = vld [vmem:[%s1558 + $0x108] sm:$0xff]
    %v1582 = vld [vmem:[%s1558 + $0x110] sm:$0xff]
    %v1583 = vld [vmem:[%s1558 + $0x120] sm:$0xff]
    %v1584 = vld [vmem:[%s1558 + $0x128] sm:$0xff]
    %v1585 = vld [vmem:[%s1558 + $0x138] sm:$0xff]
    %v1586 = vld [vmem:[%s1558 + $0x140] sm:$0xff]
    %v1587 = vld [vmem:[%s1558 + $0x150] sm:$0xff]
    %v1588 = vld [vmem:[%s1558 + $0x158] sm:$0xff]
    %v1589 = vld [vmem:[%s1558 + $0x168] sm:$0xff]
    %v1590 = vld [vmem:[%s1558 + $0x170] sm:$0xff]
    %v1591 = vld [vmem:[%s1558 + $0x1b0] sm:$0xff]
    %v1592 = vld [vmem:[%s1558 + $0x1b8] sm:$0xff]
    %v1593 = vld [vmem:[%s1558 + $0x1c8] sm:$0xff]
    %v1594 = vld [vmem:[%s1558 + $0x1d0] sm:$0xff]
    %v1595 = vld [vmem:[%s1558 + $0x1e0] sm:$0xff]
    %v1596 = vld [vmem:[%s1558 + $0x1e8] sm:$0xff]
    %v1597 = vld [vmem:[%s1558 + $0x1f8] sm:$0xff]
    %v1598 = vld [vmem:[%s1558 + $0x200] sm:$0xff]
    %v1599 = vld [vmem:[%s1558 + $0x210] sm:$0xff]
    %v1600 = vld [vmem:[%s1558 + $0x218] sm:$0xff]
    %v1601 = vld [vmem:[%s1558 + $0x228] sm:$0xff]
    %v1602 = vld [vmem:[%s1558 + $0x230] sm:$0xff]
    %v1603 = vld [vmem:[%s1558 + $0x240] sm:$0xff]
    %v1604 = vld [vmem:[%s1558 + $0x248] sm:$0xff]
    %v1605 = vld [vmem:[%s1558 + $0x258] sm:$0xff]
    %v1606 = vld [vmem:[%s1558 + $0x260] sm:$0xff]
    %v1607 = vld [vmem:[%s1558 + $0x270] sm:$0xff]
    %v1608 = vld [vmem:[%s1558 + $0x278] sm:$0xff]
    %v1609 = vld [vmem:[%s1558 + $0x288] sm:$0xff]
    %v1610 = vld [vmem:[%s1558 + $0x290] sm:$0xff]
    %v1611 = vld [vmem:[%s1558 + $0x2a0] sm:$0xff]
    %v1612 = vld [vmem:[%s1558 + $0x2a8] sm:$0xff]
    %v1613 = vld [vmem:[%s1558 + $0x2b8] sm:$0xff]
    %v1614 = vld [vmem:[%s1558 + $0x2c0] sm:$0xff]
    %v1615 = vld [vmem:[%s1558 + $0x2d0] sm:$0xff]
    %v1616 = vld [vmem:[%s1558 + $0x2d8] sm:$0xff]
    %v1617 = vld [vmem:[%s1558 + $0x2e8] sm:$0xff]
    %v1618 = vld [vmem:[%s1558 + $0x2f0] sm:$0xff]
    %v1619 = vld [vmem:[%s1558 + $0x300] sm:$0xff]
    %v1620 = vld [vmem:[%s1558 + $0x308] sm:$0xff]
    %v1621 = vld [vmem:[%s1558 + $0x318] sm:$0xff]
    %v1622 = vld [vmem:[%s1558 + $0x320] sm:$0xff]
    %v1623 = vpack.c.bf16 %v1560, %v1559
    %v1624 = vpack.c.bf16 %v1562, %v1561
    %v1625 = vpack.c.bf16 %v1564, %v1563
    %v1626 = vpack.c.bf16 %v1566, %v1565
    %v1627 = vpack.c.bf16 %v1568, %v1567
    %v1628 = vpack.c.bf16 %v1570, %v1569
    %v1629 = vpack.c.bf16 %v1572, %v1571
    %v1630 = vpack.c.bf16 %v1574, %v1573
    %v1631 = vpack.c.bf16 %v1576, %v1575
    %v1632 = vpack.c.bf16 %v1578, %v1577
    %v1633 = vpack.c.bf16 %v1580, %v1579
    %v1634 = vpack.c.bf16 %v1582, %v1581
    %v1635 = vpack.c.bf16 %v1584, %v1583
    %v1636 = vpack.c.bf16 %v1586, %v1585
    %v1637 = vpack.c.bf16 %v1588, %v1587
    %v1638 = vpack.c.bf16 %v1590, %v1589
    %v1639 = vpack.c.bf16 %v1592, %v1591
    %v1640 = vpack.c.bf16 %v1594, %v1593
    %v1641 = vpack.c.bf16 %v1596, %v1595
    %v1642 = vpack.c.bf16 %v1598, %v1597
    %v1643 = vpack.c.bf16 %v1600, %v1599
    %v1644 = vpack.c.bf16 %v1602, %v1601
    %v1645 = vpack.c.bf16 %v1604, %v1603
    %v1646 = vpack.c.bf16 %v1606, %v1605
    %v1647 = vpack.c.bf16 %v1608, %v1607
    %v1648 = vpack.c.bf16 %v1610, %v1609
    %v1649 = vpack.c.bf16 %v1612, %v1611
    %v1650 = vpack.c.bf16 %v1614, %v1613
    %v1651 = vpack.c.bf16 %v1616, %v1615
    %v1652 = vpack.c.bf16 %v1618, %v1617
    %v1653 = vpack.c.bf16 %v1620, %v1619
    %v1654 = vpack.c.bf16 %v1622, %v1621
    %v1655 = vld [vmem:[%s1558 + $0x1] sm:$0xff]
    %v1656 = vld [vmem:[%s1558 + $0x9] sm:$0xff]
    %v1657 = vld [vmem:[%s1558 + $0x19] sm:$0xff]
    %v1658 = vld [vmem:[%s1558 + $0x21] sm:$0xff]
    %v1659 = vld [vmem:[%s1558 + $0x31] sm:$0xff]
    %v1660 = vld [vmem:[%s1558 + $0x39] sm:$0xff]
    %v1661 = vld [vmem:[%s1558 + $0x49] sm:$0xff]
    %v1662 = vld [vmem:[%s1558 + $0x51] sm:$0xff]
    %v1663 = vld [vmem:[%s1558 + $0x61] sm:$0xff]
    %v1664 = vld [vmem:[%s1558 + $0x69] sm:$0xff]
    %v1665 = vld [vmem:[%s1558 + $0x79] sm:$0xff]
    %v1666 = vld [vmem:[%s1558 + $0x81] sm:$0xff]
    %v1667 = vld [vmem:[%s1558 + $0x91] sm:$0xff]
    %v1668 = vld [vmem:[%s1558 + $0x99] sm:$0xff]
    %v1669 = vld [vmem:[%s1558 + $0xa9] sm:$0xff]
    %v1670 = vld [vmem:[%s1558 + $0xb1] sm:$0xff]
    %v1671 = vld [vmem:[%s1558 + $0xc1] sm:$0xff]
    %v1672 = vld [vmem:[%s1558 + $0xc9] sm:$0xff]
    %v1673 = vld [vmem:[%s1558 + $0xd9] sm:$0xff]
    %v1674 = vld [vmem:[%s1558 + $0xe1] sm:$0xff]
    %v1675 = vld [vmem:[%s1558 + $0xf1] sm:$0xff]
    %v1676 = vld [vmem:[%s1558 + $0xf9] sm:$0xff]
    %v1677 = vld [vmem:[%s1558 + $0x109] sm:$0xff]
    %v1678 = vld [vmem:[%s1558 + $0x111] sm:$0xff]
    %v1679 = vld [vmem:[%s1558 + $0x121] sm:$0xff]
    %v1680 = vld [vmem:[%s1558 + $0x129] sm:$0xff]
    %v1681 = vld [vmem:[%s1558 + $0x139] sm:$0xff]
    %v1682 = vld [vmem:[%s1558 + $0x141] sm:$0xff]
    %v1683 = vld [vmem:[%s1558 + $0x151] sm:$0xff]
    %v1684 = vld [vmem:[%s1558 + $0x159] sm:$0xff]
    %v1685 = vld [vmem:[%s1558 + $0x169] sm:$0xff]
    %v1686 = vld [vmem:[%s1558 + $0x171] sm:$0xff]
    %v1687 = vld [vmem:[%s1558 + $0x1b1] sm:$0xff]
    %v1688 = vld [vmem:[%s1558 + $0x1b9] sm:$0xff]
    %v1689 = vld [vmem:[%s1558 + $0x1c9] sm:$0xff]
    %v1690 = vld [vmem:[%s1558 + $0x1d1] sm:$0xff]
    %v1691 = vld [vmem:[%s1558 + $0x1e1] sm:$0xff]
    %v1692 = vld [vmem:[%s1558 + $0x1e9] sm:$0xff]
    %v1693 = vld [vmem:[%s1558 + $0x1f9] sm:$0xff]
    %v1694 = vld [vmem:[%s1558 + $0x201] sm:$0xff]
    %v1695 = vld [vmem:[%s1558 + $0x211] sm:$0xff]
    %v1696 = vld [vmem:[%s1558 + $0x219] sm:$0xff]
    %v1697 = vld [vmem:[%s1558 + $0x229] sm:$0xff]
    %v1698 = vld [vmem:[%s1558 + $0x231] sm:$0xff]
    %v1699 = vld [vmem:[%s1558 + $0x241] sm:$0xff]
    %v1700 = vld [vmem:[%s1558 + $0x249] sm:$0xff]
    %v1701 = vld [vmem:[%s1558 + $0x259] sm:$0xff]
    %v1702 = vld [vmem:[%s1558 + $0x261] sm:$0xff]
    %v1703 = vld [vmem:[%s1558 + $0x271] sm:$0xff]
    %v1704 = vld [vmem:[%s1558 + $0x279] sm:$0xff]
    %v1705 = vld [vmem:[%s1558 + $0x289] sm:$0xff]
    %v1706 = vld [vmem:[%s1558 + $0x291] sm:$0xff]
    %v1707 = vld [vmem:[%s1558 + $0x2a1] sm:$0xff]
    %v1708 = vld [vmem:[%s1558 + $0x2a9] sm:$0xff]
    %v1709 = vld [vmem:[%s1558 + $0x2b9] sm:$0xff]
    %v1710 = vld [vmem:[%s1558 + $0x2c1] sm:$0xff]
    %v1711 = vld [vmem:[%s1558 + $0x2d1] sm:$0xff]
    %v1712 = vld [vmem:[%s1558 + $0x2d9] sm:$0xff]
    %v1713 = vld [vmem:[%s1558 + $0x2e9] sm:$0xff]
    %v1714 = vld [vmem:[%s1558 + $0x2f1] sm:$0xff]
    %v1715 = vld [vmem:[%s1558 + $0x301] sm:$0xff]
    %v1716 = vld [vmem:[%s1558 + $0x309] sm:$0xff]
    %v1717 = vld [vmem:[%s1558 + $0x319] sm:$0xff]
    %v1718 = vld [vmem:[%s1558 + $0x321] sm:$0xff]
    %v1719 = vpack.c.bf16 %v1656, %v1655
    %v1720 = vpack.c.bf16 %v1658, %v1657
    %v1721 = vpack.c.bf16 %v1660, %v1659
    %v1722 = vpack.c.bf16 %v1662, %v1661
    %v1723 = vpack.c.bf16 %v1664, %v1663
    %v1724 = vpack.c.bf16 %v1666, %v1665
    %v1725 = vpack.c.bf16 %v1668, %v1667
    %v1726 = vpack.c.bf16 %v1670, %v1669
    %v1727 = vpack.c.bf16 %v1672, %v1671
    %v1728 = vpack.c.bf16 %v1674, %v1673
    %v1729 = vpack.c.bf16 %v1676, %v1675
    %v1730 = vpack.c.bf16 %v1678, %v1677
    %v1731 = vpack.c.bf16 %v1680, %v1679
    %v1732 = vpack.c.bf16 %v1682, %v1681
    %v1733 = vpack.c.bf16 %v1684, %v1683
    %v1734 = vpack.c.bf16 %v1686, %v1685
    %v1735 = vpack.c.bf16 %v1688, %v1687
    %v1736 = vpack.c.bf16 %v1690, %v1689
    %v1737 = vpack.c.bf16 %v1692, %v1691
    %v1738 = vpack.c.bf16 %v1694, %v1693
    %v1739 = vpack.c.bf16 %v1696, %v1695
    %v1740 = vpack.c.bf16 %v1698, %v1697
    %v1741 = vpack.c.bf16 %v1700, %v1699
    %v1742 = vpack.c.bf16 %v1702, %v1701
    %v1743 = vpack.c.bf16 %v1704, %v1703
    %v1744 = vpack.c.bf16 %v1706, %v1705
    %v1745 = vpack.c.bf16 %v1708, %v1707
    %v1746 = vpack.c.bf16 %v1710, %v1709
    %v1747 = vpack.c.bf16 %v1712, %v1711
    %v1748 = vpack.c.bf16 %v1714, %v1713
    %v1749 = vpack.c.bf16 %v1716, %v1715
    %v1750 = vpack.c.bf16 %v1718, %v1717
    %v1751 = vld [vmem:[%s1558 + $0x2] sm:$0xff]
    %v1752 = vld [vmem:[%s1558 + $0xa] sm:$0xff]
    %v1753 = vld [vmem:[%s1558 + $0x1a] sm:$0xff]
    %v1754 = vld [vmem:[%s1558 + $0x22] sm:$0xff]
    %v1755 = vld [vmem:[%s1558 + $0x32] sm:$0xff]
    %v1756 = vld [vmem:[%s1558 + $0x3a] sm:$0xff]
    %v1757 = vld [vmem:[%s1558 + $0x4a] sm:$0xff]
    %v1758 = vld [vmem:[%s1558 + $0x52] sm:$0xff]
    %v1759 = vld [vmem:[%s1558 + $0x62] sm:$0xff]
    %v1760 = vld [vmem:[%s1558 + $0x6a] sm:$0xff]
    %v1761 = vld [vmem:[%s1558 + $0x7a] sm:$0xff]
    %v1762 = vld [vmem:[%s1558 + $0x82] sm:$0xff]
    %v1763 = vld [vmem:[%s1558 + $0x92] sm:$0xff]
    %v1764 = vld [vmem:[%s1558 + $0x9a] sm:$0xff]
    %v1765 = vld [vmem:[%s1558 + $0xaa] sm:$0xff]
    %v1766 = vld [vmem:[%s1558 + $0xb2] sm:$0xff]
    %v1767 = vld [vmem:[%s1558 + $0xc2] sm:$0xff]
    %v1768 = vld [vmem:[%s1558 + $0xca] sm:$0xff]
    %v1769 = vld [vmem:[%s1558 + $0xda] sm:$0xff]
    %v1770 = vld [vmem:[%s1558 + $0xe2] sm:$0xff]
    %v1771 = vld [vmem:[%s1558 + $0xf2] sm:$0xff]
    %v1772 = vld [vmem:[%s1558 + $0xfa] sm:$0xff]
    %v1773 = vld [vmem:[%s1558 + $0x10a] sm:$0xff]
    %v1774 = vld [vmem:[%s1558 + $0x112] sm:$0xff]
    %v1775 = vld [vmem:[%s1558 + $0x122] sm:$0xff]
    %v1776 = vld [vmem:[%s1558 + $0x12a] sm:$0xff]
    %v1777 = vld [vmem:[%s1558 + $0x13a] sm:$0xff]
    %v1778 = vld [vmem:[%s1558 + $0x142] sm:$0xff]
    %v1779 = vld [vmem:[%s1558 + $0x152] sm:$0xff]
    %v1780 = vld [vmem:[%s1558 + $0x15a] sm:$0xff]
    %v1781 = vld [vmem:[%s1558 + $0x16a] sm:$0xff]
    %v1782 = vld [vmem:[%s1558 + $0x172] sm:$0xff]
    %v1783 = vld [vmem:[%s1558 + $0x1b2] sm:$0xff]
    %v1784 = vld [vmem:[%s1558 + $0x1ba] sm:$0xff]
    %v1785 = vld [vmem:[%s1558 + $0x1ca] sm:$0xff]
    %v1786 = vld [vmem:[%s1558 + $0x1d2] sm:$0xff]
    %v1787 = vld [vmem:[%s1558 + $0x1e2] sm:$0xff]
    %v1788 = vld [vmem:[%s1558 + $0x1ea] sm:$0xff]
    %v1789 = vld [vmem:[%s1558 + $0x1fa] sm:$0xff]
    %v1790 = vld [vmem:[%s1558 + $0x202] sm:$0xff]
    %v1791 = vld [vmem:[%s1558 + $0x212] sm:$0xff]
    %v1792 = vld [vmem:[%s1558 + $0x21a] sm:$0xff]
    %v1793 = vld [vmem:[%s1558 + $0x22a] sm:$0xff]
    %v1794 = vld [vmem:[%s1558 + $0x232] sm:$0xff]
    %v1795 = vld [vmem:[%s1558 + $0x242] sm:$0xff]
    %v1796 = vld [vmem:[%s1558 + $0x24a] sm:$0xff]
    %v1797 = vld [vmem:[%s1558 + $0x25a] sm:$0xff]
    %v1798 = vld [vmem:[%s1558 + $0x262] sm:$0xff]
    %v1799 = vld [vmem:[%s1558 + $0x272] sm:$0xff]
    %v1800 = vld [vmem:[%s1558 + $0x27a] sm:$0xff]
    %v1801 = vld [vmem:[%s1558 + $0x28a] sm:$0xff]
    %v1802 = vld [vmem:[%s1558 + $0x292] sm:$0xff]
    %v1803 = vld [vmem:[%s1558 + $0x2a2] sm:$0xff]
    %v1804 = vld [vmem:[%s1558 + $0x2aa] sm:$0xff]
    %v1805 = vld [vmem:[%s1558 + $0x2ba] sm:$0xff]
    %v1806 = vld [vmem:[%s1558 + $0x2c2] sm:$0xff]
    %v1807 = vld [vmem:[%s1558 + $0x2d2] sm:$0xff]
    %v1808 = vld [vmem:[%s1558 + $0x2da] sm:$0xff]
    %v1809 = vld [vmem:[%s1558 + $0x2ea] sm:$0xff]
    %v1810 = vld [vmem:[%s1558 + $0x2f2] sm:$0xff]
    %v1811 = vld [vmem:[%s1558 + $0x302] sm:$0xff]
    %v1812 = vld [vmem:[%s1558 + $0x30a] sm:$0xff]
    %v1813 = vld [vmem:[%s1558 + $0x31a] sm:$0xff]
    %v1814 = vld [vmem:[%s1558 + $0x322] sm:$0xff]
    %v1815 = vpack.c.bf16 %v1752, %v1751
    %v1816 = vpack.c.bf16 %v1754, %v1753
    %v1817 = vpack.c.bf16 %v1756, %v1755
    %v1818 = vpack.c.bf16 %v1758, %v1757
    %v1819 = vpack.c.bf16 %v1760, %v1759
    %v1820 = vpack.c.bf16 %v1762, %v1761
    %v1821 = vpack.c.bf16 %v1764, %v1763
    %v1822 = vpack.c.bf16 %v1766, %v1765
    %v1823 = vpack.c.bf16 %v1768, %v1767
    %v1824 = vpack.c.bf16 %v1770, %v1769
    %v1825 = vpack.c.bf16 %v1772, %v1771
    %v1826 = vpack.c.bf16 %v1774, %v1773
    %v1827 = vpack.c.bf16 %v1776, %v1775
    %v1828 = vpack.c.bf16 %v1778, %v1777
    %v1829 = vpack.c.bf16 %v1780, %v1779
    %v1830 = vpack.c.bf16 %v1782, %v1781
    %v1831 = vpack.c.bf16 %v1784, %v1783
    %v1832 = vpack.c.bf16 %v1786, %v1785
    %v1833 = vpack.c.bf16 %v1788, %v1787
    %v1834 = vpack.c.bf16 %v1790, %v1789
    %v1835 = vpack.c.bf16 %v1792, %v1791
    %v1836 = vpack.c.bf16 %v1794, %v1793
    %v1837 = vpack.c.bf16 %v1796, %v1795
    %v1838 = vpack.c.bf16 %v1798, %v1797
    %v1839 = vpack.c.bf16 %v1800, %v1799
    %v1840 = vpack.c.bf16 %v1802, %v1801
    %v1841 = vpack.c.bf16 %v1804, %v1803
    %v1842 = vpack.c.bf16 %v1806, %v1805
    %v1843 = vpack.c.bf16 %v1808, %v1807
    %v1844 = vpack.c.bf16 %v1810, %v1809
    %v1845 = vpack.c.bf16 %v1812, %v1811
    %v1846 = vpack.c.bf16 %v1814, %v1813
    %1879 = vrot.lane.b32.xlu0 %v1142, 8
    %v1880 = vpop.permute.xlu0 %1879
    %1881 = vrot.lane.b32.xlu0 %v1143, 8
    %v1882 = vpop.permute.xlu0 %1881
    %1883 = vrot.lane.b32.xlu0 %v1144, 8
    %v1884 = vpop.permute.xlu0 %1883
    %1885 = vrot.lane.b32.xlu0 %v1145, 8
    %v1886 = vpop.permute.xlu0 %1885
    %1887 = vrot.lane.b32.xlu0 %v1146, 8
    %v1888 = vpop.permute.xlu0 %1887
    %1889 = vrot.lane.b32.xlu0 %v1147, 8
    %v1890 = vpop.permute.xlu0 %1889
    %1891 = vrot.lane.b32.xlu0 %v1148, 8
    %v1892 = vpop.permute.xlu0 %1891
    %1893 = vrot.lane.b32.xlu0 %v1149, 8
    %v1894 = vpop.permute.xlu0 %1893
    %1895 = vrot.lane.b32.xlu0 %v1150, 8
    %v1896 = vpop.permute.xlu0 %1895
    %1897 = vrot.lane.b32.xlu0 %v1151, 8
    %v1898 = vpop.permute.xlu0 %1897
    %1899 = vrot.lane.b32.xlu0 %v1152, 8
    %v1900 = vpop.permute.xlu0 %1899
    %1901 = vrot.lane.b32.xlu0 %v1153, 8
    %v1902 = vpop.permute.xlu0 %1901
    %1903 = vrot.lane.b32.xlu0 %v1154, 8
    %v1904 = vpop.permute.xlu0 %1903
    %1905 = vrot.lane.b32.xlu0 %v1155, 8
    %v1906 = vpop.permute.xlu0 %1905
    %1907 = vrot.lane.b32.xlu0 %v1156, 8
    %v1908 = vpop.permute.xlu0 %1907
    %1909 = vrot.lane.b32.xlu0 %v1157, 8
    %v1910 = vpop.permute.xlu0 %1909
    %1911 = vrot.lane.b32.xlu0 %v1158, 8
    %v1912 = vpop.permute.xlu0 %1911
    %1913 = vrot.lane.b32.xlu0 %v1159, 8
    %v1914 = vpop.permute.xlu0 %1913
    %1915 = vrot.lane.b32.xlu0 %v1160, 8
    %v1916 = vpop.permute.xlu0 %1915
    %1917 = vrot.lane.b32.xlu0 %v1161, 8
    %v1918 = vpop.permute.xlu0 %1917
    %1919 = vrot.lane.b32.xlu0 %v1162, 8
    %v1920 = vpop.permute.xlu0 %1919
    %1921 = vrot.lane.b32.xlu0 %v1163, 8
    %v1922 = vpop.permute.xlu0 %1921
    %1923 = vrot.lane.b32.xlu0 %v1164, 8
    %v1924 = vpop.permute.xlu0 %1923
    %1925 = vrot.lane.b32.xlu0 %v1165, 8
    %v1926 = vpop.permute.xlu0 %1925
    %1927 = vrot.lane.b32.xlu0 %v1166, 8
    %v1928 = vpop.permute.xlu0 %1927
    %1929 = vrot.lane.b32.xlu0 %v1167, 8
    %v1930 = vpop.permute.xlu0 %1929
    %1931 = vrot.lane.b32.xlu0 %v1168, 8
    %v1932 = vpop.permute.xlu0 %1931
    %1933 = vrot.lane.b32.xlu0 %v1169, 8
    %v1934 = vpop.permute.xlu0 %1933
    %1935 = vrot.lane.b32.xlu0 %v1170, 8
    %v1936 = vpop.permute.xlu0 %1935
    %1937 = vrot.lane.b32.xlu0 %v1171, 8
    %v1938 = vpop.permute.xlu0 %1937
    %1939 = vrot.lane.b32.xlu0 %v1172, 8
    %v1940 = vpop.permute.xlu0 %1939
    %1941 = vrot.lane.b32.xlu0 %v1173, 8
    %v1942 = vpop.permute.xlu0 %1941
    %1975 = vrot.lane.b32.xlu0 %v1238, 16
    %v1976 = vpop.permute.xlu0 %1975
    %1977 = vrot.lane.b32.xlu0 %v1239, 16
    %v1978 = vpop.permute.xlu0 %1977
    %1979 = vrot.lane.b32.xlu0 %v1240, 16
    %v1980 = vpop.permute.xlu0 %1979
    %1981 = vrot.lane.b32.xlu0 %v1241, 16
    %v1982 = vpop.permute.xlu0 %1981
    %1983 = vrot.lane.b32.xlu0 %v1242, 16
    %v1984 = vpop.permute.xlu0 %1983
    %1985 = vrot.lane.b32.xlu0 %v1243, 16
    %v1986 = vpop.permute.xlu0 %1985
    %1987 = vrot.lane.b32.xlu0 %v1244, 16
    %v1988 = vpop.permute.xlu0 %1987
    %1989 = vrot.lane.b32.xlu0 %v1245, 16
    %v1990 = vpop.permute.xlu0 %1989
    %1991 = vrot.lane.b32.xlu0 %v1246, 16
    %v1992 = vpop.permute.xlu0 %1991
    %1993 = vrot.lane.b32.xlu0 %v1247, 16
    %v1994 = vpop.permute.xlu0 %1993
    %1995 = vrot.lane.b32.xlu0 %v1248, 16
    %v1996 = vpop.permute.xlu0 %1995
    %1997 = vrot.lane.b32.xlu0 %v1249, 16
    %v1998 = vpop.permute.xlu0 %1997
    %1999 = vrot.lane.b32.xlu0 %v1250, 16
    %v2000 = vpop.permute.xlu0 %1999
    %2001 = vrot.lane.b32.xlu0 %v1251, 16
    %v2002 = vpop.permute.xlu0 %2001
    %2003 = vrot.lane.b32.xlu0 %v1252, 16
    %v2004 = vpop.permute.xlu0 %2003
    %2005 = vrot.lane.b32.xlu0 %v1253, 16
    %v2006 = vpop.permute.xlu0 %2005
    %2007 = vrot.lane.b32.xlu0 %v1254, 16
    %v2008 = vpop.permute.xlu0 %2007
    %2009 = vrot.lane.b32.xlu0 %v1255, 16
    %v2010 = vpop.permute.xlu0 %2009
    %2011 = vrot.lane.b32.xlu0 %v1256, 16
    %v2012 = vpop.permute.xlu0 %2011
    %2013 = vrot.lane.b32.xlu0 %v1257, 16
    %v2014 = vpop.permute.xlu0 %2013
    %2015 = vrot.lane.b32.xlu0 %v1258, 16
    %v2016 = vpop.permute.xlu0 %2015
    %2017 = vrot.lane.b32.xlu0 %v1259, 16
    %v2018 = vpop.permute.xlu0 %2017
    %2019 = vrot.lane.b32.xlu0 %v1260, 16
    %v2020 = vpop.permute.xlu0 %2019
    %2021 = vrot.lane.b32.xlu0 %v1261, 16
    %v2022 = vpop.permute.xlu0 %2021
    %2023 = vrot.lane.b32.xlu0 %v1262, 16
    %v2024 = vpop.permute.xlu0 %2023
    %2025 = vrot.lane.b32.xlu0 %v1263, 16
    %v2026 = vpop.permute.xlu0 %2025
    %2027 = vrot.lane.b32.xlu0 %v1264, 16
    %v2028 = vpop.permute.xlu0 %2027
    %2029 = vrot.lane.b32.xlu0 %v1265, 16
    %v2030 = vpop.permute.xlu0 %2029
    %2031 = vrot.lane.b32.xlu0 %v1266, 16
    %v2032 = vpop.permute.xlu0 %2031
    %2033 = vrot.lane.b32.xlu0 %v1267, 16
    %v2034 = vpop.permute.xlu0 %2033
    %2035 = vrot.lane.b32.xlu0 %v1268, 16
    %v2036 = vpop.permute.xlu0 %2035
    %2037 = vrot.lane.b32.xlu0 %v1269, 16
    %v2038 = vpop.permute.xlu0 %2037
    %2071 = vrot.lane.b32.xlu0 %v1334, 24
    %v2072 = vpop.permute.xlu0 %2071
    %2073 = vrot.lane.b32.xlu0 %v1335, 24
    %v2074 = vpop.permute.xlu0 %2073
    %2075 = vrot.lane.b32.xlu0 %v1336, 24
    %v2076 = vpop.permute.xlu0 %2075
    %2077 = vrot.lane.b32.xlu0 %v1337, 24
    %v2078 = vpop.permute.xlu0 %2077
    %2079 = vrot.lane.b32.xlu0 %v1338, 24
    %v2080 = vpop.permute.xlu0 %2079
    %2081 = vrot.lane.b32.xlu0 %v1339, 24
    %v2082 = vpop.permute.xlu0 %2081
    %2083 = vrot.lane.b32.xlu0 %v1340, 24
    %v2084 = vpop.permute.xlu0 %2083
    %2085 = vrot.lane.b32.xlu0 %v1341, 24
    %v2086 = vpop.permute.xlu0 %2085
    %2087 = vrot.lane.b32.xlu0 %v1342, 24
    %v2088 = vpop.permute.xlu0 %2087
    %2089 = vrot.lane.b32.xlu0 %v1343, 24
    %v2090 = vpop.permute.xlu0 %2089
    %2091 = vrot.lane.b32.xlu0 %v1344, 24
    %v2092 = vpop.permute.xlu0 %2091
    %2093 = vrot.lane.b32.xlu0 %v1345, 24
    %v2094 = vpop.permute.xlu0 %2093
    %2095 = vrot.lane.b32.xlu0 %v1346, 24
    %v2096 = vpop.permute.xlu0 %2095
    %2097 = vrot.lane.b32.xlu0 %v1347, 24
    %v2098 = vpop.permute.xlu0 %2097
    %2099 = vrot.lane.b32.xlu0 %v1348, 24
    %v2100 = vpop.permute.xlu0 %2099
    %2101 = vrot.lane.b32.xlu0 %v1349, 24
    %v2102 = vpop.permute.xlu0 %2101
    %2103 = vrot.lane.b32.xlu0 %v1350, 24
    %v2104 = vpop.permute.xlu0 %2103
    %2105 = vrot.lane.b32.xlu0 %v1351, 24
    %v2106 = vpop.permute.xlu0 %2105
    %2107 = vrot.lane.b32.xlu0 %v1352, 24
    %v2108 = vpop.permute.xlu0 %2107
    %2109 = vrot.lane.b32.xlu0 %v1353, 24
    %v2110 = vpop.permute.xlu0 %2109
    %2111 = vrot.lane.b32.xlu0 %v1354, 24
    %v2112 = vpop.permute.xlu0 %2111
    %2113 = vrot.lane.b32.xlu0 %v1355, 24
    %v2114 = vpop.permute.xlu0 %2113
    %2115 = vrot.lane.b32.xlu0 %v1356, 24
    %v2116 = vpop.permute.xlu0 %2115
    %2117 = vrot.lane.b32.xlu0 %v1357, 24
    %v2118 = vpop.permute.xlu0 %2117
    %2119 = vrot.lane.b32.xlu0 %v1358, 24
    %v2120 = vpop.permute.xlu0 %2119
    %2121 = vrot.lane.b32.xlu0 %v1359, 24
    %v2122 = vpop.permute.xlu0 %2121
    %2123 = vrot.lane.b32.xlu0 %v1360, 24
    %v2124 = vpop.permute.xlu0 %2123
    %2125 = vrot.lane.b32.xlu0 %v1361, 24
    %v2126 = vpop.permute.xlu0 %2125
    %2127 = vrot.lane.b32.xlu0 %v1362, 24
    %v2128 = vpop.permute.xlu0 %2127
    %2129 = vrot.lane.b32.xlu0 %v1363, 24
    %v2130 = vpop.permute.xlu0 %2129
    %2131 = vrot.lane.b32.xlu0 %v1364, 24
    %v2132 = vpop.permute.xlu0 %2131
    %2133 = vrot.lane.b32.xlu0 %v1365, 24
    %v2134 = vpop.permute.xlu0 %2133
    %2167 = vrot.lane.b32.xlu0 %v1430, 32
    %v2168 = vpop.permute.xlu0 %2167
    %2169 = vrot.lane.b32.xlu0 %v1431, 32
    %v2170 = vpop.permute.xlu0 %2169
    %2171 = vrot.lane.b32.xlu0 %v1432, 32
    %v2172 = vpop.permute.xlu0 %2171
    %2173 = vrot.lane.b32.xlu0 %v1433, 32
    %v2174 = vpop.permute.xlu0 %2173
    %2175 = vrot.lane.b32.xlu0 %v1434, 32
    %v2176 = vpop.permute.xlu0 %2175
    %2177 = vrot.lane.b32.xlu0 %v1435, 32
    %v2178 = vpop.permute.xlu0 %2177
    %2179 = vrot.lane.b32.xlu0 %v1436, 32
    %v2180 = vpop.permute.xlu0 %2179
    %2181 = vrot.lane.b32.xlu0 %v1437, 32
    %v2182 = vpop.permute.xlu0 %2181
    %2183 = vrot.lane.b32.xlu0 %v1438, 32
    %v2184 = vpop.permute.xlu0 %2183
    %2185 = vrot.lane.b32.xlu0 %v1439, 32
    %v2186 = vpop.permute.xlu0 %2185
    %2187 = vrot.lane.b32.xlu0 %v1440, 32
    %v2188 = vpop.permute.xlu0 %2187
    %2189 = vrot.lane.b32.xlu0 %v1441, 32
    %v2190 = vpop.permute.xlu0 %2189
    %2191 = vrot.lane.b32.xlu0 %v1442, 32
    %v2192 = vpop.permute.xlu0 %2191
    %2193 = vrot.lane.b32.xlu0 %v1443, 32
    %v2194 = vpop.permute.xlu0 %2193
    %2195 = vrot.lane.b32.xlu0 %v1444, 32
    %v2196 = vpop.permute.xlu0 %2195
    %2197 = vrot.lane.b32.xlu0 %v1445, 32
    %v2198 = vpop.permute.xlu0 %2197
    %2199 = vrot.lane.b32.xlu0 %v1446, 32
    %v2200 = vpop.permute.xlu0 %2199
    %2201 = vrot.lane.b32.xlu0 %v1447, 32
    %v2202 = vpop.permute.xlu0 %2201
    %2203 = vrot.lane.b32.xlu0 %v1448, 32
    %v2204 = vpop.permute.xlu0 %2203
    %2205 = vrot.lane.b32.xlu0 %v1449, 32
    %v2206 = vpop.permute.xlu0 %2205
    %2207 = vrot.lane.b32.xlu0 %v1450, 32
    %v2208 = vpop.permute.xlu0 %2207
    %2209 = vrot.lane.b32.xlu0 %v1451, 32
    %v2210 = vpop.permute.xlu0 %2209
    %2211 = vrot.lane.b32.xlu0 %v1452, 32
    %v2212 = vpop.permute.xlu0 %2211
    %2213 = vrot.lane.b32.xlu0 %v1453, 32
    %v2214 = vpop.permute.xlu0 %2213
    %2215 = vrot.lane.b32.xlu0 %v1454, 32
    %v2216 = vpop.permute.xlu0 %2215
    %2217 = vrot.lane.b32.xlu0 %v1455, 32
    %v2218 = vpop.permute.xlu0 %2217
    %2219 = vrot.lane.b32.xlu0 %v1456, 32
    %v2220 = vpop.permute.xlu0 %2219
    %2221 = vrot.lane.b32.xlu0 %v1457, 32
    %v2222 = vpop.permute.xlu0 %2221
    %2223 = vrot.lane.b32.xlu0 %v1458, 32
    %v2224 = vpop.permute.xlu0 %2223
    %2225 = vrot.lane.b32.xlu0 %v1459, 32
    %v2226 = vpop.permute.xlu0 %2225
    %2227 = vrot.lane.b32.xlu0 %v1460, 32
    %v2228 = vpop.permute.xlu0 %2227
    %2229 = vrot.lane.b32.xlu0 %v1461, 32
    %v2230 = vpop.permute.xlu0 %2229
    %2263 = vrot.lane.b32.xlu0 %v1526, 40
    %v2264 = vpop.permute.xlu0 %2263
    %2265 = vrot.lane.b32.xlu0 %v1527, 40
    %v2266 = vpop.permute.xlu0 %2265
    %2267 = vrot.lane.b32.xlu0 %v1528, 40
    %v2268 = vpop.permute.xlu0 %2267
    %2269 = vrot.lane.b32.xlu0 %v1529, 40
    %v2270 = vpop.permute.xlu0 %2269
    %2271 = vrot.lane.b32.xlu0 %v1530, 40
    %v2272 = vpop.permute.xlu0 %2271
    %2273 = vrot.lane.b32.xlu0 %v1531, 40
    %v2274 = vpop.permute.xlu0 %2273
    %2275 = vrot.lane.b32.xlu0 %v1532, 40
    %v2276 = vpop.permute.xlu0 %2275
    %2277 = vrot.lane.b32.xlu0 %v1533, 40
    %v2278 = vpop.permute.xlu0 %2277
    %2279 = vrot.lane.b32.xlu0 %v1534, 40
    %v2280 = vpop.permute.xlu0 %2279
    %2281 = vrot.lane.b32.xlu0 %v1535, 40
    %v2282 = vpop.permute.xlu0 %2281
    %2283 = vrot.lane.b32.xlu0 %v1536, 40
    %v2284 = vpop.permute.xlu0 %2283
    %2285 = vrot.lane.b32.xlu0 %v1537, 40
    %v2286 = vpop.permute.xlu0 %2285
    %2287 = vrot.lane.b32.xlu0 %v1538, 40
    %v2288 = vpop.permute.xlu0 %2287
    %2289 = vrot.lane.b32.xlu0 %v1539, 40
    %v2290 = vpop.permute.xlu0 %2289
    %2291 = vrot.lane.b32.xlu0 %v1540, 40
    %v2292 = vpop.permute.xlu0 %2291
    %2293 = vrot.lane.b32.xlu0 %v1541, 40
    %v2294 = vpop.permute.xlu0 %2293
    %2295 = vrot.lane.b32.xlu0 %v1542, 40
    %v2296 = vpop.permute.xlu0 %2295
    %2297 = vrot.lane.b32.xlu0 %v1543, 40
    %v2298 = vpop.permute.xlu0 %2297
    %2299 = vrot.lane.b32.xlu0 %v1544, 40
    %v2300 = vpop.permute.xlu0 %2299
    %2301 = vrot.lane.b32.xlu0 %v1545, 40
    %v2302 = vpop.permute.xlu0 %2301
    %2303 = vrot.lane.b32.xlu0 %v1546, 40
    %v2304 = vpop.permute.xlu0 %2303
    %2305 = vrot.lane.b32.xlu0 %v1547, 40
    %v2306 = vpop.permute.xlu0 %2305
    %2307 = vrot.lane.b32.xlu0 %v1548, 40
    %v2308 = vpop.permute.xlu0 %2307
    %2309 = vrot.lane.b32.xlu0 %v1549, 40
    %v2310 = vpop.permute.xlu0 %2309
    %2311 = vrot.lane.b32.xlu0 %v1550, 40
    %v2312 = vpop.permute.xlu0 %2311
    %2313 = vrot.lane.b32.xlu0 %v1551, 40
    %v2314 = vpop.permute.xlu0 %2313
    %2315 = vrot.lane.b32.xlu0 %v1552, 40
    %v2316 = vpop.permute.xlu0 %2315
    %2317 = vrot.lane.b32.xlu0 %v1553, 40
    %v2318 = vpop.permute.xlu0 %2317
    %2319 = vrot.lane.b32.xlu0 %v1554, 40
    %v2320 = vpop.permute.xlu0 %2319
    %2321 = vrot.lane.b32.xlu0 %v1555, 40
    %v2322 = vpop.permute.xlu0 %2321
    %2323 = vrot.lane.b32.xlu0 %v1556, 40
    %v2324 = vpop.permute.xlu0 %2323
    %2325 = vrot.lane.b32.xlu0 %v1557, 40
    %v2326 = vpop.permute.xlu0 %2325
    %2359 = vrot.lane.b32.xlu0 %v1623, 48
    %v2360 = vpop.permute.xlu0 %2359
    %2361 = vrot.lane.b32.xlu0 %v1624, 48
    %v2362 = vpop.permute.xlu0 %2361
    %2363 = vrot.lane.b32.xlu0 %v1625, 48
    %v2364 = vpop.permute.xlu0 %2363
    %2365 = vrot.lane.b32.xlu0 %v1626, 48
    %v2366 = vpop.permute.xlu0 %2365
    %2367 = vrot.lane.b32.xlu0 %v1627, 48
    %v2368 = vpop.permute.xlu0 %2367
    %2369 = vrot.lane.b32.xlu0 %v1628, 48
    %v2370 = vpop.permute.xlu0 %2369
    %2371 = vrot.lane.b32.xlu0 %v1629, 48
    %v2372 = vpop.permute.xlu0 %2371
    %2373 = vrot.lane.b32.xlu0 %v1630, 48
    %v2374 = vpop.permute.xlu0 %2373
    %2375 = vrot.lane.b32.xlu0 %v1631, 48
    %v2376 = vpop.permute.xlu0 %2375
    %2377 = vrot.lane.b32.xlu0 %v1632, 48
    %v2378 = vpop.permute.xlu0 %2377
    %2379 = vrot.lane.b32.xlu0 %v1633, 48
    %v2380 = vpop.permute.xlu0 %2379
    %2381 = vrot.lane.b32.xlu0 %v1634, 48
    %v2382 = vpop.permute.xlu0 %2381
    %2383 = vrot.lane.b32.xlu0 %v1635, 48
    %v2384 = vpop.permute.xlu0 %2383
    %2385 = vrot.lane.b32.xlu0 %v1636, 48
    %v2386 = vpop.permute.xlu0 %2385
    %2387 = vrot.lane.b32.xlu0 %v1637, 48
    %v2388 = vpop.permute.xlu0 %2387
    %2389 = vrot.lane.b32.xlu0 %v1638, 48
    %v2390 = vpop.permute.xlu0 %2389
    %2391 = vrot.lane.b32.xlu0 %v1639, 48
    %v2392 = vpop.permute.xlu0 %2391
    %2393 = vrot.lane.b32.xlu0 %v1640, 48
    %v2394 = vpop.permute.xlu0 %2393
    %2395 = vrot.lane.b32.xlu0 %v1641, 48
    %v2396 = vpop.permute.xlu0 %2395
    %2397 = vrot.lane.b32.xlu0 %v1642, 48
    %v2398 = vpop.permute.xlu0 %2397
    %2399 = vrot.lane.b32.xlu0 %v1643, 48
    %v2400 = vpop.permute.xlu0 %2399
    %2401 = vrot.lane.b32.xlu0 %v1644, 48
    %v2402 = vpop.permute.xlu0 %2401
    %2403 = vrot.lane.b32.xlu0 %v1645, 48
    %v2404 = vpop.permute.xlu0 %2403
    %2405 = vrot.lane.b32.xlu0 %v1646, 48
    %v2406 = vpop.permute.xlu0 %2405
    %2407 = vrot.lane.b32.xlu0 %v1647, 48
    %v2408 = vpop.permute.xlu0 %2407
    %2409 = vrot.lane.b32.xlu0 %v1648, 48
    %v2410 = vpop.permute.xlu0 %2409
    %2411 = vrot.lane.b32.xlu0 %v1649, 48
    %v2412 = vpop.permute.xlu0 %2411
    %2413 = vrot.lane.b32.xlu0 %v1650, 48
    %v2414 = vpop.permute.xlu0 %2413
    %2415 = vrot.lane.b32.xlu0 %v1651, 48
    %v2416 = vpop.permute.xlu0 %2415
    %2417 = vrot.lane.b32.xlu0 %v1652, 48
    %v2418 = vpop.permute.xlu0 %2417
    %2419 = vrot.lane.b32.xlu0 %v1653, 48
    %v2420 = vpop.permute.xlu0 %2419
    %2421 = vrot.lane.b32.xlu0 %v1654, 48
    %v2422 = vpop.permute.xlu0 %2421
    %2455 = vrot.lane.b32.xlu0 %v1719, 56
    %v2456 = vpop.permute.xlu0 %2455
    %2457 = vrot.lane.b32.xlu0 %v1720, 56
    %v2458 = vpop.permute.xlu0 %2457
    %2459 = vrot.lane.b32.xlu0 %v1721, 56
    %v2460 = vpop.permute.xlu0 %2459
    %2461 = vrot.lane.b32.xlu0 %v1722, 56
    %v2462 = vpop.permute.xlu0 %2461
    %2463 = vrot.lane.b32.xlu0 %v1723, 56
    %v2464 = vpop.permute.xlu0 %2463
    %2465 = vrot.lane.b32.xlu0 %v1724, 56
    %v2466 = vpop.permute.xlu0 %2465
    %2467 = vrot.lane.b32.xlu0 %v1725, 56
    %v2468 = vpop.permute.xlu0 %2467
    %2469 = vrot.lane.b32.xlu0 %v1726, 56
    %v2470 = vpop.permute.xlu0 %2469
    %2471 = vrot.lane.b32.xlu0 %v1727, 56
    %v2472 = vpop.permute.xlu0 %2471
    %2473 = vrot.lane.b32.xlu0 %v1728, 56
    %v2474 = vpop.permute.xlu0 %2473
    %2475 = vrot.lane.b32.xlu0 %v1729, 56
    %v2476 = vpop.permute.xlu0 %2475
    %2477 = vrot.lane.b32.xlu0 %v1730, 56
    %v2478 = vpop.permute.xlu0 %2477
    %2479 = vrot.lane.b32.xlu0 %v1731, 56
    %v2480 = vpop.permute.xlu0 %2479
    %2481 = vrot.lane.b32.xlu0 %v1732, 56
    %v2482 = vpop.permute.xlu0 %2481
    %2483 = vrot.lane.b32.xlu0 %v1733, 56
    %v2484 = vpop.permute.xlu0 %2483
    %2485 = vrot.lane.b32.xlu0 %v1734, 56
    %v2486 = vpop.permute.xlu0 %2485
    %2487 = vrot.lane.b32.xlu0 %v1735, 56
    %v2488 = vpop.permute.xlu0 %2487
    %2489 = vrot.lane.b32.xlu0 %v1736, 56
    %v2490 = vpop.permute.xlu0 %2489
    %2491 = vrot.lane.b32.xlu0 %v1737, 56
    %v2492 = vpop.permute.xlu0 %2491
    %2493 = vrot.lane.b32.xlu0 %v1738, 56
    %v2494 = vpop.permute.xlu0 %2493
    %2495 = vrot.lane.b32.xlu0 %v1739, 56
    %v2496 = vpop.permute.xlu0 %2495
    %2497 = vrot.lane.b32.xlu0 %v1740, 56
    %v2498 = vpop.permute.xlu0 %2497
    %2499 = vrot.lane.b32.xlu0 %v1741, 56
    %v2500 = vpop.permute.xlu0 %2499
    %2501 = vrot.lane.b32.xlu0 %v1742, 56
    %v2502 = vpop.permute.xlu0 %2501
    %2503 = vrot.lane.b32.xlu0 %v1743, 56
    %v2504 = vpop.permute.xlu0 %2503
    %2505 = vrot.lane.b32.xlu0 %v1744, 56
    %v2506 = vpop.permute.xlu0 %2505
    %2507 = vrot.lane.b32.xlu0 %v1745, 56
    %v2508 = vpop.permute.xlu0 %2507
    %2509 = vrot.lane.b32.xlu0 %v1746, 56
    %v2510 = vpop.permute.xlu0 %2509
    %2511 = vrot.lane.b32.xlu0 %v1747, 56
    %v2512 = vpop.permute.xlu0 %2511
    %2513 = vrot.lane.b32.xlu0 %v1748, 56
    %v2514 = vpop.permute.xlu0 %2513
    %2515 = vrot.lane.b32.xlu0 %v1749, 56
    %v2516 = vpop.permute.xlu0 %2515
    %2517 = vrot.lane.b32.xlu0 %v1750, 56
    %v2518 = vpop.permute.xlu0 %2517
    %2551 = vrot.lane.b32.xlu0 %v1815, 64
    %v2552 = vpop.permute.xlu0 %2551
    %2553 = vrot.lane.b32.xlu0 %v1816, 64
    %v2554 = vpop.permute.xlu0 %2553
    %2555 = vrot.lane.b32.xlu0 %v1817, 64
    %v2556 = vpop.permute.xlu0 %2555
    %2557 = vrot.lane.b32.xlu0 %v1818, 64
    %v2558 = vpop.permute.xlu0 %2557
    %2559 = vrot.lane.b32.xlu0 %v1819, 64
    %v2560 = vpop.permute.xlu0 %2559
    %2561 = vrot.lane.b32.xlu0 %v1820, 64
    %v2562 = vpop.permute.xlu0 %2561
    %2563 = vrot.lane.b32.xlu0 %v1821, 64
    %v2564 = vpop.permute.xlu0 %2563
    %2565 = vrot.lane.b32.xlu0 %v1822, 64
    %v2566 = vpop.permute.xlu0 %2565
    %2567 = vrot.lane.b32.xlu0 %v1823, 64
    %v2568 = vpop.permute.xlu0 %2567
    %2569 = vrot.lane.b32.xlu0 %v1824, 64
    %v2570 = vpop.permute.xlu0 %2569
    %2571 = vrot.lane.b32.xlu0 %v1825, 64
    %v2572 = vpop.permute.xlu0 %2571
    %2573 = vrot.lane.b32.xlu0 %v1826, 64
    %v2574 = vpop.permute.xlu0 %2573
    %2575 = vrot.lane.b32.xlu0 %v1827, 64
    %v2576 = vpop.permute.xlu0 %2575
    %2577 = vrot.lane.b32.xlu0 %v1828, 64
    %v2578 = vpop.permute.xlu0 %2577
    %2579 = vrot.lane.b32.xlu0 %v1829, 64
    %v2580 = vpop.permute.xlu0 %2579
    %2581 = vrot.lane.b32.xlu0 %v1830, 64
    %v2582 = vpop.permute.xlu0 %2581
    %2583 = vrot.lane.b32.xlu0 %v1831, 64
    %v2584 = vpop.permute.xlu0 %2583
    %2585 = vrot.lane.b32.xlu0 %v1832, 64
    %v2586 = vpop.permute.xlu0 %2585
    %2587 = vrot.lane.b32.xlu0 %v1833, 64
    %v2588 = vpop.permute.xlu0 %2587
    %2589 = vrot.lane.b32.xlu0 %v1834, 64
    %v2590 = vpop.permute.xlu0 %2589
    %2591 = vrot.lane.b32.xlu0 %v1835, 64
    %v2592 = vpop.permute.xlu0 %2591
    %2593 = vrot.lane.b32.xlu0 %v1836, 64
    %v2594 = vpop.permute.xlu0 %2593
    %2595 = vrot.lane.b32.xlu0 %v1837, 64
    %v2596 = vpop.permute.xlu0 %2595
    %2597 = vrot.lane.b32.xlu0 %v1838, 64
    %v2598 = vpop.permute.xlu0 %2597
    %2599 = vrot.lane.b32.xlu0 %v1839, 64
    %v2600 = vpop.permute.xlu0 %2599
    %2601 = vrot.lane.b32.xlu0 %v1840, 64
    %v2602 = vpop.permute.xlu0 %2601
    %2603 = vrot.lane.b32.xlu0 %v1841, 64
    %v2604 = vpop.permute.xlu0 %2603
    %2605 = vrot.lane.b32.xlu0 %v1842, 64
    %v2606 = vpop.permute.xlu0 %2605
    %2607 = vrot.lane.b32.xlu0 %v1843, 64
    %v2608 = vpop.permute.xlu0 %2607
    %2609 = vrot.lane.b32.xlu0 %v1844, 64
    %v2610 = vpop.permute.xlu0 %2609
    %2611 = vrot.lane.b32.xlu0 %v1845, 64
    %v2612 = vpop.permute.xlu0 %2611
    %2613 = vrot.lane.b32.xlu0 %v1846, 64
    %v2614 = vpop.permute.xlu0 %2613
    %v2617 = vsel %vm81, %v1046, %v1880
    %v2620 = vsel %vm81, %v1047, %v1882
    %v2623 = vsel %vm81, %v1048, %v1884
    %v2626 = vsel %vm81, %v1049, %v1886
    %v2629 = vsel %vm81, %v1050, %v1888
    %v2632 = vsel %vm81, %v1051, %v1890
    %v2635 = vsel %vm81, %v1052, %v1892
    %v2638 = vsel %vm81, %v1053, %v1894
    %v2641 = vsel %vm81, %v1054, %v1896
    %v2644 = vsel %vm81, %v1055, %v1898
    %v2647 = vsel %vm81, %v1056, %v1900
    %v2650 = vsel %vm81, %v1057, %v1902
    %v2653 = vsel %vm81, %v1058, %v1904
    %v2656 = vsel %vm81, %v1059, %v1906
    %v2659 = vsel %vm81, %v1060, %v1908
    %v2662 = vsel %vm81, %v1061, %v1910
    %v2665 = vsel %vm81, %v1062, %v1912
    %v2668 = vsel %vm81, %v1063, %v1914
    %v2671 = vsel %vm81, %v1064, %v1916
    %v2674 = vsel %vm81, %v1065, %v1918
    %v2677 = vsel %vm81, %v1066, %v1920
    %v2680 = vsel %vm81, %v1067, %v1922
    %v2683 = vsel %vm81, %v1068, %v1924
    %v2686 = vsel %vm81, %v1069, %v1926
    %v2689 = vsel %vm81, %v1070, %v1928
    %v2692 = vsel %vm81, %v1071, %v1930
    %v2695 = vsel %vm81, %v1072, %v1932
    %v2698 = vsel %vm81, %v1073, %v1934
    %v2701 = vsel %vm81, %v1074, %v1936
    %v2704 = vsel %vm81, %v1075, %v1938
    %v2707 = vsel %vm81, %v1076, %v1940
    %v2710 = vsel %vm81, %v1077, %v1942
    %vm2711 = vcmask 130048
    %v2713 = vsel %vm2711, %v2617, %v1976
    %v2715 = vsel %vm2711, %v2620, %v1978
    %v2717 = vsel %vm2711, %v2623, %v1980
    %v2719 = vsel %vm2711, %v2626, %v1982
    %v2721 = vsel %vm2711, %v2629, %v1984
    %v2723 = vsel %vm2711, %v2632, %v1986
    %v2725 = vsel %vm2711, %v2635, %v1988
    %v2727 = vsel %vm2711, %v2638, %v1990
    %v2729 = vsel %vm2711, %v2641, %v1992
    %v2731 = vsel %vm2711, %v2644, %v1994
    %v2733 = vsel %vm2711, %v2647, %v1996
    %v2735 = vsel %vm2711, %v2650, %v1998
    %v2737 = vsel %vm2711, %v2653, %v2000
    %v2739 = vsel %vm2711, %v2656, %v2002
    %v2741 = vsel %vm2711, %v2659, %v2004
    %v2743 = vsel %vm2711, %v2662, %v2006
    %v2745 = vsel %vm2711, %v2665, %v2008
    %v2747 = vsel %vm2711, %v2668, %v2010
    %v2749 = vsel %vm2711, %v2671, %v2012
    %v2751 = vsel %vm2711, %v2674, %v2014
    %v2753 = vsel %vm2711, %v2677, %v2016
    %v2755 = vsel %vm2711, %v2680, %v2018
    %v2757 = vsel %vm2711, %v2683, %v2020
    %v2759 = vsel %vm2711, %v2686, %v2022
    %v2761 = vsel %vm2711, %v2689, %v2024
    %v2763 = vsel %vm2711, %v2692, %v2026
    %v2765 = vsel %vm2711, %v2695, %v2028
    %v2767 = vsel %vm2711, %v2698, %v2030
    %v2769 = vsel %vm2711, %v2701, %v2032
    %v2771 = vsel %vm2711, %v2704, %v2034
    %v2773 = vsel %vm2711, %v2707, %v2036
    %v2775 = vsel %vm2711, %v2710, %v2038
    %vm2776 = vcmask 195584
    %v2778 = vsel %vm2776, %v2713, %v2072
    %v2780 = vsel %vm2776, %v2715, %v2074
    %v2782 = vsel %vm2776, %v2717, %v2076
    %v2784 = vsel %vm2776, %v2719, %v2078
    %v2786 = vsel %vm2776, %v2721, %v2080
    %v2788 = vsel %vm2776, %v2723, %v2082
    %v2790 = vsel %vm2776, %v2725, %v2084
    %v2792 = vsel %vm2776, %v2727, %v2086
    %v2794 = vsel %vm2776, %v2729, %v2088
    %v2796 = vsel %vm2776, %v2731, %v2090
    %v2798 = vsel %vm2776, %v2733, %v2092
    %v2800 = vsel %vm2776, %v2735, %v2094
    %v2802 = vsel %vm2776, %v2737, %v2096
    %v2804 = vsel %vm2776, %v2739, %v2098
    %v2806 = vsel %vm2776, %v2741, %v2100
    %v2808 = vsel %vm2776, %v2743, %v2102
    %v2810 = vsel %vm2776, %v2745, %v2104
    %v2812 = vsel %vm2776, %v2747, %v2106
    %v2814 = vsel %vm2776, %v2749, %v2108
    %v2816 = vsel %vm2776, %v2751, %v2110
    %v2818 = vsel %vm2776, %v2753, %v2112
    %v2820 = vsel %vm2776, %v2755, %v2114
    %v2822 = vsel %vm2776, %v2757, %v2116
    %v2824 = vsel %vm2776, %v2759, %v2118
    %v2826 = vsel %vm2776, %v2761, %v2120
    %v2828 = vsel %vm2776, %v2763, %v2122
    %v2830 = vsel %vm2776, %v2765, %v2124
    %v2832 = vsel %vm2776, %v2767, %v2126
    %v2834 = vsel %vm2776, %v2769, %v2128
    %v2836 = vsel %vm2776, %v2771, %v2130
    %v2838 = vsel %vm2776, %v2773, %v2132
    %v2840 = vsel %vm2776, %v2775, %v2134
    %vm2841 = vcmask 261120
    %v2843 = vsel %vm2841, %v2778, %v2168
    %v2845 = vsel %vm2841, %v2780, %v2170
    %v2847 = vsel %vm2841, %v2782, %v2172
    %v2849 = vsel %vm2841, %v2784, %v2174
    %v2851 = vsel %vm2841, %v2786, %v2176
    %v2853 = vsel %vm2841, %v2788, %v2178
    %v2855 = vsel %vm2841, %v2790, %v2180
    %v2857 = vsel %vm2841, %v2792, %v2182
    %v2859 = vsel %vm2841, %v2794, %v2184
    %v2861 = vsel %vm2841, %v2796, %v2186
    %v2863 = vsel %vm2841, %v2798, %v2188
    %v2865 = vsel %vm2841, %v2800, %v2190
    %v2867 = vsel %vm2841, %v2802, %v2192
    %v2869 = vsel %vm2841, %v2804, %v2194
    %v2871 = vsel %vm2841, %v2806, %v2196
    %v2873 = vsel %vm2841, %v2808, %v2198
    %v2875 = vsel %vm2841, %v2810, %v2200
    %v2877 = vsel %vm2841, %v2812, %v2202
    %v2879 = vsel %vm2841, %v2814, %v2204
    %v2881 = vsel %vm2841, %v2816, %v2206
    %v2883 = vsel %vm2841, %v2818, %v2208
    %v2885 = vsel %vm2841, %v2820, %v2210
    %v2887 = vsel %vm2841, %v2822, %v2212
    %v2889 = vsel %vm2841, %v2824, %v2214
    %v2891 = vsel %vm2841, %v2826, %v2216
    %v2893 = vsel %vm2841, %v2828, %v2218
    %v2895 = vsel %vm2841, %v2830, %v2220
    %v2897 = vsel %vm2841, %v2832, %v2222
    %v2899 = vsel %vm2841, %v2834, %v2224
    %v2901 = vsel %vm2841, %v2836, %v2226
    %v2903 = vsel %vm2841, %v2838, %v2228
    %v2905 = vsel %vm2841, %v2840, %v2230
    %vm2906 = vcmask 326656
    %v2908 = vsel %vm2906, %v2843, %v2264
    %v2910 = vsel %vm2906, %v2845, %v2266
    %v2912 = vsel %vm2906, %v2847, %v2268
    %v2914 = vsel %vm2906, %v2849, %v2270
    %v2916 = vsel %vm2906, %v2851, %v2272
    %v2918 = vsel %vm2906, %v2853, %v2274
    %v2920 = vsel %vm2906, %v2855, %v2276
    %v2922 = vsel %vm2906, %v2857, %v2278
    %v2924 = vsel %vm2906, %v2859, %v2280
    %v2926 = vsel %vm2906, %v2861, %v2282
    %v2928 = vsel %vm2906, %v2863, %v2284
    %v2930 = vsel %vm2906, %v2865, %v2286
    %v2932 = vsel %vm2906, %v2867, %v2288
    %v2934 = vsel %vm2906, %v2869, %v2290
    %v2936 = vsel %vm2906, %v2871, %v2292
    %v2938 = vsel %vm2906, %v2873, %v2294
    %v2940 = vsel %vm2906, %v2875, %v2296
    %v2942 = vsel %vm2906, %v2877, %v2298
    %v2944 = vsel %vm2906, %v2879, %v2300
    %v2946 = vsel %vm2906, %v2881, %v2302
    %v2948 = vsel %vm2906, %v2883, %v2304
    %v2950 = vsel %vm2906, %v2885, %v2306
    %v2952 = vsel %vm2906, %v2887, %v2308
    %v2954 = vsel %vm2906, %v2889, %v2310
    %v2956 = vsel %vm2906, %v2891, %v2312
    %v2958 = vsel %vm2906, %v2893, %v2314
    %v2960 = vsel %vm2906, %v2895, %v2316
    %v2962 = vsel %vm2906, %v2897, %v2318
    %v2964 = vsel %vm2906, %v2899, %v2320
    %v2966 = vsel %vm2906, %v2901, %v2322
    %v2968 = vsel %vm2906, %v2903, %v2324
    %v2970 = vsel %vm2906, %v2905, %v2326
    %vm2971 = vcmask 392192
    %v2973 = vsel %vm2971, %v2908, %v2360
    %v2975 = vsel %vm2971, %v2910, %v2362
    %v2977 = vsel %vm2971, %v2912, %v2364
    %v2979 = vsel %vm2971, %v2914, %v2366
    %v2981 = vsel %vm2971, %v2916, %v2368
    %v2983 = vsel %vm2971, %v2918, %v2370
    %v2985 = vsel %vm2971, %v2920, %v2372
    %v2987 = vsel %vm2971, %v2922, %v2374
    %v2989 = vsel %vm2971, %v2924, %v2376
    %v2991 = vsel %vm2971, %v2926, %v2378
    %v2993 = vsel %vm2971, %v2928, %v2380
    %v2995 = vsel %vm2971, %v2930, %v2382
    %v2997 = vsel %vm2971, %v2932, %v2384
    %v2999 = vsel %vm2971, %v2934, %v2386
    %v3001 = vsel %vm2971, %v2936, %v2388
    %v3003 = vsel %vm2971, %v2938, %v2390
    %v3005 = vsel %vm2971, %v2940, %v2392
    %v3007 = vsel %vm2971, %v2942, %v2394
    %v3009 = vsel %vm2971, %v2944, %v2396
    %v3011 = vsel %vm2971, %v2946, %v2398
    %v3013 = vsel %vm2971, %v2948, %v2400
    %v3015 = vsel %vm2971, %v2950, %v2402
    %v3017 = vsel %vm2971, %v2952, %v2404
    %v3019 = vsel %vm2971, %v2954, %v2406
    %v3021 = vsel %vm2971, %v2956, %v2408
    %v3023 = vsel %vm2971, %v2958, %v2410
    %v3025 = vsel %vm2971, %v2960, %v2412
    %v3027 = vsel %vm2971, %v2962, %v2414
    %v3029 = vsel %vm2971, %v2964, %v2416
    %v3031 = vsel %vm2971, %v2966, %v2418
    %v3033 = vsel %vm2971, %v2968, %v2420
    %v3035 = vsel %vm2971, %v2970, %v2422
    %vm3036 = vcmask 457728
    %v3038 = vsel %vm3036, %v2973, %v2456
    %v3040 = vsel %vm3036, %v2975, %v2458
    %v3042 = vsel %vm3036, %v2977, %v2460
    %v3044 = vsel %vm3036, %v2979, %v2462
    %v3046 = vsel %vm3036, %v2981, %v2464
    %v3048 = vsel %vm3036, %v2983, %v2466
    %v3050 = vsel %vm3036, %v2985, %v2468
    %v3052 = vsel %vm3036, %v2987, %v2470
    %v3054 = vsel %vm3036, %v2989, %v2472
    %v3056 = vsel %vm3036, %v2991, %v2474
    %v3058 = vsel %vm3036, %v2993, %v2476
    %v3060 = vsel %vm3036, %v2995, %v2478
    %v3062 = vsel %vm3036, %v2997, %v2480
    %v3064 = vsel %vm3036, %v2999, %v2482
    %v3066 = vsel %vm3036, %v3001, %v2484
    %v3068 = vsel %vm3036, %v3003, %v2486
    %v3070 = vsel %vm3036, %v3005, %v2488
    %v3072 = vsel %vm3036, %v3007, %v2490
    %v3074 = vsel %vm3036, %v3009, %v2492
    %v3076 = vsel %vm3036, %v3011, %v2494
    %v3078 = vsel %vm3036, %v3013, %v2496
    %v3080 = vsel %vm3036, %v3015, %v2498
    %v3082 = vsel %vm3036, %v3017, %v2500
    %v3084 = vsel %vm3036, %v3019, %v2502
    %v3086 = vsel %vm3036, %v3021, %v2504
    %v3088 = vsel %vm3036, %v3023, %v2506
    %v3090 = vsel %vm3036, %v3025, %v2508
    %v3092 = vsel %vm3036, %v3027, %v2510
    %v3094 = vsel %vm3036, %v3029, %v2512
    %v3096 = vsel %vm3036, %v3031, %v2514
    %v3098 = vsel %vm3036, %v3033, %v2516
    %v3100 = vsel %vm3036, %v3035, %v2518
    %vm3101 = vcmask 523264
    %v3103 = vsel %vm3101, %v3038, %v2552
    %v3105 = vsel %vm3101, %v3040, %v2554
    %v3107 = vsel %vm3101, %v3042, %v2556
    %v3109 = vsel %vm3101, %v3044, %v2558
    %v3111 = vsel %vm3101, %v3046, %v2560
    %v3113 = vsel %vm3101, %v3048, %v2562
    %v3115 = vsel %vm3101, %v3050, %v2564
    %v3117 = vsel %vm3101, %v3052, %v2566
    %v3119 = vsel %vm3101, %v3054, %v2568
    %v3121 = vsel %vm3101, %v3056, %v2570
    %v3123 = vsel %vm3101, %v3058, %v2572
    %v3125 = vsel %vm3101, %v3060, %v2574
    %v3127 = vsel %vm3101, %v3062, %v2576
    %v3129 = vsel %vm3101, %v3064, %v2578
    %v3131 = vsel %vm3101, %v3066, %v2580
    %v3133 = vsel %vm3101, %v3068, %v2582
    %v3135 = vsel %vm3101, %v3070, %v2584
    %v3137 = vsel %vm3101, %v3072, %v2586
    %v3139 = vsel %vm3101, %v3074, %v2588
    %v3141 = vsel %vm3101, %v3076, %v2590
    %v3143 = vsel %vm3101, %v3078, %v2592
    %v3145 = vsel %vm3101, %v3080, %v2594
    %v3147 = vsel %vm3101, %v3082, %v2596
    %v3149 = vsel %vm3101, %v3084, %v2598
    %v3151 = vsel %vm3101, %v3086, %v2600
    %v3153 = vsel %vm3101, %v3088, %v2602
    %v3155 = vsel %vm3101, %v3090, %v2604
    %v3157 = vsel %vm3101, %v3092, %v2606
    %v3159 = vsel %vm3101, %v3094, %v2608
    %v3161 = vsel %vm3101, %v3096, %v2610
    %v3163 = vsel %vm3101, %v3098, %v2612
    %v3165 = vsel %vm3101, %v3100, %v2614
    %v3166 = vld [vmem:[#allocation6] sm:$0xf]
    %v3167 = vld [vmem:[#allocation6 + $0x4] sm:$0xf]
    %v3168 = vld [vmem:[#allocation6 + $0x8] sm:$0xf]
    %v3169 = vld [vmem:[#allocation6 + $0xc] sm:$0xf]
    %v3170 = vld [vmem:[#allocation6 + $0x10] sm:$0xf]
    %v3171 = vld [vmem:[#allocation6 + $0x14] sm:$0xf]
    %v3172 = vld [vmem:[#allocation6 + $0x18] sm:$0xf]
    %v3173 = vld [vmem:[#allocation6 + $0x1c] sm:$0xf]
    %v3174 = vld [vmem:[#allocation6 + $0x20] sm:$0xf]
    %v3184 = vunpack.c.l.b16 %v3166
    %v3185 = vunpack.c.l.b16 %v3167
    %v3186 = vunpack.c.l.b16 %v3168
    %v3187 = vunpack.c.l.b16 %v3169
    %v3188 = vunpack.c.l.b16 %v3170
    %v3189 = vunpack.c.l.b16 %v3171
    %v3190 = vunpack.c.l.b16 %v3172
    %v3191 = vunpack.c.l.b16 %v3173
    %v3192 = vunpack.c.l.b16 %v3174
    %v3193 = vpack.c.b16 %v3185, %v3184
    %v3194 = vpack.c.b16 %v3187, %v3186
    %v3195 = vpack.c.b16 %v3189, %v3188
    %v3196 = vpack.c.b16 %v3191, %v3190
    %v3197 = vpack.c.b16 %v3192, %v3192
    %vm3202 = vcmask 588800
    %v3203 = vsel %vm3202, %v3103, 0
    %v3205 = vsel %vm3202, %v3105, 0
    %v3207 = vsel %vm3202, %v3107, 0
    %v3209 = vsel %vm3202, %v3109, 0
    %v3211 = vsel %vm3202, %v3111, 0
    %v3213 = vsel %vm3202, %v3113, 0
    %v3215 = vsel %vm3202, %v3115, 0
    %v3217 = vsel %vm3202, %v3117, 0
    %v3219 = vsel %vm3202, %v3119, 0
    %v3221 = vsel %vm3202, %v3121, 0
    %v3223 = vsel %vm3202, %v3123, 0
    %v3225 = vsel %vm3202, %v3125, 0
    %v3227 = vsel %vm3202, %v3127, 0
    %v3229 = vsel %vm3202, %v3129, 0
    %v3231 = vsel %vm3202, %v3131, 0
    %v3233 = vsel %vm3202, %v3133, 0
    %v3235 = vsel %vm3202, %v3135, 0
    %v3237 = vsel %vm3202, %v3137, 0
    %v3239 = vsel %vm3202, %v3139, 0
    %v3241 = vsel %vm3202, %v3141, 0
    %v3243 = vsel %vm3202, %v3143, 0
    %v3245 = vsel %vm3202, %v3145, 0
    %v3247 = vsel %vm3202, %v3147, 0
    %v3249 = vsel %vm3202, %v3149, 0
    %v3251 = vsel %vm3202, %v3151, 0
    %v3253 = vsel %vm3202, %v3153, 0
    %v3255 = vsel %vm3202, %v3155, 0
    %v3257 = vsel %vm3202, %v3157, 0
    %v3259 = vsel %vm3202, %v3159, 0
    %v3261 = vsel %vm3202, %v3161, 0
    %v3263 = vsel %vm3202, %v3163, 0
    %v3265 = vsel %vm3202, %v3165, 0
    %vm3267 = vcmask 1043456
    %v3269 = vsel %vm3267, %v3197, 0
    %3271 = vmatprep.subr.bf16.mxu0 0
    %3272 = vmatpush1.bf16.msra.mxu0 0
    %3273 = vmatprep.subr.bf16.mxu0 0
    %3274 = vmatpush1.bf16.msra.mxu0 0
    %3275 = vmatprep.subr.bf16.mxu0 0
    %3276 = vmatpush1.bf16.msra.mxu0 0
    %3277 = vmatprep.subr.bf16.mxu0 0
    %3278 = vmatpush1.bf16.msra.mxu0 %v3269
    %3279 = vmatprep.subr.bf16.mxu0 0
    %3280 = vmatpush1.bf16.msra.mxu0 %v3196
    %3281 = vmatprep.subr.bf16.mxu0 0
    %3282 = vmatpush1.bf16.msra.mxu0 %v3195
    %3283 = vmatprep.subr.bf16.mxu0 0
    %3284 = vmatpush1.bf16.msra.mxu0 %v3194
    %3285 = vmatprep.subr.bf16.mxu0 0
    %3286 = vmatpush1.bf16.msra.mxu0 %v3193
    %3287 = vmatprep.subr.bf16.mxu0 0
    %3288 = vmatpush2.bf16.msra.mxu0 0
    %3289 = vmatprep.subr.bf16.mxu0 0
    %3290 = vmatpush2.bf16.msra.mxu0 0
    %3291 = vmatprep.subr.bf16.mxu0 0
    %3292 = vmatpush2.bf16.msra.mxu0 0
    %3293 = vmatprep.subr.bf16.mxu0 0
    %3294 = vmatpush2.bf16.msra.mxu0 0
    %3295 = vmatprep.subr.bf16.mxu0 0
    %3296 = vmatpush2.bf16.msra.mxu0 0
    %3297 = vmatprep.subr.bf16.mxu0 0
    %3298 = vmatpush2.bf16.msra.mxu0 0
    %3299 = vmatprep.subr.bf16.mxu0 0
    %3300 = vmatpush2.bf16.msra.mxu0 0
    %3301 = vmatprep.subr.bf16.mxu0 0
    %3302 = vmatpush2.bf16.msra.mxu0 0
    %3303 = vmatprep.mubr.bf16.mxu0 0
    %3304 = vmatmul.mubr.bf16.gmra.mxu0 %v3203
    %v3305 = vpop.f32.mrf.mxu0
    %v3306 = vadd.f32 0.0, %v3305
    %v3307 = vpop.f32.mrf.mxu0
    %v3308 = vpop.f32.mrf.mxu0
    %v3309 = vadd.f32 0.0, %v3308
    %v3310 = vpop.f32.mrf.mxu0
    %3311 = vmatprep.mubr.bf16.mxu0 0
    %3312 = vmatmul.mubr.bf16.gmra.mxu0 %v3205
    %v3313 = vpop.f32.mrf.mxu0
    %v3314 = vadd.f32 0.0, %v3313
    %v3315 = vpop.f32.mrf.mxu0
    %v3316 = vpop.f32.mrf.mxu0
    %v3317 = vadd.f32 0.0, %v3316
    %v3318 = vpop.f32.mrf.mxu0
    %3319 = vmatprep.mubr.bf16.mxu0 0
    %3320 = vmatmul.mubr.bf16.gmra.mxu0 %v3207
    %v3321 = vpop.f32.mrf.mxu0
    %v3322 = vadd.f32 0.0, %v3321
    %v3323 = vpop.f32.mrf.mxu0
    %v3324 = vpop.f32.mrf.mxu0
    %v3325 = vadd.f32 0.0, %v3324
    %v3326 = vpop.f32.mrf.mxu0
    %3327 = vmatprep.mubr.bf16.mxu0 0
    %3328 = vmatmul.mubr.bf16.gmra.mxu0 %v3209
    %v3329 = vpop.f32.mrf.mxu0
    %v3330 = vadd.f32 0.0, %v3329
    %v3331 = vpop.f32.mrf.mxu0
    %v3332 = vpop.f32.mrf.mxu0
    %v3333 = vadd.f32 0.0, %v3332
    %v3334 = vpop.f32.mrf.mxu0
    %3335 = vmatprep.mubr.bf16.mxu0 0
    %3336 = vmatmul.mubr.bf16.gmra.mxu0 %v3211
    %v3337 = vpop.f32.mrf.mxu0
    %v3338 = vadd.f32 0.0, %v3337
    %v3339 = vpop.f32.mrf.mxu0
    %v3340 = vpop.f32.mrf.mxu0
    %v3341 = vadd.f32 0.0, %v3340
    %v3342 = vpop.f32.mrf.mxu0
    %3343 = vmatprep.mubr.bf16.mxu0 0
    %3344 = vmatmul.mubr.bf16.gmra.mxu0 %v3213
    %v3345 = vpop.f32.mrf.mxu0
    %v3346 = vadd.f32 0.0, %v3345
    %v3347 = vpop.f32.mrf.mxu0
    %v3348 = vpop.f32.mrf.mxu0
    %v3349 = vadd.f32 0.0, %v3348
    %v3350 = vpop.f32.mrf.mxu0
    %3351 = vmatprep.mubr.bf16.mxu0 0
    %3352 = vmatmul.mubr.bf16.gmra.mxu0 %v3215
    %v3353 = vpop.f32.mrf.mxu0
    %v3354 = vadd.f32 0.0, %v3353
    %v3355 = vpop.f32.mrf.mxu0
    %v3356 = vpop.f32.mrf.mxu0
    %v3357 = vadd.f32 0.0, %v3356
    %v3358 = vpop.f32.mrf.mxu0
    %3359 = vmatprep.mubr.bf16.mxu0 0
    %3360 = vmatmul.mubr.bf16.gmra.mxu0 %v3217
    %v3361 = vpop.f32.mrf.mxu0
    %v3362 = vadd.f32 0.0, %v3361
    %v3363 = vpop.f32.mrf.mxu0
    %v3364 = vpop.f32.mrf.mxu0
    %v3365 = vadd.f32 0.0, %v3364
    %v3366 = vpop.f32.mrf.mxu0
    %3367 = vmatprep.mubr.bf16.mxu0 0
    %3368 = vmatmul.mubr.bf16.gmra.mxu0 %v3219
    %v3369 = vpop.f32.mrf.mxu0
    %v3370 = vadd.f32 0.0, %v3369
    %v3371 = vpop.f32.mrf.mxu0
    %v3372 = vpop.f32.mrf.mxu0
    %v3373 = vadd.f32 0.0, %v3372
    %v3374 = vpop.f32.mrf.mxu0
    %3375 = vmatprep.mubr.bf16.mxu0 0
    %3376 = vmatmul.mubr.bf16.gmra.mxu0 %v3221
    %v3377 = vpop.f32.mrf.mxu0
    %v3378 = vadd.f32 0.0, %v3377
    %v3379 = vpop.f32.mrf.mxu0
    %v3380 = vpop.f32.mrf.mxu0
    %v3381 = vadd.f32 0.0, %v3380
    %v3382 = vpop.f32.mrf.mxu0
    %3383 = vmatprep.mubr.bf16.mxu0 0
    %3384 = vmatmul.mubr.bf16.gmra.mxu0 %v3223
    %v3385 = vpop.f32.mrf.mxu0
    %v3386 = vadd.f32 0.0, %v3385
    %v3387 = vpop.f32.mrf.mxu0
    %v3388 = vpop.f32.mrf.mxu0
    %v3389 = vadd.f32 0.0, %v3388
    %v3390 = vpop.f32.mrf.mxu0
    %3391 = vmatprep.mubr.bf16.mxu0 0
    %3392 = vmatmul.mubr.bf16.gmra.mxu0 %v3225
    %v3393 = vpop.f32.mrf.mxu0
    %v3394 = vadd.f32 0.0, %v3393
    %v3395 = vpop.f32.mrf.mxu0
    %v3396 = vpop.f32.mrf.mxu0
    %v3397 = vadd.f32 0.0, %v3396
    %v3398 = vpop.f32.mrf.mxu0
    %3399 = vmatprep.mubr.bf16.mxu0 0
    %3400 = vmatmul.mubr.bf16.gmra.mxu0 %v3227
    %v3401 = vpop.f32.mrf.mxu0
    %v3402 = vadd.f32 0.0, %v3401
    %v3403 = vpop.f32.mrf.mxu0
    %v3404 = vpop.f32.mrf.mxu0
    %v3405 = vadd.f32 0.0, %v3404
    %v3406 = vpop.f32.mrf.mxu0
    %3407 = vmatprep.mubr.bf16.mxu0 0
    %3408 = vmatmul.mubr.bf16.gmra.mxu0 %v3229
    %v3409 = vpop.f32.mrf.mxu0
    %v3410 = vadd.f32 0.0, %v3409
    %v3411 = vpop.f32.mrf.mxu0
    %v3412 = vpop.f32.mrf.mxu0
    %v3413 = vadd.f32 0.0, %v3412
    %v3414 = vpop.f32.mrf.mxu0
    %3415 = vmatprep.mubr.bf16.mxu0 0
    %3416 = vmatmul.mubr.bf16.gmra.mxu0 %v3231
    %v3417 = vpop.f32.mrf.mxu0
    %v3418 = vadd.f32 0.0, %v3417
    %v3419 = vpop.f32.mrf.mxu0
    %v3420 = vpop.f32.mrf.mxu0
    %v3421 = vadd.f32 0.0, %v3420
    %v3422 = vpop.f32.mrf.mxu0
    %3423 = vmatprep.mubr.bf16.mxu0 0
    %3424 = vmatmul.mubr.bf16.gmra.mxu0 %v3233
    %v3425 = vpop.f32.mrf.mxu0
    %v3426 = vadd.f32 0.0, %v3425
    %v3427 = vpop.f32.mrf.mxu0
    %v3428 = vpop.f32.mrf.mxu0
    %v3429 = vadd.f32 0.0, %v3428
    %v3430 = vpop.f32.mrf.mxu0
    %3431 = vmatprep.mubr.bf16.mxu0 0
    %3432 = vmatmul.mubr.bf16.gmra.mxu0 %v3235
    %v3433 = vpop.f32.mrf.mxu0
    %v3434 = vadd.f32 0.0, %v3433
    %v3435 = vpop.f32.mrf.mxu0
    %v3436 = vpop.f32.mrf.mxu0
    %v3437 = vadd.f32 0.0, %v3436
    %v3438 = vpop.f32.mrf.mxu0
    %3439 = vmatprep.mubr.bf16.mxu0 0
    %3440 = vmatmul.mubr.bf16.gmra.mxu0 %v3237
    %v3441 = vpop.f32.mrf.mxu0
    %v3442 = vadd.f32 0.0, %v3441
    %v3443 = vpop.f32.mrf.mxu0
    %v3444 = vpop.f32.mrf.mxu0
    %v3445 = vadd.f32 0.0, %v3444
    %v3446 = vpop.f32.mrf.mxu0
    %3447 = vmatprep.mubr.bf16.mxu0 0
    %3448 = vmatmul.mubr.bf16.gmra.mxu0 %v3239
    %v3449 = vpop.f32.mrf.mxu0
    %v3450 = vadd.f32 0.0, %v3449
    %v3451 = vpop.f32.mrf.mxu0
    %v3452 = vpop.f32.mrf.mxu0
    %v3453 = vadd.f32 0.0, %v3452
    %v3454 = vpop.f32.mrf.mxu0
    %3455 = vmatprep.mubr.bf16.mxu0 0
    %3456 = vmatmul.mubr.bf16.gmra.mxu0 %v3241
    %v3457 = vpop.f32.mrf.mxu0
    %v3458 = vadd.f32 0.0, %v3457
    %v3459 = vpop.f32.mrf.mxu0
    %v3460 = vpop.f32.mrf.mxu0
    %v3461 = vadd.f32 0.0, %v3460
    %v3462 = vpop.f32.mrf.mxu0
    %3463 = vmatprep.mubr.bf16.mxu0 0
    %3464 = vmatmul.mubr.bf16.gmra.mxu0 %v3243
    %v3465 = vpop.f32.mrf.mxu0
    %v3466 = vadd.f32 0.0, %v3465
    %v3467 = vpop.f32.mrf.mxu0
    %v3468 = vpop.f32.mrf.mxu0
    %v3469 = vadd.f32 0.0, %v3468
    %v3470 = vpop.f32.mrf.mxu0
    %3471 = vmatprep.mubr.bf16.mxu0 0
    %3472 = vmatmul.mubr.bf16.gmra.mxu0 %v3245
    %v3473 = vpop.f32.mrf.mxu0
    %v3474 = vadd.f32 0.0, %v3473
    %v3475 = vpop.f32.mrf.mxu0
    %v3476 = vpop.f32.mrf.mxu0
    %v3477 = vadd.f32 0.0, %v3476
    %v3478 = vpop.f32.mrf.mxu0
    %3479 = vmatprep.mubr.bf16.mxu0 0
    %3480 = vmatmul.mubr.bf16.gmra.mxu0 %v3247
    %v3481 = vpop.f32.mrf.mxu0
    %v3482 = vadd.f32 0.0, %v3481
    %v3483 = vpop.f32.mrf.mxu0
    %v3484 = vpop.f32.mrf.mxu0
    %v3485 = vadd.f32 0.0, %v3484
    %v3486 = vpop.f32.mrf.mxu0
    %3487 = vmatprep.mubr.bf16.mxu0 0
    %3488 = vmatmul.mubr.bf16.gmra.mxu0 %v3249
    %v3489 = vpop.f32.mrf.mxu0
    %v3490 = vadd.f32 0.0, %v3489
    %v3491 = vpop.f32.mrf.mxu0
    %v3492 = vpop.f32.mrf.mxu0
    %v3493 = vadd.f32 0.0, %v3492
    %v3494 = vpop.f32.mrf.mxu0
    %3495 = vmatprep.mubr.bf16.mxu0 0
    %3496 = vmatmul.mubr.bf16.gmra.mxu0 %v3251
    %v3497 = vpop.f32.mrf.mxu0
    %v3498 = vadd.f32 0.0, %v3497
    %v3499 = vpop.f32.mrf.mxu0
    %v3500 = vpop.f32.mrf.mxu0
    %v3501 = vadd.f32 0.0, %v3500
    %v3502 = vpop.f32.mrf.mxu0
    %3503 = vmatprep.mubr.bf16.mxu0 0
    %3504 = vmatmul.mubr.bf16.gmra.mxu0 %v3253
    %v3505 = vpop.f32.mrf.mxu0
    %v3506 = vadd.f32 0.0, %v3505
    %v3507 = vpop.f32.mrf.mxu0
    %v3508 = vpop.f32.mrf.mxu0
    %v3509 = vadd.f32 0.0, %v3508
    %v3510 = vpop.f32.mrf.mxu0
    %3511 = vmatprep.mubr.bf16.mxu0 0
    %3512 = vmatmul.mubr.bf16.gmra.mxu0 %v3255
    %v3513 = vpop.f32.mrf.mxu0
    %v3514 = vadd.f32 0.0, %v3513
    %v3515 = vpop.f32.mrf.mxu0
    %v3516 = vpop.f32.mrf.mxu0
    %v3517 = vadd.f32 0.0, %v3516
    %v3518 = vpop.f32.mrf.mxu0
    %3519 = vmatprep.mubr.bf16.mxu0 0
    %3520 = vmatmul.mubr.bf16.gmra.mxu0 %v3257
    %v3521 = vpop.f32.mrf.mxu0
    %v3522 = vadd.f32 0.0, %v3521
    %v3523 = vpop.f32.mrf.mxu0
    %v3524 = vpop.f32.mrf.mxu0
    %v3525 = vadd.f32 0.0, %v3524
    %v3526 = vpop.f32.mrf.mxu0
    %3527 = vmatprep.mubr.bf16.mxu0 0
    %3528 = vmatmul.mubr.bf16.gmra.mxu0 %v3259
    %v3529 = vpop.f32.mrf.mxu0
    %v3530 = vadd.f32 0.0, %v3529
    %v3531 = vpop.f32.mrf.mxu0
    %v3532 = vpop.f32.mrf.mxu0
    %v3533 = vadd.f32 0.0, %v3532
    %v3534 = vpop.f32.mrf.mxu0
    %3535 = vmatprep.mubr.bf16.mxu0 0
    %3536 = vmatmul.mubr.bf16.gmra.mxu0 %v3261
    %v3537 = vpop.f32.mrf.mxu0
    %v3538 = vadd.f32 0.0, %v3537
    %v3539 = vpop.f32.mrf.mxu0
    %v3540 = vpop.f32.mrf.mxu0
    %v3541 = vadd.f32 0.0, %v3540
    %v3542 = vpop.f32.mrf.mxu0
    %3543 = vmatprep.mubr.bf16.mxu0 0
    %3544 = vmatmul.mubr.bf16.gmra.mxu0 %v3263
    %v3545 = vpop.f32.mrf.mxu0
    %v3546 = vadd.f32 0.0, %v3545
    %v3547 = vpop.f32.mrf.mxu0
    %v3548 = vpop.f32.mrf.mxu0
    %v3549 = vadd.f32 0.0, %v3548
    %v3550 = vpop.f32.mrf.mxu0
    %3551 = vmatprep.mubr.bf16.mxu0 0
    %3552 = vmatmul.mubr.bf16.gmra.mxu0 %v3265
    %v3553 = vpop.f32.mrf.mxu0
    %v3554 = vadd.f32 0.0, %v3553
    %v3555 = vpop.f32.mrf.mxu0
    %v3556 = vpop.f32.mrf.mxu0
    %v3557 = vadd.f32 0.0, %v3556
    %v3558 = vpop.f32.mrf.mxu0
    %3559 = vdwg.mxu0
    %v3560 = vadd.f32 %v3306, %v3309
    %v3561 = vadd.f32 %v3560, %v3314
    %v3562 = vadd.f32 %v3561, %v3317
    %v3563 = vadd.f32 %v3562, %v3322
    %v3564 = vadd.f32 %v3563, %v3325
    %v3565 = vadd.f32 %v3564, %v3330
    %v3566 = vadd.f32 %v3565, %v3333
    %v3567 = vadd.f32 %v3566, %v3338
    %v3568 = vadd.f32 %v3567, %v3341
    %v3569 = vadd.f32 %v3568, %v3346
    %v3570 = vadd.f32 %v3569, %v3349
    %v3571 = vadd.f32 %v3570, %v3354
    %v3572 = vadd.f32 %v3571, %v3357
    %v3573 = vadd.f32 %v3572, %v3362
    %v3574 = vadd.f32 %v3573, %v3365
    %v3575 = vadd.f32 %v3574, %v3370
    %v3576 = vadd.f32 %v3575, %v3373
    %v3577 = vadd.f32 %v3576, %v3378
    %v3578 = vadd.f32 %v3577, %v3381
    %v3579 = vadd.f32 %v3578, %v3386
    %v3580 = vadd.f32 %v3579, %v3389
    %v3581 = vadd.f32 %v3580, %v3394
    %v3582 = vadd.f32 %v3581, %v3397
    %v3583 = vadd.f32 %v3582, %v3402
    %v3584 = vadd.f32 %v3583, %v3405
    %v3585 = vadd.f32 %v3584, %v3410
    %v3586 = vadd.f32 %v3585, %v3413
    %v3587 = vadd.f32 %v3586, %v3418
    %v3588 = vadd.f32 %v3587, %v3421
    %v3589 = vadd.f32 %v3588, %v3426
    %v3590 = vadd.f32 %v3589, %v3429
    %v3591 = vadd.f32 %v3590, %v3434
    %v3592 = vadd.f32 %v3591, %v3437
    %v3593 = vadd.f32 %v3592, %v3442
    %v3594 = vadd.f32 %v3593, %v3445
    %v3595 = vadd.f32 %v3594, %v3450
    %v3596 = vadd.f32 %v3595, %v3453
    %v3597 = vadd.f32 %v3596, %v3458
    %v3598 = vadd.f32 %v3597, %v3461
    %v3599 = vadd.f32 %v3598, %v3466
    %v3600 = vadd.f32 %v3599, %v3469
    %v3601 = vadd.f32 %v3600, %v3474
    %v3602 = vadd.f32 %v3601, %v3477
    %v3603 = vadd.f32 %v3602, %v3482
    %v3604 = vadd.f32 %v3603, %v3485
    %v3605 = vadd.f32 %v3604, %v3490
    %v3606 = vadd.f32 %v3605, %v3493
    %v3607 = vadd.f32 %v3606, %v3498
    %v3608 = vadd.f32 %v3607, %v3501
    %v3609 = vadd.f32 %v3608, %v3506
    %v3610 = vadd.f32 %v3609, %v3509
    %v3611 = vadd.f32 %v3610, %v3514
    %v3612 = vadd.f32 %v3611, %v3517
    %v3613 = vadd.f32 %v3612, %v3522
    %v3614 = vadd.f32 %v3613, %v3525
    %v3615 = vadd.f32 %v3614, %v3530
    %v3616 = vadd.f32 %v3615, %v3533
    %v3617 = vadd.f32 %v3616, %v3538
    %v3618 = vadd.f32 %v3617, %v3541
    %v3619 = vadd.f32 %v3618, %v3546
    %v3620 = vadd.f32 %v3619, %v3549
    %v3621 = vadd.f32 %v3620, %v3554
    %v3622 = vadd.f32 %v3621, %v3557
    %v3623 = vrot.slane %v3622, 4
    %v3624 = vadd.f32 %v3622, %v3623
    %v3625 = vrot.slane %v3624, 2
    %v3626 = vadd.f32 %v3624, %v3625
    %v3627 = vrot.slane %v3626, 1
    %v3628 = vadd.f32 %v3626, %v3627
    %v3629 = vmul.f32 %v3628, 0.001953125
    %v3630 = vmul.f32 %v3306, %v3306
    %v3631 = vmul.f32 %v3309, %v3309
    %v3632 = vmul.f32 %v3314, %v3314
    %v3633 = vmul.f32 %v3317, %v3317
    %v3634 = vmul.f32 %v3322, %v3322
    %v3635 = vmul.f32 %v3325, %v3325
    %v3636 = vmul.f32 %v3330, %v3330
    %v3637 = vmul.f32 %v3333, %v3333
    %v3638 = vmul.f32 %v3338, %v3338
    %v3639 = vmul.f32 %v3341, %v3341
    %v3640 = vmul.f32 %v3346, %v3346
    %v3641 = vmul.f32 %v3349, %v3349
    %v3642 = vmul.f32 %v3354, %v3354
    %v3643 = vmul.f32 %v3357, %v3357
    %v3644 = vmul.f32 %v3362, %v3362
    %v3645 = vmul.f32 %v3365, %v3365
    %v3646 = vmul.f32 %v3370, %v3370
    %v3647 = vmul.f32 %v3373, %v3373
    %v3648 = vmul.f32 %v3378, %v3378
    %v3649 = vmul.f32 %v3381, %v3381
    %v3650 = vmul.f32 %v3386, %v3386
    %v3651 = vmul.f32 %v3389, %v3389
    %v3652 = vmul.f32 %v3394, %v3394
    %v3653 = vmul.f32 %v3397, %v3397
    %v3654 = vmul.f32 %v3402, %v3402
    %v3655 = vmul.f32 %v3405, %v3405
    %v3656 = vmul.f32 %v3410, %v3410
    %v3657 = vmul.f32 %v3413, %v3413
    %v3658 = vmul.f32 %v3418, %v3418
    %v3659 = vmul.f32 %v3421, %v3421
    %v3660 = vmul.f32 %v3426, %v3426
    %v3661 = vmul.f32 %v3429, %v3429
    %v3662 = vmul.f32 %v3434, %v3434
    %v3663 = vmul.f32 %v3437, %v3437
    %v3664 = vmul.f32 %v3442, %v3442
    %v3665 = vmul.f32 %v3445, %v3445
    %v3666 = vmul.f32 %v3450, %v3450
    %v3667 = vmul.f32 %v3453, %v3453
    %v3668 = vmul.f32 %v3458, %v3458
    %v3669 = vmul.f32 %v3461, %v3461
    %v3670 = vmul.f32 %v3466, %v3466
    %v3671 = vmul.f32 %v3469, %v3469
    %v3672 = vmul.f32 %v3474, %v3474
    %v3673 = vmul.f32 %v3477, %v3477
    %v3674 = vmul.f32 %v3482, %v3482
    %v3675 = vmul.f32 %v3485, %v3485
    %v3676 = vmul.f32 %v3490, %v3490
    %v3677 = vmul.f32 %v3493, %v3493
    %v3678 = vmul.f32 %v3498, %v3498
    %v3679 = vmul.f32 %v3501, %v3501
    %v3680 = vmul.f32 %v3506, %v3506
    %v3681 = vmul.f32 %v3509, %v3509
    %v3682 = vmul.f32 %v3514, %v3514
    %v3683 = vmul.f32 %v3517, %v3517
    %v3684 = vmul.f32 %v3522, %v3522
    %v3685 = vmul.f32 %v3525, %v3525
    %v3686 = vmul.f32 %v3530, %v3530
    %v3687 = vmul.f32 %v3533, %v3533
    %v3688 = vmul.f32 %v3538, %v3538
    %v3689 = vmul.f32 %v3541, %v3541
    %v3690 = vmul.f32 %v3546, %v3546
    %v3691 = vmul.f32 %v3549, %v3549
    %v3692 = vmul.f32 %v3554, %v3554
    %v3693 = vmul.f32 %v3557, %v3557
    %v3694 = vadd.f32 %v3630, %v3631
    %v3695 = vadd.f32 %v3694, %v3632
    %v3696 = vadd.f32 %v3695, %v3633
    %v3697 = vadd.f32 %v3696, %v3634
    %v3698 = vadd.f32 %v3697, %v3635
    %v3699 = vadd.f32 %v3698, %v3636
    %v3700 = vadd.f32 %v3699, %v3637
    %v3701 = vadd.f32 %v3700, %v3638
    %v3702 = vadd.f32 %v3701, %v3639
    %v3703 = vadd.f32 %v3702, %v3640
    %v3704 = vadd.f32 %v3703, %v3641
    %v3705 = vadd.f32 %v3704, %v3642
    %v3706 = vadd.f32 %v3705, %v3643
    %v3707 = vadd.f32 %v3706, %v3644
    %v3708 = vadd.f32 %v3707, %v3645
    %v3709 = vadd.f32 %v3708, %v3646
    %v3710 = vadd.f32 %v3709, %v3647
    %v3711 = vadd.f32 %v3710, %v3648
    %v3712 = vadd.f32 %v3711, %v3649
    %v3713 = vadd.f32 %v3712, %v3650
    %v3714 = vadd.f32 %v3713, %v3651
    %v3715 = vadd.f32 %v3714, %v3652
    %v3716 = vadd.f32 %v3715, %v3653
    %v3717 = vadd.f32 %v3716, %v3654
    %v3718 = vadd.f32 %v3717, %v3655
    %v3719 = vadd.f32 %v3718, %v3656
    %v3720 = vadd.f32 %v3719, %v3657
    %v3721 = vadd.f32 %v3720, %v3658
    %v3722 = vadd.f32 %v3721, %v3659
    %v3723 = vadd.f32 %v3722, %v3660
    %v3724 = vadd.f32 %v3723, %v3661
    %v3725 = vadd.f32 %v3724, %v3662
    %v3726 = vadd.f32 %v3725, %v3663
    %v3727 = vadd.f32 %v3726, %v3664
    %v3728 = vadd.f32 %v3727, %v3665
    %v3729 = vadd.f32 %v3728, %v3666
    %v3730 = vadd.f32 %v3729, %v3667
    %v3731 = vadd.f32 %v3730, %v3668
    %v3732 = vadd.f32 %v3731, %v3669
    %v3733 = vadd.f32 %v3732, %v3670
    %v3734 = vadd.f32 %v3733, %v3671
    %v3735 = vadd.f32 %v3734, %v3672
    %v3736 = vadd.f32 %v3735, %v3673
    %v3737 = vadd.f32 %v3736, %v3674
    %v3738 = vadd.f32 %v3737, %v3675
    %v3739 = vadd.f32 %v3738, %v3676
    %v3740 = vadd.f32 %v3739, %v3677
    %v3741 = vadd.f32 %v3740, %v3678
    %v3742 = vadd.f32 %v3741, %v3679
    %v3743 = vadd.f32 %v3742, %v3680
    %v3744 = vadd.f32 %v3743, %v3681
    %v3745 = vadd.f32 %v3744, %v3682
    %v3746 = vadd.f32 %v3745, %v3683
    %v3747 = vadd.f32 %v3746, %v3684
    %v3748 = vadd.f32 %v3747, %v3685
    %v3749 = vadd.f32 %v3748, %v3686
    %v3750 = vadd.f32 %v3749, %v3687
    %v3751 = vadd.f32 %v3750, %v3688
    %v3752 = vadd.f32 %v3751, %v3689
    %v3753 = vadd.f32 %v3752, %v3690
    %v3754 = vadd.f32 %v3753, %v3691
    %v3755 = vadd.f32 %v3754, %v3692
    %v3756 = vadd.f32 %v3755, %v3693
    %v3757 = vrot.slane %v3756, 4
    %v3758 = vadd.f32 %v3756, %v3757
    %v3759 = vrot.slane %v3758, 2
    %v3760 = vadd.f32 %v3758, %v3759
    %v3761 = vrot.slane %v3760, 1
    %v3762 = vadd.f32 %v3760, %v3761
    %v3763 = vmul.f32 %v3762, 0.001953125
    %v3764 = vmul.f32 %v3629, %v3629
    %v3765 = vsub.f32 %v3763, %v3764
    %v3766 = vmax.f32 %v3765, 0.0
    %v3767 = vadd.f32 %v3766, 1e-05
    %v3768 = vrsqrt.pop %v3767
    %v3769 = vld [vmem:[%s2] sm:$0x1]
    %v3770 = vmul.f32 %v3768, %v3769
    %v3771 = vsub.f32 %v3306, %v3629
    %v3772 = vsub.f32 %v3309, %v3629
    %v3773 = vsub.f32 %v3314, %v3629
    %v3774 = vsub.f32 %v3317, %v3629
    %v3775 = vsub.f32 %v3322, %v3629
    %v3776 = vsub.f32 %v3325, %v3629
    %v3777 = vsub.f32 %v3330, %v3629
    %v3778 = vsub.f32 %v3333, %v3629
    %v3779 = vsub.f32 %v3338, %v3629
    %v3780 = vsub.f32 %v3341, %v3629
    %v3781 = vsub.f32 %v3346, %v3629
    %v3782 = vsub.f32 %v3349, %v3629
    %v3783 = vsub.f32 %v3354, %v3629
    %v3784 = vsub.f32 %v3357, %v3629
    %v3785 = vsub.f32 %v3362, %v3629
    %v3786 = vsub.f32 %v3365, %v3629
    %v3787 = vsub.f32 %v3370, %v3629
    %v3788 = vsub.f32 %v3373, %v3629
    %v3789 = vsub.f32 %v3378, %v3629
    %v3790 = vsub.f32 %v3381, %v3629
    %v3791 = vsub.f32 %v3386, %v3629
    %v3792 = vsub.f32 %v3389, %v3629
    %v3793 = vsub.f32 %v3394, %v3629
    %v3794 = vsub.f32 %v3397, %v3629
    %v3795 = vsub.f32 %v3402, %v3629
    %v3796 = vsub.f32 %v3405, %v3629
    %v3797 = vsub.f32 %v3410, %v3629
    %v3798 = vsub.f32 %v3413, %v3629
    %v3799 = vsub.f32 %v3418, %v3629
    %v3800 = vsub.f32 %v3421, %v3629
    %v3801 = vsub.f32 %v3426, %v3629
    %v3802 = vsub.f32 %v3429, %v3629
    %v3803 = vsub.f32 %v3434, %v3629
    %v3804 = vsub.f32 %v3437, %v3629
    %v3805 = vsub.f32 %v3442, %v3629
    %v3806 = vsub.f32 %v3445, %v3629
    %v3807 = vsub.f32 %v3450, %v3629
    %v3808 = vsub.f32 %v3453, %v3629
    %v3809 = vsub.f32 %v3458, %v3629
    %v3810 = vsub.f32 %v3461, %v3629
    %v3811 = vsub.f32 %v3466, %v3629
    %v3812 = vsub.f32 %v3469, %v3629
    %v3813 = vsub.f32 %v3474, %v3629
    %v3814 = vsub.f32 %v3477, %v3629
    %v3815 = vsub.f32 %v3482, %v3629
    %v3816 = vsub.f32 %v3485, %v3629
    %v3817 = vsub.f32 %v3490, %v3629
    %v3818 = vsub.f32 %v3493, %v3629
    %v3819 = vsub.f32 %v3498, %v3629
    %v3820 = vsub.f32 %v3501, %v3629
    %v3821 = vsub.f32 %v3506, %v3629
    %v3822 = vsub.f32 %v3509, %v3629
    %v3823 = vsub.f32 %v3514, %v3629
    %v3824 = vsub.f32 %v3517, %v3629
    %v3825 = vsub.f32 %v3522, %v3629
    %v3826 = vsub.f32 %v3525, %v3629
    %v3827 = vsub.f32 %v3530, %v3629
    %v3828 = vsub.f32 %v3533, %v3629
    %v3829 = vsub.f32 %v3538, %v3629
    %v3830 = vsub.f32 %v3541, %v3629
    %v3831 = vsub.f32 %v3546, %v3629
    %v3832 = vsub.f32 %v3549, %v3629
    %v3833 = vsub.f32 %v3554, %v3629
    %v3834 = vsub.f32 %v3557, %v3629
    %v3835 = vlaneseq
    %v3836 = vshrl.u32 %v3835, 7
    %v3837 = vsub.s32 0, %v3836
    %v3838 = vrot.slane %v3770, %v3837
    %v3839 = vmul.f32 %v3771, %v3838
    %v3840 = vmul.f32 %v3772, %v3838
    %v3841 = vmul.f32 %v3773, %v3838
    %v3842 = vmul.f32 %v3774, %v3838
    %v3843 = vmul.f32 %v3775, %v3838
    %v3844 = vmul.f32 %v3776, %v3838
    %v3845 = vmul.f32 %v3777, %v3838
    %v3846 = vmul.f32 %v3778, %v3838
    %v3847 = vmul.f32 %v3779, %v3838
    %v3848 = vmul.f32 %v3780, %v3838
    %v3849 = vmul.f32 %v3781, %v3838
    %v3850 = vmul.f32 %v3782, %v3838
    %v3851 = vmul.f32 %v3783, %v3838
    %v3852 = vmul.f32 %v3784, %v3838
    %v3853 = vmul.f32 %v3785, %v3838
    %v3854 = vmul.f32 %v3786, %v3838
    %v3855 = vmul.f32 %v3787, %v3838
    %v3856 = vmul.f32 %v3788, %v3838
    %v3857 = vmul.f32 %v3789, %v3838
    %v3858 = vmul.f32 %v3790, %v3838
    %v3859 = vmul.f32 %v3791, %v3838
    %v3860 = vmul.f32 %v3792, %v3838
    %v3861 = vmul.f32 %v3793, %v3838
    %v3862 = vmul.f32 %v3794, %v3838
    %v3863 = vmul.f32 %v3795, %v3838
    %v3864 = vmul.f32 %v3796, %v3838
    %v3865 = vmul.f32 %v3797, %v3838
    %v3866 = vmul.f32 %v3798, %v3838
    %v3867 = vmul.f32 %v3799, %v3838
    %v3868 = vmul.f32 %v3800, %v3838
    %v3869 = vmul.f32 %v3801, %v3838
    %v3870 = vmul.f32 %v3802, %v3838
    %v3871 = vmul.f32 %v3803, %v3838
    %v3872 = vmul.f32 %v3804, %v3838
    %v3873 = vmul.f32 %v3805, %v3838
    %v3874 = vmul.f32 %v3806, %v3838
    %v3875 = vmul.f32 %v3807, %v3838
    %v3876 = vmul.f32 %v3808, %v3838
    %v3877 = vmul.f32 %v3809, %v3838
    %v3878 = vmul.f32 %v3810, %v3838
    %v3879 = vmul.f32 %v3811, %v3838
    %v3880 = vmul.f32 %v3812, %v3838
    %v3881 = vmul.f32 %v3813, %v3838
    %v3882 = vmul.f32 %v3814, %v3838
    %v3883 = vmul.f32 %v3815, %v3838
    %v3884 = vmul.f32 %v3816, %v3838
    %v3885 = vmul.f32 %v3817, %v3838
    %v3886 = vmul.f32 %v3818, %v3838
    %v3887 = vmul.f32 %v3819, %v3838
    %v3888 = vmul.f32 %v3820, %v3838
    %v3889 = vmul.f32 %v3821, %v3838
    %v3890 = vmul.f32 %v3822, %v3838
    %v3891 = vmul.f32 %v3823, %v3838
    %v3892 = vmul.f32 %v3824, %v3838
    %v3893 = vmul.f32 %v3825, %v3838
    %v3894 = vmul.f32 %v3826, %v3838
    %v3895 = vmul.f32 %v3827, %v3838
    %v3896 = vmul.f32 %v3828, %v3838
    %v3897 = vmul.f32 %v3829, %v3838
    %v3898 = vmul.f32 %v3830, %v3838
    %v3899 = vmul.f32 %v3831, %v3838
    %v3900 = vmul.f32 %v3832, %v3838
    %v3901 = vmul.f32 %v3833, %v3838
    %v3902 = vmul.f32 %v3834, %v3838
    %v3903 = vld [vmem:[%s3] sm:$0x1]
    %v3905 = vlaneseq
    %v3906 = vshrl.u32 %v3905, 7
    %v3907 = vsub.s32 0, %v3906
    %v3908 = vrot.slane %v3903, %v3907
    %v3910 = vadd.f32 %v3839, %v3908
    %v3911 = vadd.f32 %v3840, %v3908
    %v3912 = vadd.f32 %v3841, %v3908
    %v3913 = vadd.f32 %v3842, %v3908
    %v3914 = vadd.f32 %v3843, %v3908
    %v3915 = vadd.f32 %v3844, %v3908
    %v3916 = vadd.f32 %v3845, %v3908
    %v3917 = vadd.f32 %v3846, %v3908
    %v3918 = vadd.f32 %v3847, %v3908
    %v3919 = vadd.f32 %v3848, %v3908
    %v3920 = vadd.f32 %v3849, %v3908
    %v3921 = vadd.f32 %v3850, %v3908
    %v3922 = vadd.f32 %v3851, %v3908
    %v3923 = vadd.f32 %v3852, %v3908
    %v3924 = vadd.f32 %v3853, %v3908
    %v3925 = vadd.f32 %v3854, %v3908
    %v3926 = vadd.f32 %v3855, %v3908
    %v3927 = vadd.f32 %v3856, %v3908
    %v3928 = vadd.f32 %v3857, %v3908
    %v3929 = vadd.f32 %v3858, %v3908
    %v3930 = vadd.f32 %v3859, %v3908
    %v3931 = vadd.f32 %v3860, %v3908
    %v3932 = vadd.f32 %v3861, %v3908
    %v3933 = vadd.f32 %v3862, %v3908
    %v3934 = vadd.f32 %v3863, %v3908
    %v3935 = vadd.f32 %v3864, %v3908
    %v3936 = vadd.f32 %v3865, %v3908
    %v3937 = vadd.f32 %v3866, %v3908
    %v3938 = vadd.f32 %v3867, %v3908
    %v3939 = vadd.f32 %v3868, %v3908
    %v3940 = vadd.f32 %v3869, %v3908
    %v3941 = vadd.f32 %v3870, %v3908
    %v3942 = vadd.f32 %v3871, %v3908
    %v3943 = vadd.f32 %v3872, %v3908
    %v3944 = vadd.f32 %v3873, %v3908
    %v3945 = vadd.f32 %v3874, %v3908
    %v3946 = vadd.f32 %v3875, %v3908
    %v3947 = vadd.f32 %v3876, %v3908
    %v3948 = vadd.f32 %v3877, %v3908
    %v3949 = vadd.f32 %v3878, %v3908
    %v3950 = vadd.f32 %v3879, %v3908
    %v3951 = vadd.f32 %v3880, %v3908
    %v3952 = vadd.f32 %v3881, %v3908
    %v3953 = vadd.f32 %v3882, %v3908
    %v3954 = vadd.f32 %v3883, %v3908
    %v3955 = vadd.f32 %v3884, %v3908
    %v3956 = vadd.f32 %v3885, %v3908
    %v3957 = vadd.f32 %v3886, %v3908
    %v3958 = vadd.f32 %v3887, %v3908
    %v3959 = vadd.f32 %v3888, %v3908
    %v3960 = vadd.f32 %v3889, %v3908
    %v3961 = vadd.f32 %v3890, %v3908
    %v3962 = vadd.f32 %v3891, %v3908
    %v3963 = vadd.f32 %v3892, %v3908
    %v3964 = vadd.f32 %v3893, %v3908
    %v3965 = vadd.f32 %v3894, %v3908
    %v3966 = vadd.f32 %v3895, %v3908
    %v3967 = vadd.f32 %v3896, %v3908
    %v3968 = vadd.f32 %v3897, %v3908
    %v3969 = vadd.f32 %v3898, %v3908
    %v3970 = vadd.f32 %v3899, %v3908
    %v3971 = vadd.f32 %v3900, %v3908
    %v3972 = vadd.f32 %v3901, %v3908
    %v3973 = vadd.f32 %v3902, %v3908
    %v3974 = vmax.f32 %v3910, 0.0
    %v3975 = vmax.f32 %v3911, 0.0
    %v3976 = vmax.f32 %v3912, 0.0
    %v3977 = vmax.f32 %v3913, 0.0
    %v3978 = vmax.f32 %v3914, 0.0
    %v3979 = vmax.f32 %v3915, 0.0
    %v3980 = vmax.f32 %v3916, 0.0
    %v3981 = vmax.f32 %v3917, 0.0
    %v3982 = vmax.f32 %v3918, 0.0
    %v3983 = vmax.f32 %v3919, 0.0
    %v3984 = vmax.f32 %v3920, 0.0
    %v3985 = vmax.f32 %v3921, 0.0
    %v3986 = vmax.f32 %v3922, 0.0
    %v3987 = vmax.f32 %v3923, 0.0
    %v3988 = vmax.f32 %v3924, 0.0
    %v3989 = vmax.f32 %v3925, 0.0
    %v3990 = vmax.f32 %v3926, 0.0
    %v3991 = vmax.f32 %v3927, 0.0
    %v3992 = vmax.f32 %v3928, 0.0
    %v3993 = vmax.f32 %v3929, 0.0
    %v3994 = vmax.f32 %v3930, 0.0
    %v3995 = vmax.f32 %v3931, 0.0
    %v3996 = vmax.f32 %v3932, 0.0
    %v3997 = vmax.f32 %v3933, 0.0
    %v3998 = vmax.f32 %v3934, 0.0
    %v3999 = vmax.f32 %v3935, 0.0
    %v4000 = vmax.f32 %v3936, 0.0
    %v4001 = vmax.f32 %v3937, 0.0
    %v4002 = vmax.f32 %v3938, 0.0
    %v4003 = vmax.f32 %v3939, 0.0
    %v4004 = vmax.f32 %v3940, 0.0
    %v4005 = vmax.f32 %v3941, 0.0
    %v4006 = vmax.f32 %v3942, 0.0
    %v4007 = vmax.f32 %v3943, 0.0
    %v4008 = vmax.f32 %v3944, 0.0
    %v4009 = vmax.f32 %v3945, 0.0
    %v4010 = vmax.f32 %v3946, 0.0
    %v4011 = vmax.f32 %v3947, 0.0
    %v4012 = vmax.f32 %v3948, 0.0
    %v4013 = vmax.f32 %v3949, 0.0
    %v4014 = vmax.f32 %v3950, 0.0
    %v4015 = vmax.f32 %v3951, 0.0
    %v4016 = vmax.f32 %v3952, 0.0
    %v4017 = vmax.f32 %v3953, 0.0
    %v4018 = vmax.f32 %v3954, 0.0
    %v4019 = vmax.f32 %v3955, 0.0
    %v4020 = vmax.f32 %v3956, 0.0
    %v4021 = vmax.f32 %v3957, 0.0
    %v4022 = vmax.f32 %v3958, 0.0
    %v4023 = vmax.f32 %v3959, 0.0
    %v4024 = vmax.f32 %v3960, 0.0
    %v4025 = vmax.f32 %v3961, 0.0
    %v4026 = vmax.f32 %v3962, 0.0
    %v4027 = vmax.f32 %v3963, 0.0
    %v4028 = vmax.f32 %v3964, 0.0
    %v4029 = vmax.f32 %v3965, 0.0
    %v4030 = vmax.f32 %v3966, 0.0
    %v4031 = vmax.f32 %v3967, 0.0
    %v4032 = vmax.f32 %v3968, 0.0
    %v4033 = vmax.f32 %v3969, 0.0
    %v4034 = vmax.f32 %v3970, 0.0
    %v4035 = vmax.f32 %v3971, 0.0
    %v4036 = vmax.f32 %v3972, 0.0
    %v4037 = vmax.f32 %v3973, 0.0
    %4038 = vst.msk [vmem:[%s96 + $0x1] sm:$0xff] %vm81, %v3974
    %4039 = vst.msk [vmem:[%s96 + $0x9] sm:$0xff] %vm81, %v3975
    %4040 = vst.msk [vmem:[%s96 + $0x19] sm:$0xff] %vm81, %v3976
    %4041 = vst.msk [vmem:[%s96 + $0x21] sm:$0xff] %vm81, %v3977
    %4042 = vst.msk [vmem:[%s96 + $0x31] sm:$0xff] %vm81, %v3978
    %4043 = vst.msk [vmem:[%s96 + $0x39] sm:$0xff] %vm81, %v3979
    %4044 = vst.msk [vmem:[%s96 + $0x49] sm:$0xff] %vm81, %v3980
    %4045 = vst.msk [vmem:[%s96 + $0x51] sm:$0xff] %vm81, %v3981
    %4046 = vst.msk [vmem:[%s96 + $0x61] sm:$0xff] %vm81, %v3982
    %4047 = vst.msk [vmem:[%s96 + $0x69] sm:$0xff] %vm81, %v3983
    %4048 = vst.msk [vmem:[%s96 + $0x79] sm:$0xff] %vm81, %v3984
    %4049 = vst.msk [vmem:[%s96 + $0x81] sm:$0xff] %vm81, %v3985
    %4050 = vst.msk [vmem:[%s96 + $0x91] sm:$0xff] %vm81, %v3986
    %4051 = vst.msk [vmem:[%s96 + $0x99] sm:$0xff] %vm81, %v3987
    %4052 = vst.msk [vmem:[%s96 + $0xa9] sm:$0xff] %vm81, %v3988
    %4053 = vst.msk [vmem:[%s96 + $0xb1] sm:$0xff] %vm81, %v3989
    %4054 = vst.msk [vmem:[%s96 + $0xc1] sm:$0xff] %vm81, %v3990
    %4055 = vst.msk [vmem:[%s96 + $0xc9] sm:$0xff] %vm81, %v3991
    %4056 = vst.msk [vmem:[%s96 + $0xd9] sm:$0xff] %vm81, %v3992
    %4057 = vst.msk [vmem:[%s96 + $0xe1] sm:$0xff] %vm81, %v3993
    %4058 = vst.msk [vmem:[%s96 + $0xf1] sm:$0xff] %vm81, %v3994
    %4059 = vst.msk [vmem:[%s96 + $0xf9] sm:$0xff] %vm81, %v3995
    %4060 = vst.msk [vmem:[%s96 + $0x109] sm:$0xff] %vm81, %v3996
    %4061 = vst.msk [vmem:[%s96 + $0x111] sm:$0xff] %vm81, %v3997
    %4062 = vst.msk [vmem:[%s96 + $0x121] sm:$0xff] %vm81, %v3998
    %4063 = vst.msk [vmem:[%s96 + $0x129] sm:$0xff] %vm81, %v3999
    %4064 = vst.msk [vmem:[%s96 + $0x139] sm:$0xff] %vm81, %v4000
    %4065 = vst.msk [vmem:[%s96 + $0x141] sm:$0xff] %vm81, %v4001
    %4066 = vst.msk [vmem:[%s96 + $0x151] sm:$0xff] %vm81, %v4002
    %4067 = vst.msk [vmem:[%s96 + $0x159] sm:$0xff] %vm81, %v4003
    %4068 = vst.msk [vmem:[%s96 + $0x169] sm:$0xff] %vm81, %v4004
    %4069 = vst.msk [vmem:[%s96 + $0x171] sm:$0xff] %vm81, %v4005
    %4070 = vst.msk [vmem:[%s96 + $0x1b1] sm:$0xff] %vm81, %v4006
    %4071 = vst.msk [vmem:[%s96 + $0x1b9] sm:$0xff] %vm81, %v4007
    %4072 = vst.msk [vmem:[%s96 + $0x1c9] sm:$0xff] %vm81, %v4008
    %4073 = vst.msk [vmem:[%s96 + $0x1d1] sm:$0xff] %vm81, %v4009
    %4074 = vst.msk [vmem:[%s96 + $0x1e1] sm:$0xff] %vm81, %v4010
    %4075 = vst.msk [vmem:[%s96 + $0x1e9] sm:$0xff] %vm81, %v4011
    %4076 = vst.msk [vmem:[%s96 + $0x1f9] sm:$0xff] %vm81, %v4012
    %4077 = vst.msk [vmem:[%s96 + $0x201] sm:$0xff] %vm81, %v4013
    %4078 = vst.msk [vmem:[%s96 + $0x211] sm:$0xff] %vm81, %v4014
    %4079 = vst.msk [vmem:[%s96 + $0x219] sm:$0xff] %vm81, %v4015
    %4080 = vst.msk [vmem:[%s96 + $0x229] sm:$0xff] %vm81, %v4016
    %4081 = vst.msk [vmem:[%s96 + $0x231] sm:$0xff] %vm81, %v4017
    %4082 = vst.msk [vmem:[%s96 + $0x241] sm:$0xff] %vm81, %v4018
    %4083 = vst.msk [vmem:[%s96 + $0x249] sm:$0xff] %vm81, %v4019
    %4084 = vst.msk [vmem:[%s96 + $0x259] sm:$0xff] %vm81, %v4020
    %4085 = vst.msk [vmem:[%s96 + $0x261] sm:$0xff] %vm81, %v4021
    %4086 = vst.msk [vmem:[%s96 + $0x271] sm:$0xff] %vm81, %v4022
    %4087 = vst.msk [vmem:[%s96 + $0x279] sm:$0xff] %vm81, %v4023
    %4088 = vst.msk [vmem:[%s96 + $0x289] sm:$0xff] %vm81, %v4024
    %4089 = vst.msk [vmem:[%s96 + $0x291] sm:$0xff] %vm81, %v4025
    %4090 = vst.msk [vmem:[%s96 + $0x2a1] sm:$0xff] %vm81, %v4026
    %4091 = vst.msk [vmem:[%s96 + $0x2a9] sm:$0xff] %vm81, %v4027
    %4092 = vst.msk [vmem:[%s96 + $0x2b9] sm:$0xff] %vm81, %v4028
    %4093 = vst.msk [vmem:[%s96 + $0x2c1] sm:$0xff] %vm81, %v4029
    %4094 = vst.msk [vmem:[%s96 + $0x2d1] sm:$0xff] %vm81, %v4030
    %4095 = vst.msk [vmem:[%s96 + $0x2d9] sm:$0xff] %vm81, %v4031
    %4096 = vst.msk [vmem:[%s96 + $0x2e9] sm:$0xff] %vm81, %v4032
    %4097 = vst.msk [vmem:[%s96 + $0x2f1] sm:$0xff] %vm81, %v4033
    %4098 = vst.msk [vmem:[%s96 + $0x301] sm:$0xff] %vm81, %v4034
    %4099 = vst.msk [vmem:[%s96 + $0x309] sm:$0xff] %vm81, %v4035
    %4100 = vst.msk [vmem:[%s96 + $0x319] sm:$0xff] %vm81, %v4036
    %4101 = vst.msk [vmem:[%s96 + $0x321] sm:$0xff] %vm81, %v4037
    %v4102 = vld [vmem:[#allocation2] sm:$0xff]
    %v4103 = vld [vmem:[#allocation2 + $0x8] sm:$0xff]
    %v4104 = vld [vmem:[#allocation2 + $0x18] sm:$0xff]
    %v4105 = vld [vmem:[#allocation2 + $0x20] sm:$0xff]
    %v4106 = vld [vmem:[#allocation2 + $0x30] sm:$0xff]
    %v4107 = vld [vmem:[#allocation2 + $0x38] sm:$0xff]
    %v4108 = vld [vmem:[#allocation2 + $0x48] sm:$0xff]
    %v4109 = vld [vmem:[#allocation2 + $0x50] sm:$0xff]
    %v4110 = vld [vmem:[#allocation2 + $0x60] sm:$0xff]
    %v4111 = vld [vmem:[#allocation2 + $0x68] sm:$0xff]
    %v4112 = vld [vmem:[#allocation2 + $0x78] sm:$0xff]
    %v4113 = vld [vmem:[#allocation2 + $0x80] sm:$0xff]
    %v4114 = vld [vmem:[#allocation2 + $0x90] sm:$0xff]
    %v4115 = vld [vmem:[#allocation2 + $0x98] sm:$0xff]
    %v4116 = vld [vmem:[#allocation2 + $0xa8] sm:$0xff]
    %v4117 = vld [vmem:[#allocation2 + $0xb0] sm:$0xff]
    %v4118 = vld [vmem:[#allocation2 + $0xc0] sm:$0xff]
    %v4119 = vld [vmem:[#allocation2 + $0xc8] sm:$0xff]
    %v4120 = vld [vmem:[#allocation2 + $0xd8] sm:$0xff]
    %v4121 = vld [vmem:[#allocation2 + $0xe0] sm:$0xff]
    %v4122 = vld [vmem:[#allocation2 + $0xf0] sm:$0xff]
    %v4123 = vld [vmem:[#allocation2 + $0xf8] sm:$0xff]
    %v4124 = vld [vmem:[#allocation2 + $0x108] sm:$0xff]
    %v4125 = vld [vmem:[#allocation2 + $0x110] sm:$0xff]
    %v4126 = vld [vmem:[#allocation2 + $0x120] sm:$0xff]
    %v4127 = vld [vmem:[#allocation2 + $0x128] sm:$0xff]
    %v4128 = vld [vmem:[#allocation2 + $0x138] sm:$0xff]
    %v4129 = vld [vmem:[#allocation2 + $0x140] sm:$0xff]
    %v4130 = vld [vmem:[#allocation2 + $0x150] sm:$0xff]
    %v4131 = vld [vmem:[#allocation2 + $0x158] sm:$0xff]
    %v4132 = vld [vmem:[#allocation2 + $0x168] sm:$0xff]
    %v4133 = vld [vmem:[#allocation2 + $0x170] sm:$0xff]
    %v4134 = vld [vmem:[#allocation2 + $0x1b0] sm:$0xff]
    %v4135 = vld [vmem:[#allocation2 + $0x1b8] sm:$0xff]
    %v4136 = vld [vmem:[#allocation2 + $0x1c8] sm:$0xff]
    %v4137 = vld [vmem:[#allocation2 + $0x1d0] sm:$0xff]
    %v4138 = vld [vmem:[#allocation2 + $0x1e0] sm:$0xff]
    %v4139 = vld [vmem:[#allocation2 + $0x1e8] sm:$0xff]
    %v4140 = vld [vmem:[#allocation2 + $0x1f8] sm:$0xff]
    %v4141 = vld [vmem:[#allocation2 + $0x200] sm:$0xff]
    %v4142 = vld [vmem:[#allocation2 + $0x210] sm:$0xff]
    %v4143 = vld [vmem:[#allocation2 + $0x218] sm:$0xff]
    %v4144 = vld [vmem:[#allocation2 + $0x228] sm:$0xff]
    %v4145 = vld [vmem:[#allocation2 + $0x230] sm:$0xff]
    %v4146 = vld [vmem:[#allocation2 + $0x240] sm:$0xff]
    %v4147 = vld [vmem:[#allocation2 + $0x248] sm:$0xff]
    %v4148 = vld [vmem:[#allocation2 + $0x258] sm:$0xff]
    %v4149 = vld [vmem:[#allocation2 + $0x260] sm:$0xff]
    %v4150 = vld [vmem:[#allocation2 + $0x270] sm:$0xff]
    %v4151 = vld [vmem:[#allocation2 + $0x278] sm:$0xff]
    %v4152 = vld [vmem:[#allocation2 + $0x288] sm:$0xff]
    %v4153 = vld [vmem:[#allocation2 + $0x290] sm:$0xff]
    %v4154 = vld [vmem:[#allocation2 + $0x2a0] sm:$0xff]
    %v4155 = vld [vmem:[#allocation2 + $0x2a8] sm:$0xff]
    %v4156 = vld [vmem:[#allocation2 + $0x2b8] sm:$0xff]
    %v4157 = vld [vmem:[#allocation2 + $0x2c0] sm:$0xff]
    %v4158 = vld [vmem:[#allocation2 + $0x2d0] sm:$0xff]
    %v4159 = vld [vmem:[#allocation2 + $0x2d8] sm:$0xff]
    %v4160 = vld [vmem:[#allocation2 + $0x2e8] sm:$0xff]
    %v4161 = vld [vmem:[#allocation2 + $0x2f0] sm:$0xff]
    %v4162 = vld [vmem:[#allocation2 + $0x300] sm:$0xff]
    %v4163 = vld [vmem:[#allocation2 + $0x308] sm:$0xff]
    %v4164 = vld [vmem:[#allocation2 + $0x318] sm:$0xff]
    %v4165 = vld [vmem:[#allocation2 + $0x320] sm:$0xff]
    %v4166 = vpack.c.bf16 %v4103, %v4102
    %v4167 = vpack.c.bf16 %v4105, %v4104
    %v4168 = vpack.c.bf16 %v4107, %v4106
    %v4169 = vpack.c.bf16 %v4109, %v4108
    %v4170 = vpack.c.bf16 %v4111, %v4110
    %v4171 = vpack.c.bf16 %v4113, %v4112
    %v4172 = vpack.c.bf16 %v4115, %v4114
    %v4173 = vpack.c.bf16 %v4117, %v4116
    %v4174 = vpack.c.bf16 %v4119, %v4118
    %v4175 = vpack.c.bf16 %v4121, %v4120
    %v4176 = vpack.c.bf16 %v4123, %v4122
    %v4177 = vpack.c.bf16 %v4125, %v4124
    %v4178 = vpack.c.bf16 %v4127, %v4126
    %v4179 = vpack.c.bf16 %v4129, %v4128
    %v4180 = vpack.c.bf16 %v4131, %v4130
    %v4181 = vpack.c.bf16 %v4133, %v4132
    %v4182 = vpack.c.bf16 %v4135, %v4134
    %v4183 = vpack.c.bf16 %v4137, %v4136
    %v4184 = vpack.c.bf16 %v4139, %v4138
    %v4185 = vpack.c.bf16 %v4141, %v4140
    %v4186 = vpack.c.bf16 %v4143, %v4142
    %v4187 = vpack.c.bf16 %v4145, %v4144
    %v4188 = vpack.c.bf16 %v4147, %v4146
    %v4189 = vpack.c.bf16 %v4149, %v4148
    %v4190 = vpack.c.bf16 %v4151, %v4150
    %v4191 = vpack.c.bf16 %v4153, %v4152
    %v4192 = vpack.c.bf16 %v4155, %v4154
    %v4193 = vpack.c.bf16 %v4157, %v4156
    %v4194 = vpack.c.bf16 %v4159, %v4158
    %v4195 = vpack.c.bf16 %v4161, %v4160
    %v4196 = vpack.c.bf16 %v4163, %v4162
    %v4197 = vpack.c.bf16 %v4165, %v4164
    %v4198 = vld [vmem:[#allocation2 + $0x1] sm:$0xff]
    %v4199 = vld [vmem:[#allocation2 + $0x9] sm:$0xff]
    %v4200 = vld [vmem:[#allocation2 + $0x19] sm:$0xff]
    %v4201 = vld [vmem:[#allocation2 + $0x21] sm:$0xff]
    %v4202 = vld [vmem:[#allocation2 + $0x31] sm:$0xff]
    %v4203 = vld [vmem:[#allocation2 + $0x39] sm:$0xff]
    %v4204 = vld [vmem:[#allocation2 + $0x49] sm:$0xff]
    %v4205 = vld [vmem:[#allocation2 + $0x51] sm:$0xff]
    %v4206 = vld [vmem:[#allocation2 + $0x61] sm:$0xff]
    %v4207 = vld [vmem:[#allocation2 + $0x69] sm:$0xff]
    %v4208 = vld [vmem:[#allocation2 + $0x79] sm:$0xff]
    %v4209 = vld [vmem:[#allocation2 + $0x81] sm:$0xff]
    %v4210 = vld [vmem:[#allocation2 + $0x91] sm:$0xff]
    %v4211 = vld [vmem:[#allocation2 + $0x99] sm:$0xff]
    %v4212 = vld [vmem:[#allocation2 + $0xa9] sm:$0xff]
    %v4213 = vld [vmem:[#allocation2 + $0xb1] sm:$0xff]
    %v4214 = vld [vmem:[#allocation2 + $0xc1] sm:$0xff]
    %v4215 = vld [vmem:[#allocation2 + $0xc9] sm:$0xff]
    %v4216 = vld [vmem:[#allocation2 + $0xd9] sm:$0xff]
    %v4217 = vld [vmem:[#allocation2 + $0xe1] sm:$0xff]
    %v4218 = vld [vmem:[#allocation2 + $0xf1] sm:$0xff]
    %v4219 = vld [vmem:[#allocation2 + $0xf9] sm:$0xff]
    %v4220 = vld [vmem:[#allocation2 + $0x109] sm:$0xff]
    %v4221 = vld [vmem:[#allocation2 + $0x111] sm:$0xff]
    %v4222 = vld [vmem:[#allocation2 + $0x121] sm:$0xff]
    %v4223 = vld [vmem:[#allocation2 + $0x129] sm:$0xff]
    %v4224 = vld [vmem:[#allocation2 + $0x139] sm:$0xff]
    %v4225 = vld [vmem:[#allocation2 + $0x141] sm:$0xff]
    %v4226 = vld [vmem:[#allocation2 + $0x151] sm:$0xff]
    %v4227 = vld [vmem:[#allocation2 + $0x159] sm:$0xff]
    %v4228 = vld [vmem:[#allocation2 + $0x169] sm:$0xff]
    %v4229 = vld [vmem:[#allocation2 + $0x171] sm:$0xff]
    %v4230 = vld [vmem:[#allocation2 + $0x1b1] sm:$0xff]
    %v4231 = vld [vmem:[#allocation2 + $0x1b9] sm:$0xff]
    %v4232 = vld [vmem:[#allocation2 + $0x1c9] sm:$0xff]
    %v4233 = vld [vmem:[#allocation2 + $0x1d1] sm:$0xff]
    %v4234 = vld [vmem:[#allocation2 + $0x1e1] sm:$0xff]
    %v4235 = vld [vmem:[#allocation2 + $0x1e9] sm:$0xff]
    %v4236 = vld [vmem:[#allocation2 + $0x1f9] sm:$0xff]
    %v4237 = vld [vmem:[#allocation2 + $0x201] sm:$0xff]
    %v4238 = vld [vmem:[#allocation2 + $0x211] sm:$0xff]
    %v4239 = vld [vmem:[#allocation2 + $0x219] sm:$0xff]
    %v4240 = vld [vmem:[#allocation2 + $0x229] sm:$0xff]
    %v4241 = vld [vmem:[#allocation2 + $0x231] sm:$0xff]
    %v4242 = vld [vmem:[#allocation2 + $0x241] sm:$0xff]
    %v4243 = vld [vmem:[#allocation2 + $0x249] sm:$0xff]
    %v4244 = vld [vmem:[#allocation2 + $0x259] sm:$0xff]
    %v4245 = vld [vmem:[#allocation2 + $0x261] sm:$0xff]
    %v4246 = vld [vmem:[#allocation2 + $0x271] sm:$0xff]
    %v4247 = vld [vmem:[#allocation2 + $0x279] sm:$0xff]
    %v4248 = vld [vmem:[#allocation2 + $0x289] sm:$0xff]
    %v4249 = vld [vmem:[#allocation2 + $0x291] sm:$0xff]
    %v4250 = vld [vmem:[#allocation2 + $0x2a1] sm:$0xff]
    %v4251 = vld [vmem:[#allocation2 + $0x2a9] sm:$0xff]
    %v4252 = vld [vmem:[#allocation2 + $0x2b9] sm:$0xff]
    %v4253 = vld [vmem:[#allocation2 + $0x2c1] sm:$0xff]
    %v4254 = vld [vmem:[#allocation2 + $0x2d1] sm:$0xff]
    %v4255 = vld [vmem:[#allocation2 + $0x2d9] sm:$0xff]
    %v4256 = vld [vmem:[#allocation2 + $0x2e9] sm:$0xff]
    %v4257 = vld [vmem:[#allocation2 + $0x2f1] sm:$0xff]
    %v4258 = vld [vmem:[#allocation2 + $0x301] sm:$0xff]
    %v4259 = vld [vmem:[#allocation2 + $0x309] sm:$0xff]
    %v4260 = vld [vmem:[#allocation2 + $0x319] sm:$0xff]
    %v4261 = vld [vmem:[#allocation2 + $0x321] sm:$0xff]
    %v4262 = vpack.c.bf16 %v4199, %v4198
    %v4263 = vpack.c.bf16 %v4201, %v4200
    %v4264 = vpack.c.bf16 %v4203, %v4202
    %v4265 = vpack.c.bf16 %v4205, %v4204
    %v4266 = vpack.c.bf16 %v4207, %v4206
    %v4267 = vpack.c.bf16 %v4209, %v4208
    %v4268 = vpack.c.bf16 %v4211, %v4210
    %v4269 = vpack.c.bf16 %v4213, %v4212
    %v4270 = vpack.c.bf16 %v4215, %v4214
    %v4271 = vpack.c.bf16 %v4217, %v4216
    %v4272 = vpack.c.bf16 %v4219, %v4218
    %v4273 = vpack.c.bf16 %v4221, %v4220
    %v4274 = vpack.c.bf16 %v4223, %v4222
    %v4275 = vpack.c.bf16 %v4225, %v4224
    %v4276 = vpack.c.bf16 %v4227, %v4226
    %v4277 = vpack.c.bf16 %v4229, %v4228
    %v4278 = vpack.c.bf16 %v4231, %v4230
    %v4279 = vpack.c.bf16 %v4233, %v4232
    %v4280 = vpack.c.bf16 %v4235, %v4234
    %v4281 = vpack.c.bf16 %v4237, %v4236
    %v4282 = vpack.c.bf16 %v4239, %v4238
    %v4283 = vpack.c.bf16 %v4241, %v4240
    %v4284 = vpack.c.bf16 %v4243, %v4242
    %v4285 = vpack.c.bf16 %v4245, %v4244
    %v4286 = vpack.c.bf16 %v4247, %v4246
    %v4287 = vpack.c.bf16 %v4249, %v4248
    %v4288 = vpack.c.bf16 %v4251, %v4250
    %v4289 = vpack.c.bf16 %v4253, %v4252
    %v4290 = vpack.c.bf16 %v4255, %v4254
    %v4291 = vpack.c.bf16 %v4257, %v4256
    %v4292 = vpack.c.bf16 %v4259, %v4258
    %v4293 = vpack.c.bf16 %v4261, %v4260
    %v4294 = vld [vmem:[#allocation2 + $0x2] sm:$0xff]
    %v4295 = vld [vmem:[#allocation2 + $0xa] sm:$0xff]
    %v4296 = vld [vmem:[#allocation2 + $0x1a] sm:$0xff]
    %v4297 = vld [vmem:[#allocation2 + $0x22] sm:$0xff]
    %v4298 = vld [vmem:[#allocation2 + $0x32] sm:$0xff]
    %v4299 = vld [vmem:[#allocation2 + $0x3a] sm:$0xff]
    %v4300 = vld [vmem:[#allocation2 + $0x4a] sm:$0xff]
    %v4301 = vld [vmem:[#allocation2 + $0x52] sm:$0xff]
    %v4302 = vld [vmem:[#allocation2 + $0x62] sm:$0xff]
    %v4303 = vld [vmem:[#allocation2 + $0x6a] sm:$0xff]
    %v4304 = vld [vmem:[#allocation2 + $0x7a] sm:$0xff]
    %v4305 = vld [vmem:[#allocation2 + $0x82] sm:$0xff]
    %v4306 = vld [vmem:[#allocation2 + $0x92] sm:$0xff]
    %v4307 = vld [vmem:[#allocation2 + $0x9a] sm:$0xff]
    %v4308 = vld [vmem:[#allocation2 + $0xaa] sm:$0xff]
    %v4309 = vld [vmem:[#allocation2 + $0xb2] sm:$0xff]
    %v4310 = vld [vmem:[#allocation2 + $0xc2] sm:$0xff]
    %v4311 = vld [vmem:[#allocation2 + $0xca] sm:$0xff]
    %v4312 = vld [vmem:[#allocation2 + $0xda] sm:$0xff]
    %v4313 = vld [vmem:[#allocation2 + $0xe2] sm:$0xff]
    %v4314 = vld [vmem:[#allocation2 + $0xf2] sm:$0xff]
    %v4315 = vld [vmem:[#allocation2 + $0xfa] sm:$0xff]
    %v4316 = vld [vmem:[#allocation2 + $0x10a] sm:$0xff]
    %v4317 = vld [vmem:[#allocation2 + $0x112] sm:$0xff]
    %v4318 = vld [vmem:[#allocation2 + $0x122] sm:$0xff]
    %v4319 = vld [vmem:[#allocation2 + $0x12a] sm:$0xff]
    %v4320 = vld [vmem:[#allocation2 + $0x13a] sm:$0xff]
    %v4321 = vld [vmem:[#allocation2 + $0x142] sm:$0xff]
    %v4322 = vld [vmem:[#allocation2 + $0x152] sm:$0xff]
    %v4323 = vld [vmem:[#allocation2 + $0x15a] sm:$0xff]
    %v4324 = vld [vmem:[#allocation2 + $0x16a] sm:$0xff]
    %v4325 = vld [vmem:[#allocation2 + $0x172] sm:$0xff]
    %v4326 = vld [vmem:[#allocation2 + $0x1b2] sm:$0xff]
    %v4327 = vld [vmem:[#allocation2 + $0x1ba] sm:$0xff]
    %v4328 = vld [vmem:[#allocation2 + $0x1ca] sm:$0xff]
    %v4329 = vld [vmem:[#allocation2 + $0x1d2] sm:$0xff]
    %v4330 = vld [vmem:[#allocation2 + $0x1e2] sm:$0xff]
    %v4331 = vld [vmem:[#allocation2 + $0x1ea] sm:$0xff]
    %v4332 = vld [vmem:[#allocation2 + $0x1fa] sm:$0xff]
    %v4333 = vld [vmem:[#allocation2 + $0x202] sm:$0xff]
    %v4334 = vld [vmem:[#allocation2 + $0x212] sm:$0xff]
    %v4335 = vld [vmem:[#allocation2 + $0x21a] sm:$0xff]
    %v4336 = vld [vmem:[#allocation2 + $0x22a] sm:$0xff]
    %v4337 = vld [vmem:[#allocation2 + $0x232] sm:$0xff]
    %v4338 = vld [vmem:[#allocation2 + $0x242] sm:$0xff]
    %v4339 = vld [vmem:[#allocation2 + $0x24a] sm:$0xff]
    %v4340 = vld [vmem:[#allocation2 + $0x25a] sm:$0xff]
    %v4341 = vld [vmem:[#allocation2 + $0x262] sm:$0xff]
    %v4342 = vld [vmem:[#allocation2 + $0x272] sm:$0xff]
    %v4343 = vld [vmem:[#allocation2 + $0x27a] sm:$0xff]
    %v4344 = vld [vmem:[#allocation2 + $0x28a] sm:$0xff]
    %v4345 = vld [vmem:[#allocation2 + $0x292] sm:$0xff]
    %v4346 = vld [vmem:[#allocation2 + $0x2a2] sm:$0xff]
    %v4347 = vld [vmem:[#allocation2 + $0x2aa] sm:$0xff]
    %v4348 = vld [vmem:[#allocation2 + $0x2ba] sm:$0xff]
    %v4349 = vld [vmem:[#allocation2 + $0x2c2] sm:$0xff]
    %v4350 = vld [vmem:[#allocation2 + $0x2d2] sm:$0xff]
    %v4351 = vld [vmem:[#allocation2 + $0x2da] sm:$0xff]
    %v4352 = vld [vmem:[#allocation2 + $0x2ea] sm:$0xff]
    %v4353 = vld [vmem:[#allocation2 + $0x2f2] sm:$0xff]
    %v4354 = vld [vmem:[#allocation2 + $0x302] sm:$0xff]
    %v4355 = vld [vmem:[#allocation2 + $0x30a] sm:$0xff]
    %v4356 = vld [vmem:[#allocation2 + $0x31a] sm:$0xff]
    %v4357 = vld [vmem:[#allocation2 + $0x322] sm:$0xff]
    %v4358 = vpack.c.bf16 %v4295, %v4294
    %v4359 = vpack.c.bf16 %v4297, %v4296
    %v4360 = vpack.c.bf16 %v4299, %v4298
    %v4361 = vpack.c.bf16 %v4301, %v4300
    %v4362 = vpack.c.bf16 %v4303, %v4302
    %v4363 = vpack.c.bf16 %v4305, %v4304
    %v4364 = vpack.c.bf16 %v4307, %v4306
    %v4365 = vpack.c.bf16 %v4309, %v4308
    %v4366 = vpack.c.bf16 %v4311, %v4310
    %v4367 = vpack.c.bf16 %v4313, %v4312
    %v4368 = vpack.c.bf16 %v4315, %v4314
    %v4369 = vpack.c.bf16 %v4317, %v4316
    %v4370 = vpack.c.bf16 %v4319, %v4318
    %v4371 = vpack.c.bf16 %v4321, %v4320
    %v4372 = vpack.c.bf16 %v4323, %v4322
    %v4373 = vpack.c.bf16 %v4325, %v4324
    %v4374 = vpack.c.bf16 %v4327, %v4326
    %v4375 = vpack.c.bf16 %v4329, %v4328
    %v4376 = vpack.c.bf16 %v4331, %v4330
    %v4377 = vpack.c.bf16 %v4333, %v4332
    %v4378 = vpack.c.bf16 %v4335, %v4334
    %v4379 = vpack.c.bf16 %v4337, %v4336
    %v4380 = vpack.c.bf16 %v4339, %v4338
    %v4381 = vpack.c.bf16 %v4341, %v4340
    %v4382 = vpack.c.bf16 %v4343, %v4342
    %v4383 = vpack.c.bf16 %v4345, %v4344
    %v4384 = vpack.c.bf16 %v4347, %v4346
    %v4385 = vpack.c.bf16 %v4349, %v4348
    %v4386 = vpack.c.bf16 %v4351, %v4350
    %v4387 = vpack.c.bf16 %v4353, %v4352
    %v4388 = vpack.c.bf16 %v4355, %v4354
    %v4389 = vpack.c.bf16 %v4357, %v4356
    %v4390 = vld [vmem:[%s96] sm:$0xff]
    %v4391 = vld [vmem:[%s96 + $0x8] sm:$0xff]
    %v4392 = vld [vmem:[%s96 + $0x18] sm:$0xff]
    %v4393 = vld [vmem:[%s96 + $0x20] sm:$0xff]
    %v4394 = vld [vmem:[%s96 + $0x30] sm:$0xff]
    %v4395 = vld [vmem:[%s96 + $0x38] sm:$0xff]
    %v4396 = vld [vmem:[%s96 + $0x48] sm:$0xff]
    %v4397 = vld [vmem:[%s96 + $0x50] sm:$0xff]
    %v4398 = vld [vmem:[%s96 + $0x60] sm:$0xff]
    %v4399 = vld [vmem:[%s96 + $0x68] sm:$0xff]
    %v4400 = vld [vmem:[%s96 + $0x78] sm:$0xff]
    %v4401 = vld [vmem:[%s96 + $0x80] sm:$0xff]
    %v4402 = vld [vmem:[%s96 + $0x90] sm:$0xff]
    %v4403 = vld [vmem:[%s96 + $0x98] sm:$0xff]
    %v4404 = vld [vmem:[%s96 + $0xa8] sm:$0xff]
    %v4405 = vld [vmem:[%s96 + $0xb0] sm:$0xff]
    %v4406 = vld [vmem:[%s96 + $0xc0] sm:$0xff]
    %v4407 = vld [vmem:[%s96 + $0xc8] sm:$0xff]
    %v4408 = vld [vmem:[%s96 + $0xd8] sm:$0xff]
    %v4409 = vld [vmem:[%s96 + $0xe0] sm:$0xff]
    %v4410 = vld [vmem:[%s96 + $0xf0] sm:$0xff]
    %v4411 = vld [vmem:[%s96 + $0xf8] sm:$0xff]
    %v4412 = vld [vmem:[%s96 + $0x108] sm:$0xff]
    %v4413 = vld [vmem:[%s96 + $0x110] sm:$0xff]
    %v4414 = vld [vmem:[%s96 + $0x120] sm:$0xff]
    %v4415 = vld [vmem:[%s96 + $0x128] sm:$0xff]
    %v4416 = vld [vmem:[%s96 + $0x138] sm:$0xff]
    %v4417 = vld [vmem:[%s96 + $0x140] sm:$0xff]
    %v4418 = vld [vmem:[%s96 + $0x150] sm:$0xff]
    %v4419 = vld [vmem:[%s96 + $0x158] sm:$0xff]
    %v4420 = vld [vmem:[%s96 + $0x168] sm:$0xff]
    %v4421 = vld [vmem:[%s96 + $0x170] sm:$0xff]
    %v4422 = vld [vmem:[%s96 + $0x1b0] sm:$0xff]
    %v4423 = vld [vmem:[%s96 + $0x1b8] sm:$0xff]
    %v4424 = vld [vmem:[%s96 + $0x1c8] sm:$0xff]
    %v4425 = vld [vmem:[%s96 + $0x1d0] sm:$0xff]
    %v4426 = vld [vmem:[%s96 + $0x1e0] sm:$0xff]
    %v4427 = vld [vmem:[%s96 + $0x1e8] sm:$0xff]
    %v4428 = vld [vmem:[%s96 + $0x1f8] sm:$0xff]
    %v4429 = vld [vmem:[%s96 + $0x200] sm:$0xff]
    %v4430 = vld [vmem:[%s96 + $0x210] sm:$0xff]
    %v4431 = vld [vmem:[%s96 + $0x218] sm:$0xff]
    %v4432 = vld [vmem:[%s96 + $0x228] sm:$0xff]
    %v4433 = vld [vmem:[%s96 + $0x230] sm:$0xff]
    %v4434 = vld [vmem:[%s96 + $0x240] sm:$0xff]
    %v4435 = vld [vmem:[%s96 + $0x248] sm:$0xff]
    %v4436 = vld [vmem:[%s96 + $0x258] sm:$0xff]
    %v4437 = vld [vmem:[%s96 + $0x260] sm:$0xff]
    %v4438 = vld [vmem:[%s96 + $0x270] sm:$0xff]
    %v4439 = vld [vmem:[%s96 + $0x278] sm:$0xff]
    %v4440 = vld [vmem:[%s96 + $0x288] sm:$0xff]
    %v4441 = vld [vmem:[%s96 + $0x290] sm:$0xff]
    %v4442 = vld [vmem:[%s96 + $0x2a0] sm:$0xff]
    %v4443 = vld [vmem:[%s96 + $0x2a8] sm:$0xff]
    %v4444 = vld [vmem:[%s96 + $0x2b8] sm:$0xff]
    %v4445 = vld [vmem:[%s96 + $0x2c0] sm:$0xff]
    %v4446 = vld [vmem:[%s96 + $0x2d0] sm:$0xff]
    %v4447 = vld [vmem:[%s96 + $0x2d8] sm:$0xff]
    %v4448 = vld [vmem:[%s96 + $0x2e8] sm:$0xff]
    %v4449 = vld [vmem:[%s96 + $0x2f0] sm:$0xff]
    %v4450 = vld [vmem:[%s96 + $0x300] sm:$0xff]
    %v4451 = vld [vmem:[%s96 + $0x308] sm:$0xff]
    %v4452 = vld [vmem:[%s96 + $0x318] sm:$0xff]
    %v4453 = vld [vmem:[%s96 + $0x320] sm:$0xff]
    %v4454 = vpack.c.bf16 %v4391, %v4390
    %v4455 = vpack.c.bf16 %v4393, %v4392
    %v4456 = vpack.c.bf16 %v4395, %v4394
    %v4457 = vpack.c.bf16 %v4397, %v4396
    %v4458 = vpack.c.bf16 %v4399, %v4398
    %v4459 = vpack.c.bf16 %v4401, %v4400
    %v4460 = vpack.c.bf16 %v4403, %v4402
    %v4461 = vpack.c.bf16 %v4405, %v4404
    %v4462 = vpack.c.bf16 %v4407, %v4406
    %v4463 = vpack.c.bf16 %v4409, %v4408
    %v4464 = vpack.c.bf16 %v4411, %v4410
    %v4465 = vpack.c.bf16 %v4413, %v4412
    %v4466 = vpack.c.bf16 %v4415, %v4414
    %v4467 = vpack.c.bf16 %v4417, %v4416
    %v4468 = vpack.c.bf16 %v4419, %v4418
    %v4469 = vpack.c.bf16 %v4421, %v4420
    %v4470 = vpack.c.bf16 %v4423, %v4422
    %v4471 = vpack.c.bf16 %v4425, %v4424
    %v4472 = vpack.c.bf16 %v4427, %v4426
    %v4473 = vpack.c.bf16 %v4429, %v4428
    %v4474 = vpack.c.bf16 %v4431, %v4430
    %v4475 = vpack.c.bf16 %v4433, %v4432
    %v4476 = vpack.c.bf16 %v4435, %v4434
    %v4477 = vpack.c.bf16 %v4437, %v4436
    %v4478 = vpack.c.bf16 %v4439, %v4438
    %v4479 = vpack.c.bf16 %v4441, %v4440
    %v4480 = vpack.c.bf16 %v4443, %v4442
    %v4481 = vpack.c.bf16 %v4445, %v4444
    %v4482 = vpack.c.bf16 %v4447, %v4446
    %v4483 = vpack.c.bf16 %v4449, %v4448
    %v4484 = vpack.c.bf16 %v4451, %v4450
    %v4485 = vpack.c.bf16 %v4453, %v4452
    %v4486 = vld [vmem:[%s96 + $0x1] sm:$0xff]
    %v4487 = vld [vmem:[%s96 + $0x9] sm:$0xff]
    %v4488 = vld [vmem:[%s96 + $0x19] sm:$0xff]
    %v4489 = vld [vmem:[%s96 + $0x21] sm:$0xff]
    %v4490 = vld [vmem:[%s96 + $0x31] sm:$0xff]
    %v4491 = vld [vmem:[%s96 + $0x39] sm:$0xff]
    %v4492 = vld [vmem:[%s96 + $0x49] sm:$0xff]
    %v4493 = vld [vmem:[%s96 + $0x51] sm:$0xff]
    %v4494 = vld [vmem:[%s96 + $0x61] sm:$0xff]
    %v4495 = vld [vmem:[%s96 + $0x69] sm:$0xff]
    %v4496 = vld [vmem:[%s96 + $0x79] sm:$0xff]
    %v4497 = vld [vmem:[%s96 + $0x81] sm:$0xff]
    %v4498 = vld [vmem:[%s96 + $0x91] sm:$0xff]
    %v4499 = vld [vmem:[%s96 + $0x99] sm:$0xff]
    %v4500 = vld [vmem:[%s96 + $0xa9] sm:$0xff]
    %v4501 = vld [vmem:[%s96 + $0xb1] sm:$0xff]
    %v4502 = vld [vmem:[%s96 + $0xc1] sm:$0xff]
    %v4503 = vld [vmem:[%s96 + $0xc9] sm:$0xff]
    %v4504 = vld [vmem:[%s96 + $0xd9] sm:$0xff]
    %v4505 = vld [vmem:[%s96 + $0xe1] sm:$0xff]
    %v4506 = vld [vmem:[%s96 + $0xf1] sm:$0xff]
    %v4507 = vld [vmem:[%s96 + $0xf9] sm:$0xff]
    %v4508 = vld [vmem:[%s96 + $0x109] sm:$0xff]
    %v4509 = vld [vmem:[%s96 + $0x111] sm:$0xff]
    %v4510 = vld [vmem:[%s96 + $0x121] sm:$0xff]
    %v4511 = vld [vmem:[%s96 + $0x129] sm:$0xff]
    %v4512 = vld [vmem:[%s96 + $0x139] sm:$0xff]
    %v4513 = vld [vmem:[%s96 + $0x141] sm:$0xff]
    %v4514 = vld [vmem:[%s96 + $0x151] sm:$0xff]
    %v4515 = vld [vmem:[%s96 + $0x159] sm:$0xff]
    %v4516 = vld [vmem:[%s96 + $0x169] sm:$0xff]
    %v4517 = vld [vmem:[%s96 + $0x171] sm:$0xff]
    %v4518 = vld [vmem:[%s96 + $0x1b1] sm:$0xff]
    %v4519 = vld [vmem:[%s96 + $0x1b9] sm:$0xff]
    %v4520 = vld [vmem:[%s96 + $0x1c9] sm:$0xff]
    %v4521 = vld [vmem:[%s96 + $0x1d1] sm:$0xff]
    %v4522 = vld [vmem:[%s96 + $0x1e1] sm:$0xff]
    %v4523 = vld [vmem:[%s96 + $0x1e9] sm:$0xff]
    %v4524 = vld [vmem:[%s96 + $0x1f9] sm:$0xff]
    %v4525 = vld [vmem:[%s96 + $0x201] sm:$0xff]
    %v4526 = vld [vmem:[%s96 + $0x211] sm:$0xff]
    %v4527 = vld [vmem:[%s96 + $0x219] sm:$0xff]
    %v4528 = vld [vmem:[%s96 + $0x229] sm:$0xff]
    %v4529 = vld [vmem:[%s96 + $0x231] sm:$0xff]
    %v4530 = vld [vmem:[%s96 + $0x241] sm:$0xff]
    %v4531 = vld [vmem:[%s96 + $0x249] sm:$0xff]
    %v4532 = vld [vmem:[%s96 + $0x259] sm:$0xff]
    %v4533 = vld [vmem:[%s96 + $0x261] sm:$0xff]
    %v4534 = vld [vmem:[%s96 + $0x271] sm:$0xff]
    %v4535 = vld [vmem:[%s96 + $0x279] sm:$0xff]
    %v4536 = vld [vmem:[%s96 + $0x289] sm:$0xff]
    %v4537 = vld [vmem:[%s96 + $0x291] sm:$0xff]
    %v4538 = vld [vmem:[%s96 + $0x2a1] sm:$0xff]
    %v4539 = vld [vmem:[%s96 + $0x2a9] sm:$0xff]
    %v4540 = vld [vmem:[%s96 + $0x2b9] sm:$0xff]
    %v4541 = vld [vmem:[%s96 + $0x2c1] sm:$0xff]
    %v4542 = vld [vmem:[%s96 + $0x2d1] sm:$0xff]
    %v4543 = vld [vmem:[%s96 + $0x2d9] sm:$0xff]
    %v4544 = vld [vmem:[%s96 + $0x2e9] sm:$0xff]
    %v4545 = vld [vmem:[%s96 + $0x2f1] sm:$0xff]
    %v4546 = vld [vmem:[%s96 + $0x301] sm:$0xff]
    %v4547 = vld [vmem:[%s96 + $0x309] sm:$0xff]
    %v4548 = vld [vmem:[%s96 + $0x319] sm:$0xff]
    %v4549 = vld [vmem:[%s96 + $0x321] sm:$0xff]
    %v4550 = vpack.c.bf16 %v4487, %v4486
    %v4551 = vpack.c.bf16 %v4489, %v4488
    %v4552 = vpack.c.bf16 %v4491, %v4490
    %v4553 = vpack.c.bf16 %v4493, %v4492
    %v4554 = vpack.c.bf16 %v4495, %v4494
    %v4555 = vpack.c.bf16 %v4497, %v4496
    %v4556 = vpack.c.bf16 %v4499, %v4498
    %v4557 = vpack.c.bf16 %v4501, %v4500
    %v4558 = vpack.c.bf16 %v4503, %v4502
    %v4559 = vpack.c.bf16 %v4505, %v4504
    %v4560 = vpack.c.bf16 %v4507, %v4506
    %v4561 = vpack.c.bf16 %v4509, %v4508
    %v4562 = vpack.c.bf16 %v4511, %v4510
    %v4563 = vpack.c.bf16 %v4513, %v4512
    %v4564 = vpack.c.bf16 %v4515, %v4514
    %v4565 = vpack.c.bf16 %v4517, %v4516
    %v4566 = vpack.c.bf16 %v4519, %v4518
    %v4567 = vpack.c.bf16 %v4521, %v4520
    %v4568 = vpack.c.bf16 %v4523, %v4522
    %v4569 = vpack.c.bf16 %v4525, %v4524
    %v4570 = vpack.c.bf16 %v4527, %v4526
    %v4571 = vpack.c.bf16 %v4529, %v4528
    %v4572 = vpack.c.bf16 %v4531, %v4530
    %v4573 = vpack.c.bf16 %v4533, %v4532
    %v4574 = vpack.c.bf16 %v4535, %v4534
    %v4575 = vpack.c.bf16 %v4537, %v4536
    %v4576 = vpack.c.bf16 %v4539, %v4538
    %v4577 = vpack.c.bf16 %v4541, %v4540
    %v4578 = vpack.c.bf16 %v4543, %v4542
    %v4579 = vpack.c.bf16 %v4545, %v4544
    %v4580 = vpack.c.bf16 %v4547, %v4546
    %v4581 = vpack.c.bf16 %v4549, %v4548
    %v4582 = vld [vmem:[%s96 + $0x2] sm:$0xff]
    %v4583 = vld [vmem:[%s96 + $0xa] sm:$0xff]
    %v4584 = vld [vmem:[%s96 + $0x1a] sm:$0xff]
    %v4585 = vld [vmem:[%s96 + $0x22] sm:$0xff]
    %v4586 = vld [vmem:[%s96 + $0x32] sm:$0xff]
    %v4587 = vld [vmem:[%s96 + $0x3a] sm:$0xff]
    %v4588 = vld [vmem:[%s96 + $0x4a] sm:$0xff]
    %v4589 = vld [vmem:[%s96 + $0x52] sm:$0xff]
    %v4590 = vld [vmem:[%s96 + $0x62] sm:$0xff]
    %v4591 = vld [vmem:[%s96 + $0x6a] sm:$0xff]
    %v4592 = vld [vmem:[%s96 + $0x7a] sm:$0xff]
    %v4593 = vld [vmem:[%s96 + $0x82] sm:$0xff]
    %v4594 = vld [vmem:[%s96 + $0x92] sm:$0xff]
    %v4595 = vld [vmem:[%s96 + $0x9a] sm:$0xff]
    %v4596 = vld [vmem:[%s96 + $0xaa] sm:$0xff]
    %v4597 = vld [vmem:[%s96 + $0xb2] sm:$0xff]
    %v4598 = vld [vmem:[%s96 + $0xc2] sm:$0xff]
    %v4599 = vld [vmem:[%s96 + $0xca] sm:$0xff]
    %v4600 = vld [vmem:[%s96 + $0xda] sm:$0xff]
    %v4601 = vld [vmem:[%s96 + $0xe2] sm:$0xff]
    %v4602 = vld [vmem:[%s96 + $0xf2] sm:$0xff]
    %v4603 = vld [vmem:[%s96 + $0xfa] sm:$0xff]
    %v4604 = vld [vmem:[%s96 + $0x10a] sm:$0xff]
    %v4605 = vld [vmem:[%s96 + $0x112] sm:$0xff]
    %v4606 = vld [vmem:[%s96 + $0x122] sm:$0xff]
    %v4607 = vld [vmem:[%s96 + $0x12a] sm:$0xff]
    %v4608 = vld [vmem:[%s96 + $0x13a] sm:$0xff]
    %v4609 = vld [vmem:[%s96 + $0x142] sm:$0xff]
    %v4610 = vld [vmem:[%s96 + $0x152] sm:$0xff]
    %v4611 = vld [vmem:[%s96 + $0x15a] sm:$0xff]
    %v4612 = vld [vmem:[%s96 + $0x16a] sm:$0xff]
    %v4613 = vld [vmem:[%s96 + $0x172] sm:$0xff]
    %v4614 = vld [vmem:[%s96 + $0x1b2] sm:$0xff]
    %v4615 = vld [vmem:[%s96 + $0x1ba] sm:$0xff]
    %v4616 = vld [vmem:[%s96 + $0x1ca] sm:$0xff]
    %v4617 = vld [vmem:[%s96 + $0x1d2] sm:$0xff]
    %v4618 = vld [vmem:[%s96 + $0x1e2] sm:$0xff]
    %v4619 = vld [vmem:[%s96 + $0x1ea] sm:$0xff]
    %v4620 = vld [vmem:[%s96 + $0x1fa] sm:$0xff]
    %v4621 = vld [vmem:[%s96 + $0x202] sm:$0xff]
    %v4622 = vld [vmem:[%s96 + $0x212] sm:$0xff]
    %v4623 = vld [vmem:[%s96 + $0x21a] sm:$0xff]
    %v4624 = vld [vmem:[%s96 + $0x22a] sm:$0xff]
    %v4625 = vld [vmem:[%s96 + $0x232] sm:$0xff]
    %v4626 = vld [vmem:[%s96 + $0x242] sm:$0xff]
    %v4627 = vld [vmem:[%s96 + $0x24a] sm:$0xff]
    %v4628 = vld [vmem:[%s96 + $0x25a] sm:$0xff]
    %v4629 = vld [vmem:[%s96 + $0x262] sm:$0xff]
    %v4630 = vld [vmem:[%s96 + $0x272] sm:$0xff]
    %v4631 = vld [vmem:[%s96 + $0x27a] sm:$0xff]
    %v4632 = vld [vmem:[%s96 + $0x28a] sm:$0xff]
    %v4633 = vld [vmem:[%s96 + $0x292] sm:$0xff]
    %v4634 = vld [vmem:[%s96 + $0x2a2] sm:$0xff]
    %v4635 = vld [vmem:[%s96 + $0x2aa] sm:$0xff]
    %v4636 = vld [vmem:[%s96 + $0x2ba] sm:$0xff]
    %v4637 = vld [vmem:[%s96 + $0x2c2] sm:$0xff]
    %v4638 = vld [vmem:[%s96 + $0x2d2] sm:$0xff]
    %v4639 = vld [vmem:[%s96 + $0x2da] sm:$0xff]
    %v4640 = vld [vmem:[%s96 + $0x2ea] sm:$0xff]
    %v4641 = vld [vmem:[%s96 + $0x2f2] sm:$0xff]
    %v4642 = vld [vmem:[%s96 + $0x302] sm:$0xff]
    %v4643 = vld [vmem:[%s96 + $0x30a] sm:$0xff]
    %v4644 = vld [vmem:[%s96 + $0x31a] sm:$0xff]
    %v4645 = vld [vmem:[%s96 + $0x322] sm:$0xff]
    %v4646 = vpack.c.bf16 %v4583, %v4582
    %v4647 = vpack.c.bf16 %v4585, %v4584
    %v4648 = vpack.c.bf16 %v4587, %v4586
    %v4649 = vpack.c.bf16 %v4589, %v4588
    %v4650 = vpack.c.bf16 %v4591, %v4590
    %v4651 = vpack.c.bf16 %v4593, %v4592
    %v4652 = vpack.c.bf16 %v4595, %v4594
    %v4653 = vpack.c.bf16 %v4597, %v4596
    %v4654 = vpack.c.bf16 %v4599, %v4598
    %v4655 = vpack.c.bf16 %v4601, %v4600
    %v4656 = vpack.c.bf16 %v4603, %v4602
    %v4657 = vpack.c.bf16 %v4605, %v4604
    %v4658 = vpack.c.bf16 %v4607, %v4606
    %v4659 = vpack.c.bf16 %v4609, %v4608
    %v4660 = vpack.c.bf16 %v4611, %v4610
    %v4661 = vpack.c.bf16 %v4613, %v4612
    %v4662 = vpack.c.bf16 %v4615, %v4614
    %v4663 = vpack.c.bf16 %v4617, %v4616
    %v4664 = vpack.c.bf16 %v4619, %v4618
    %v4665 = vpack.c.bf16 %v4621, %v4620
    %v4666 = vpack.c.bf16 %v4623, %v4622
    %v4667 = vpack.c.bf16 %v4625, %v4624
    %v4668 = vpack.c.bf16 %v4627, %v4626
    %v4669 = vpack.c.bf16 %v4629, %v4628
    %v4670 = vpack.c.bf16 %v4631, %v4630
    %v4671 = vpack.c.bf16 %v4633, %v4632
    %v4672 = vpack.c.bf16 %v4635, %v4634
    %v4673 = vpack.c.bf16 %v4637, %v4636
    %v4674 = vpack.c.bf16 %v4639, %v4638
    %v4675 = vpack.c.bf16 %v4641, %v4640
    %v4676 = vpack.c.bf16 %v4643, %v4642
    %v4677 = vpack.c.bf16 %v4645, %v4644
    %v4678 = vld [vmem:[%s1558] sm:$0xff]
    %v4679 = vld [vmem:[%s1558 + $0x8] sm:$0xff]
    %v4680 = vld [vmem:[%s1558 + $0x18] sm:$0xff]
    %v4681 = vld [vmem:[%s1558 + $0x20] sm:$0xff]
    %v4682 = vld [vmem:[%s1558 + $0x30] sm:$0xff]
    %v4683 = vld [vmem:[%s1558 + $0x38] sm:$0xff]
    %v4684 = vld [vmem:[%s1558 + $0x48] sm:$0xff]
    %v4685 = vld [vmem:[%s1558 + $0x50] sm:$0xff]
    %v4686 = vld [vmem:[%s1558 + $0x60] sm:$0xff]
    %v4687 = vld [vmem:[%s1558 + $0x68] sm:$0xff]
    %v4688 = vld [vmem:[%s1558 + $0x78] sm:$0xff]
    %v4689 = vld [vmem:[%s1558 + $0x80] sm:$0xff]
    %v4690 = vld [vmem:[%s1558 + $0x90] sm:$0xff]
    %v4691 = vld [vmem:[%s1558 + $0x98] sm:$0xff]
    %v4692 = vld [vmem:[%s1558 + $0xa8] sm:$0xff]
    %v4693 = vld [vmem:[%s1558 + $0xb0] sm:$0xff]
    %v4694 = vld [vmem:[%s1558 + $0xc0] sm:$0xff]
    %v4695 = vld [vmem:[%s1558 + $0xc8] sm:$0xff]
    %v4696 = vld [vmem:[%s1558 + $0xd8] sm:$0xff]
    %v4697 = vld [vmem:[%s1558 + $0xe0] sm:$0xff]
    %v4698 = vld [vmem:[%s1558 + $0xf0] sm:$0xff]
    %v4699 = vld [vmem:[%s1558 + $0xf8] sm:$0xff]
    %v4700 = vld [vmem:[%s1558 + $0x108] sm:$0xff]
    %v4701 = vld [vmem:[%s1558 + $0x110] sm:$0xff]
    %v4702 = vld [vmem:[%s1558 + $0x120] sm:$0xff]
    %v4703 = vld [vmem:[%s1558 + $0x128] sm:$0xff]
    %v4704 = vld [vmem:[%s1558 + $0x138] sm:$0xff]
    %v4705 = vld [vmem:[%s1558 + $0x140] sm:$0xff]
    %v4706 = vld [vmem:[%s1558 + $0x150] sm:$0xff]
    %v4707 = vld [vmem:[%s1558 + $0x158] sm:$0xff]
    %v4708 = vld [vmem:[%s1558 + $0x168] sm:$0xff]
    %v4709 = vld [vmem:[%s1558 + $0x170] sm:$0xff]
    %v4710 = vld [vmem:[%s1558 + $0x1b0] sm:$0xff]
    %v4711 = vld [vmem:[%s1558 + $0x1b8] sm:$0xff]
    %v4712 = vld [vmem:[%s1558 + $0x1c8] sm:$0xff]
    %v4713 = vld [vmem:[%s1558 + $0x1d0] sm:$0xff]
    %v4714 = vld [vmem:[%s1558 + $0x1e0] sm:$0xff]
    %v4715 = vld [vmem:[%s1558 + $0x1e8] sm:$0xff]
    %v4716 = vld [vmem:[%s1558 + $0x1f8] sm:$0xff]
    %v4717 = vld [vmem:[%s1558 + $0x200] sm:$0xff]
    %v4718 = vld [vmem:[%s1558 + $0x210] sm:$0xff]
    %v4719 = vld [vmem:[%s1558 + $0x218] sm:$0xff]
    %v4720 = vld [vmem:[%s1558 + $0x228] sm:$0xff]
    %v4721 = vld [vmem:[%s1558 + $0x230] sm:$0xff]
    %v4722 = vld [vmem:[%s1558 + $0x240] sm:$0xff]
    %v4723 = vld [vmem:[%s1558 + $0x248] sm:$0xff]
    %v4724 = vld [vmem:[%s1558 + $0x258] sm:$0xff]
    %v4725 = vld [vmem:[%s1558 + $0x260] sm:$0xff]
    %v4726 = vld [vmem:[%s1558 + $0x270] sm:$0xff]
    %v4727 = vld [vmem:[%s1558 + $0x278] sm:$0xff]
    %v4728 = vld [vmem:[%s1558 + $0x288] sm:$0xff]
    %v4729 = vld [vmem:[%s1558 + $0x290] sm:$0xff]
    %v4730 = vld [vmem:[%s1558 + $0x2a0] sm:$0xff]
    %v4731 = vld [vmem:[%s1558 + $0x2a8] sm:$0xff]
    %v4732 = vld [vmem:[%s1558 + $0x2b8] sm:$0xff]
    %v4733 = vld [vmem:[%s1558 + $0x2c0] sm:$0xff]
    %v4734 = vld [vmem:[%s1558 + $0x2d0] sm:$0xff]
    %v4735 = vld [vmem:[%s1558 + $0x2d8] sm:$0xff]
    %v4736 = vld [vmem:[%s1558 + $0x2e8] sm:$0xff]
    %v4737 = vld [vmem:[%s1558 + $0x2f0] sm:$0xff]
    %v4738 = vld [vmem:[%s1558 + $0x300] sm:$0xff]
    %v4739 = vld [vmem:[%s1558 + $0x308] sm:$0xff]
    %v4740 = vld [vmem:[%s1558 + $0x318] sm:$0xff]
    %v4741 = vld [vmem:[%s1558 + $0x320] sm:$0xff]
    %v4742 = vpack.c.bf16 %v4679, %v4678
    %v4743 = vpack.c.bf16 %v4681, %v4680
    %v4744 = vpack.c.bf16 %v4683, %v4682
    %v4745 = vpack.c.bf16 %v4685, %v4684
    %v4746 = vpack.c.bf16 %v4687, %v4686
    %v4747 = vpack.c.bf16 %v4689, %v4688
    %v4748 = vpack.c.bf16 %v4691, %v4690
    %v4749 = vpack.c.bf16 %v4693, %v4692
    %v4750 = vpack.c.bf16 %v4695, %v4694
    %v4751 = vpack.c.bf16 %v4697, %v4696
    %v4752 = vpack.c.bf16 %v4699, %v4698
    %v4753 = vpack.c.bf16 %v4701, %v4700
    %v4754 = vpack.c.bf16 %v4703, %v4702
    %v4755 = vpack.c.bf16 %v4705, %v4704
    %v4756 = vpack.c.bf16 %v4707, %v4706
    %v4757 = vpack.c.bf16 %v4709, %v4708
    %v4758 = vpack.c.bf16 %v4711, %v4710
    %v4759 = vpack.c.bf16 %v4713, %v4712
    %v4760 = vpack.c.bf16 %v4715, %v4714
    %v4761 = vpack.c.bf16 %v4717, %v4716
    %v4762 = vpack.c.bf16 %v4719, %v4718
    %v4763 = vpack.c.bf16 %v4721, %v4720
    %v4764 = vpack.c.bf16 %v4723, %v4722
    %v4765 = vpack.c.bf16 %v4725, %v4724
    %v4766 = vpack.c.bf16 %v4727, %v4726
    %v4767 = vpack.c.bf16 %v4729, %v4728
    %v4768 = vpack.c.bf16 %v4731, %v4730
    %v4769 = vpack.c.bf16 %v4733, %v4732
    %v4770 = vpack.c.bf16 %v4735, %v4734
    %v4771 = vpack.c.bf16 %v4737, %v4736
    %v4772 = vpack.c.bf16 %v4739, %v4738
    %v4773 = vpack.c.bf16 %v4741, %v4740
    %v4774 = vld [vmem:[%s1558 + $0x1] sm:$0xff]
    %v4775 = vld [vmem:[%s1558 + $0x9] sm:$0xff]
    %v4776 = vld [vmem:[%s1558 + $0x19] sm:$0xff]
    %v4777 = vld [vmem:[%s1558 + $0x21] sm:$0xff]
    %v4778 = vld [vmem:[%s1558 + $0x31] sm:$0xff]
    %v4779 = vld [vmem:[%s1558 + $0x39] sm:$0xff]
    %v4780 = vld [vmem:[%s1558 + $0x49] sm:$0xff]
    %v4781 = vld [vmem:[%s1558 + $0x51] sm:$0xff]
    %v4782 = vld [vmem:[%s1558 + $0x61] sm:$0xff]
    %v4783 = vld [vmem:[%s1558 + $0x69] sm:$0xff]
    %v4784 = vld [vmem:[%s1558 + $0x79] sm:$0xff]
    %v4785 = vld [vmem:[%s1558 + $0x81] sm:$0xff]
    %v4786 = vld [vmem:[%s1558 + $0x91] sm:$0xff]
    %v4787 = vld [vmem:[%s1558 + $0x99] sm:$0xff]
    %v4788 = vld [vmem:[%s1558 + $0xa9] sm:$0xff]
    %v4789 = vld [vmem:[%s1558 + $0xb1] sm:$0xff]
    %v4790 = vld [vmem:[%s1558 + $0xc1] sm:$0xff]
    %v4791 = vld [vmem:[%s1558 + $0xc9] sm:$0xff]
    %v4792 = vld [vmem:[%s1558 + $0xd9] sm:$0xff]
    %v4793 = vld [vmem:[%s1558 + $0xe1] sm:$0xff]
    %v4794 = vld [vmem:[%s1558 + $0xf1] sm:$0xff]
    %v4795 = vld [vmem:[%s1558 + $0xf9] sm:$0xff]
    %v4796 = vld [vmem:[%s1558 + $0x109] sm:$0xff]
    %v4797 = vld [vmem:[%s1558 + $0x111] sm:$0xff]
    %v4798 = vld [vmem:[%s1558 + $0x121] sm:$0xff]
    %v4799 = vld [vmem:[%s1558 + $0x129] sm:$0xff]
    %v4800 = vld [vmem:[%s1558 + $0x139] sm:$0xff]
    %v4801 = vld [vmem:[%s1558 + $0x141] sm:$0xff]
    %v4802 = vld [vmem:[%s1558 + $0x151] sm:$0xff]
    %v4803 = vld [vmem:[%s1558 + $0x159] sm:$0xff]
    %v4804 = vld [vmem:[%s1558 + $0x169] sm:$0xff]
    %v4805 = vld [vmem:[%s1558 + $0x171] sm:$0xff]
    %v4806 = vld [vmem:[%s1558 + $0x1b1] sm:$0xff]
    %v4807 = vld [vmem:[%s1558 + $0x1b9] sm:$0xff]
    %v4808 = vld [vmem:[%s1558 + $0x1c9] sm:$0xff]
    %v4809 = vld [vmem:[%s1558 + $0x1d1] sm:$0xff]
    %v4810 = vld [vmem:[%s1558 + $0x1e1] sm:$0xff]
    %v4811 = vld [vmem:[%s1558 + $0x1e9] sm:$0xff]
    %v4812 = vld [vmem:[%s1558 + $0x1f9] sm:$0xff]
    %v4813 = vld [vmem:[%s1558 + $0x201] sm:$0xff]
    %v4814 = vld [vmem:[%s1558 + $0x211] sm:$0xff]
    %v4815 = vld [vmem:[%s1558 + $0x219] sm:$0xff]
    %v4816 = vld [vmem:[%s1558 + $0x229] sm:$0xff]
    %v4817 = vld [vmem:[%s1558 + $0x231] sm:$0xff]
    %v4818 = vld [vmem:[%s1558 + $0x241] sm:$0xff]
    %v4819 = vld [vmem:[%s1558 + $0x249] sm:$0xff]
    %v4820 = vld [vmem:[%s1558 + $0x259] sm:$0xff]
    %v4821 = vld [vmem:[%s1558 + $0x261] sm:$0xff]
    %v4822 = vld [vmem:[%s1558 + $0x271] sm:$0xff]
    %v4823 = vld [vmem:[%s1558 + $0x279] sm:$0xff]
    %v4824 = vld [vmem:[%s1558 + $0x289] sm:$0xff]
    %v4825 = vld [vmem:[%s1558 + $0x291] sm:$0xff]
    %v4826 = vld [vmem:[%s1558 + $0x2a1] sm:$0xff]
    %v4827 = vld [vmem:[%s1558 + $0x2a9] sm:$0xff]
    %v4828 = vld [vmem:[%s1558 + $0x2b9] sm:$0xff]
    %v4829 = vld [vmem:[%s1558 + $0x2c1] sm:$0xff]
    %v4830 = vld [vmem:[%s1558 + $0x2d1] sm:$0xff]
    %v4831 = vld [vmem:[%s1558 + $0x2d9] sm:$0xff]
    %v4832 = vld [vmem:[%s1558 + $0x2e9] sm:$0xff]
    %v4833 = vld [vmem:[%s1558 + $0x2f1] sm:$0xff]
    %v4834 = vld [vmem:[%s1558 + $0x301] sm:$0xff]
    %v4835 = vld [vmem:[%s1558 + $0x309] sm:$0xff]
    %v4836 = vld [vmem:[%s1558 + $0x319] sm:$0xff]
    %v4837 = vld [vmem:[%s1558 + $0x321] sm:$0xff]
    %v4838 = vpack.c.bf16 %v4775, %v4774
    %v4839 = vpack.c.bf16 %v4777, %v4776
    %v4840 = vpack.c.bf16 %v4779, %v4778
    %v4841 = vpack.c.bf16 %v4781, %v4780
    %v4842 = vpack.c.bf16 %v4783, %v4782
    %v4843 = vpack.c.bf16 %v4785, %v4784
    %v4844 = vpack.c.bf16 %v4787, %v4786
    %v4845 = vpack.c.bf16 %v4789, %v4788
    %v4846 = vpack.c.bf16 %v4791, %v4790
    %v4847 = vpack.c.bf16 %v4793, %v4792
    %v4848 = vpack.c.bf16 %v4795, %v4794
    %v4849 = vpack.c.bf16 %v4797, %v4796
    %v4850 = vpack.c.bf16 %v4799, %v4798
    %v4851 = vpack.c.bf16 %v4801, %v4800
    %v4852 = vpack.c.bf16 %v4803, %v4802
    %v4853 = vpack.c.bf16 %v4805, %v4804
    %v4854 = vpack.c.bf16 %v4807, %v4806
    %v4855 = vpack.c.bf16 %v4809, %v4808
    %v4856 = vpack.c.bf16 %v4811, %v4810
    %v4857 = vpack.c.bf16 %v4813, %v4812
    %v4858 = vpack.c.bf16 %v4815, %v4814
    %v4859 = vpack.c.bf16 %v4817, %v4816
    %v4860 = vpack.c.bf16 %v4819, %v4818
    %v4861 = vpack.c.bf16 %v4821, %v4820
    %v4862 = vpack.c.bf16 %v4823, %v4822
    %v4863 = vpack.c.bf16 %v4825, %v4824
    %v4864 = vpack.c.bf16 %v4827, %v4826
    %v4865 = vpack.c.bf16 %v4829, %v4828
    %v4866 = vpack.c.bf16 %v4831, %v4830
    %v4867 = vpack.c.bf16 %v4833, %v4832
    %v4868 = vpack.c.bf16 %v4835, %v4834
    %v4869 = vpack.c.bf16 %v4837, %v4836
    %v4870 = vld [vmem:[%s1558 + $0x2] sm:$0xff]
    %v4871 = vld [vmem:[%s1558 + $0xa] sm:$0xff]
    %v4872 = vld [vmem:[%s1558 + $0x1a] sm:$0xff]
    %v4873 = vld [vmem:[%s1558 + $0x22] sm:$0xff]
    %v4874 = vld [vmem:[%s1558 + $0x32] sm:$0xff]
    %v4875 = vld [vmem:[%s1558 + $0x3a] sm:$0xff]
    %v4876 = vld [vmem:[%s1558 + $0x4a] sm:$0xff]
    %v4877 = vld [vmem:[%s1558 + $0x52] sm:$0xff]
    %v4878 = vld [vmem:[%s1558 + $0x62] sm:$0xff]
    %v4879 = vld [vmem:[%s1558 + $0x6a] sm:$0xff]
    %v4880 = vld [vmem:[%s1558 + $0x7a] sm:$0xff]
    %v4881 = vld [vmem:[%s1558 + $0x82] sm:$0xff]
    %v4882 = vld [vmem:[%s1558 + $0x92] sm:$0xff]
    %v4883 = vld [vmem:[%s1558 + $0x9a] sm:$0xff]
    %v4884 = vld [vmem:[%s1558 + $0xaa] sm:$0xff]
    %v4885 = vld [vmem:[%s1558 + $0xb2] sm:$0xff]
    %v4886 = vld [vmem:[%s1558 + $0xc2] sm:$0xff]
    %v4887 = vld [vmem:[%s1558 + $0xca] sm:$0xff]
    %v4888 = vld [vmem:[%s1558 + $0xda] sm:$0xff]
    %v4889 = vld [vmem:[%s1558 + $0xe2] sm:$0xff]
    %v4890 = vld [vmem:[%s1558 + $0xf2] sm:$0xff]
    %v4891 = vld [vmem:[%s1558 + $0xfa] sm:$0xff]
    %v4892 = vld [vmem:[%s1558 + $0x10a] sm:$0xff]
    %v4893 = vld [vmem:[%s1558 + $0x112] sm:$0xff]
    %v4894 = vld [vmem:[%s1558 + $0x122] sm:$0xff]
    %v4895 = vld [vmem:[%s1558 + $0x12a] sm:$0xff]
    %v4896 = vld [vmem:[%s1558 + $0x13a] sm:$0xff]
    %v4897 = vld [vmem:[%s1558 + $0x142] sm:$0xff]
    %v4898 = vld [vmem:[%s1558 + $0x152] sm:$0xff]
    %v4899 = vld [vmem:[%s1558 + $0x15a] sm:$0xff]
    %v4900 = vld [vmem:[%s1558 + $0x16a] sm:$0xff]
    %v4901 = vld [vmem:[%s1558 + $0x172] sm:$0xff]
    %v4902 = vld [vmem:[%s1558 + $0x1b2] sm:$0xff]
    %v4903 = vld [vmem:[%s1558 + $0x1ba] sm:$0xff]
    %v4904 = vld [vmem:[%s1558 + $0x1ca] sm:$0xff]
    %v4905 = vld [vmem:[%s1558 + $0x1d2] sm:$0xff]
    %v4906 = vld [vmem:[%s1558 + $0x1e2] sm:$0xff]
    %v4907 = vld [vmem:[%s1558 + $0x1ea] sm:$0xff]
    %v4908 = vld [vmem:[%s1558 + $0x1fa] sm:$0xff]
    %v4909 = vld [vmem:[%s1558 + $0x202] sm:$0xff]
    %v4910 = vld [vmem:[%s1558 + $0x212] sm:$0xff]
    %v4911 = vld [vmem:[%s1558 + $0x21a] sm:$0xff]
    %v4912 = vld [vmem:[%s1558 + $0x22a] sm:$0xff]
    %v4913 = vld [vmem:[%s1558 + $0x232] sm:$0xff]
    %v4914 = vld [vmem:[%s1558 + $0x242] sm:$0xff]
    %v4915 = vld [vmem:[%s1558 + $0x24a] sm:$0xff]
    %v4916 = vld [vmem:[%s1558 + $0x25a] sm:$0xff]
    %v4917 = vld [vmem:[%s1558 + $0x262] sm:$0xff]
    %v4918 = vld [vmem:[%s1558 + $0x272] sm:$0xff]
    %v4919 = vld [vmem:[%s1558 + $0x27a] sm:$0xff]
    %v4920 = vld [vmem:[%s1558 + $0x28a] sm:$0xff]
    %v4921 = vld [vmem:[%s1558 + $0x292] sm:$0xff]
    %v4922 = vld [vmem:[%s1558 + $0x2a2] sm:$0xff]
    %v4923 = vld [vmem:[%s1558 + $0x2aa] sm:$0xff]
    %v4924 = vld [vmem:[%s1558 + $0x2ba] sm:$0xff]
    %v4925 = vld [vmem:[%s1558 + $0x2c2] sm:$0xff]
    %v4926 = vld [vmem:[%s1558 + $0x2d2] sm:$0xff]
    %v4927 = vld [vmem:[%s1558 + $0x2da] sm:$0xff]
    %v4928 = vld [vmem:[%s1558 + $0x2ea] sm:$0xff]
    %v4929 = vld [vmem:[%s1558 + $0x2f2] sm:$0xff]
    %v4930 = vld [vmem:[%s1558 + $0x302] sm:$0xff]
    %v4931 = vld [vmem:[%s1558 + $0x30a] sm:$0xff]
    %v4932 = vld [vmem:[%s1558 + $0x31a] sm:$0xff]
    %v4933 = vld [vmem:[%s1558 + $0x322] sm:$0xff]
    %v4934 = vpack.c.bf16 %v4871, %v4870
    %v4935 = vpack.c.bf16 %v4873, %v4872
    %v4936 = vpack.c.bf16 %v4875, %v4874
    %v4937 = vpack.c.bf16 %v4877, %v4876
    %v4938 = vpack.c.bf16 %v4879, %v4878
    %v4939 = vpack.c.bf16 %v4881, %v4880
    %v4940 = vpack.c.bf16 %v4883, %v4882
    %v4941 = vpack.c.bf16 %v4885, %v4884
    %v4942 = vpack.c.bf16 %v4887, %v4886
    %v4943 = vpack.c.bf16 %v4889, %v4888
    %v4944 = vpack.c.bf16 %v4891, %v4890
    %v4945 = vpack.c.bf16 %v4893, %v4892
    %v4946 = vpack.c.bf16 %v4895, %v4894
    %v4947 = vpack.c.bf16 %v4897, %v4896
    %v4948 = vpack.c.bf16 %v4899, %v4898
    %v4949 = vpack.c.bf16 %v4901, %v4900
    %v4950 = vpack.c.bf16 %v4903, %v4902
    %v4951 = vpack.c.bf16 %v4905, %v4904
    %v4952 = vpack.c.bf16 %v4907, %v4906
    %v4953 = vpack.c.bf16 %v4909, %v4908
    %v4954 = vpack.c.bf16 %v4911, %v4910
    %v4955 = vpack.c.bf16 %v4913, %v4912
    %v4956 = vpack.c.bf16 %v4915, %v4914
    %v4957 = vpack.c.bf16 %v4917, %v4916
    %v4958 = vpack.c.bf16 %v4919, %v4918
    %v4959 = vpack.c.bf16 %v4921, %v4920
    %v4960 = vpack.c.bf16 %v4923, %v4922
    %v4961 = vpack.c.bf16 %v4925, %v4924
    %v4962 = vpack.c.bf16 %v4927, %v4926
    %v4963 = vpack.c.bf16 %v4929, %v4928
    %v4964 = vpack.c.bf16 %v4931, %v4930
    %v4965 = vpack.c.bf16 %v4933, %v4932
    %4998 = vrot.lane.b32.xlu0 %v4262, 8
    %v4999 = vpop.permute.xlu0 %4998
    %5000 = vrot.lane.b32.xlu0 %v4263, 8
    %v5001 = vpop.permute.xlu0 %5000
    %5002 = vrot.lane.b32.xlu0 %v4264, 8
    %v5003 = vpop.permute.xlu0 %5002
    %5004 = vrot.lane.b32.xlu0 %v4265, 8
    %v5005 = vpop.permute.xlu0 %5004
    %5006 = vrot.lane.b32.xlu0 %v4266, 8
    %v5007 = vpop.permute.xlu0 %5006
    %5008 = vrot.lane.b32.xlu0 %v4267, 8
    %v5009 = vpop.permute.xlu0 %5008
    %5010 = vrot.lane.b32.xlu0 %v4268, 8
    %v5011 = vpop.permute.xlu0 %5010
    %5012 = vrot.lane.b32.xlu0 %v4269, 8
    %v5013 = vpop.permute.xlu0 %5012
    %5014 = vrot.lane.b32.xlu0 %v4270, 8
    %v5015 = vpop.permute.xlu0 %5014
    %5016 = vrot.lane.b32.xlu0 %v4271, 8
    %v5017 = vpop.permute.xlu0 %5016
    %5018 = vrot.lane.b32.xlu0 %v4272, 8
    %v5019 = vpop.permute.xlu0 %5018
    %5020 = vrot.lane.b32.xlu0 %v4273, 8
    %v5021 = vpop.permute.xlu0 %5020
    %5022 = vrot.lane.b32.xlu0 %v4274, 8
    %v5023 = vpop.permute.xlu0 %5022
    %5024 = vrot.lane.b32.xlu0 %v4275, 8
    %v5025 = vpop.permute.xlu0 %5024
    %5026 = vrot.lane.b32.xlu0 %v4276, 8
    %v5027 = vpop.permute.xlu0 %5026
    %5028 = vrot.lane.b32.xlu0 %v4277, 8
    %v5029 = vpop.permute.xlu0 %5028
    %5030 = vrot.lane.b32.xlu0 %v4278, 8
    %v5031 = vpop.permute.xlu0 %5030
    %5032 = vrot.lane.b32.xlu0 %v4279, 8
    %v5033 = vpop.permute.xlu0 %5032
    %5034 = vrot.lane.b32.xlu0 %v4280, 8
    %v5035 = vpop.permute.xlu0 %5034
    %5036 = vrot.lane.b32.xlu0 %v4281, 8
    %v5037 = vpop.permute.xlu0 %5036
    %5038 = vrot.lane.b32.xlu0 %v4282, 8
    %v5039 = vpop.permute.xlu0 %5038
    %5040 = vrot.lane.b32.xlu0 %v4283, 8
    %v5041 = vpop.permute.xlu0 %5040
    %5042 = vrot.lane.b32.xlu0 %v4284, 8
    %v5043 = vpop.permute.xlu0 %5042
    %5044 = vrot.lane.b32.xlu0 %v4285, 8
    %v5045 = vpop.permute.xlu0 %5044
    %5046 = vrot.lane.b32.xlu0 %v4286, 8
    %v5047 = vpop.permute.xlu0 %5046
    %5048 = vrot.lane.b32.xlu0 %v4287, 8
    %v5049 = vpop.permute.xlu0 %5048
    %5050 = vrot.lane.b32.xlu0 %v4288, 8
    %v5051 = vpop.permute.xlu0 %5050
    %5052 = vrot.lane.b32.xlu0 %v4289, 8
    %v5053 = vpop.permute.xlu0 %5052
    %5054 = vrot.lane.b32.xlu0 %v4290, 8
    %v5055 = vpop.permute.xlu0 %5054
    %5056 = vrot.lane.b32.xlu0 %v4291, 8
    %v5057 = vpop.permute.xlu0 %5056
    %5058 = vrot.lane.b32.xlu0 %v4292, 8
    %v5059 = vpop.permute.xlu0 %5058
    %5060 = vrot.lane.b32.xlu0 %v4293, 8
    %v5061 = vpop.permute.xlu0 %5060
    %5094 = vrot.lane.b32.xlu0 %v4358, 16
    %v5095 = vpop.permute.xlu0 %5094
    %5096 = vrot.lane.b32.xlu0 %v4359, 16
    %v5097 = vpop.permute.xlu0 %5096
    %5098 = vrot.lane.b32.xlu0 %v4360, 16
    %v5099 = vpop.permute.xlu0 %5098
    %5100 = vrot.lane.b32.xlu0 %v4361, 16
    %v5101 = vpop.permute.xlu0 %5100
    %5102 = vrot.lane.b32.xlu0 %v4362, 16
    %v5103 = vpop.permute.xlu0 %5102
    %5104 = vrot.lane.b32.xlu0 %v4363, 16
    %v5105 = vpop.permute.xlu0 %5104
    %5106 = vrot.lane.b32.xlu0 %v4364, 16
    %v5107 = vpop.permute.xlu0 %5106
    %5108 = vrot.lane.b32.xlu0 %v4365, 16
    %v5109 = vpop.permute.xlu0 %5108
    %5110 = vrot.lane.b32.xlu0 %v4366, 16
    %v5111 = vpop.permute.xlu0 %5110
    %5112 = vrot.lane.b32.xlu0 %v4367, 16
    %v5113 = vpop.permute.xlu0 %5112
    %5114 = vrot.lane.b32.xlu0 %v4368, 16
    %v5115 = vpop.permute.xlu0 %5114
    %5116 = vrot.lane.b32.xlu0 %v4369, 16
    %v5117 = vpop.permute.xlu0 %5116
    %5118 = vrot.lane.b32.xlu0 %v4370, 16
    %v5119 = vpop.permute.xlu0 %5118
    %5120 = vrot.lane.b32.xlu0 %v4371, 16
    %v5121 = vpop.permute.xlu0 %5120
    %5122 = vrot.lane.b32.xlu0 %v4372, 16
    %v5123 = vpop.permute.xlu0 %5122
    %5124 = vrot.lane.b32.xlu0 %v4373, 16
    %v5125 = vpop.permute.xlu0 %5124
    %5126 = vrot.lane.b32.xlu0 %v4374, 16
    %v5127 = vpop.permute.xlu0 %5126
    %5128 = vrot.lane.b32.xlu0 %v4375, 16
    %v5129 = vpop.permute.xlu0 %5128
    %5130 = vrot.lane.b32.xlu0 %v4376, 16
    %v5131 = vpop.permute.xlu0 %5130
    %5132 = vrot.lane.b32.xlu0 %v4377, 16
    %v5133 = vpop.permute.xlu0 %5132
    %5134 = vrot.lane.b32.xlu0 %v4378, 16
    %v5135 = vpop.permute.xlu0 %5134
    %5136 = vrot.lane.b32.xlu0 %v4379, 16
    %v5137 = vpop.permute.xlu0 %5136
    %5138 = vrot.lane.b32.xlu0 %v4380, 16
    %v5139 = vpop.permute.xlu0 %5138
    %5140 = vrot.lane.b32.xlu0 %v4381, 16
    %v5141 = vpop.permute.xlu0 %5140
    %5142 = vrot.lane.b32.xlu0 %v4382, 16
    %v5143 = vpop.permute.xlu0 %5142
    %5144 = vrot.lane.b32.xlu0 %v4383, 16
    %v5145 = vpop.permute.xlu0 %5144
    %5146 = vrot.lane.b32.xlu0 %v4384, 16
    %v5147 = vpop.permute.xlu0 %5146
    %5148 = vrot.lane.b32.xlu0 %v4385, 16
    %v5149 = vpop.permute.xlu0 %5148
    %5150 = vrot.lane.b32.xlu0 %v4386, 16
    %v5151 = vpop.permute.xlu0 %5150
    %5152 = vrot.lane.b32.xlu0 %v4387, 16
    %v5153 = vpop.permute.xlu0 %5152
    %5154 = vrot.lane.b32.xlu0 %v4388, 16
    %v5155 = vpop.permute.xlu0 %5154
    %5156 = vrot.lane.b32.xlu0 %v4389, 16
    %v5157 = vpop.permute.xlu0 %5156
    %5190 = vrot.lane.b32.xlu0 %v4454, 24
    %v5191 = vpop.permute.xlu0 %5190
    %5192 = vrot.lane.b32.xlu0 %v4455, 24
    %v5193 = vpop.permute.xlu0 %5192
    %5194 = vrot.lane.b32.xlu0 %v4456, 24
    %v5195 = vpop.permute.xlu0 %5194
    %5196 = vrot.lane.b32.xlu0 %v4457, 24
    %v5197 = vpop.permute.xlu0 %5196
    %5198 = vrot.lane.b32.xlu0 %v4458, 24
    %v5199 = vpop.permute.xlu0 %5198
    %5200 = vrot.lane.b32.xlu0 %v4459, 24
    %v5201 = vpop.permute.xlu0 %5200
    %5202 = vrot.lane.b32.xlu0 %v4460, 24
    %v5203 = vpop.permute.xlu0 %5202
    %5204 = vrot.lane.b32.xlu0 %v4461, 24
    %v5205 = vpop.permute.xlu0 %5204
    %5206 = vrot.lane.b32.xlu0 %v4462, 24
    %v5207 = vpop.permute.xlu0 %5206
    %5208 = vrot.lane.b32.xlu0 %v4463, 24
    %v5209 = vpop.permute.xlu0 %5208
    %5210 = vrot.lane.b32.xlu0 %v4464, 24
    %v5211 = vpop.permute.xlu0 %5210
    %5212 = vrot.lane.b32.xlu0 %v4465, 24
    %v5213 = vpop.permute.xlu0 %5212
    %5214 = vrot.lane.b32.xlu0 %v4466, 24
    %v5215 = vpop.permute.xlu0 %5214
    %5216 = vrot.lane.b32.xlu0 %v4467, 24
    %v5217 = vpop.permute.xlu0 %5216
    %5218 = vrot.lane.b32.xlu0 %v4468, 24
    %v5219 = vpop.permute.xlu0 %5218
    %5220 = vrot.lane.b32.xlu0 %v4469, 24
    %v5221 = vpop.permute.xlu0 %5220
    %5222 = vrot.lane.b32.xlu0 %v4470, 24
    %v5223 = vpop.permute.xlu0 %5222
    %5224 = vrot.lane.b32.xlu0 %v4471, 24
    %v5225 = vpop.permute.xlu0 %5224
    %5226 = vrot.lane.b32.xlu0 %v4472, 24
    %v5227 = vpop.permute.xlu0 %5226
    %5228 = vrot.lane.b32.xlu0 %v4473, 24
    %v5229 = vpop.permute.xlu0 %5228
    %5230 = vrot.lane.b32.xlu0 %v4474, 24
    %v5231 = vpop.permute.xlu0 %5230
    %5232 = vrot.lane.b32.xlu0 %v4475, 24
    %v5233 = vpop.permute.xlu0 %5232
    %5234 = vrot.lane.b32.xlu0 %v4476, 24
    %v5235 = vpop.permute.xlu0 %5234
    %5236 = vrot.lane.b32.xlu0 %v4477, 24
    %v5237 = vpop.permute.xlu0 %5236
    %5238 = vrot.lane.b32.xlu0 %v4478, 24
    %v5239 = vpop.permute.xlu0 %5238
    %5240 = vrot.lane.b32.xlu0 %v4479, 24
    %v5241 = vpop.permute.xlu0 %5240
    %5242 = vrot.lane.b32.xlu0 %v4480, 24
    %v5243 = vpop.permute.xlu0 %5242
    %5244 = vrot.lane.b32.xlu0 %v4481, 24
    %v5245 = vpop.permute.xlu0 %5244
    %5246 = vrot.lane.b32.xlu0 %v4482, 24
    %v5247 = vpop.permute.xlu0 %5246
    %5248 = vrot.lane.b32.xlu0 %v4483, 24
    %v5249 = vpop.permute.xlu0 %5248
    %5250 = vrot.lane.b32.xlu0 %v4484, 24
    %v5251 = vpop.permute.xlu0 %5250
    %5252 = vrot.lane.b32.xlu0 %v4485, 24
    %v5253 = vpop.permute.xlu0 %5252
    %5286 = vrot.lane.b32.xlu0 %v4550, 32
    %v5287 = vpop.permute.xlu0 %5286
    %5288 = vrot.lane.b32.xlu0 %v4551, 32
    %v5289 = vpop.permute.xlu0 %5288
    %5290 = vrot.lane.b32.xlu0 %v4552, 32
    %v5291 = vpop.permute.xlu0 %5290
    %5292 = vrot.lane.b32.xlu0 %v4553, 32
    %v5293 = vpop.permute.xlu0 %5292
    %5294 = vrot.lane.b32.xlu0 %v4554, 32
    %v5295 = vpop.permute.xlu0 %5294
    %5296 = vrot.lane.b32.xlu0 %v4555, 32
    %v5297 = vpop.permute.xlu0 %5296
    %5298 = vrot.lane.b32.xlu0 %v4556, 32
    %v5299 = vpop.permute.xlu0 %5298
    %5300 = vrot.lane.b32.xlu0 %v4557, 32
    %v5301 = vpop.permute.xlu0 %5300
    %5302 = vrot.lane.b32.xlu0 %v4558, 32
    %v5303 = vpop.permute.xlu0 %5302
    %5304 = vrot.lane.b32.xlu0 %v4559, 32
    %v5305 = vpop.permute.xlu0 %5304
    %5306 = vrot.lane.b32.xlu0 %v4560, 32
    %v5307 = vpop.permute.xlu0 %5306
    %5308 = vrot.lane.b32.xlu0 %v4561, 32
    %v5309 = vpop.permute.xlu0 %5308
    %5310 = vrot.lane.b32.xlu0 %v4562, 32
    %v5311 = vpop.permute.xlu0 %5310
    %5312 = vrot.lane.b32.xlu0 %v4563, 32
    %v5313 = vpop.permute.xlu0 %5312
    %5314 = vrot.lane.b32.xlu0 %v4564, 32
    %v5315 = vpop.permute.xlu0 %5314
    %5316 = vrot.lane.b32.xlu0 %v4565, 32
    %v5317 = vpop.permute.xlu0 %5316
    %5318 = vrot.lane.b32.xlu0 %v4566, 32
    %v5319 = vpop.permute.xlu0 %5318
    %5320 = vrot.lane.b32.xlu0 %v4567, 32
    %v5321 = vpop.permute.xlu0 %5320
    %5322 = vrot.lane.b32.xlu0 %v4568, 32
    %v5323 = vpop.permute.xlu0 %5322
    %5324 = vrot.lane.b32.xlu0 %v4569, 32
    %v5325 = vpop.permute.xlu0 %5324
    %5326 = vrot.lane.b32.xlu0 %v4570, 32
    %v5327 = vpop.permute.xlu0 %5326
    %5328 = vrot.lane.b32.xlu0 %v4571, 32
    %v5329 = vpop.permute.xlu0 %5328
    %5330 = vrot.lane.b32.xlu0 %v4572, 32
    %v5331 = vpop.permute.xlu0 %5330
    %5332 = vrot.lane.b32.xlu0 %v4573, 32
    %v5333 = vpop.permute.xlu0 %5332
    %5334 = vrot.lane.b32.xlu0 %v4574, 32
    %v5335 = vpop.permute.xlu0 %5334
    %5336 = vrot.lane.b32.xlu0 %v4575, 32
    %v5337 = vpop.permute.xlu0 %5336
    %5338 = vrot.lane.b32.xlu0 %v4576, 32
    %v5339 = vpop.permute.xlu0 %5338
    %5340 = vrot.lane.b32.xlu0 %v4577, 32
    %v5341 = vpop.permute.xlu0 %5340
    %5342 = vrot.lane.b32.xlu0 %v4578, 32
    %v5343 = vpop.permute.xlu0 %5342
    %5344 = vrot.lane.b32.xlu0 %v4579, 32
    %v5345 = vpop.permute.xlu0 %5344
    %5346 = vrot.lane.b32.xlu0 %v4580, 32
    %v5347 = vpop.permute.xlu0 %5346
    %5348 = vrot.lane.b32.xlu0 %v4581, 32
    %v5349 = vpop.permute.xlu0 %5348
    %5382 = vrot.lane.b32.xlu0 %v4646, 40
    %v5383 = vpop.permute.xlu0 %5382
    %5384 = vrot.lane.b32.xlu0 %v4647, 40
    %v5385 = vpop.permute.xlu0 %5384
    %5386 = vrot.lane.b32.xlu0 %v4648, 40
    %v5387 = vpop.permute.xlu0 %5386
    %5388 = vrot.lane.b32.xlu0 %v4649, 40
    %v5389 = vpop.permute.xlu0 %5388
    %5390 = vrot.lane.b32.xlu0 %v4650, 40
    %v5391 = vpop.permute.xlu0 %5390
    %5392 = vrot.lane.b32.xlu0 %v4651, 40
    %v5393 = vpop.permute.xlu0 %5392
    %5394 = vrot.lane.b32.xlu0 %v4652, 40
    %v5395 = vpop.permute.xlu0 %5394
    %5396 = vrot.lane.b32.xlu0 %v4653, 40
    %v5397 = vpop.permute.xlu0 %5396
    %5398 = vrot.lane.b32.xlu0 %v4654, 40
    %v5399 = vpop.permute.xlu0 %5398
    %5400 = vrot.lane.b32.xlu0 %v4655, 40
    %v5401 = vpop.permute.xlu0 %5400
    %5402 = vrot.lane.b32.xlu0 %v4656, 40
    %v5403 = vpop.permute.xlu0 %5402
    %5404 = vrot.lane.b32.xlu0 %v4657, 40
    %v5405 = vpop.permute.xlu0 %5404
    %5406 = vrot.lane.b32.xlu0 %v4658, 40
    %v5407 = vpop.permute.xlu0 %5406
    %5408 = vrot.lane.b32.xlu0 %v4659, 40
    %v5409 = vpop.permute.xlu0 %5408
    %5410 = vrot.lane.b32.xlu0 %v4660, 40
    %v5411 = vpop.permute.xlu0 %5410
    %5412 = vrot.lane.b32.xlu0 %v4661, 40
    %v5413 = vpop.permute.xlu0 %5412
    %5414 = vrot.lane.b32.xlu0 %v4662, 40
    %v5415 = vpop.permute.xlu0 %5414
    %5416 = vrot.lane.b32.xlu0 %v4663, 40
    %v5417 = vpop.permute.xlu0 %5416
    %5418 = vrot.lane.b32.xlu0 %v4664, 40
    %v5419 = vpop.permute.xlu0 %5418
    %5420 = vrot.lane.b32.xlu0 %v4665, 40
    %v5421 = vpop.permute.xlu0 %5420
    %5422 = vrot.lane.b32.xlu0 %v4666, 40
    %v5423 = vpop.permute.xlu0 %5422
    %5424 = vrot.lane.b32.xlu0 %v4667, 40
    %v5425 = vpop.permute.xlu0 %5424
    %5426 = vrot.lane.b32.xlu0 %v4668, 40
    %v5427 = vpop.permute.xlu0 %5426
    %5428 = vrot.lane.b32.xlu0 %v4669, 40
    %v5429 = vpop.permute.xlu0 %5428
    %5430 = vrot.lane.b32.xlu0 %v4670, 40
    %v5431 = vpop.permute.xlu0 %5430
    %5432 = vrot.lane.b32.xlu0 %v4671, 40
    %v5433 = vpop.permute.xlu0 %5432
    %5434 = vrot.lane.b32.xlu0 %v4672, 40
    %v5435 = vpop.permute.xlu0 %5434
    %5436 = vrot.lane.b32.xlu0 %v4673, 40
    %v5437 = vpop.permute.xlu0 %5436
    %5438 = vrot.lane.b32.xlu0 %v4674, 40
    %v5439 = vpop.permute.xlu0 %5438
    %5440 = vrot.lane.b32.xlu0 %v4675, 40
    %v5441 = vpop.permute.xlu0 %5440
    %5442 = vrot.lane.b32.xlu0 %v4676, 40
    %v5443 = vpop.permute.xlu0 %5442
    %5444 = vrot.lane.b32.xlu0 %v4677, 40
    %v5445 = vpop.permute.xlu0 %5444
    %5478 = vrot.lane.b32.xlu0 %v4742, 48
    %v5479 = vpop.permute.xlu0 %5478
    %5480 = vrot.lane.b32.xlu0 %v4743, 48
    %v5481 = vpop.permute.xlu0 %5480
    %5482 = vrot.lane.b32.xlu0 %v4744, 48
    %v5483 = vpop.permute.xlu0 %5482
    %5484 = vrot.lane.b32.xlu0 %v4745, 48
    %v5485 = vpop.permute.xlu0 %5484
    %5486 = vrot.lane.b32.xlu0 %v4746, 48
    %v5487 = vpop.permute.xlu0 %5486
    %5488 = vrot.lane.b32.xlu0 %v4747, 48
    %v5489 = vpop.permute.xlu0 %5488
    %5490 = vrot.lane.b32.xlu0 %v4748, 48
    %v5491 = vpop.permute.xlu0 %5490
    %5492 = vrot.lane.b32.xlu0 %v4749, 48
    %v5493 = vpop.permute.xlu0 %5492
    %5494 = vrot.lane.b32.xlu0 %v4750, 48
    %v5495 = vpop.permute.xlu0 %5494
    %5496 = vrot.lane.b32.xlu0 %v4751, 48
    %v5497 = vpop.permute.xlu0 %5496
    %5498 = vrot.lane.b32.xlu0 %v4752, 48
    %v5499 = vpop.permute.xlu0 %5498
    %5500 = vrot.lane.b32.xlu0 %v4753, 48
    %v5501 = vpop.permute.xlu0 %5500
    %5502 = vrot.lane.b32.xlu0 %v4754, 48
    %v5503 = vpop.permute.xlu0 %5502
    %5504 = vrot.lane.b32.xlu0 %v4755, 48
    %v5505 = vpop.permute.xlu0 %5504
    %5506 = vrot.lane.b32.xlu0 %v4756, 48
    %v5507 = vpop.permute.xlu0 %5506
    %5508 = vrot.lane.b32.xlu0 %v4757, 48
    %v5509 = vpop.permute.xlu0 %5508
    %5510 = vrot.lane.b32.xlu0 %v4758, 48
    %v5511 = vpop.permute.xlu0 %5510
    %5512 = vrot.lane.b32.xlu0 %v4759, 48
    %v5513 = vpop.permute.xlu0 %5512
    %5514 = vrot.lane.b32.xlu0 %v4760, 48
    %v5515 = vpop.permute.xlu0 %5514
    %5516 = vrot.lane.b32.xlu0 %v4761, 48
    %v5517 = vpop.permute.xlu0 %5516
    %5518 = vrot.lane.b32.xlu0 %v4762, 48
    %v5519 = vpop.permute.xlu0 %5518
    %5520 = vrot.lane.b32.xlu0 %v4763, 48
    %v5521 = vpop.permute.xlu0 %5520
    %5522 = vrot.lane.b32.xlu0 %v4764, 48
    %v5523 = vpop.permute.xlu0 %5522
    %5524 = vrot.lane.b32.xlu0 %v4765, 48
    %v5525 = vpop.permute.xlu0 %5524
    %5526 = vrot.lane.b32.xlu0 %v4766, 48
    %v5527 = vpop.permute.xlu0 %5526
    %5528 = vrot.lane.b32.xlu0 %v4767, 48
    %v5529 = vpop.permute.xlu0 %5528
    %5530 = vrot.lane.b32.xlu0 %v4768, 48
    %v5531 = vpop.permute.xlu0 %5530
    %5532 = vrot.lane.b32.xlu0 %v4769, 48
    %v5533 = vpop.permute.xlu0 %5532
    %5534 = vrot.lane.b32.xlu0 %v4770, 48
    %v5535 = vpop.permute.xlu0 %5534
    %5536 = vrot.lane.b32.xlu0 %v4771, 48
    %v5537 = vpop.permute.xlu0 %5536
    %5538 = vrot.lane.b32.xlu0 %v4772, 48
    %v5539 = vpop.permute.xlu0 %5538
    %5540 = vrot.lane.b32.xlu0 %v4773, 48
    %v5541 = vpop.permute.xlu0 %5540
    %5574 = vrot.lane.b32.xlu0 %v4838, 56
    %v5575 = vpop.permute.xlu0 %5574
    %5576 = vrot.lane.b32.xlu0 %v4839, 56
    %v5577 = vpop.permute.xlu0 %5576
    %5578 = vrot.lane.b32.xlu0 %v4840, 56
    %v5579 = vpop.permute.xlu0 %5578
    %5580 = vrot.lane.b32.xlu0 %v4841, 56
    %v5581 = vpop.permute.xlu0 %5580
    %5582 = vrot.lane.b32.xlu0 %v4842, 56
    %v5583 = vpop.permute.xlu0 %5582
    %5584 = vrot.lane.b32.xlu0 %v4843, 56
    %v5585 = vpop.permute.xlu0 %5584
    %5586 = vrot.lane.b32.xlu0 %v4844, 56
    %v5587 = vpop.permute.xlu0 %5586
    %5588 = vrot.lane.b32.xlu0 %v4845, 56
    %v5589 = vpop.permute.xlu0 %5588
    %5590 = vrot.lane.b32.xlu0 %v4846, 56
    %v5591 = vpop.permute.xlu0 %5590
    %5592 = vrot.lane.b32.xlu0 %v4847, 56
    %v5593 = vpop.permute.xlu0 %5592
    %5594 = vrot.lane.b32.xlu0 %v4848, 56
    %v5595 = vpop.permute.xlu0 %5594
    %5596 = vrot.lane.b32.xlu0 %v4849, 56
    %v5597 = vpop.permute.xlu0 %5596
    %5598 = vrot.lane.b32.xlu0 %v4850, 56
    %v5599 = vpop.permute.xlu0 %5598
    %5600 = vrot.lane.b32.xlu0 %v4851, 56
    %v5601 = vpop.permute.xlu0 %5600
    %5602 = vrot.lane.b32.xlu0 %v4852, 56
    %v5603 = vpop.permute.xlu0 %5602
    %5604 = vrot.lane.b32.xlu0 %v4853, 56
    %v5605 = vpop.permute.xlu0 %5604
    %5606 = vrot.lane.b32.xlu0 %v4854, 56
    %v5607 = vpop.permute.xlu0 %5606
    %5608 = vrot.lane.b32.xlu0 %v4855, 56
    %v5609 = vpop.permute.xlu0 %5608
    %5610 = vrot.lane.b32.xlu0 %v4856, 56
    %v5611 = vpop.permute.xlu0 %5610
    %5612 = vrot.lane.b32.xlu0 %v4857, 56
    %v5613 = vpop.permute.xlu0 %5612
    %5614 = vrot.lane.b32.xlu0 %v4858, 56
    %v5615 = vpop.permute.xlu0 %5614
    %5616 = vrot.lane.b32.xlu0 %v4859, 56
    %v5617 = vpop.permute.xlu0 %5616
    %5618 = vrot.lane.b32.xlu0 %v4860, 56
    %v5619 = vpop.permute.xlu0 %5618
    %5620 = vrot.lane.b32.xlu0 %v4861, 56
    %v5621 = vpop.permute.xlu0 %5620
    %5622 = vrot.lane.b32.xlu0 %v4862, 56
    %v5623 = vpop.permute.xlu0 %5622
    %5624 = vrot.lane.b32.xlu0 %v4863, 56
    %v5625 = vpop.permute.xlu0 %5624
    %5626 = vrot.lane.b32.xlu0 %v4864, 56
    %v5627 = vpop.permute.xlu0 %5626
    %5628 = vrot.lane.b32.xlu0 %v4865, 56
    %v5629 = vpop.permute.xlu0 %5628
    %5630 = vrot.lane.b32.xlu0 %v4866, 56
    %v5631 = vpop.permute.xlu0 %5630
    %5632 = vrot.lane.b32.xlu0 %v4867, 56
    %v5633 = vpop.permute.xlu0 %5632
    %5634 = vrot.lane.b32.xlu0 %v4868, 56
    %v5635 = vpop.permute.xlu0 %5634
    %5636 = vrot.lane.b32.xlu0 %v4869, 56
    %v5637 = vpop.permute.xlu0 %5636
    %5670 = vrot.lane.b32.xlu0 %v4934, 64
    %v5671 = vpop.permute.xlu0 %5670
    %5672 = vrot.lane.b32.xlu0 %v4935, 64
    %v5673 = vpop.permute.xlu0 %5672
    %5674 = vrot.lane.b32.xlu0 %v4936, 64
    %v5675 = vpop.permute.xlu0 %5674
    %5676 = vrot.lane.b32.xlu0 %v4937, 64
    %v5677 = vpop.permute.xlu0 %5676
    %5678 = vrot.lane.b32.xlu0 %v4938, 64
    %v5679 = vpop.permute.xlu0 %5678
    %5680 = vrot.lane.b32.xlu0 %v4939, 64
    %v5681 = vpop.permute.xlu0 %5680
    %5682 = vrot.lane.b32.xlu0 %v4940, 64
    %v5683 = vpop.permute.xlu0 %5682
    %5684 = vrot.lane.b32.xlu0 %v4941, 64
    %v5685 = vpop.permute.xlu0 %5684
    %5686 = vrot.lane.b32.xlu0 %v4942, 64
    %v5687 = vpop.permute.xlu0 %5686
    %5688 = vrot.lane.b32.xlu0 %v4943, 64
    %v5689 = vpop.permute.xlu0 %5688
    %5690 = vrot.lane.b32.xlu0 %v4944, 64
    %v5691 = vpop.permute.xlu0 %5690
    %5692 = vrot.lane.b32.xlu0 %v4945, 64
    %v5693 = vpop.permute.xlu0 %5692
    %5694 = vrot.lane.b32.xlu0 %v4946, 64
    %v5695 = vpop.permute.xlu0 %5694
    %5696 = vrot.lane.b32.xlu0 %v4947, 64
    %v5697 = vpop.permute.xlu0 %5696
    %5698 = vrot.lane.b32.xlu0 %v4948, 64
    %v5699 = vpop.permute.xlu0 %5698
    %5700 = vrot.lane.b32.xlu0 %v4949, 64
    %v5701 = vpop.permute.xlu0 %5700
    %5702 = vrot.lane.b32.xlu0 %v4950, 64
    %v5703 = vpop.permute.xlu0 %5702
    %5704 = vrot.lane.b32.xlu0 %v4951, 64
    %v5705 = vpop.permute.xlu0 %5704
    %5706 = vrot.lane.b32.xlu0 %v4952, 64
    %v5707 = vpop.permute.xlu0 %5706
    %5708 = vrot.lane.b32.xlu0 %v4953, 64
    %v5709 = vpop.permute.xlu0 %5708
    %5710 = vrot.lane.b32.xlu0 %v4954, 64
    %v5711 = vpop.permute.xlu0 %5710
    %5712 = vrot.lane.b32.xlu0 %v4955, 64
    %v5713 = vpop.permute.xlu0 %5712
    %5714 = vrot.lane.b32.xlu0 %v4956, 64
    %v5715 = vpop.permute.xlu0 %5714
    %5716 = vrot.lane.b32.xlu0 %v4957, 64
    %v5717 = vpop.permute.xlu0 %5716
    %5718 = vrot.lane.b32.xlu0 %v4958, 64
    %v5719 = vpop.permute.xlu0 %5718
    %5720 = vrot.lane.b32.xlu0 %v4959, 64
    %v5721 = vpop.permute.xlu0 %5720
    %5722 = vrot.lane.b32.xlu0 %v4960, 64
    %v5723 = vpop.permute.xlu0 %5722
    %5724 = vrot.lane.b32.xlu0 %v4961, 64
    %v5725 = vpop.permute.xlu0 %5724
    %5726 = vrot.lane.b32.xlu0 %v4962, 64
    %v5727 = vpop.permute.xlu0 %5726
    %5728 = vrot.lane.b32.xlu0 %v4963, 64
    %v5729 = vpop.permute.xlu0 %5728
    %5730 = vrot.lane.b32.xlu0 %v4964, 64
    %v5731 = vpop.permute.xlu0 %5730
    %5732 = vrot.lane.b32.xlu0 %v4965, 64
    %v5733 = vpop.permute.xlu0 %5732
    %v5736 = vsel %vm81, %v4166, %v4999
    %v5739 = vsel %vm81, %v4167, %v5001
    %v5742 = vsel %vm81, %v4168, %v5003
    %v5745 = vsel %vm81, %v4169, %v5005
    %v5748 = vsel %vm81, %v4170, %v5007
    %v5751 = vsel %vm81, %v4171, %v5009
    %v5754 = vsel %vm81, %v4172, %v5011
    %v5757 = vsel %vm81, %v4173, %v5013
    %v5760 = vsel %vm81, %v4174, %v5015
    %v5763 = vsel %vm81, %v4175, %v5017
    %v5766 = vsel %vm81, %v4176, %v5019
    %v5769 = vsel %vm81, %v4177, %v5021
    %v5772 = vsel %vm81, %v4178, %v5023
    %v5775 = vsel %vm81, %v4179, %v5025
    %v5778 = vsel %vm81, %v4180, %v5027
    %v5781 = vsel %vm81, %v4181, %v5029
    %v5784 = vsel %vm81, %v4182, %v5031
    %v5787 = vsel %vm81, %v4183, %v5033
    %v5790 = vsel %vm81, %v4184, %v5035
    %v5793 = vsel %vm81, %v4185, %v5037
    %v5796 = vsel %vm81, %v4186, %v5039
    %v5799 = vsel %vm81, %v4187, %v5041
    %v5802 = vsel %vm81, %v4188, %v5043
    %v5805 = vsel %vm81, %v4189, %v5045
    %v5808 = vsel %vm81, %v4190, %v5047
    %v5811 = vsel %vm81, %v4191, %v5049
    %v5814 = vsel %vm81, %v4192, %v5051
    %v5817 = vsel %vm81, %v4193, %v5053
    %v5820 = vsel %vm81, %v4194, %v5055
    %v5823 = vsel %vm81, %v4195, %v5057
    %v5826 = vsel %vm81, %v4196, %v5059
    %v5829 = vsel %vm81, %v4197, %v5061
    %v5831 = vsel %vm2711, %v5736, %v5095
    %v5833 = vsel %vm2711, %v5739, %v5097
    %v5835 = vsel %vm2711, %v5742, %v5099
    %v5837 = vsel %vm2711, %v5745, %v5101
    %v5839 = vsel %vm2711, %v5748, %v5103
    %v5841 = vsel %vm2711, %v5751, %v5105
    %v5843 = vsel %vm2711, %v5754, %v5107
    %v5845 = vsel %vm2711, %v5757, %v5109
    %v5847 = vsel %vm2711, %v5760, %v5111
    %v5849 = vsel %vm2711, %v5763, %v5113
    %v5851 = vsel %vm2711, %v5766, %v5115
    %v5853 = vsel %vm2711, %v5769, %v5117
    %v5855 = vsel %vm2711, %v5772, %v5119
    %v5857 = vsel %vm2711, %v5775, %v5121
    %v5859 = vsel %vm2711, %v5778, %v5123
    %v5861 = vsel %vm2711, %v5781, %v5125
    %v5863 = vsel %vm2711, %v5784, %v5127
    %v5865 = vsel %vm2711, %v5787, %v5129
    %v5867 = vsel %vm2711, %v5790, %v5131
    %v5869 = vsel %vm2711, %v5793, %v5133
    %v5871 = vsel %vm2711, %v5796, %v5135
    %v5873 = vsel %vm2711, %v5799, %v5137
    %v5875 = vsel %vm2711, %v5802, %v5139
    %v5877 = vsel %vm2711, %v5805, %v5141
    %v5879 = vsel %vm2711, %v5808, %v5143
    %v5881 = vsel %vm2711, %v5811, %v5145
    %v5883 = vsel %vm2711, %v5814, %v5147
    %v5885 = vsel %vm2711, %v5817, %v5149
    %v5887 = vsel %vm2711, %v5820, %v5151
    %v5889 = vsel %vm2711, %v5823, %v5153
    %v5891 = vsel %vm2711, %v5826, %v5155
    %v5893 = vsel %vm2711, %v5829, %v5157
    %v5895 = vsel %vm2776, %v5831, %v5191
    %v5897 = vsel %vm2776, %v5833, %v5193
    %v5899 = vsel %vm2776, %v5835, %v5195
    %v5901 = vsel %vm2776, %v5837, %v5197
    %v5903 = vsel %vm2776, %v5839, %v5199
    %v5905 = vsel %vm2776, %v5841, %v5201
    %v5907 = vsel %vm2776, %v5843, %v5203
    %v5909 = vsel %vm2776, %v5845, %v5205
    %v5911 = vsel %vm2776, %v5847, %v5207
    %v5913 = vsel %vm2776, %v5849, %v5209
    %v5915 = vsel %vm2776, %v5851, %v5211
    %v5917 = vsel %vm2776, %v5853, %v5213
    %v5919 = vsel %vm2776, %v5855, %v5215
    %v5921 = vsel %vm2776, %v5857, %v5217
    %v5923 = vsel %vm2776, %v5859, %v5219
    %v5925 = vsel %vm2776, %v5861, %v5221
    %v5927 = vsel %vm2776, %v5863, %v5223
    %v5929 = vsel %vm2776, %v5865, %v5225
    %v5931 = vsel %vm2776, %v5867, %v5227
    %v5933 = vsel %vm2776, %v5869, %v5229
    %v5935 = vsel %vm2776, %v5871, %v5231
    %v5937 = vsel %vm2776, %v5873, %v5233
    %v5939 = vsel %vm2776, %v5875, %v5235
    %v5941 = vsel %vm2776, %v5877, %v5237
    %v5943 = vsel %vm2776, %v5879, %v5239
    %v5945 = vsel %vm2776, %v5881, %v5241
    %v5947 = vsel %vm2776, %v5883, %v5243
    %v5949 = vsel %vm2776, %v5885, %v5245
    %v5951 = vsel %vm2776, %v5887, %v5247
    %v5953 = vsel %vm2776, %v5889, %v5249
    %v5955 = vsel %vm2776, %v5891, %v5251
    %v5957 = vsel %vm2776, %v5893, %v5253
    %v5959 = vsel %vm2841, %v5895, %v5287
    %v5961 = vsel %vm2841, %v5897, %v5289
    %v5963 = vsel %vm2841, %v5899, %v5291
    %v5965 = vsel %vm2841, %v5901, %v5293
    %v5967 = vsel %vm2841, %v5903, %v5295
    %v5969 = vsel %vm2841, %v5905, %v5297
    %v5971 = vsel %vm2841, %v5907, %v5299
    %v5973 = vsel %vm2841, %v5909, %v5301
    %v5975 = vsel %vm2841, %v5911, %v5303
    %v5977 = vsel %vm2841, %v5913, %v5305
    %v5979 = vsel %vm2841, %v5915, %v5307
    %v5981 = vsel %vm2841, %v5917, %v5309
    %v5983 = vsel %vm2841, %v5919, %v5311
    %v5985 = vsel %vm2841, %v5921, %v5313
    %v5987 = vsel %vm2841, %v5923, %v5315
    %v5989 = vsel %vm2841, %v5925, %v5317
    %v5991 = vsel %vm2841, %v5927, %v5319
    %v5993 = vsel %vm2841, %v5929, %v5321
    %v5995 = vsel %vm2841, %v5931, %v5323
    %v5997 = vsel %vm2841, %v5933, %v5325
    %v5999 = vsel %vm2841, %v5935, %v5327
    %v6001 = vsel %vm2841, %v5937, %v5329
    %v6003 = vsel %vm2841, %v5939, %v5331
    %v6005 = vsel %vm2841, %v5941, %v5333
    %v6007 = vsel %vm2841, %v5943, %v5335
    %v6009 = vsel %vm2841, %v5945, %v5337
    %v6011 = vsel %vm2841, %v5947, %v5339
    %v6013 = vsel %vm2841, %v5949, %v5341
    %v6015 = vsel %vm2841, %v5951, %v5343
    %v6017 = vsel %vm2841, %v5953, %v5345
    %v6019 = vsel %vm2841, %v5955, %v5347
    %v6021 = vsel %vm2841, %v5957, %v5349
    %v6023 = vsel %vm2906, %v5959, %v5383
    %v6025 = vsel %vm2906, %v5961, %v5385
    %v6027 = vsel %vm2906, %v5963, %v5387
    %v6029 = vsel %vm2906, %v5965, %v5389
    %v6031 = vsel %vm2906, %v5967, %v5391
    %v6033 = vsel %vm2906, %v5969, %v5393
    %v6035 = vsel %vm2906, %v5971, %v5395
    %v6037 = vsel %vm2906, %v5973, %v5397
    %v6039 = vsel %vm2906, %v5975, %v5399
    %v6041 = vsel %vm2906, %v5977, %v5401
    %v6043 = vsel %vm2906, %v5979, %v5403
    %v6045 = vsel %vm2906, %v5981, %v5405
    %v6047 = vsel %vm2906, %v5983, %v5407
    %v6049 = vsel %vm2906, %v5985, %v5409
    %v6051 = vsel %vm2906, %v5987, %v5411
    %v6053 = vsel %vm2906, %v5989, %v5413
    %v6055 = vsel %vm2906, %v5991, %v5415
    %v6057 = vsel %vm2906, %v5993, %v5417
    %v6059 = vsel %vm2906, %v5995, %v5419
    %v6061 = vsel %vm2906, %v5997, %v5421
    %v6063 = vsel %vm2906, %v5999, %v5423
    %v6065 = vsel %vm2906, %v6001, %v5425
    %v6067 = vsel %vm2906, %v6003, %v5427
    %v6069 = vsel %vm2906, %v6005, %v5429
    %v6071 = vsel %vm2906, %v6007, %v5431
    %v6073 = vsel %vm2906, %v6009, %v5433
    %v6075 = vsel %vm2906, %v6011, %v5435
    %v6077 = vsel %vm2906, %v6013, %v5437
    %v6079 = vsel %vm2906, %v6015, %v5439
    %v6081 = vsel %vm2906, %v6017, %v5441
    %v6083 = vsel %vm2906, %v6019, %v5443
    %v6085 = vsel %vm2906, %v6021, %v5445
    %v6087 = vsel %vm2971, %v6023, %v5479
    %v6089 = vsel %vm2971, %v6025, %v5481
    %v6091 = vsel %vm2971, %v6027, %v5483
    %v6093 = vsel %vm2971, %v6029, %v5485
    %v6095 = vsel %vm2971, %v6031, %v5487
    %v6097 = vsel %vm2971, %v6033, %v5489
    %v6099 = vsel %vm2971, %v6035, %v5491
    %v6101 = vsel %vm2971, %v6037, %v5493
    %v6103 = vsel %vm2971, %v6039, %v5495
    %v6105 = vsel %vm2971, %v6041, %v5497
    %v6107 = vsel %vm2971, %v6043, %v5499
    %v6109 = vsel %vm2971, %v6045, %v5501
    %v6111 = vsel %vm2971, %v6047, %v5503
    %v6113 = vsel %vm2971, %v6049, %v5505
    %v6115 = vsel %vm2971, %v6051, %v5507
    %v6117 = vsel %vm2971, %v6053, %v5509
    %v6119 = vsel %vm2971, %v6055, %v5511
    %v6121 = vsel %vm2971, %v6057, %v5513
    %v6123 = vsel %vm2971, %v6059, %v5515
    %v6125 = vsel %vm2971, %v6061, %v5517
    %v6127 = vsel %vm2971, %v6063, %v5519
    %v6129 = vsel %vm2971, %v6065, %v5521
    %v6131 = vsel %vm2971, %v6067, %v5523
    %v6133 = vsel %vm2971, %v6069, %v5525
    %v6135 = vsel %vm2971, %v6071, %v5527
    %v6137 = vsel %vm2971, %v6073, %v5529
    %v6139 = vsel %vm2971, %v6075, %v5531
    %v6141 = vsel %vm2971, %v6077, %v5533
    %v6143 = vsel %vm2971, %v6079, %v5535
    %v6145 = vsel %vm2971, %v6081, %v5537
    %v6147 = vsel %vm2971, %v6083, %v5539
    %v6149 = vsel %vm2971, %v6085, %v5541
    %v6151 = vsel %vm3036, %v6087, %v5575
    %v6153 = vsel %vm3036, %v6089, %v5577
    %v6155 = vsel %vm3036, %v6091, %v5579
    %v6157 = vsel %vm3036, %v6093, %v5581
    %v6159 = vsel %vm3036, %v6095, %v5583
    %v6161 = vsel %vm3036, %v6097, %v5585
    %v6163 = vsel %vm3036, %v6099, %v5587
    %v6165 = vsel %vm3036, %v6101, %v5589
    %v6167 = vsel %vm3036, %v6103, %v5591
    %v6169 = vsel %vm3036, %v6105, %v5593
    %v6171 = vsel %vm3036, %v6107, %v5595
    %v6173 = vsel %vm3036, %v6109, %v5597
    %v6175 = vsel %vm3036, %v6111, %v5599
    %v6177 = vsel %vm3036, %v6113, %v5601
    %v6179 = vsel %vm3036, %v6115, %v5603
    %v6181 = vsel %vm3036, %v6117, %v5605
    %v6183 = vsel %vm3036, %v6119, %v5607
    %v6185 = vsel %vm3036, %v6121, %v5609
    %v6187 = vsel %vm3036, %v6123, %v5611
    %v6189 = vsel %vm3036, %v6125, %v5613
    %v6191 = vsel %vm3036, %v6127, %v5615
    %v6193 = vsel %vm3036, %v6129, %v5617
    %v6195 = vsel %vm3036, %v6131, %v5619
    %v6197 = vsel %vm3036, %v6133, %v5621
    %v6199 = vsel %vm3036, %v6135, %v5623
    %v6201 = vsel %vm3036, %v6137, %v5625
    %v6203 = vsel %vm3036, %v6139, %v5627
    %v6205 = vsel %vm3036, %v6141, %v5629
    %v6207 = vsel %vm3036, %v6143, %v5631
    %v6209 = vsel %vm3036, %v6145, %v5633
    %v6211 = vsel %vm3036, %v6147, %v5635
    %v6213 = vsel %vm3036, %v6149, %v5637
    %v6215 = vsel %vm3101, %v6151, %v5671
    %v6217 = vsel %vm3101, %v6153, %v5673
    %v6219 = vsel %vm3101, %v6155, %v5675
    %v6221 = vsel %vm3101, %v6157, %v5677
    %v6223 = vsel %vm3101, %v6159, %v5679
    %v6225 = vsel %vm3101, %v6161, %v5681
    %v6227 = vsel %vm3101, %v6163, %v5683
    %v6229 = vsel %vm3101, %v6165, %v5685
    %v6231 = vsel %vm3101, %v6167, %v5687
    %v6233 = vsel %vm3101, %v6169, %v5689
    %v6235 = vsel %vm3101, %v6171, %v5691
    %v6237 = vsel %vm3101, %v6173, %v5693
    %v6239 = vsel %vm3101, %v6175, %v5695
    %v6241 = vsel %vm3101, %v6177, %v5697
    %v6243 = vsel %vm3101, %v6179, %v5699
    %v6245 = vsel %vm3101, %v6181, %v5701
    %v6247 = vsel %vm3101, %v6183, %v5703
    %v6249 = vsel %vm3101, %v6185, %v5705
    %v6251 = vsel %vm3101, %v6187, %v5707
    %v6253 = vsel %vm3101, %v6189, %v5709
    %v6255 = vsel %vm3101, %v6191, %v5711
    %v6257 = vsel %vm3101, %v6193, %v5713
    %v6259 = vsel %vm3101, %v6195, %v5715
    %v6261 = vsel %vm3101, %v6197, %v5717
    %v6263 = vsel %vm3101, %v6199, %v5719
    %v6265 = vsel %vm3101, %v6201, %v5721
    %v6267 = vsel %vm3101, %v6203, %v5723
    %v6269 = vsel %vm3101, %v6205, %v5725
    %v6271 = vsel %vm3101, %v6207, %v5727
    %v6273 = vsel %vm3101, %v6209, %v5729
    %v6275 = vsel %vm3101, %v6211, %v5731
    %v6277 = vsel %vm3101, %v6213, %v5733
    %v6278 = vld [vmem:[#allocation8] sm:$0xf]
    %v6279 = vld [vmem:[#allocation8 + $0x4] sm:$0xf]
    %v6280 = vld [vmem:[#allocation8 + $0x8] sm:$0xf]
    %v6281 = vld [vmem:[#allocation8 + $0xc] sm:$0xf]
    %v6282 = vld [vmem:[#allocation8 + $0x10] sm:$0xf]
    %v6283 = vld [vmem:[#allocation8 + $0x14] sm:$0xf]
    %v6284 = vld [vmem:[#allocation8 + $0x18] sm:$0xf]
    %v6285 = vld [vmem:[#allocation8 + $0x1c] sm:$0xf]
    %v6286 = vld [vmem:[#allocation8 + $0x20] sm:$0xf]
    %v6296 = vunpack.c.l.b16 %v6278
    %v6297 = vunpack.c.l.b16 %v6279
    %v6298 = vunpack.c.l.b16 %v6280
    %v6299 = vunpack.c.l.b16 %v6281
    %v6300 = vunpack.c.l.b16 %v6282
    %v6301 = vunpack.c.l.b16 %v6283
    %v6302 = vunpack.c.l.b16 %v6284
    %v6303 = vunpack.c.l.b16 %v6285
    %v6304 = vunpack.c.l.b16 %v6286
    %v6305 = vpack.c.b16 %v6297, %v6296
    %v6306 = vpack.c.b16 %v6299, %v6298
    %v6307 = vpack.c.b16 %v6301, %v6300
    %v6308 = vpack.c.b16 %v6303, %v6302
    %v6309 = vpack.c.b16 %v6304, %v6304
    %v6314 = vsel %vm3202, %v6215, 0
    %v6316 = vsel %vm3202, %v6217, 0
    %v6318 = vsel %vm3202, %v6219, 0
    %v6320 = vsel %vm3202, %v6221, 0
    %v6322 = vsel %vm3202, %v6223, 0
    %v6324 = vsel %vm3202, %v6225, 0
    %v6326 = vsel %vm3202, %v6227, 0
    %v6328 = vsel %vm3202, %v6229, 0
    %v6330 = vsel %vm3202, %v6231, 0
    %v6332 = vsel %vm3202, %v6233, 0
    %v6334 = vsel %vm3202, %v6235, 0
    %v6336 = vsel %vm3202, %v6237, 0
    %v6338 = vsel %vm3202, %v6239, 0
    %v6340 = vsel %vm3202, %v6241, 0
    %v6342 = vsel %vm3202, %v6243, 0
    %v6344 = vsel %vm3202, %v6245, 0
    %v6346 = vsel %vm3202, %v6247, 0
    %v6348 = vsel %vm3202, %v6249, 0
    %v6350 = vsel %vm3202, %v6251, 0
    %v6352 = vsel %vm3202, %v6253, 0
    %v6354 = vsel %vm3202, %v6255, 0
    %v6356 = vsel %vm3202, %v6257, 0
    %v6358 = vsel %vm3202, %v6259, 0
    %v6360 = vsel %vm3202, %v6261, 0
    %v6362 = vsel %vm3202, %v6263, 0
    %v6364 = vsel %vm3202, %v6265, 0
    %v6366 = vsel %vm3202, %v6267, 0
    %v6368 = vsel %vm3202, %v6269, 0
    %v6370 = vsel %vm3202, %v6271, 0
    %v6372 = vsel %vm3202, %v6273, 0
    %v6374 = vsel %vm3202, %v6275, 0
    %v6376 = vsel %vm3202, %v6277, 0
    %v6379 = vsel %vm3267, %v6309, 0
    %6381 = vmatprep.subr.bf16.mxu0 0
    %6382 = vmatpush1.bf16.msra.mxu0 0
    %6383 = vmatprep.subr.bf16.mxu0 0
    %6384 = vmatpush1.bf16.msra.mxu0 0
    %6385 = vmatprep.subr.bf16.mxu0 0
    %6386 = vmatpush1.bf16.msra.mxu0 0
    %6387 = vmatprep.subr.bf16.mxu0 0
    %6388 = vmatpush1.bf16.msra.mxu0 %v6379
    %6389 = vmatprep.subr.bf16.mxu0 0
    %6390 = vmatpush1.bf16.msra.mxu0 %v6308
    %6391 = vmatprep.subr.bf16.mxu0 0
    %6392 = vmatpush1.bf16.msra.mxu0 %v6307
    %6393 = vmatprep.subr.bf16.mxu0 0
    %6394 = vmatpush1.bf16.msra.mxu0 %v6306
    %6395 = vmatprep.subr.bf16.mxu0 0
    %6396 = vmatpush1.bf16.msra.mxu0 %v6305
    %6397 = vmatprep.subr.bf16.mxu0 0
    %6398 = vmatpush2.bf16.msra.mxu0 0
    %6399 = vmatprep.subr.bf16.mxu0 0
    %6400 = vmatpush2.bf16.msra.mxu0 0
    %6401 = vmatprep.subr.bf16.mxu0 0
    %6402 = vmatpush2.bf16.msra.mxu0 0
    %6403 = vmatprep.subr.bf16.mxu0 0
    %6404 = vmatpush2.bf16.msra.mxu0 0
    %6405 = vmatprep.subr.bf16.mxu0 0
    %6406 = vmatpush2.bf16.msra.mxu0 0
    %6407 = vmatprep.subr.bf16.mxu0 0
    %6408 = vmatpush2.bf16.msra.mxu0 0
    %6409 = vmatprep.subr.bf16.mxu0 0
    %6410 = vmatpush2.bf16.msra.mxu0 0
    %6411 = vmatprep.subr.bf16.mxu0 0
    %6412 = vmatpush2.bf16.msra.mxu0 0
    %6413 = vmatprep.mubr.bf16.mxu0 0
    %6414 = vmatmul.mubr.bf16.gmra.mxu0 %v6314
    %v6415 = vpop.f32.mrf.mxu0
    %v6416 = vadd.f32 0.0, %v6415
    %v6417 = vpop.f32.mrf.mxu0
    %v6418 = vpop.f32.mrf.mxu0
    %v6419 = vadd.f32 0.0, %v6418
    %v6420 = vpop.f32.mrf.mxu0
    %6421 = vmatprep.mubr.bf16.mxu0 0
    %6422 = vmatmul.mubr.bf16.gmra.mxu0 %v6316
    %v6423 = vpop.f32.mrf.mxu0
    %v6424 = vadd.f32 0.0, %v6423
    %v6425 = vpop.f32.mrf.mxu0
    %v6426 = vpop.f32.mrf.mxu0
    %v6427 = vadd.f32 0.0, %v6426
    %v6428 = vpop.f32.mrf.mxu0
    %6429 = vmatprep.mubr.bf16.mxu0 0
    %6430 = vmatmul.mubr.bf16.gmra.mxu0 %v6318
    %v6431 = vpop.f32.mrf.mxu0
    %v6432 = vadd.f32 0.0, %v6431
    %v6433 = vpop.f32.mrf.mxu0
    %v6434 = vpop.f32.mrf.mxu0
    %v6435 = vadd.f32 0.0, %v6434
    %v6436 = vpop.f32.mrf.mxu0
    %6437 = vmatprep.mubr.bf16.mxu0 0
    %6438 = vmatmul.mubr.bf16.gmra.mxu0 %v6320
    %v6439 = vpop.f32.mrf.mxu0
    %v6440 = vadd.f32 0.0, %v6439
    %v6441 = vpop.f32.mrf.mxu0
    %v6442 = vpop.f32.mrf.mxu0
    %v6443 = vadd.f32 0.0, %v6442
    %v6444 = vpop.f32.mrf.mxu0
    %6445 = vmatprep.mubr.bf16.mxu0 0
    %6446 = vmatmul.mubr.bf16.gmra.mxu0 %v6322
    %v6447 = vpop.f32.mrf.mxu0
    %v6448 = vadd.f32 0.0, %v6447
    %v6449 = vpop.f32.mrf.mxu0
    %v6450 = vpop.f32.mrf.mxu0
    %v6451 = vadd.f32 0.0, %v6450
    %v6452 = vpop.f32.mrf.mxu0
    %6453 = vmatprep.mubr.bf16.mxu0 0
    %6454 = vmatmul.mubr.bf16.gmra.mxu0 %v6324
    %v6455 = vpop.f32.mrf.mxu0
    %v6456 = vadd.f32 0.0, %v6455
    %v6457 = vpop.f32.mrf.mxu0
    %v6458 = vpop.f32.mrf.mxu0
    %v6459 = vadd.f32 0.0, %v6458
    %v6460 = vpop.f32.mrf.mxu0
    %6461 = vmatprep.mubr.bf16.mxu0 0
    %6462 = vmatmul.mubr.bf16.gmra.mxu0 %v6326
    %v6463 = vpop.f32.mrf.mxu0
    %v6464 = vadd.f32 0.0, %v6463
    %v6465 = vpop.f32.mrf.mxu0
    %v6466 = vpop.f32.mrf.mxu0
    %v6467 = vadd.f32 0.0, %v6466
    %v6468 = vpop.f32.mrf.mxu0
    %6469 = vmatprep.mubr.bf16.mxu0 0
    %6470 = vmatmul.mubr.bf16.gmra.mxu0 %v6328
    %v6471 = vpop.f32.mrf.mxu0
    %v6472 = vadd.f32 0.0, %v6471
    %v6473 = vpop.f32.mrf.mxu0
    %v6474 = vpop.f32.mrf.mxu0
    %v6475 = vadd.f32 0.0, %v6474
    %v6476 = vpop.f32.mrf.mxu0
    %6477 = vmatprep.mubr.bf16.mxu0 0
    %6478 = vmatmul.mubr.bf16.gmra.mxu0 %v6330
    %v6479 = vpop.f32.mrf.mxu0
    %v6480 = vadd.f32 0.0, %v6479
    %v6481 = vpop.f32.mrf.mxu0
    %v6482 = vpop.f32.mrf.mxu0
    %v6483 = vadd.f32 0.0, %v6482
    %v6484 = vpop.f32.mrf.mxu0
    %6485 = vmatprep.mubr.bf16.mxu0 0
    %6486 = vmatmul.mubr.bf16.gmra.mxu0 %v6332
    %v6487 = vpop.f32.mrf.mxu0
    %v6488 = vadd.f32 0.0, %v6487
    %v6489 = vpop.f32.mrf.mxu0
    %v6490 = vpop.f32.mrf.mxu0
    %v6491 = vadd.f32 0.0, %v6490
    %v6492 = vpop.f32.mrf.mxu0
    %6493 = vmatprep.mubr.bf16.mxu0 0
    %6494 = vmatmul.mubr.bf16.gmra.mxu0 %v6334
    %v6495 = vpop.f32.mrf.mxu0
    %v6496 = vadd.f32 0.0, %v6495
    %v6497 = vpop.f32.mrf.mxu0
    %v6498 = vpop.f32.mrf.mxu0
    %v6499 = vadd.f32 0.0, %v6498
    %v6500 = vpop.f32.mrf.mxu0
    %6501 = vmatprep.mubr.bf16.mxu0 0
    %6502 = vmatmul.mubr.bf16.gmra.mxu0 %v6336
    %v6503 = vpop.f32.mrf.mxu0
    %v6504 = vadd.f32 0.0, %v6503
    %v6505 = vpop.f32.mrf.mxu0
    %v6506 = vpop.f32.mrf.mxu0
    %v6507 = vadd.f32 0.0, %v6506
    %v6508 = vpop.f32.mrf.mxu0
    %6509 = vmatprep.mubr.bf16.mxu0 0
    %6510 = vmatmul.mubr.bf16.gmra.mxu0 %v6338
    %v6511 = vpop.f32.mrf.mxu0
    %v6512 = vadd.f32 0.0, %v6511
    %v6513 = vpop.f32.mrf.mxu0
    %v6514 = vpop.f32.mrf.mxu0
    %v6515 = vadd.f32 0.0, %v6514
    %v6516 = vpop.f32.mrf.mxu0
    %6517 = vmatprep.mubr.bf16.mxu0 0
    %6518 = vmatmul.mubr.bf16.gmra.mxu0 %v6340
    %v6519 = vpop.f32.mrf.mxu0
    %v6520 = vadd.f32 0.0, %v6519
    %v6521 = vpop.f32.mrf.mxu0
    %v6522 = vpop.f32.mrf.mxu0
    %v6523 = vadd.f32 0.0, %v6522
    %v6524 = vpop.f32.mrf.mxu0
    %6525 = vmatprep.mubr.bf16.mxu0 0
    %6526 = vmatmul.mubr.bf16.gmra.mxu0 %v6342
    %v6527 = vpop.f32.mrf.mxu0
    %v6528 = vadd.f32 0.0, %v6527
    %v6529 = vpop.f32.mrf.mxu0
    %v6530 = vpop.f32.mrf.mxu0
    %v6531 = vadd.f32 0.0, %v6530
    %v6532 = vpop.f32.mrf.mxu0
    %6533 = vmatprep.mubr.bf16.mxu0 0
    %6534 = vmatmul.mubr.bf16.gmra.mxu0 %v6344
    %v6535 = vpop.f32.mrf.mxu0
    %v6536 = vadd.f32 0.0, %v6535
    %v6537 = vpop.f32.mrf.mxu0
    %v6538 = vpop.f32.mrf.mxu0
    %v6539 = vadd.f32 0.0, %v6538
    %v6540 = vpop.f32.mrf.mxu0
    %6541 = vmatprep.mubr.bf16.mxu0 0
    %6542 = vmatmul.mubr.bf16.gmra.mxu0 %v6346
    %v6543 = vpop.f32.mrf.mxu0
    %v6544 = vadd.f32 0.0, %v6543
    %v6545 = vpop.f32.mrf.mxu0
    %v6546 = vpop.f32.mrf.mxu0
    %v6547 = vadd.f32 0.0, %v6546
    %v6548 = vpop.f32.mrf.mxu0
    %6549 = vmatprep.mubr.bf16.mxu0 0
    %6550 = vmatmul.mubr.bf16.gmra.mxu0 %v6348
    %v6551 = vpop.f32.mrf.mxu0
    %v6552 = vadd.f32 0.0, %v6551
    %v6553 = vpop.f32.mrf.mxu0
    %v6554 = vpop.f32.mrf.mxu0
    %v6555 = vadd.f32 0.0, %v6554
    %v6556 = vpop.f32.mrf.mxu0
    %6557 = vmatprep.mubr.bf16.mxu0 0
    %6558 = vmatmul.mubr.bf16.gmra.mxu0 %v6350
    %v6559 = vpop.f32.mrf.mxu0
    %v6560 = vadd.f32 0.0, %v6559
    %v6561 = vpop.f32.mrf.mxu0
    %v6562 = vpop.f32.mrf.mxu0
    %v6563 = vadd.f32 0.0, %v6562
    %v6564 = vpop.f32.mrf.mxu0
    %6565 = vmatprep.mubr.bf16.mxu0 0
    %6566 = vmatmul.mubr.bf16.gmra.mxu0 %v6352
    %v6567 = vpop.f32.mrf.mxu0
    %v6568 = vadd.f32 0.0, %v6567
    %v6569 = vpop.f32.mrf.mxu0
    %v6570 = vpop.f32.mrf.mxu0
    %v6571 = vadd.f32 0.0, %v6570
    %v6572 = vpop.f32.mrf.mxu0
    %6573 = vmatprep.mubr.bf16.mxu0 0
    %6574 = vmatmul.mubr.bf16.gmra.mxu0 %v6354
    %v6575 = vpop.f32.mrf.mxu0
    %v6576 = vadd.f32 0.0, %v6575
    %v6577 = vpop.f32.mrf.mxu0
    %v6578 = vpop.f32.mrf.mxu0
    %v6579 = vadd.f32 0.0, %v6578
    %v6580 = vpop.f32.mrf.mxu0
    %6581 = vmatprep.mubr.bf16.mxu0 0
    %6582 = vmatmul.mubr.bf16.gmra.mxu0 %v6356
    %v6583 = vpop.f32.mrf.mxu0
    %v6584 = vadd.f32 0.0, %v6583
    %v6585 = vpop.f32.mrf.mxu0
    %v6586 = vpop.f32.mrf.mxu0
    %v6587 = vadd.f32 0.0, %v6586
    %v6588 = vpop.f32.mrf.mxu0
    %6589 = vmatprep.mubr.bf16.mxu0 0
    %6590 = vmatmul.mubr.bf16.gmra.mxu0 %v6358
    %v6591 = vpop.f32.mrf.mxu0
    %v6592 = vadd.f32 0.0, %v6591
    %v6593 = vpop.f32.mrf.mxu0
    %v6594 = vpop.f32.mrf.mxu0
    %v6595 = vadd.f32 0.0, %v6594
    %v6596 = vpop.f32.mrf.mxu0
    %6597 = vmatprep.mubr.bf16.mxu0 0
    %6598 = vmatmul.mubr.bf16.gmra.mxu0 %v6360
    %v6599 = vpop.f32.mrf.mxu0
    %v6600 = vadd.f32 0.0, %v6599
    %v6601 = vpop.f32.mrf.mxu0
    %v6602 = vpop.f32.mrf.mxu0
    %v6603 = vadd.f32 0.0, %v6602
    %v6604 = vpop.f32.mrf.mxu0
    %6605 = vmatprep.mubr.bf16.mxu0 0
    %6606 = vmatmul.mubr.bf16.gmra.mxu0 %v6362
    %v6607 = vpop.f32.mrf.mxu0
    %v6608 = vadd.f32 0.0, %v6607
    %v6609 = vpop.f32.mrf.mxu0
    %v6610 = vpop.f32.mrf.mxu0
    %v6611 = vadd.f32 0.0, %v6610
    %v6612 = vpop.f32.mrf.mxu0
    %6613 = vmatprep.mubr.bf16.mxu0 0
    %6614 = vmatmul.mubr.bf16.gmra.mxu0 %v6364
    %v6615 = vpop.f32.mrf.mxu0
    %v6616 = vadd.f32 0.0, %v6615
    %v6617 = vpop.f32.mrf.mxu0
    %v6618 = vpop.f32.mrf.mxu0
    %v6619 = vadd.f32 0.0, %v6618
    %v6620 = vpop.f32.mrf.mxu0
    %6621 = vmatprep.mubr.bf16.mxu0 0
    %6622 = vmatmul.mubr.bf16.gmra.mxu0 %v6366
    %v6623 = vpop.f32.mrf.mxu0
    %v6624 = vadd.f32 0.0, %v6623
    %v6625 = vpop.f32.mrf.mxu0
    %v6626 = vpop.f32.mrf.mxu0
    %v6627 = vadd.f32 0.0, %v6626
    %v6628 = vpop.f32.mrf.mxu0
    %6629 = vmatprep.mubr.bf16.mxu0 0
    %6630 = vmatmul.mubr.bf16.gmra.mxu0 %v6368
    %v6631 = vpop.f32.mrf.mxu0
    %v6632 = vadd.f32 0.0, %v6631
    %v6633 = vpop.f32.mrf.mxu0
    %v6634 = vpop.f32.mrf.mxu0
    %v6635 = vadd.f32 0.0, %v6634
    %v6636 = vpop.f32.mrf.mxu0
    %6637 = vmatprep.mubr.bf16.mxu0 0
    %6638 = vmatmul.mubr.bf16.gmra.mxu0 %v6370
    %v6639 = vpop.f32.mrf.mxu0
    %v6640 = vadd.f32 0.0, %v6639
    %v6641 = vpop.f32.mrf.mxu0
    %v6642 = vpop.f32.mrf.mxu0
    %v6643 = vadd.f32 0.0, %v6642
    %v6644 = vpop.f32.mrf.mxu0
    %6645 = vmatprep.mubr.bf16.mxu0 0
    %6646 = vmatmul.mubr.bf16.gmra.mxu0 %v6372
    %v6647 = vpop.f32.mrf.mxu0
    %v6648 = vadd.f32 0.0, %v6647
    %v6649 = vpop.f32.mrf.mxu0
    %v6650 = vpop.f32.mrf.mxu0
    %v6651 = vadd.f32 0.0, %v6650
    %v6652 = vpop.f32.mrf.mxu0
    %6653 = vmatprep.mubr.bf16.mxu0 0
    %6654 = vmatmul.mubr.bf16.gmra.mxu0 %v6374
    %v6655 = vpop.f32.mrf.mxu0
    %v6656 = vadd.f32 0.0, %v6655
    %v6657 = vpop.f32.mrf.mxu0
    %v6658 = vpop.f32.mrf.mxu0
    %v6659 = vadd.f32 0.0, %v6658
    %v6660 = vpop.f32.mrf.mxu0
    %6661 = vmatprep.mubr.bf16.mxu0 0
    %6662 = vmatmul.mubr.bf16.gmra.mxu0 %v6376
    %v6663 = vpop.f32.mrf.mxu0
    %v6664 = vadd.f32 0.0, %v6663
    %v6665 = vpop.f32.mrf.mxu0
    %v6666 = vpop.f32.mrf.mxu0
    %v6667 = vadd.f32 0.0, %v6666
    %v6668 = vpop.f32.mrf.mxu0
    %6669 = vdwg.mxu0
    %v6670 = vadd.f32 %v6416, %v6419
    %v6671 = vadd.f32 %v6670, %v6424
    %v6672 = vadd.f32 %v6671, %v6427
    %v6673 = vadd.f32 %v6672, %v6432
    %v6674 = vadd.f32 %v6673, %v6435
    %v6675 = vadd.f32 %v6674, %v6440
    %v6676 = vadd.f32 %v6675, %v6443
    %v6677 = vadd.f32 %v6676, %v6448
    %v6678 = vadd.f32 %v6677, %v6451
    %v6679 = vadd.f32 %v6678, %v6456
    %v6680 = vadd.f32 %v6679, %v6459
    %v6681 = vadd.f32 %v6680, %v6464
    %v6682 = vadd.f32 %v6681, %v6467
    %v6683 = vadd.f32 %v6682, %v6472
    %v6684 = vadd.f32 %v6683, %v6475
    %v6685 = vadd.f32 %v6684, %v6480
    %v6686 = vadd.f32 %v6685, %v6483
    %v6687 = vadd.f32 %v6686, %v6488
    %v6688 = vadd.f32 %v6687, %v6491
    %v6689 = vadd.f32 %v6688, %v6496
    %v6690 = vadd.f32 %v6689, %v6499
    %v6691 = vadd.f32 %v6690, %v6504
    %v6692 = vadd.f32 %v6691, %v6507
    %v6693 = vadd.f32 %v6692, %v6512
    %v6694 = vadd.f32 %v6693, %v6515
    %v6695 = vadd.f32 %v6694, %v6520
    %v6696 = vadd.f32 %v6695, %v6523
    %v6697 = vadd.f32 %v6696, %v6528
    %v6698 = vadd.f32 %v6697, %v6531
    %v6699 = vadd.f32 %v6698, %v6536
    %v6700 = vadd.f32 %v6699, %v6539
    %v6701 = vadd.f32 %v6700, %v6544
    %v6702 = vadd.f32 %v6701, %v6547
    %v6703 = vadd.f32 %v6702, %v6552
    %v6704 = vadd.f32 %v6703, %v6555
    %v6705 = vadd.f32 %v6704, %v6560
    %v6706 = vadd.f32 %v6705, %v6563
    %v6707 = vadd.f32 %v6706, %v6568
    %v6708 = vadd.f32 %v6707, %v6571
    %v6709 = vadd.f32 %v6708, %v6576
    %v6710 = vadd.f32 %v6709, %v6579
    %v6711 = vadd.f32 %v6710, %v6584
    %v6712 = vadd.f32 %v6711, %v6587
    %v6713 = vadd.f32 %v6712, %v6592
    %v6714 = vadd.f32 %v6713, %v6595
    %v6715 = vadd.f32 %v6714, %v6600
    %v6716 = vadd.f32 %v6715, %v6603
    %v6717 = vadd.f32 %v6716, %v6608
    %v6718 = vadd.f32 %v6717, %v6611
    %v6719 = vadd.f32 %v6718, %v6616
    %v6720 = vadd.f32 %v6719, %v6619
    %v6721 = vadd.f32 %v6720, %v6624
    %v6722 = vadd.f32 %v6721, %v6627
    %v6723 = vadd.f32 %v6722, %v6632
    %v6724 = vadd.f32 %v6723, %v6635
    %v6725 = vadd.f32 %v6724, %v6640
    %v6726 = vadd.f32 %v6725, %v6643
    %v6727 = vadd.f32 %v6726, %v6648
    %v6728 = vadd.f32 %v6727, %v6651
    %v6729 = vadd.f32 %v6728, %v6656
    %v6730 = vadd.f32 %v6729, %v6659
    %v6731 = vadd.f32 %v6730, %v6664
    %v6732 = vadd.f32 %v6731, %v6667
    %v6733 = vrot.slane %v6732, 4
    %v6734 = vadd.f32 %v6732, %v6733
    %v6735 = vrot.slane %v6734, 2
    %v6736 = vadd.f32 %v6734, %v6735
    %v6737 = vrot.slane %v6736, 1
    %v6738 = vadd.f32 %v6736, %v6737
    %v6739 = vmul.f32 %v6738, 0.001953125
    %v6740 = vmul.f32 %v6416, %v6416
    %v6741 = vmul.f32 %v6419, %v6419
    %v6742 = vmul.f32 %v6424, %v6424
    %v6743 = vmul.f32 %v6427, %v6427
    %v6744 = vmul.f32 %v6432, %v6432
    %v6745 = vmul.f32 %v6435, %v6435
    %v6746 = vmul.f32 %v6440, %v6440
    %v6747 = vmul.f32 %v6443, %v6443
    %v6748 = vmul.f32 %v6448, %v6448
    %v6749 = vmul.f32 %v6451, %v6451
    %v6750 = vmul.f32 %v6456, %v6456
    %v6751 = vmul.f32 %v6459, %v6459
    %v6752 = vmul.f32 %v6464, %v6464
    %v6753 = vmul.f32 %v6467, %v6467
    %v6754 = vmul.f32 %v6472, %v6472
    %v6755 = vmul.f32 %v6475, %v6475
    %v6756 = vmul.f32 %v6480, %v6480
    %v6757 = vmul.f32 %v6483, %v6483
    %v6758 = vmul.f32 %v6488, %v6488
    %v6759 = vmul.f32 %v6491, %v6491
    %v6760 = vmul.f32 %v6496, %v6496
    %v6761 = vmul.f32 %v6499, %v6499
    %v6762 = vmul.f32 %v6504, %v6504
    %v6763 = vmul.f32 %v6507, %v6507
    %v6764 = vmul.f32 %v6512, %v6512
    %v6765 = vmul.f32 %v6515, %v6515
    %v6766 = vmul.f32 %v6520, %v6520
    %v6767 = vmul.f32 %v6523, %v6523
    %v6768 = vmul.f32 %v6528, %v6528
    %v6769 = vmul.f32 %v6531, %v6531
    %v6770 = vmul.f32 %v6536, %v6536
    %v6771 = vmul.f32 %v6539, %v6539
    %v6772 = vmul.f32 %v6544, %v6544
    %v6773 = vmul.f32 %v6547, %v6547
    %v6774 = vmul.f32 %v6552, %v6552
    %v6775 = vmul.f32 %v6555, %v6555
    %v6776 = vmul.f32 %v6560, %v6560
    %v6777 = vmul.f32 %v6563, %v6563
    %v6778 = vmul.f32 %v6568, %v6568
    %v6779 = vmul.f32 %v6571, %v6571
    %v6780 = vmul.f32 %v6576, %v6576
    %v6781 = vmul.f32 %v6579, %v6579
    %v6782 = vmul.f32 %v6584, %v6584
    %v6783 = vmul.f32 %v6587, %v6587
    %v6784 = vmul.f32 %v6592, %v6592
    %v6785 = vmul.f32 %v6595, %v6595
    %v6786 = vmul.f32 %v6600, %v6600
    %v6787 = vmul.f32 %v6603, %v6603
    %v6788 = vmul.f32 %v6608, %v6608
    %v6789 = vmul.f32 %v6611, %v6611
    %v6790 = vmul.f32 %v6616, %v6616
    %v6791 = vmul.f32 %v6619, %v6619
    %v6792 = vmul.f32 %v6624, %v6624
    %v6793 = vmul.f32 %v6627, %v6627
    %v6794 = vmul.f32 %v6632, %v6632
    %v6795 = vmul.f32 %v6635, %v6635
    %v6796 = vmul.f32 %v6640, %v6640
    %v6797 = vmul.f32 %v6643, %v6643
    %v6798 = vmul.f32 %v6648, %v6648
    %v6799 = vmul.f32 %v6651, %v6651
    %v6800 = vmul.f32 %v6656, %v6656
    %v6801 = vmul.f32 %v6659, %v6659
    %v6802 = vmul.f32 %v6664, %v6664
    %v6803 = vmul.f32 %v6667, %v6667
    %v6804 = vadd.f32 %v6740, %v6741
    %v6805 = vadd.f32 %v6804, %v6742
    %v6806 = vadd.f32 %v6805, %v6743
    %v6807 = vadd.f32 %v6806, %v6744
    %v6808 = vadd.f32 %v6807, %v6745
    %v6809 = vadd.f32 %v6808, %v6746
    %v6810 = vadd.f32 %v6809, %v6747
    %v6811 = vadd.f32 %v6810, %v6748
    %v6812 = vadd.f32 %v6811, %v6749
    %v6813 = vadd.f32 %v6812, %v6750
    %v6814 = vadd.f32 %v6813, %v6751
    %v6815 = vadd.f32 %v6814, %v6752
    %v6816 = vadd.f32 %v6815, %v6753
    %v6817 = vadd.f32 %v6816, %v6754
    %v6818 = vadd.f32 %v6817, %v6755
    %v6819 = vadd.f32 %v6818, %v6756
    %v6820 = vadd.f32 %v6819, %v6757
    %v6821 = vadd.f32 %v6820, %v6758
    %v6822 = vadd.f32 %v6821, %v6759
    %v6823 = vadd.f32 %v6822, %v6760
    %v6824 = vadd.f32 %v6823, %v6761
    %v6825 = vadd.f32 %v6824, %v6762
    %v6826 = vadd.f32 %v6825, %v6763
    %v6827 = vadd.f32 %v6826, %v6764
    %v6828 = vadd.f32 %v6827, %v6765
    %v6829 = vadd.f32 %v6828, %v6766
    %v6830 = vadd.f32 %v6829, %v6767
    %v6831 = vadd.f32 %v6830, %v6768
    %v6832 = vadd.f32 %v6831, %v6769
    %v6833 = vadd.f32 %v6832, %v6770
    %v6834 = vadd.f32 %v6833, %v6771
    %v6835 = vadd.f32 %v6834, %v6772
    %v6836 = vadd.f32 %v6835, %v6773
    %v6837 = vadd.f32 %v6836, %v6774
    %v6838 = vadd.f32 %v6837, %v6775
    %v6839 = vadd.f32 %v6838, %v6776
    %v6840 = vadd.f32 %v6839, %v6777
    %v6841 = vadd.f32 %v6840, %v6778
    %v6842 = vadd.f32 %v6841, %v6779
    %v6843 = vadd.f32 %v6842, %v6780
    %v6844 = vadd.f32 %v6843, %v6781
    %v6845 = vadd.f32 %v6844, %v6782
    %v6846 = vadd.f32 %v6845, %v6783
    %v6847 = vadd.f32 %v6846, %v6784
    %v6848 = vadd.f32 %v6847, %v6785
    %v6849 = vadd.f32 %v6848, %v6786
    %v6850 = vadd.f32 %v6849, %v6787
    %v6851 = vadd.f32 %v6850, %v6788
    %v6852 = vadd.f32 %v6851, %v6789
    %v6853 = vadd.f32 %v6852, %v6790
    %v6854 = vadd.f32 %v6853, %v6791
    %v6855 = vadd.f32 %v6854, %v6792
    %v6856 = vadd.f32 %v6855, %v6793
    %v6857 = vadd.f32 %v6856, %v6794
    %v6858 = vadd.f32 %v6857, %v6795
    %v6859 = vadd.f32 %v6858, %v6796
    %v6860 = vadd.f32 %v6859, %v6797
    %v6861 = vadd.f32 %v6860, %v6798
    %v6862 = vadd.f32 %v6861, %v6799
    %v6863 = vadd.f32 %v6862, %v6800
    %v6864 = vadd.f32 %v6863, %v6801
    %v6865 = vadd.f32 %v6864, %v6802
    %v6866 = vadd.f32 %v6865, %v6803
    %v6867 = vrot.slane %v6866, 4
    %v6868 = vadd.f32 %v6866, %v6867
    %v6869 = vrot.slane %v6868, 2
    %v6870 = vadd.f32 %v6868, %v6869
    %v6871 = vrot.slane %v6870, 1
    %v6872 = vadd.f32 %v6870, %v6871
    %v6873 = vmul.f32 %v6872, 0.001953125
    %v6874 = vmul.f32 %v6739, %v6739
    %v6875 = vsub.f32 %v6873, %v6874
    %v6876 = vmax.f32 %v6875, 0.0
    %v6877 = vadd.f32 %v6876, 1e-05
    %v6878 = vrsqrt.pop %v6877
    %v6879 = vld [vmem:[%s5] sm:$0x1]
    %v6880 = vmul.f32 %v6878, %v6879
    %v6881 = vsub.f32 %v6416, %v6739
    %v6882 = vsub.f32 %v6419, %v6739
    %v6883 = vsub.f32 %v6424, %v6739
    %v6884 = vsub.f32 %v6427, %v6739
    %v6885 = vsub.f32 %v6432, %v6739
    %v6886 = vsub.f32 %v6435, %v6739
    %v6887 = vsub.f32 %v6440, %v6739
    %v6888 = vsub.f32 %v6443, %v6739
    %v6889 = vsub.f32 %v6448, %v6739
    %v6890 = vsub.f32 %v6451, %v6739
    %v6891 = vsub.f32 %v6456, %v6739
    %v6892 = vsub.f32 %v6459, %v6739
    %v6893 = vsub.f32 %v6464, %v6739
    %v6894 = vsub.f32 %v6467, %v6739
    %v6895 = vsub.f32 %v6472, %v6739
    %v6896 = vsub.f32 %v6475, %v6739
    %v6897 = vsub.f32 %v6480, %v6739
    %v6898 = vsub.f32 %v6483, %v6739
    %v6899 = vsub.f32 %v6488, %v6739
    %v6900 = vsub.f32 %v6491, %v6739
    %v6901 = vsub.f32 %v6496, %v6739
    %v6902 = vsub.f32 %v6499, %v6739
    %v6903 = vsub.f32 %v6504, %v6739
    %v6904 = vsub.f32 %v6507, %v6739
    %v6905 = vsub.f32 %v6512, %v6739
    %v6906 = vsub.f32 %v6515, %v6739
    %v6907 = vsub.f32 %v6520, %v6739
    %v6908 = vsub.f32 %v6523, %v6739
    %v6909 = vsub.f32 %v6528, %v6739
    %v6910 = vsub.f32 %v6531, %v6739
    %v6911 = vsub.f32 %v6536, %v6739
    %v6912 = vsub.f32 %v6539, %v6739
    %v6913 = vsub.f32 %v6544, %v6739
    %v6914 = vsub.f32 %v6547, %v6739
    %v6915 = vsub.f32 %v6552, %v6739
    %v6916 = vsub.f32 %v6555, %v6739
    %v6917 = vsub.f32 %v6560, %v6739
    %v6918 = vsub.f32 %v6563, %v6739
    %v6919 = vsub.f32 %v6568, %v6739
    %v6920 = vsub.f32 %v6571, %v6739
    %v6921 = vsub.f32 %v6576, %v6739
    %v6922 = vsub.f32 %v6579, %v6739
    %v6923 = vsub.f32 %v6584, %v6739
    %v6924 = vsub.f32 %v6587, %v6739
    %v6925 = vsub.f32 %v6592, %v6739
    %v6926 = vsub.f32 %v6595, %v6739
    %v6927 = vsub.f32 %v6600, %v6739
    %v6928 = vsub.f32 %v6603, %v6739
    %v6929 = vsub.f32 %v6608, %v6739
    %v6930 = vsub.f32 %v6611, %v6739
    %v6931 = vsub.f32 %v6616, %v6739
    %v6932 = vsub.f32 %v6619, %v6739
    %v6933 = vsub.f32 %v6624, %v6739
    %v6934 = vsub.f32 %v6627, %v6739
    %v6935 = vsub.f32 %v6632, %v6739
    %v6936 = vsub.f32 %v6635, %v6739
    %v6937 = vsub.f32 %v6640, %v6739
    %v6938 = vsub.f32 %v6643, %v6739
    %v6939 = vsub.f32 %v6648, %v6739
    %v6940 = vsub.f32 %v6651, %v6739
    %v6941 = vsub.f32 %v6656, %v6739
    %v6942 = vsub.f32 %v6659, %v6739
    %v6943 = vsub.f32 %v6664, %v6739
    %v6944 = vsub.f32 %v6667, %v6739
    %v6945 = vlaneseq
    %v6946 = vshrl.u32 %v6945, 7
    %v6947 = vsub.s32 0, %v6946
    %v6948 = vrot.slane %v6880, %v6947
    %v6949 = vmul.f32 %v6881, %v6948
    %v6950 = vmul.f32 %v6882, %v6948
    %v6951 = vmul.f32 %v6883, %v6948
    %v6952 = vmul.f32 %v6884, %v6948
    %v6953 = vmul.f32 %v6885, %v6948
    %v6954 = vmul.f32 %v6886, %v6948
    %v6955 = vmul.f32 %v6887, %v6948
    %v6956 = vmul.f32 %v6888, %v6948
    %v6957 = vmul.f32 %v6889, %v6948
    %v6958 = vmul.f32 %v6890, %v6948
    %v6959 = vmul.f32 %v6891, %v6948
    %v6960 = vmul.f32 %v6892, %v6948
    %v6961 = vmul.f32 %v6893, %v6948
    %v6962 = vmul.f32 %v6894, %v6948
    %v6963 = vmul.f32 %v6895, %v6948
    %v6964 = vmul.f32 %v6896, %v6948
    %v6965 = vmul.f32 %v6897, %v6948
    %v6966 = vmul.f32 %v6898, %v6948
    %v6967 = vmul.f32 %v6899, %v6948
    %v6968 = vmul.f32 %v6900, %v6948
    %v6969 = vmul.f32 %v6901, %v6948
    %v6970 = vmul.f32 %v6902, %v6948
    %v6971 = vmul.f32 %v6903, %v6948
    %v6972 = vmul.f32 %v6904, %v6948
    %v6973 = vmul.f32 %v6905, %v6948
    %v6974 = vmul.f32 %v6906, %v6948
    %v6975 = vmul.f32 %v6907, %v6948
    %v6976 = vmul.f32 %v6908, %v6948
    %v6977 = vmul.f32 %v6909, %v6948
    %v6978 = vmul.f32 %v6910, %v6948
    %v6979 = vmul.f32 %v6911, %v6948
    %v6980 = vmul.f32 %v6912, %v6948
    %v6981 = vmul.f32 %v6913, %v6948
    %v6982 = vmul.f32 %v6914, %v6948
    %v6983 = vmul.f32 %v6915, %v6948
    %v6984 = vmul.f32 %v6916, %v6948
    %v6985 = vmul.f32 %v6917, %v6948
    %v6986 = vmul.f32 %v6918, %v6948
    %v6987 = vmul.f32 %v6919, %v6948
    %v6988 = vmul.f32 %v6920, %v6948
    %v6989 = vmul.f32 %v6921, %v6948
    %v6990 = vmul.f32 %v6922, %v6948
    %v6991 = vmul.f32 %v6923, %v6948
    %v6992 = vmul.f32 %v6924, %v6948
    %v6993 = vmul.f32 %v6925, %v6948
    %v6994 = vmul.f32 %v6926, %v6948
    %v6995 = vmul.f32 %v6927, %v6948
    %v6996 = vmul.f32 %v6928, %v6948
    %v6997 = vmul.f32 %v6929, %v6948
    %v6998 = vmul.f32 %v6930, %v6948
    %v6999 = vmul.f32 %v6931, %v6948
    %v7000 = vmul.f32 %v6932, %v6948
    %v7001 = vmul.f32 %v6933, %v6948
    %v7002 = vmul.f32 %v6934, %v6948
    %v7003 = vmul.f32 %v6935, %v6948
    %v7004 = vmul.f32 %v6936, %v6948
    %v7005 = vmul.f32 %v6937, %v6948
    %v7006 = vmul.f32 %v6938, %v6948
    %v7007 = vmul.f32 %v6939, %v6948
    %v7008 = vmul.f32 %v6940, %v6948
    %v7009 = vmul.f32 %v6941, %v6948
    %v7010 = vmul.f32 %v6942, %v6948
    %v7011 = vmul.f32 %v6943, %v6948
    %v7012 = vmul.f32 %v6944, %v6948
    %v7013 = vld [vmem:[%s6] sm:$0x1]
    %v7015 = vlaneseq
    %v7016 = vshrl.u32 %v7015, 7
    %v7017 = vsub.s32 0, %v7016
    %v7018 = vrot.slane %v7013, %v7017
    %v7020 = vadd.f32 %v6949, %v7018
    %v7021 = vadd.f32 %v6950, %v7018
    %v7022 = vadd.f32 %v6951, %v7018
    %v7023 = vadd.f32 %v6952, %v7018
    %v7024 = vadd.f32 %v6953, %v7018
    %v7025 = vadd.f32 %v6954, %v7018
    %v7026 = vadd.f32 %v6955, %v7018
    %v7027 = vadd.f32 %v6956, %v7018
    %v7028 = vadd.f32 %v6957, %v7018
    %v7029 = vadd.f32 %v6958, %v7018
    %v7030 = vadd.f32 %v6959, %v7018
    %v7031 = vadd.f32 %v6960, %v7018
    %v7032 = vadd.f32 %v6961, %v7018
    %v7033 = vadd.f32 %v6962, %v7018
    %v7034 = vadd.f32 %v6963, %v7018
    %v7035 = vadd.f32 %v6964, %v7018
    %v7036 = vadd.f32 %v6965, %v7018
    %v7037 = vadd.f32 %v6966, %v7018
    %v7038 = vadd.f32 %v6967, %v7018
    %v7039 = vadd.f32 %v6968, %v7018
    %v7040 = vadd.f32 %v6969, %v7018
    %v7041 = vadd.f32 %v6970, %v7018
    %v7042 = vadd.f32 %v6971, %v7018
    %v7043 = vadd.f32 %v6972, %v7018
    %v7044 = vadd.f32 %v6973, %v7018
    %v7045 = vadd.f32 %v6974, %v7018
    %v7046 = vadd.f32 %v6975, %v7018
    %v7047 = vadd.f32 %v6976, %v7018
    %v7048 = vadd.f32 %v6977, %v7018
    %v7049 = vadd.f32 %v6978, %v7018
    %v7050 = vadd.f32 %v6979, %v7018
    %v7051 = vadd.f32 %v6980, %v7018
    %v7052 = vadd.f32 %v6981, %v7018
    %v7053 = vadd.f32 %v6982, %v7018
    %v7054 = vadd.f32 %v6983, %v7018
    %v7055 = vadd.f32 %v6984, %v7018
    %v7056 = vadd.f32 %v6985, %v7018
    %v7057 = vadd.f32 %v6986, %v7018
    %v7058 = vadd.f32 %v6987, %v7018
    %v7059 = vadd.f32 %v6988, %v7018
    %v7060 = vadd.f32 %v6989, %v7018
    %v7061 = vadd.f32 %v6990, %v7018
    %v7062 = vadd.f32 %v6991, %v7018
    %v7063 = vadd.f32 %v6992, %v7018
    %v7064 = vadd.f32 %v6993, %v7018
    %v7065 = vadd.f32 %v6994, %v7018
    %v7066 = vadd.f32 %v6995, %v7018
    %v7067 = vadd.f32 %v6996, %v7018
    %v7068 = vadd.f32 %v6997, %v7018
    %v7069 = vadd.f32 %v6998, %v7018
    %v7070 = vadd.f32 %v6999, %v7018
    %v7071 = vadd.f32 %v7000, %v7018
    %v7072 = vadd.f32 %v7001, %v7018
    %v7073 = vadd.f32 %v7002, %v7018
    %v7074 = vadd.f32 %v7003, %v7018
    %v7075 = vadd.f32 %v7004, %v7018
    %v7076 = vadd.f32 %v7005, %v7018
    %v7077 = vadd.f32 %v7006, %v7018
    %v7078 = vadd.f32 %v7007, %v7018
    %v7079 = vadd.f32 %v7008, %v7018
    %v7080 = vadd.f32 %v7009, %v7018
    %v7081 = vadd.f32 %v7010, %v7018
    %v7082 = vadd.f32 %v7011, %v7018
    %v7083 = vadd.f32 %v7012, %v7018
    %v7084 = vlaneseq
    %v7085 = vshrl.u32 %v7084, 7
    %v7086 = vsub.s32 0, %v7085
    %v7087 = vrot.slane %v436, %v7086
    %v7088 = vmul.f32 %v162, %v7087
    %v7089 = vmul.f32 %v163, %v7087
    %v7090 = vmul.f32 %v164, %v7087
    %v7091 = vmul.f32 %v165, %v7087
    %v7092 = vmul.f32 %v166, %v7087
    %v7093 = vmul.f32 %v167, %v7087
    %v7094 = vmul.f32 %v168, %v7087
    %v7095 = vmul.f32 %v169, %v7087
    %v7096 = vmul.f32 %v170, %v7087
    %v7097 = vmul.f32 %v171, %v7087
    %v7098 = vmul.f32 %v172, %v7087
    %v7099 = vmul.f32 %v173, %v7087
    %v7100 = vmul.f32 %v174, %v7087
    %v7101 = vmul.f32 %v175, %v7087
    %v7102 = vmul.f32 %v176, %v7087
    %v7103 = vmul.f32 %v177, %v7087
    %v7104 = vmul.f32 %v178, %v7087
    %v7105 = vmul.f32 %v179, %v7087
    %v7106 = vmul.f32 %v180, %v7087
    %v7107 = vmul.f32 %v181, %v7087
    %v7108 = vmul.f32 %v182, %v7087
    %v7109 = vmul.f32 %v183, %v7087
    %v7110 = vmul.f32 %v184, %v7087
    %v7111 = vmul.f32 %v185, %v7087
    %v7112 = vmul.f32 %v186, %v7087
    %v7113 = vmul.f32 %v187, %v7087
    %v7114 = vmul.f32 %v188, %v7087
    %v7115 = vmul.f32 %v189, %v7087
    %v7116 = vmul.f32 %v190, %v7087
    %v7117 = vmul.f32 %v191, %v7087
    %v7118 = vmul.f32 %v192, %v7087
    %v7119 = vmul.f32 %v193, %v7087
    %v7120 = vmul.f32 %v194, %v7087
    %v7121 = vmul.f32 %v195, %v7087
    %v7122 = vmul.f32 %v196, %v7087
    %v7123 = vmul.f32 %v197, %v7087
    %v7124 = vmul.f32 %v198, %v7087
    %v7125 = vmul.f32 %v199, %v7087
    %v7126 = vmul.f32 %v200, %v7087
    %v7127 = vmul.f32 %v201, %v7087
    %v7128 = vmul.f32 %v202, %v7087
    %v7129 = vmul.f32 %v203, %v7087
    %v7130 = vmul.f32 %v204, %v7087
    %v7131 = vmul.f32 %v205, %v7087
    %v7132 = vmul.f32 %v206, %v7087
    %v7133 = vmul.f32 %v207, %v7087
    %v7134 = vmul.f32 %v208, %v7087
    %v7135 = vmul.f32 %v209, %v7087
    %v7136 = vmul.f32 %v210, %v7087
    %v7137 = vmul.f32 %v211, %v7087
    %v7138 = vmul.f32 %v212, %v7087
    %v7139 = vmul.f32 %v213, %v7087
    %v7140 = vmul.f32 %v214, %v7087
    %v7141 = vmul.f32 %v215, %v7087
    %v7142 = vmul.f32 %v216, %v7087
    %v7143 = vmul.f32 %v217, %v7087
    %v7144 = vmul.f32 %v218, %v7087
    %v7145 = vmul.f32 %v219, %v7087
    %v7146 = vmul.f32 %v220, %v7087
    %v7147 = vmul.f32 %v221, %v7087
    %v7148 = vmul.f32 %v222, %v7087
    %v7149 = vmul.f32 %v223, %v7087
    %v7150 = vmul.f32 %v224, %v7087
    %v7151 = vmul.f32 %v225, %v7087
    %v7153 = vlaneseq
    %v7154 = vshrl.u32 %v7153, 7
    %v7155 = vsub.s32 0, %v7154
    %v7156 = vrot.slane %v439, %v7155
    %v7158 = vadd.f32 %v7088, %v7156
    %v7159 = vadd.f32 %v7089, %v7156
    %v7160 = vadd.f32 %v7090, %v7156
    %v7161 = vadd.f32 %v7091, %v7156
    %v7162 = vadd.f32 %v7092, %v7156
    %v7163 = vadd.f32 %v7093, %v7156
    %v7164 = vadd.f32 %v7094, %v7156
    %v7165 = vadd.f32 %v7095, %v7156
    %v7166 = vadd.f32 %v7096, %v7156
    %v7167 = vadd.f32 %v7097, %v7156
    %v7168 = vadd.f32 %v7098, %v7156
    %v7169 = vadd.f32 %v7099, %v7156
    %v7170 = vadd.f32 %v7100, %v7156
    %v7171 = vadd.f32 %v7101, %v7156
    %v7172 = vadd.f32 %v7102, %v7156
    %v7173 = vadd.f32 %v7103, %v7156
    %v7174 = vadd.f32 %v7104, %v7156
    %v7175 = vadd.f32 %v7105, %v7156
    %v7176 = vadd.f32 %v7106, %v7156
    %v7177 = vadd.f32 %v7107, %v7156
    %v7178 = vadd.f32 %v7108, %v7156
    %v7179 = vadd.f32 %v7109, %v7156
    %v7180 = vadd.f32 %v7110, %v7156
    %v7181 = vadd.f32 %v7111, %v7156
    %v7182 = vadd.f32 %v7112, %v7156
    %v7183 = vadd.f32 %v7113, %v7156
    %v7184 = vadd.f32 %v7114, %v7156
    %v7185 = vadd.f32 %v7115, %v7156
    %v7186 = vadd.f32 %v7116, %v7156
    %v7187 = vadd.f32 %v7117, %v7156
    %v7188 = vadd.f32 %v7118, %v7156
    %v7189 = vadd.f32 %v7119, %v7156
    %v7190 = vadd.f32 %v7120, %v7156
    %v7191 = vadd.f32 %v7121, %v7156
    %v7192 = vadd.f32 %v7122, %v7156
    %v7193 = vadd.f32 %v7123, %v7156
    %v7194 = vadd.f32 %v7124, %v7156
    %v7195 = vadd.f32 %v7125, %v7156
    %v7196 = vadd.f32 %v7126, %v7156
    %v7197 = vadd.f32 %v7127, %v7156
    %v7198 = vadd.f32 %v7128, %v7156
    %v7199 = vadd.f32 %v7129, %v7156
    %v7200 = vadd.f32 %v7130, %v7156
    %v7201 = vadd.f32 %v7131, %v7156
    %v7202 = vadd.f32 %v7132, %v7156
    %v7203 = vadd.f32 %v7133, %v7156
    %v7204 = vadd.f32 %v7134, %v7156
    %v7205 = vadd.f32 %v7135, %v7156
    %v7206 = vadd.f32 %v7136, %v7156
    %v7207 = vadd.f32 %v7137, %v7156
    %v7208 = vadd.f32 %v7138, %v7156
    %v7209 = vadd.f32 %v7139, %v7156
    %v7210 = vadd.f32 %v7140, %v7156
    %v7211 = vadd.f32 %v7141, %v7156
    %v7212 = vadd.f32 %v7142, %v7156
    %v7213 = vadd.f32 %v7143, %v7156
    %v7214 = vadd.f32 %v7144, %v7156
    %v7215 = vadd.f32 %v7145, %v7156
    %v7216 = vadd.f32 %v7146, %v7156
    %v7217 = vadd.f32 %v7147, %v7156
    %v7218 = vadd.f32 %v7148, %v7156
    %v7219 = vadd.f32 %v7149, %v7156
    %v7220 = vadd.f32 %v7150, %v7156
    %v7221 = vadd.f32 %v7151, %v7156
    %v7222 = vadd.f32 %v7158, %v7020
    %v7223 = vadd.f32 %v7159, %v7021
    %v7224 = vadd.f32 %v7160, %v7022
    %v7225 = vadd.f32 %v7161, %v7023
    %v7226 = vadd.f32 %v7162, %v7024
    %v7227 = vadd.f32 %v7163, %v7025
    %v7228 = vadd.f32 %v7164, %v7026
    %v7229 = vadd.f32 %v7165, %v7027
    %v7230 = vadd.f32 %v7166, %v7028
    %v7231 = vadd.f32 %v7167, %v7029
    %v7232 = vadd.f32 %v7168, %v7030
    %v7233 = vadd.f32 %v7169, %v7031
    %v7234 = vadd.f32 %v7170, %v7032
    %v7235 = vadd.f32 %v7171, %v7033
    %v7236 = vadd.f32 %v7172, %v7034
    %v7237 = vadd.f32 %v7173, %v7035
    %v7238 = vadd.f32 %v7174, %v7036
    %v7239 = vadd.f32 %v7175, %v7037
    %v7240 = vadd.f32 %v7176, %v7038
    %v7241 = vadd.f32 %v7177, %v7039
    %v7242 = vadd.f32 %v7178, %v7040
    %v7243 = vadd.f32 %v7179, %v7041
    %v7244 = vadd.f32 %v7180, %v7042
    %v7245 = vadd.f32 %v7181, %v7043
    %v7246 = vadd.f32 %v7182, %v7044
    %v7247 = vadd.f32 %v7183, %v7045
    %v7248 = vadd.f32 %v7184, %v7046
    %v7249 = vadd.f32 %v7185, %v7047
    %v7250 = vadd.f32 %v7186, %v7048
    %v7251 = vadd.f32 %v7187, %v7049
    %v7252 = vadd.f32 %v7188, %v7050
    %v7253 = vadd.f32 %v7189, %v7051
    %v7254 = vadd.f32 %v7190, %v7052
    %v7255 = vadd.f32 %v7191, %v7053
    %v7256 = vadd.f32 %v7192, %v7054
    %v7257 = vadd.f32 %v7193, %v7055
    %v7258 = vadd.f32 %v7194, %v7056
    %v7259 = vadd.f32 %v7195, %v7057
    %v7260 = vadd.f32 %v7196, %v7058
    %v7261 = vadd.f32 %v7197, %v7059
    %v7262 = vadd.f32 %v7198, %v7060
    %v7263 = vadd.f32 %v7199, %v7061
    %v7264 = vadd.f32 %v7200, %v7062
    %v7265 = vadd.f32 %v7201, %v7063
    %v7266 = vadd.f32 %v7202, %v7064
    %v7267 = vadd.f32 %v7203, %v7065
    %v7268 = vadd.f32 %v7204, %v7066
    %v7269 = vadd.f32 %v7205, %v7067
    %v7270 = vadd.f32 %v7206, %v7068
    %v7271 = vadd.f32 %v7207, %v7069
    %v7272 = vadd.f32 %v7208, %v7070
    %v7273 = vadd.f32 %v7209, %v7071
    %v7274 = vadd.f32 %v7210, %v7072
    %v7275 = vadd.f32 %v7211, %v7073
    %v7276 = vadd.f32 %v7212, %v7074
    %v7277 = vadd.f32 %v7213, %v7075
    %v7278 = vadd.f32 %v7214, %v7076
    %v7279 = vadd.f32 %v7215, %v7077
    %v7280 = vadd.f32 %v7216, %v7078
    %v7281 = vadd.f32 %v7217, %v7079
    %v7282 = vadd.f32 %v7218, %v7080
    %v7283 = vadd.f32 %v7219, %v7081
    %v7284 = vadd.f32 %v7220, %v7082
    %v7285 = vadd.f32 %v7221, %v7083
    %7286 = vst [vmem:[#allocation9] sm:$0xff] %v7222
    %7287 = vst [vmem:[#allocation9 + $0x8] sm:$0xff] %v7223
    %7288 = vst [vmem:[#allocation9 + $0x10] sm:$0xff] %v7224
    %7289 = vst [vmem:[#allocation9 + $0x18] sm:$0xff] %v7225
    %7290 = vst [vmem:[#allocation9 + $0x20] sm:$0xff] %v7226
    %7291 = vst [vmem:[#allocation9 + $0x28] sm:$0xff] %v7227
    %7292 = vst [vmem:[#allocation9 + $0x30] sm:$0xff] %v7228
    %7293 = vst [vmem:[#allocation9 + $0x38] sm:$0xff] %v7229
    %7294 = vst [vmem:[#allocation9 + $0x40] sm:$0xff] %v7230
    %7295 = vst [vmem:[#allocation9 + $0x48] sm:$0xff] %v7231
    %7296 = vst [vmem:[#allocation9 + $0x50] sm:$0xff] %v7232
    %7297 = vst [vmem:[#allocation9 + $0x58] sm:$0xff] %v7233
    %7298 = vst [vmem:[#allocation9 + $0x60] sm:$0xff] %v7234
    %7299 = vst [vmem:[#allocation9 + $0x68] sm:$0xff] %v7235
    %7300 = vst [vmem:[#allocation9 + $0x70] sm:$0xff] %v7236
    %7301 = vst [vmem:[#allocation9 + $0x78] sm:$0xff] %v7237
    %7302 = vst [vmem:[#allocation9 + $0x80] sm:$0xff] %v7238
    %7303 = vst [vmem:[#allocation9 + $0x88] sm:$0xff] %v7239
    %7304 = vst [vmem:[#allocation9 + $0x90] sm:$0xff] %v7240
    %7305 = vst [vmem:[#allocation9 + $0x98] sm:$0xff] %v7241
    %7306 = vst [vmem:[#allocation9 + $0xa0] sm:$0xff] %v7242
    %7307 = vst [vmem:[#allocation9 + $0xa8] sm:$0xff] %v7243
    %7308 = vst [vmem:[#allocation9 + $0xb0] sm:$0xff] %v7244
    %7309 = vst [vmem:[#allocation9 + $0xb8] sm:$0xff] %v7245
    %7310 = vst [vmem:[#allocation9 + $0xc0] sm:$0xff] %v7246
    %7311 = vst [vmem:[#allocation9 + $0xc8] sm:$0xff] %v7247
    %7312 = vst [vmem:[#allocation9 + $0xd0] sm:$0xff] %v7248
    %7313 = vst [vmem:[#allocation9 + $0xd8] sm:$0xff] %v7249
    %7314 = vst [vmem:[#allocation9 + $0xe0] sm:$0xff] %v7250
    %7315 = vst [vmem:[#allocation9 + $0xe8] sm:$0xff] %v7251
    %7316 = vst [vmem:[#allocation9 + $0xf0] sm:$0xff] %v7252
    %7317 = vst [vmem:[#allocation9 + $0xf8] sm:$0xff] %v7253
    %7318 = vst [vmem:[#allocation9 + $0x100] sm:$0xff] %v7254
    %7319 = vst [vmem:[#allocation9 + $0x108] sm:$0xff] %v7255
    %7320 = vst [vmem:[#allocation9 + $0x110] sm:$0xff] %v7256
    %7321 = vst [vmem:[#allocation9 + $0x118] sm:$0xff] %v7257
    %7322 = vst [vmem:[#allocation9 + $0x120] sm:$0xff] %v7258
    %7323 = vst [vmem:[#allocation9 + $0x128] sm:$0xff] %v7259
    %7324 = vst [vmem:[#allocation9 + $0x130] sm:$0xff] %v7260
    %7325 = vst [vmem:[#allocation9 + $0x138] sm:$0xff] %v7261
    %7326 = vst [vmem:[#allocation9 + $0x140] sm:$0xff] %v7262
    %7327 = vst [vmem:[#allocation9 + $0x148] sm:$0xff] %v7263
    %7328 = vst [vmem:[#allocation9 + $0x150] sm:$0xff] %v7264
    %7329 = vst [vmem:[#allocation9 + $0x158] sm:$0xff] %v7265
    %7330 = vst [vmem:[#allocation9 + $0x160] sm:$0xff] %v7266
    %7331 = vst [vmem:[#allocation9 + $0x168] sm:$0xff] %v7267
    %7332 = vst [vmem:[#allocation9 + $0x170] sm:$0xff] %v7268
    %7333 = vst [vmem:[#allocation9 + $0x178] sm:$0xff] %v7269
    %7334 = vst [vmem:[#allocation9 + $0x180] sm:$0xff] %v7270
    %7335 = vst [vmem:[#allocation9 + $0x188] sm:$0xff] %v7271
    %7336 = vst [vmem:[#allocation9 + $0x190] sm:$0xff] %v7272
    %7337 = vst [vmem:[#allocation9 + $0x198] sm:$0xff] %v7273
    %7338 = vst [vmem:[#allocation9 + $0x1a0] sm:$0xff] %v7274
    %7339 = vst [vmem:[#allocation9 + $0x1a8] sm:$0xff] %v7275
    %7340 = vst [vmem:[#allocation9 + $0x1b0] sm:$0xff] %v7276
    %7341 = vst [vmem:[#allocation9 + $0x1b8] sm:$0xff] %v7277
    %7342 = vst [vmem:[#allocation9 + $0x1c0] sm:$0xff] %v7278
    %7343 = vst [vmem:[#allocation9 + $0x1c8] sm:$0xff] %v7279
    %7344 = vst [vmem:[#allocation9 + $0x1d0] sm:$0xff] %v7280
    %7345 = vst [vmem:[#allocation9 + $0x1d8] sm:$0xff] %v7281
    %7346 = vst [vmem:[#allocation9 + $0x1e0] sm:$0xff] %v7282
    %7347 = vst [vmem:[#allocation9 + $0x1e8] sm:$0xff] %v7283
    %7348 = vst [vmem:[#allocation9 + $0x1f0] sm:$0xff] %v7284
    %7349 = vst [vmem:[#allocation9 + $0x1f8] sm:$0xff] %v7285
    // Predicated region
    $region58: #{tpu_custom_call.1} parent=1 // pred_check
      _
    $region59: #{tpu_custom_call.1} parent=1 // pred_check_branch
      %7351 = sbr.rel (0) target = $region61
    $region60: #{tpu_custom_call.1} parent=1 // pred_region
      %s7353 = ssub.s32 8192, 8192
      %7354 = vsyncadd [#allocation5], %s7353
      %s7355 = sshll.u32 [#allocation9], 4
      %s7356 = int_to_ptr.vmem [resolvable:$true] %s7355
      %7361 = dma.vmem_to_hbm [thread:$0]  %s7356, 8192, %s11, [#allocation5], 128, 128, 8
    $region61: #{tpu_custom_call.1} parent=1 // pred_fallthru
      _
    // Predicated region
    $region62: #{tpu_custom_call.1} parent=1 // pred_check
      _
    $region63: #{tpu_custom_call.1} parent=1 // pred_check_branch
      %7363 = sbr.rel (0) target = $region65
    $region64: #{tpu_custom_call.1} parent=1 // pred_region
      %7364 = dma.done [#allocation5], 8192
    $region65: #{tpu_custom_call.1} parent=1 // pred_fallthru
      _
    %7365 = vsyncpa [#allocation4], 1
    %7366 = vsyncpa [#allocation7], 1
    %7367 = vsyncpa [#allocation5], 1

</llo_original>
